<compile_context>
chip_gen: v7x
topology: tpu7x:2x2x1
jax: 0.10.0
libtpu: 0.0.40
codegen_flags: <defaults>
</compile_context>

<pallas_src>
import functools
import jax
import jax.numpy as jnp
from jax.experimental import pallas as pl
from jax.experimental.pallas import tpu as pltpu

# ----------------------------------------------------------------------------
# Small demo config (shrunk but structurally identical to the PyTorch module)
#   torch defaults: input_size=57, length_MC=10, dim_embed=512, depth=6,
#                   heads=8, dim_head=64, num_channels=[64]*3, dim_mlp=20, num_classes=10
# ----------------------------------------------------------------------------
CFG = dict(
    batch=2,
    input_size=8,          # num_variates
    length_MC=10,          # lookback length (== pred_length == mlp input dim)
    pred_length=10,
    num_classes=4,
    dim_embed=32,
    depth=2,
    heads=2,
    dim_head=16,
    ff_mult=4,
    dim_mlp=8,
    num_channels=[16, 16, 16],
    kernel_size=3,
)

_VMEM = pl.BlockSpec(memory_space=pltpu.MemorySpace.VMEM)
_EPS = 1e-5


# ----------------------------------------------------------------------------
# Param flattening (kernel receives a flat list of refs; names keep it readable)
# ----------------------------------------------------------------------------
def _flatten_params(params):
    names, vals = [], []

    def rec(prefix, obj):
        if isinstance(obj, dict):
            for k in sorted(obj):
                rec(f"{prefix}{k}/", obj[k])
        elif isinstance(obj, (list, tuple)):
            for i, v in enumerate(obj):
                rec(f"{prefix}{i}/", v)
        else:
            names.append(prefix[:-1])
            vals.append(obj)

    rec("", params)
    return names, vals


# ----------------------------------------------------------------------------
# In-kernel helpers (operate on VMEM-resident values)
# ----------------------------------------------------------------------------
def _layernorm(x, g, b):
    mu = jnp.mean(x, axis=-1, keepdims=True)
    var = jnp.mean(jnp.square(x - mu), axis=-1, keepdims=True)
    return (x - mu) * jax.lax.rsqrt(var + _EPS) * g + b


def _causal_dilated_conv(x_cm, w_ref, b_ref, dilation):
    """Causal dilated Conv1d (weight_norm == plain conv in forward) as K shifted matmuls.
    x_cm: (Cin, T) value, channel-major; w_ref: (K, Cout, Cin); b_ref: (Cout, 1)."""
    cin, t_len = x_cm.shape
    k_taps = w_ref.shape[0]
    acc = jnp.zeros((w_ref.shape[1], t_len), jnp.float32) + b_ref[...]
    for kk in range(k_taps):
        s = (k_taps - 1 - kk) * dilation           # causal left shift (pad + chomp)
        if s >= t_len:
            continue                               # tap entirely outside the window
        if s == 0:
            xs = x_cm
        else:
            xs = jnp.concatenate(
                [jnp.zeros((cin, s), jnp.float32), x_cm[:, :t_len - s]], axis=1)
        acc = acc + jnp.dot(w_ref[kk], xs, preferred_element_type=jnp.float32)
    return acc


# ----------------------------------------------------------------------------
# Fused forward kernel
# ----------------------------------------------------------------------------
def model_kernel(*refs, names):
    n = len(names)
    x_ref = refs[0]                                 # (L, B, V) time-major input
    prm = dict(zip(names, refs[1:1 + n]))           # name -> VMEM ref
    out_ref = refs[1 + n]                           # (B, num_classes)

    L, B, V = x_ref.shape
    dim, H, dh = CFG['dim_embed'], CFG['heads'], CFG['dim_head']
    chans = CFG['num_channels']
    f32 = jnp.float32

    # ---- 1. x, _ = self.lstm(x): single layer, gates stacked (i|f|g|o) along 4V -------
    wih = prm['lstm_wih'][...]                      # (V, 4V)
    whh = prm['lstm_whh'][...]                      # (V, 4V)
    bg = prm['lstm_b'][...]                         # (1, 4V)
    h = jnp.zeros((B, V), f32)
    c = jnp.zeros((B, V), f32)
    hs = []                                         # per-step hidden states stay in vregs
    for t in range(L):                              # static unrolled recurrence
        gates = (jnp.dot(x_ref[t], wih, preferred_element_type=f32)
                 + jnp.dot(h, whh, preferred_element_type=f32) + bg)     # (B, 4V)
        i_g = jax.nn.sigmoid(gates[:, 0 * V:1 * V])
        f_g = jax.nn.sigmoid(gates[:, 1 * V:2 * V])
        g_g = jnp.tanh(gates[:, 2 * V:3 * V])
        o_g = jax.nn.sigmoid(gates[:, 3 * V:4 * V])
        c = f_g * c + i_g * g_g
        h = o_g * jnp.tanh(c)
        hs.append(h)

    # ---- 2. x1 = self.model1(x): iTransformer (RevIN + embed + attention blocks) ------
    g_rv = prm['revin_gamma'][...]                  # (V, 1)
    b_rv = prm['revin_beta'][...]                   # (V, 1)
    xn_rows, mean_rows, std_rows = [], [], []
    for b in range(B):
        # variates-as-tokens view of this batch element: (V, L)
        xb = jnp.concatenate([ht[b:b + 1, :] for ht in hs], axis=0)      # (L, V)
        xv = jnp.transpose(xb)                                           # (V, L)
        mu = jnp.mean(xv, axis=-1, keepdims=True)
        var = jnp.mean(jnp.square(xv - mu), axis=-1, keepdims=True)      # unbiased=False
        var = jnp.maximum(var, _EPS)                # same clamped variance fwd & inverse
        xn_rows.append((xv - mu) * jax.lax.rsqrt(var) * g_rv + b_rv)
        mean_rows.append(mu)
        std_rows.append(jnp.sqrt(var))
    xn = jnp.concatenate(xn_rows, axis=0)           # (B*V, L)
    mean_bv = jnp.concatenate(mean_rows, axis=0)    # (B*V, 1)
    std_bv = jnp.concatenate(std_rows, axis=0)      # (B*V, 1)

    # per-variate embedding Linear(L -> dim) + LayerNorm
    tok = jnp.dot(xn, prm['embed_w'][...], preferred_element_type=f32) + prm['embed_b'][...]
    tok = _layernorm(tok, prm['embed_ln_g'][...], prm['embed_ln_b'][...])

    scale = dh ** -0.5
    for li in range(CFG['depth']):
        pfx = f'layers/{li}/'
        qkv = jnp.dot(tok, prm[pfx + 'w_qkv'][...], preferred_element_type=f32)  # (B*V, 3*H*dh)
        att_rows = []
        for b in range(B):                          # attention over the V variate tokens
            blk = qkv[b * V:(b + 1) * V, :]         # (V, 3*H*dh) -- head split via static slices
            heads = []
            for hh in range(H):
                qh = blk[:, hh * dh:(hh + 1) * dh]
                kh = blk[:, (H + hh) * dh:(H + hh + 1) * dh]
                vh = blk[:, (2 * H + hh) * dh:(2 * H + hh + 1) * dh]
                s = jnp.dot(qh, kh.T, preferred_element_type=f32) * scale        # (V, V)
                m = jnp.max(s, axis=-1, keepdims=True)
                p = jnp.exp(s - m)
                denom = jnp.sum(p, axis=-1, keepdims=True)
                o = jnp.dot(p, vh, preferred_element_type=f32) * pl.reciprocal(denom, approx=True)
                heads.append(o)
            att_rows.append(jnp.concatenate(heads, axis=-1))                     # (V, H*dh)
        att = jnp.concatenate(att_rows, axis=0)                                  # (B*V, H*dh)
        a = jnp.dot(att, prm[pfx + 'w_out'][...], preferred_element_type=f32)
        tok = _layernorm(tok + a, prm[pfx + 'ln1_g'][...], prm[pfx + 'ln1_b'][...])
        ff = jnp.dot(tok, prm[pfx + 'ff_w1'][...], preferred_element_type=f32) + prm[pfx + 'ff_b1'][...]
        # TODO(synk): torch nn.GELU defaults to exact erf GELU; tanh approximation used in-kernel.
        ff = jax.nn.gelu(ff, approximate=True)
        ff = jnp.dot(ff, prm[pfx + 'ff_w2'][...], preferred_element_type=f32) + prm[pfx + 'ff_b2'][...]
        tok = _layernorm(tok + ff, prm[pfx + 'ln2_g'][...], prm[pfx + 'ln2_b'][...])

    # reversible-instance-norm inverse + per-variate prediction head -> (B*V, P)
    cg = jnp.where(g_rv >= 0.0, jnp.maximum(g_rv, _EPS), jnp.minimum(g_rv, -_EPS))  # never 0
    scale_bv = jnp.concatenate([1.0 / cg] * B, axis=0) * std_bv                     # (B*V, 1)
    beta_bv = jnp.concatenate([b_rv] * B, axis=0)
    tok_dn = (tok - beta_bv) * scale_bv + mean_bv
    pred = jnp.dot(tok_dn, prm['pred_w'][...], preferred_element_type=f32) + prm['pred_b'][...]
    # pred rows (batch-major, per-variate time series) == torch x1.transpose(2, 1):
    # exactly the (channels=V, time=P) layout TemporalConvNet consumes -> no transpose.

    # ---- 3. x1 = self.model2(x1.transpose(2, 1)): TCN, channel-major shifted matmuls ---
    c_last = chans[-1]
    last_rows = []
    for b in range(B):
        y = pred[b * V:(b + 1) * V, :]              # (Cin=V, T=P)
        for bi in range(len(chans)):
            d = 2 ** bi
            pfx = f'tcn/{bi}/'
            h1 = jnp.maximum(_causal_dilated_conv(y, prm[pfx + 'w1'], prm[pfx + 'b1'], d), 0.0)
            h2 = jnp.maximum(_causal_dilated_conv(h1, prm[pfx + 'w2'], prm[pfx + 'b2'], d), 0.0)
            if (pfx + 'wd') in prm:                 # 1x1 downsample residual
                res = (jnp.dot(prm[pfx + 'wd'][...], y, preferred_element_type=f32)
                       + prm[pfx + 'bd'][...])
            else:
                res = y
            y = jnp.maximum(h2 + res, 0.0)
        last_rows.append(y[c_last - 1:c_last, :])   # torch x1[:, -1, :]: last channel over time
    last = jnp.concatenate(last_rows, axis=0)       # (B, P)

    # ---- 4. output = self.mlp(x1[:, -1, :]) -------------------------------------------
    h1 = jnp.maximum(jnp.dot(last, prm['mlp_w1'][...], preferred_element_type=f32)
                     + prm['mlp_b1'][...], 0.0)
    out_ref[...] = (jnp.dot(h1, prm['mlp_w2'][...], preferred_element_type=f32)
                    + prm['mlp_b2'][...])


# ----------------------------------------------------------------------------
# Parameter setup (synthetic, deterministic)
# ----------------------------------------------------------------------------
def init_params(key):
    V, L, P = CFG['input_size'], CFG['length_MC'], CFG['pred_length']
    dim, H, dh = CFG['dim_embed'], CFG['heads'], CFG['dim_head']
    mult, K = CFG['ff_mult'], CFG['kernel_size']
    chans, nmlp, ncls = CFG['num_channels'], CFG['dim_mlp'], CFG['num_classes']

    keys = iter(jax.random.split(key, 256))

    def nrm(*shape, s=0.05):
        return (s * jax.random.normal(next(keys), shape)).astype(jnp.float32)

    def zeros(*shape):
        return jnp.zeros(shape, jnp.float32)

    p = {}
    # nn.LSTM(V, V, batch_first=True): gate blocks (i|f|g|o) stacked along 4V; b = b_ih + b_hh
    p['lstm_wih'] = nrm(V, 4 * V)
    p['lstm_whh'] = nrm(V, 4 * V)
    p['lstm_b'] = nrm(1, 4 * V)
    # iTransformer: RevIN (per-variate affine)
    p['revin_gamma'] = jnp.ones((V, 1), jnp.float32)
    p['revin_beta'] = zeros(V, 1)
    # per-variate embedding Linear(lookback -> dim) + LayerNorm
    p['embed_w'] = nrm(L, dim)
    p['embed_b'] = zeros(1, dim)
    p['embed_ln_g'] = jnp.ones((1, dim), jnp.float32)
    p['embed_ln_b'] = zeros(1, dim)
    layers = []
    for _ in range(CFG['depth']):
        layers.append(dict(
            w_qkv=nrm(dim, 3 * H * dh),                       # bias-free
            w_out=nrm(H * dh, dim),                           # bias-free
            ln1_g=jnp.ones((1, dim), jnp.float32), ln1_b=zeros(1, dim),
            ff_w1=nrm(dim, mult * dim), ff_b1=zeros(1, mult * dim),
            ff_w2=nrm(mult * dim, dim), ff_b2=zeros(1, dim),
            ln2_g=jnp.ones((1, dim), jnp.float32), ln2_b=zeros(1, dim),
        ))
    p['layers'] = layers
    # pred head: Linear(dim -> pred_length) per variate
    p['pred_w'] = nrm(dim, P)
    p['pred_b'] = zeros(1, P)
    # TemporalConvNet: per-tap conv weights (Cout, Cin) so the conv is K shifted matmuls
    tcn = []
    c_in = V
    for i, c_out in enumerate(chans):
        blk = dict(
            w1=nrm(K, c_out, c_in), b1=nrm(c_out, 1),
            w2=nrm(K, c_out, c_out), b2=nrm(c_out, 1),
        )
        if c_in != c_out:
            blk['wd'] = nrm(c_out, c_in)
            blk['bd'] = nrm(c_out, 1)
        tcn.append(blk)
        c_in = c_out
    p['tcn'] = tcn
    # output head: nn.Sequential(Linear(length_MC, dim_mlp), ReLU, Linear(dim_mlp, num_classes))
    p['mlp_w1'] = nrm(L, nmlp)
    p['mlp_b1'] = zeros(1, nmlp)
    p['mlp_w2'] = nrm(nmlp, ncls)
    p['mlp_b2'] = zeros(1, ncls)
    return p


# ----------------------------------------------------------------------------
# Forward pass == Model_Torder.forward : a single fused pallas_call
# ----------------------------------------------------------------------------
def forward(params, x):
    B = x.shape[0]
    names, vals = _flatten_params(params)
    xt = jnp.transpose(x, (1, 0, 2))                # (L, B, V): time-major for the LSTM loop
    return pl.pallas_call(
        functools.partial(model_kernel, names=tuple(names)),
        out_shape=jax.ShapeDtypeStruct((B, CFG['num_classes']), jnp.float32),
        in_specs=[_VMEM] * (1 + len(vals)),
        out_specs=_VMEM,
        compiler_params=pltpu.CompilerParams(vmem_limit_bytes=32 * 1024 * 1024),
    )(xt, *vals)


if __name__ == "__main__":
    key = jax.random.PRNGKey(0)
    pkey, xkey = jax.random.split(key)
    params = init_params(pkey)
    x = jax.random.normal(xkey, (CFG['batch'], CFG['length_MC'], CFG['input_size']),
                          dtype=jnp.float32)
    out = jax.jit(forward)(params, x)
    out = jax.block_until_ready(out)
    assert out.shape == (CFG['batch'], CFG['num_classes']), out.shape
    assert bool(jnp.all(jnp.isfinite(out)))
    print("KERNEL_OK")
</pallas_src>

<mosaic_0001>
module attributes {stable_mosaic.version = 11 : i64} {
  func.func @model_kernel(%arg0: memref<10x2x8xf32, #tpu.memory_space<vmem>>, %arg1: memref<1x32xf32, #tpu.memory_space<vmem>>, %arg2: memref<1x32xf32, #tpu.memory_space<vmem>>, %arg3: memref<1x32xf32, #tpu.memory_space<vmem>>, %arg4: memref<10x32xf32, #tpu.memory_space<vmem>>, %arg5: memref<1x128xf32, #tpu.memory_space<vmem>>, %arg6: memref<1x32xf32, #tpu.memory_space<vmem>>, %arg7: memref<32x128xf32, #tpu.memory_space<vmem>>, %arg8: memref<128x32xf32, #tpu.memory_space<vmem>>, %arg9: memref<1x32xf32, #tpu.memory_space<vmem>>, %arg10: memref<1x32xf32, #tpu.memory_space<vmem>>, %arg11: memref<1x32xf32, #tpu.memory_space<vmem>>, %arg12: memref<1x32xf32, #tpu.memory_space<vmem>>, %arg13: memref<32x32xf32, #tpu.memory_space<vmem>>, %arg14: memref<32x96xf32, #tpu.memory_space<vmem>>, %arg15: memref<1x128xf32, #tpu.memory_space<vmem>>, %arg16: memref<1x32xf32, #tpu.memory_space<vmem>>, %arg17: memref<32x128xf32, #tpu.memory_space<vmem>>, %arg18: memref<128x32xf32, #tpu.memory_space<vmem>>, %arg19: memref<1x32xf32, #tpu.memory_space<vmem>>, %arg20: memref<1x32xf32, #tpu.memory_space<vmem>>, %arg21: memref<1x32xf32, #tpu.memory_space<vmem>>, %arg22: memref<1x32xf32, #tpu.memory_space<vmem>>, %arg23: memref<32x32xf32, #tpu.memory_space<vmem>>, %arg24: memref<32x96xf32, #tpu.memory_space<vmem>>, %arg25: memref<1x32xf32, #tpu.memory_space<vmem>>, %arg26: memref<8x32xf32, #tpu.memory_space<vmem>>, %arg27: memref<8x32xf32, #tpu.memory_space<vmem>>, %arg28: memref<1x8xf32, #tpu.memory_space<vmem>>, %arg29: memref<1x4xf32, #tpu.memory_space<vmem>>, %arg30: memref<10x8xf32, #tpu.memory_space<vmem>>, %arg31: memref<8x4xf32, #tpu.memory_space<vmem>>, %arg32: memref<1x10xf32, #tpu.memory_space<vmem>>, %arg33: memref<32x10xf32, #tpu.memory_space<vmem>>, %arg34: memref<8x1xf32, #tpu.memory_space<vmem>>, %arg35: memref<8x1xf32, #tpu.memory_space<vmem>>, %arg36: memref<16x1xf32, #tpu.memory_space<vmem>>, %arg37: memref<16x1xf32, #tpu.memory_space<vmem>>, %arg38: memref<16x1xf32, #tpu.memory_space<vmem>>, %arg39: memref<3x16x8xf32, #tpu.memory_space<vmem>>, %arg40: memref<3x16x16xf32, #tpu.memory_space<vmem>>, %arg41: memref<16x8xf32, #tpu.memory_space<vmem>>, %arg42: memref<16x1xf32, #tpu.memory_space<vmem>>, %arg43: memref<16x1xf32, #tpu.memory_space<vmem>>, %arg44: memref<3x16x16xf32, #tpu.memory_space<vmem>>, %arg45: memref<3x16x16xf32, #tpu.memory_space<vmem>>, %arg46: memref<16x1xf32, #tpu.memory_space<vmem>>, %arg47: memref<16x1xf32, #tpu.memory_space<vmem>>, %arg48: memref<3x16x16xf32, #tpu.memory_space<vmem>>, %arg49: memref<3x16x16xf32, #tpu.memory_space<vmem>>, %arg50: memref<2x4xf32, #tpu.memory_space<vmem>>) attributes {dimension_semantics = [], scalar_prefetch = 0 : i64, scratch_operands = 0 : i64, tpu.core_type = #tpu.core_type<tc>} {
    %c0 = arith.constant 0 : index
    %c0_0 = arith.constant 0 : index
    %0 = vector.load %arg27[%c0, %c0_0] : memref<8x32xf32, #tpu.memory_space<vmem>>, vector<8x32xf32>
    %c0_1 = arith.constant 0 : index
    %c0_2 = arith.constant 0 : index
    %1 = vector.load %arg26[%c0_1, %c0_2] : memref<8x32xf32, #tpu.memory_space<vmem>>, vector<8x32xf32>
    %c0_3 = arith.constant 0 : index
    %c0_4 = arith.constant 0 : index
    %2 = vector.load %arg25[%c0_3, %c0_4] : memref<1x32xf32, #tpu.memory_space<vmem>>, vector<1x32xf32>
    %cst = arith.constant 0.000000e+00 : f32
    %3 = vector.broadcast %cst : f32 to vector<2x8xf32>
    %cst_5 = arith.constant 0.000000e+00 : f32
    %4 = vector.broadcast %cst_5 : f32 to vector<2x8xf32>
    %c0_6 = arith.constant 0 : index
    %c0_7 = arith.constant 0 : index
    %c0_8 = arith.constant 0 : index
    %5 = vector.load %arg0[%c0_6, %c0_7, %c0_8] : memref<10x2x8xf32, #tpu.memory_space<vmem>>, vector<1x2x8xf32>
    %6 = vector.shape_cast %5 : vector<1x2x8xf32> to vector<2x8xf32>
    %cst_9 = arith.constant dense<0.000000e+00> : vector<2x32xf32>
    %7 = tpu.matmul %6, %0, %cst_9 {dimension_numbers = #tpu.dot_dimension_numbers<[1], [0], [0], [1], [0, 0, 1, 1], [], []>} : vector<2x8xf32>, vector<8x32xf32>, vector<2x32xf32> -> vector<2x32xf32>
    %cst_10 = arith.constant dense<0.000000e+00> : vector<2x32xf32>
    %8 = tpu.matmul %3, %1, %cst_10 {dimension_numbers = #tpu.dot_dimension_numbers<[1], [0], [0], [1], [0, 0, 1, 1], [], []>} : vector<2x8xf32>, vector<8x32xf32>, vector<2x32xf32> -> vector<2x32xf32>
    %9 = arith.addf %7, %8 : vector<2x32xf32>
    %10 = vector.broadcast %2 : vector<1x32xf32> to vector<2x32xf32>
    %11 = arith.addf %9, %10 : vector<2x32xf32>
    %12 = vector.extract_strided_slice %11 {offsets = [0, 0], sizes = [2, 8], strides = [1, 1]} : vector<2x32xf32> to vector<2x8xf32>
    %13 = arith.negf %12 : vector<2x8xf32>
    %14 = math.exp %13 : vector<2x8xf32>
    %cst_11 = arith.constant 1.000000e+00 : f32
    %15 = vector.broadcast %cst_11 : f32 to vector<2x8xf32>
    %16 = arith.addf %15, %14 : vector<2x8xf32>
    %17 = arith.divf %15, %16 : vector<2x8xf32>
    %18 = vector.extract_strided_slice %11 {offsets = [0, 8], sizes = [2, 8], strides = [1, 1]} : vector<2x32xf32> to vector<2x8xf32>
    %19 = arith.negf %18 : vector<2x8xf32>
    %20 = math.exp %19 : vector<2x8xf32>
    %cst_12 = arith.constant 1.000000e+00 : f32
    %21 = vector.broadcast %cst_12 : f32 to vector<2x8xf32>
    %22 = arith.addf %21, %20 : vector<2x8xf32>
    %23 = arith.divf %21, %22 : vector<2x8xf32>
    %24 = vector.extract_strided_slice %11 {offsets = [0, 16], sizes = [2, 8], strides = [1, 1]} : vector<2x32xf32> to vector<2x8xf32>
    %25 = math.tanh %24 : vector<2x8xf32>
    %26 = vector.extract_strided_slice %11 {offsets = [0, 24], sizes = [2, 8], strides = [1, 1]} : vector<2x32xf32> to vector<2x8xf32>
    %27 = arith.negf %26 : vector<2x8xf32>
    %28 = math.exp %27 : vector<2x8xf32>
    %cst_13 = arith.constant 1.000000e+00 : f32
    %29 = vector.broadcast %cst_13 : f32 to vector<2x8xf32>
    %30 = arith.addf %29, %28 : vector<2x8xf32>
    %31 = arith.divf %29, %30 : vector<2x8xf32>
    %32 = arith.mulf %23, %4 : vector<2x8xf32>
    %33 = arith.mulf %17, %25 : vector<2x8xf32>
    %34 = arith.addf %32, %33 : vector<2x8xf32>
    %35 = math.tanh %34 : vector<2x8xf32>
    %36 = arith.mulf %31, %35 : vector<2x8xf32>
    %c1 = arith.constant 1 : index
    %c0_14 = arith.constant 0 : index
    %c0_15 = arith.constant 0 : index
    %37 = vector.load %arg0[%c1, %c0_14, %c0_15] : memref<10x2x8xf32, #tpu.memory_space<vmem>>, vector<1x2x8xf32>
    %38 = vector.shape_cast %37 : vector<1x2x8xf32> to vector<2x8xf32>
    %cst_16 = arith.constant dense<0.000000e+00> : vector<2x32xf32>
    %39 = tpu.matmul %38, %0, %cst_16 {dimension_numbers = #tpu.dot_dimension_numbers<[1], [0], [0], [1], [0, 0, 1, 1], [], []>} : vector<2x8xf32>, vector<8x32xf32>, vector<2x32xf32> -> vector<2x32xf32>
    %cst_17 = arith.constant dense<0.000000e+00> : vector<2x32xf32>
    %40 = tpu.matmul %36, %1, %cst_17 {dimension_numbers = #tpu.dot_dimension_numbers<[1], [0], [0], [1], [0, 0, 1, 1], [], []>} : vector<2x8xf32>, vector<8x32xf32>, vector<2x32xf32> -> vector<2x32xf32>
    %41 = arith.addf %39, %40 : vector<2x32xf32>
    %42 = vector.broadcast %2 : vector<1x32xf32> to vector<2x32xf32>
    %43 = arith.addf %41, %42 : vector<2x32xf32>
    %44 = vector.extract_strided_slice %43 {offsets = [0, 0], sizes = [2, 8], strides = [1, 1]} : vector<2x32xf32> to vector<2x8xf32>
    %45 = arith.negf %44 : vector<2x8xf32>
    %46 = math.exp %45 : vector<2x8xf32>
    %cst_18 = arith.constant 1.000000e+00 : f32
    %47 = vector.broadcast %cst_18 : f32 to vector<2x8xf32>
    %48 = arith.addf %47, %46 : vector<2x8xf32>
    %49 = arith.divf %47, %48 : vector<2x8xf32>
    %50 = vector.extract_strided_slice %43 {offsets = [0, 8], sizes = [2, 8], strides = [1, 1]} : vector<2x32xf32> to vector<2x8xf32>
    %51 = arith.negf %50 : vector<2x8xf32>
    %52 = math.exp %51 : vector<2x8xf32>
    %cst_19 = arith.constant 1.000000e+00 : f32
    %53 = vector.broadcast %cst_19 : f32 to vector<2x8xf32>
    %54 = arith.addf %53, %52 : vector<2x8xf32>
    %55 = arith.divf %53, %54 : vector<2x8xf32>
    %56 = vector.extract_strided_slice %43 {offsets = [0, 16], sizes = [2, 8], strides = [1, 1]} : vector<2x32xf32> to vector<2x8xf32>
    %57 = math.tanh %56 : vector<2x8xf32>
    %58 = vector.extract_strided_slice %43 {offsets = [0, 24], sizes = [2, 8], strides = [1, 1]} : vector<2x32xf32> to vector<2x8xf32>
    %59 = arith.negf %58 : vector<2x8xf32>
    %60 = math.exp %59 : vector<2x8xf32>
    %cst_20 = arith.constant 1.000000e+00 : f32
    %61 = vector.broadcast %cst_20 : f32 to vector<2x8xf32>
    %62 = arith.addf %61, %60 : vector<2x8xf32>
    %63 = arith.divf %61, %62 : vector<2x8xf32>
    %64 = arith.mulf %55, %34 : vector<2x8xf32>
    %65 = arith.mulf %49, %57 : vector<2x8xf32>
    %66 = arith.addf %64, %65 : vector<2x8xf32>
    %67 = math.tanh %66 : vector<2x8xf32>
    %68 = arith.mulf %63, %67 : vector<2x8xf32>
    %c2 = arith.constant 2 : index
    %c0_21 = arith.constant 0 : index
    %c0_22 = arith.constant 0 : index
    %69 = vector.load %arg0[%c2, %c0_21, %c0_22] : memref<10x2x8xf32, #tpu.memory_space<vmem>>, vector<1x2x8xf32>
    %70 = vector.shape_cast %69 : vector<1x2x8xf32> to vector<2x8xf32>
    %cst_23 = arith.constant dense<0.000000e+00> : vector<2x32xf32>
    %71 = tpu.matmul %70, %0, %cst_23 {dimension_numbers = #tpu.dot_dimension_numbers<[1], [0], [0], [1], [0, 0, 1, 1], [], []>} : vector<2x8xf32>, vector<8x32xf32>, vector<2x32xf32> -> vector<2x32xf32>
    %cst_24 = arith.constant dense<0.000000e+00> : vector<2x32xf32>
    %72 = tpu.matmul %68, %1, %cst_24 {dimension_numbers = #tpu.dot_dimension_numbers<[1], [0], [0], [1], [0, 0, 1, 1], [], []>} : vector<2x8xf32>, vector<8x32xf32>, vector<2x32xf32> -> vector<2x32xf32>
    %73 = arith.addf %71, %72 : vector<2x32xf32>
    %74 = vector.broadcast %2 : vector<1x32xf32> to vector<2x32xf32>
    %75 = arith.addf %73, %74 : vector<2x32xf32>
    %76 = vector.extract_strided_slice %75 {offsets = [0, 0], sizes = [2, 8], strides = [1, 1]} : vector<2x32xf32> to vector<2x8xf32>
    %77 = arith.negf %76 : vector<2x8xf32>
    %78 = math.exp %77 : vector<2x8xf32>
    %cst_25 = arith.constant 1.000000e+00 : f32
    %79 = vector.broadcast %cst_25 : f32 to vector<2x8xf32>
    %80 = arith.addf %79, %78 : vector<2x8xf32>
    %81 = arith.divf %79, %80 : vector<2x8xf32>
    %82 = vector.extract_strided_slice %75 {offsets = [0, 8], sizes = [2, 8], strides = [1, 1]} : vector<2x32xf32> to vector<2x8xf32>
    %83 = arith.negf %82 : vector<2x8xf32>
    %84 = math.exp %83 : vector<2x8xf32>
    %cst_26 = arith.constant 1.000000e+00 : f32
    %85 = vector.broadcast %cst_26 : f32 to vector<2x8xf32>
    %86 = arith.addf %85, %84 : vector<2x8xf32>
    %87 = arith.divf %85, %86 : vector<2x8xf32>
    %88 = vector.extract_strided_slice %75 {offsets = [0, 16], sizes = [2, 8], strides = [1, 1]} : vector<2x32xf32> to vector<2x8xf32>
    %89 = math.tanh %88 : vector<2x8xf32>
    %90 = vector.extract_strided_slice %75 {offsets = [0, 24], sizes = [2, 8], strides = [1, 1]} : vector<2x32xf32> to vector<2x8xf32>
    %91 = arith.negf %90 : vector<2x8xf32>
    %92 = math.exp %91 : vector<2x8xf32>
    %cst_27 = arith.constant 1.000000e+00 : f32
    %93 = vector.broadcast %cst_27 : f32 to vector<2x8xf32>
    %94 = arith.addf %93, %92 : vector<2x8xf32>
    %95 = arith.divf %93, %94 : vector<2x8xf32>
    %96 = arith.mulf %87, %66 : vector<2x8xf32>
    %97 = arith.mulf %81, %89 : vector<2x8xf32>
    %98 = arith.addf %96, %97 : vector<2x8xf32>
    %99 = math.tanh %98 : vector<2x8xf32>
    %100 = arith.mulf %95, %99 : vector<2x8xf32>
    %c3 = arith.constant 3 : index
    %c0_28 = arith.constant 0 : index
    %c0_29 = arith.constant 0 : index
    %101 = vector.load %arg0[%c3, %c0_28, %c0_29] : memref<10x2x8xf32, #tpu.memory_space<vmem>>, vector<1x2x8xf32>
    %102 = vector.shape_cast %101 : vector<1x2x8xf32> to vector<2x8xf32>
    %cst_30 = arith.constant dense<0.000000e+00> : vector<2x32xf32>
    %103 = tpu.matmul %102, %0, %cst_30 {dimension_numbers = #tpu.dot_dimension_numbers<[1], [0], [0], [1], [0, 0, 1, 1], [], []>} : vector<2x8xf32>, vector<8x32xf32>, vector<2x32xf32> -> vector<2x32xf32>
    %cst_31 = arith.constant dense<0.000000e+00> : vector<2x32xf32>
    %104 = tpu.matmul %100, %1, %cst_31 {dimension_numbers = #tpu.dot_dimension_numbers<[1], [0], [0], [1], [0, 0, 1, 1], [], []>} : vector<2x8xf32>, vector<8x32xf32>, vector<2x32xf32> -> vector<2x32xf32>
    %105 = arith.addf %103, %104 : vector<2x32xf32>
    %106 = vector.broadcast %2 : vector<1x32xf32> to vector<2x32xf32>
    %107 = arith.addf %105, %106 : vector<2x32xf32>
    %108 = vector.extract_strided_slice %107 {offsets = [0, 0], sizes = [2, 8], strides = [1, 1]} : vector<2x32xf32> to vector<2x8xf32>
    %109 = arith.negf %108 : vector<2x8xf32>
    %110 = math.exp %109 : vector<2x8xf32>
    %cst_32 = arith.constant 1.000000e+00 : f32
    %111 = vector.broadcast %cst_32 : f32 to vector<2x8xf32>
    %112 = arith.addf %111, %110 : vector<2x8xf32>
    %113 = arith.divf %111, %112 : vector<2x8xf32>
    %114 = vector.extract_strided_slice %107 {offsets = [0, 8], sizes = [2, 8], strides = [1, 1]} : vector<2x32xf32> to vector<2x8xf32>
    %115 = arith.negf %114 : vector<2x8xf32>
    %116 = math.exp %115 : vector<2x8xf32>
    %cst_33 = arith.constant 1.000000e+00 : f32
    %117 = vector.broadcast %cst_33 : f32 to vector<2x8xf32>
    %118 = arith.addf %117, %116 : vector<2x8xf32>
    %119 = arith.divf %117, %118 : vector<2x8xf32>
    %120 = vector.extract_strided_slice %107 {offsets = [0, 16], sizes = [2, 8], strides = [1, 1]} : vector<2x32xf32> to vector<2x8xf32>
    %121 = math.tanh %120 : vector<2x8xf32>
    %122 = vector.extract_strided_slice %107 {offsets = [0, 24], sizes = [2, 8], strides = [1, 1]} : vector<2x32xf32> to vector<2x8xf32>
    %123 = arith.negf %122 : vector<2x8xf32>
    %124 = math.exp %123 : vector<2x8xf32>
    %cst_34 = arith.constant 1.000000e+00 : f32
    %125 = vector.broadcast %cst_34 : f32 to vector<2x8xf32>
    %126 = arith.addf %125, %124 : vector<2x8xf32>
    %127 = arith.divf %125, %126 : vector<2x8xf32>
    %128 = arith.mulf %119, %98 : vector<2x8xf32>
    %129 = arith.mulf %113, %121 : vector<2x8xf32>
    %130 = arith.addf %128, %129 : vector<2x8xf32>
    %131 = math.tanh %130 : vector<2x8xf32>
    %132 = arith.mulf %127, %131 : vector<2x8xf32>
    %c4 = arith.constant 4 : index
    %c0_35 = arith.constant 0 : index
    %c0_36 = arith.constant 0 : index
    %133 = vector.load %arg0[%c4, %c0_35, %c0_36] : memref<10x2x8xf32, #tpu.memory_space<vmem>>, vector<1x2x8xf32>
    %134 = vector.shape_cast %133 : vector<1x2x8xf32> to vector<2x8xf32>
    %cst_37 = arith.constant dense<0.000000e+00> : vector<2x32xf32>
    %135 = tpu.matmul %134, %0, %cst_37 {dimension_numbers = #tpu.dot_dimension_numbers<[1], [0], [0], [1], [0, 0, 1, 1], [], []>} : vector<2x8xf32>, vector<8x32xf32>, vector<2x32xf32> -> vector<2x32xf32>
    %cst_38 = arith.constant dense<0.000000e+00> : vector<2x32xf32>
    %136 = tpu.matmul %132, %1, %cst_38 {dimension_numbers = #tpu.dot_dimension_numbers<[1], [0], [0], [1], [0, 0, 1, 1], [], []>} : vector<2x8xf32>, vector<8x32xf32>, vector<2x32xf32> -> vector<2x32xf32>
    %137 = arith.addf %135, %136 : vector<2x32xf32>
    %138 = vector.broadcast %2 : vector<1x32xf32> to vector<2x32xf32>
    %139 = arith.addf %137, %138 : vector<2x32xf32>
    %140 = vector.extract_strided_slice %139 {offsets = [0, 0], sizes = [2, 8], strides = [1, 1]} : vector<2x32xf32> to vector<2x8xf32>
    %141 = arith.negf %140 : vector<2x8xf32>
    %142 = math.exp %141 : vector<2x8xf32>
    %cst_39 = arith.constant 1.000000e+00 : f32
    %143 = vector.broadcast %cst_39 : f32 to vector<2x8xf32>
    %144 = arith.addf %143, %142 : vector<2x8xf32>
    %145 = arith.divf %143, %144 : vector<2x8xf32>
    %146 = vector.extract_strided_slice %139 {offsets = [0, 8], sizes = [2, 8], strides = [1, 1]} : vector<2x32xf32> to vector<2x8xf32>
    %147 = arith.negf %146 : vector<2x8xf32>
    %148 = math.exp %147 : vector<2x8xf32>
    %cst_40 = arith.constant 1.000000e+00 : f32
    %149 = vector.broadcast %cst_40 : f32 to vector<2x8xf32>
    %150 = arith.addf %149, %148 : vector<2x8xf32>
    %151 = arith.divf %149, %150 : vector<2x8xf32>
    %152 = vector.extract_strided_slice %139 {offsets = [0, 16], sizes = [2, 8], strides = [1, 1]} : vector<2x32xf32> to vector<2x8xf32>
    %153 = math.tanh %152 : vector<2x8xf32>
    %154 = vector.extract_strided_slice %139 {offsets = [0, 24], sizes = [2, 8], strides = [1, 1]} : vector<2x32xf32> to vector<2x8xf32>
    %155 = arith.negf %154 : vector<2x8xf32>
    %156 = math.exp %155 : vector<2x8xf32>
    %cst_41 = arith.constant 1.000000e+00 : f32
    %157 = vector.broadcast %cst_41 : f32 to vector<2x8xf32>
    %158 = arith.addf %157, %156 : vector<2x8xf32>
    %159 = arith.divf %157, %158 : vector<2x8xf32>
    %160 = arith.mulf %151, %130 : vector<2x8xf32>
    %161 = arith.mulf %145, %153 : vector<2x8xf32>
    %162 = arith.addf %160, %161 : vector<2x8xf32>
    %163 = math.tanh %162 : vector<2x8xf32>
    %164 = arith.mulf %159, %163 : vector<2x8xf32>
    %c5 = arith.constant 5 : index
    %c0_42 = arith.constant 0 : index
    %c0_43 = arith.constant 0 : index
    %165 = vector.load %arg0[%c5, %c0_42, %c0_43] : memref<10x2x8xf32, #tpu.memory_space<vmem>>, vector<1x2x8xf32>
    %166 = vector.shape_cast %165 : vector<1x2x8xf32> to vector<2x8xf32>
    %cst_44 = arith.constant dense<0.000000e+00> : vector<2x32xf32>
    %167 = tpu.matmul %166, %0, %cst_44 {dimension_numbers = #tpu.dot_dimension_numbers<[1], [0], [0], [1], [0, 0, 1, 1], [], []>} : vector<2x8xf32>, vector<8x32xf32>, vector<2x32xf32> -> vector<2x32xf32>
    %cst_45 = arith.constant dense<0.000000e+00> : vector<2x32xf32>
    %168 = tpu.matmul %164, %1, %cst_45 {dimension_numbers = #tpu.dot_dimension_numbers<[1], [0], [0], [1], [0, 0, 1, 1], [], []>} : vector<2x8xf32>, vector<8x32xf32>, vector<2x32xf32> -> vector<2x32xf32>
    %169 = arith.addf %167, %168 : vector<2x32xf32>
    %170 = vector.broadcast %2 : vector<1x32xf32> to vector<2x32xf32>
    %171 = arith.addf %169, %170 : vector<2x32xf32>
    %172 = vector.extract_strided_slice %171 {offsets = [0, 0], sizes = [2, 8], strides = [1, 1]} : vector<2x32xf32> to vector<2x8xf32>
    %173 = arith.negf %172 : vector<2x8xf32>
    %174 = math.exp %173 : vector<2x8xf32>
    %cst_46 = arith.constant 1.000000e+00 : f32
    %175 = vector.broadcast %cst_46 : f32 to vector<2x8xf32>
    %176 = arith.addf %175, %174 : vector<2x8xf32>
    %177 = arith.divf %175, %176 : vector<2x8xf32>
    %178 = vector.extract_strided_slice %171 {offsets = [0, 8], sizes = [2, 8], strides = [1, 1]} : vector<2x32xf32> to vector<2x8xf32>
    %179 = arith.negf %178 : vector<2x8xf32>
    %180 = math.exp %179 : vector<2x8xf32>
    %cst_47 = arith.constant 1.000000e+00 : f32
    %181 = vector.broadcast %cst_47 : f32 to vector<2x8xf32>
    %182 = arith.addf %181, %180 : vector<2x8xf32>
    %183 = arith.divf %181, %182 : vector<2x8xf32>
    %184 = vector.extract_strided_slice %171 {offsets = [0, 16], sizes = [2, 8], strides = [1, 1]} : vector<2x32xf32> to vector<2x8xf32>
    %185 = math.tanh %184 : vector<2x8xf32>
    %186 = vector.extract_strided_slice %171 {offsets = [0, 24], sizes = [2, 8], strides = [1, 1]} : vector<2x32xf32> to vector<2x8xf32>
    %187 = arith.negf %186 : vector<2x8xf32>
    %188 = math.exp %187 : vector<2x8xf32>
    %cst_48 = arith.constant 1.000000e+00 : f32
    %189 = vector.broadcast %cst_48 : f32 to vector<2x8xf32>
    %190 = arith.addf %189, %188 : vector<2x8xf32>
    %191 = arith.divf %189, %190 : vector<2x8xf32>
    %192 = arith.mulf %183, %162 : vector<2x8xf32>
    %193 = arith.mulf %177, %185 : vector<2x8xf32>
    %194 = arith.addf %192, %193 : vector<2x8xf32>
    %195 = math.tanh %194 : vector<2x8xf32>
    %196 = arith.mulf %191, %195 : vector<2x8xf32>
    %c6 = arith.constant 6 : index
    %c0_49 = arith.constant 0 : index
    %c0_50 = arith.constant 0 : index
    %197 = vector.load %arg0[%c6, %c0_49, %c0_50] : memref<10x2x8xf32, #tpu.memory_space<vmem>>, vector<1x2x8xf32>
    %198 = vector.shape_cast %197 : vector<1x2x8xf32> to vector<2x8xf32>
    %cst_51 = arith.constant dense<0.000000e+00> : vector<2x32xf32>
    %199 = tpu.matmul %198, %0, %cst_51 {dimension_numbers = #tpu.dot_dimension_numbers<[1], [0], [0], [1], [0, 0, 1, 1], [], []>} : vector<2x8xf32>, vector<8x32xf32>, vector<2x32xf32> -> vector<2x32xf32>
    %cst_52 = arith.constant dense<0.000000e+00> : vector<2x32xf32>
    %200 = tpu.matmul %196, %1, %cst_52 {dimension_numbers = #tpu.dot_dimension_numbers<[1], [0], [0], [1], [0, 0, 1, 1], [], []>} : vector<2x8xf32>, vector<8x32xf32>, vector<2x32xf32> -> vector<2x32xf32>
    %201 = arith.addf %199, %200 : vector<2x32xf32>
    %202 = vector.broadcast %2 : vector<1x32xf32> to vector<2x32xf32>
    %203 = arith.addf %201, %202 : vector<2x32xf32>
    %204 = vector.extract_strided_slice %203 {offsets = [0, 0], sizes = [2, 8], strides = [1, 1]} : vector<2x32xf32> to vector<2x8xf32>
    %205 = arith.negf %204 : vector<2x8xf32>
    %206 = math.exp %205 : vector<2x8xf32>
    %cst_53 = arith.constant 1.000000e+00 : f32
    %207 = vector.broadcast %cst_53 : f32 to vector<2x8xf32>
    %208 = arith.addf %207, %206 : vector<2x8xf32>
    %209 = arith.divf %207, %208 : vector<2x8xf32>
    %210 = vector.extract_strided_slice %203 {offsets = [0, 8], sizes = [2, 8], strides = [1, 1]} : vector<2x32xf32> to vector<2x8xf32>
    %211 = arith.negf %210 : vector<2x8xf32>
    %212 = math.exp %211 : vector<2x8xf32>
    %cst_54 = arith.constant 1.000000e+00 : f32
    %213 = vector.broadcast %cst_54 : f32 to vector<2x8xf32>
    %214 = arith.addf %213, %212 : vector<2x8xf32>
    %215 = arith.divf %213, %214 : vector<2x8xf32>
    %216 = vector.extract_strided_slice %203 {offsets = [0, 16], sizes = [2, 8], strides = [1, 1]} : vector<2x32xf32> to vector<2x8xf32>
    %217 = math.tanh %216 : vector<2x8xf32>
    %218 = vector.extract_strided_slice %203 {offsets = [0, 24], sizes = [2, 8], strides = [1, 1]} : vector<2x32xf32> to vector<2x8xf32>
    %219 = arith.negf %218 : vector<2x8xf32>
    %220 = math.exp %219 : vector<2x8xf32>
    %cst_55 = arith.constant 1.000000e+00 : f32
    %221 = vector.broadcast %cst_55 : f32 to vector<2x8xf32>
    %222 = arith.addf %221, %220 : vector<2x8xf32>
    %223 = arith.divf %221, %222 : vector<2x8xf32>
    %224 = arith.mulf %215, %194 : vector<2x8xf32>
    %225 = arith.mulf %209, %217 : vector<2x8xf32>
    %226 = arith.addf %224, %225 : vector<2x8xf32>
    %227 = math.tanh %226 : vector<2x8xf32>
    %228 = arith.mulf %223, %227 : vector<2x8xf32>
    %c7 = arith.constant 7 : index
    %c0_56 = arith.constant 0 : index
    %c0_57 = arith.constant 0 : index
    %229 = vector.load %arg0[%c7, %c0_56, %c0_57] : memref<10x2x8xf32, #tpu.memory_space<vmem>>, vector<1x2x8xf32>
    %230 = vector.shape_cast %229 : vector<1x2x8xf32> to vector<2x8xf32>
    %cst_58 = arith.constant dense<0.000000e+00> : vector<2x32xf32>
    %231 = tpu.matmul %230, %0, %cst_58 {dimension_numbers = #tpu.dot_dimension_numbers<[1], [0], [0], [1], [0, 0, 1, 1], [], []>} : vector<2x8xf32>, vector<8x32xf32>, vector<2x32xf32> -> vector<2x32xf32>
    %cst_59 = arith.constant dense<0.000000e+00> : vector<2x32xf32>
    %232 = tpu.matmul %228, %1, %cst_59 {dimension_numbers = #tpu.dot_dimension_numbers<[1], [0], [0], [1], [0, 0, 1, 1], [], []>} : vector<2x8xf32>, vector<8x32xf32>, vector<2x32xf32> -> vector<2x32xf32>
    %233 = arith.addf %231, %232 : vector<2x32xf32>
    %234 = vector.broadcast %2 : vector<1x32xf32> to vector<2x32xf32>
    %235 = arith.addf %233, %234 : vector<2x32xf32>
    %236 = vector.extract_strided_slice %235 {offsets = [0, 0], sizes = [2, 8], strides = [1, 1]} : vector<2x32xf32> to vector<2x8xf32>
    %237 = arith.negf %236 : vector<2x8xf32>
    %238 = math.exp %237 : vector<2x8xf32>
    %cst_60 = arith.constant 1.000000e+00 : f32
    %239 = vector.broadcast %cst_60 : f32 to vector<2x8xf32>
    %240 = arith.addf %239, %238 : vector<2x8xf32>
    %241 = arith.divf %239, %240 : vector<2x8xf32>
    %242 = vector.extract_strided_slice %235 {offsets = [0, 8], sizes = [2, 8], strides = [1, 1]} : vector<2x32xf32> to vector<2x8xf32>
    %243 = arith.negf %242 : vector<2x8xf32>
    %244 = math.exp %243 : vector<2x8xf32>
    %cst_61 = arith.constant 1.000000e+00 : f32
    %245 = vector.broadcast %cst_61 : f32 to vector<2x8xf32>
    %246 = arith.addf %245, %244 : vector<2x8xf32>
    %247 = arith.divf %245, %246 : vector<2x8xf32>
    %248 = vector.extract_strided_slice %235 {offsets = [0, 16], sizes = [2, 8], strides = [1, 1]} : vector<2x32xf32> to vector<2x8xf32>
    %249 = math.tanh %248 : vector<2x8xf32>
    %250 = vector.extract_strided_slice %235 {offsets = [0, 24], sizes = [2, 8], strides = [1, 1]} : vector<2x32xf32> to vector<2x8xf32>
    %251 = arith.negf %250 : vector<2x8xf32>
    %252 = math.exp %251 : vector<2x8xf32>
    %cst_62 = arith.constant 1.000000e+00 : f32
    %253 = vector.broadcast %cst_62 : f32 to vector<2x8xf32>
    %254 = arith.addf %253, %252 : vector<2x8xf32>
    %255 = arith.divf %253, %254 : vector<2x8xf32>
    %256 = arith.mulf %247, %226 : vector<2x8xf32>
    %257 = arith.mulf %241, %249 : vector<2x8xf32>
    %258 = arith.addf %256, %257 : vector<2x8xf32>
    %259 = math.tanh %258 : vector<2x8xf32>
    %260 = arith.mulf %255, %259 : vector<2x8xf32>
    %c8 = arith.constant 8 : index
    %c0_63 = arith.constant 0 : index
    %c0_64 = arith.constant 0 : index
    %261 = vector.load %arg0[%c8, %c0_63, %c0_64] : memref<10x2x8xf32, #tpu.memory_space<vmem>>, vector<1x2x8xf32>
    %262 = vector.shape_cast %261 : vector<1x2x8xf32> to vector<2x8xf32>
    %cst_65 = arith.constant dense<0.000000e+00> : vector<2x32xf32>
    %263 = tpu.matmul %262, %0, %cst_65 {dimension_numbers = #tpu.dot_dimension_numbers<[1], [0], [0], [1], [0, 0, 1, 1], [], []>} : vector<2x8xf32>, vector<8x32xf32>, vector<2x32xf32> -> vector<2x32xf32>
    %cst_66 = arith.constant dense<0.000000e+00> : vector<2x32xf32>
    %264 = tpu.matmul %260, %1, %cst_66 {dimension_numbers = #tpu.dot_dimension_numbers<[1], [0], [0], [1], [0, 0, 1, 1], [], []>} : vector<2x8xf32>, vector<8x32xf32>, vector<2x32xf32> -> vector<2x32xf32>
    %265 = arith.addf %263, %264 : vector<2x32xf32>
    %266 = vector.broadcast %2 : vector<1x32xf32> to vector<2x32xf32>
    %267 = arith.addf %265, %266 : vector<2x32xf32>
    %268 = vector.extract_strided_slice %267 {offsets = [0, 0], sizes = [2, 8], strides = [1, 1]} : vector<2x32xf32> to vector<2x8xf32>
    %269 = arith.negf %268 : vector<2x8xf32>
    %270 = math.exp %269 : vector<2x8xf32>
    %cst_67 = arith.constant 1.000000e+00 : f32
    %271 = vector.broadcast %cst_67 : f32 to vector<2x8xf32>
    %272 = arith.addf %271, %270 : vector<2x8xf32>
    %273 = arith.divf %271, %272 : vector<2x8xf32>
    %274 = vector.extract_strided_slice %267 {offsets = [0, 8], sizes = [2, 8], strides = [1, 1]} : vector<2x32xf32> to vector<2x8xf32>
    %275 = arith.negf %274 : vector<2x8xf32>
    %276 = math.exp %275 : vector<2x8xf32>
    %cst_68 = arith.constant 1.000000e+00 : f32
    %277 = vector.broadcast %cst_68 : f32 to vector<2x8xf32>
    %278 = arith.addf %277, %276 : vector<2x8xf32>
    %279 = arith.divf %277, %278 : vector<2x8xf32>
    %280 = vector.extract_strided_slice %267 {offsets = [0, 16], sizes = [2, 8], strides = [1, 1]} : vector<2x32xf32> to vector<2x8xf32>
    %281 = math.tanh %280 : vector<2x8xf32>
    %282 = vector.extract_strided_slice %267 {offsets = [0, 24], sizes = [2, 8], strides = [1, 1]} : vector<2x32xf32> to vector<2x8xf32>
    %283 = arith.negf %282 : vector<2x8xf32>
    %284 = math.exp %283 : vector<2x8xf32>
    %cst_69 = arith.constant 1.000000e+00 : f32
    %285 = vector.broadcast %cst_69 : f32 to vector<2x8xf32>
    %286 = arith.addf %285, %284 : vector<2x8xf32>
    %287 = arith.divf %285, %286 : vector<2x8xf32>
    %288 = arith.mulf %279, %258 : vector<2x8xf32>
    %289 = arith.mulf %273, %281 : vector<2x8xf32>
    %290 = arith.addf %288, %289 : vector<2x8xf32>
    %291 = math.tanh %290 : vector<2x8xf32>
    %292 = arith.mulf %287, %291 : vector<2x8xf32>
    %c9 = arith.constant 9 : index
    %c0_70 = arith.constant 0 : index
    %c0_71 = arith.constant 0 : index
    %293 = vector.load %arg0[%c9, %c0_70, %c0_71] : memref<10x2x8xf32, #tpu.memory_space<vmem>>, vector<1x2x8xf32>
    %294 = vector.shape_cast %293 : vector<1x2x8xf32> to vector<2x8xf32>
    %cst_72 = arith.constant dense<0.000000e+00> : vector<2x32xf32>
    %295 = tpu.matmul %294, %0, %cst_72 {dimension_numbers = #tpu.dot_dimension_numbers<[1], [0], [0], [1], [0, 0, 1, 1], [], []>} : vector<2x8xf32>, vector<8x32xf32>, vector<2x32xf32> -> vector<2x32xf32>
    %cst_73 = arith.constant dense<0.000000e+00> : vector<2x32xf32>
    %296 = tpu.matmul %292, %1, %cst_73 {dimension_numbers = #tpu.dot_dimension_numbers<[1], [0], [0], [1], [0, 0, 1, 1], [], []>} : vector<2x8xf32>, vector<8x32xf32>, vector<2x32xf32> -> vector<2x32xf32>
    %297 = arith.addf %295, %296 : vector<2x32xf32>
    %298 = vector.broadcast %2 : vector<1x32xf32> to vector<2x32xf32>
    %299 = arith.addf %297, %298 : vector<2x32xf32>
    %300 = vector.extract_strided_slice %299 {offsets = [0, 0], sizes = [2, 8], strides = [1, 1]} : vector<2x32xf32> to vector<2x8xf32>
    %301 = arith.negf %300 : vector<2x8xf32>
    %302 = math.exp %301 : vector<2x8xf32>
    %cst_74 = arith.constant 1.000000e+00 : f32
    %303 = vector.broadcast %cst_74 : f32 to vector<2x8xf32>
    %304 = arith.addf %303, %302 : vector<2x8xf32>
    %305 = arith.divf %303, %304 : vector<2x8xf32>
    %306 = vector.extract_strided_slice %299 {offsets = [0, 8], sizes = [2, 8], strides = [1, 1]} : vector<2x32xf32> to vector<2x8xf32>
    %307 = arith.negf %306 : vector<2x8xf32>
    %308 = math.exp %307 : vector<2x8xf32>
    %cst_75 = arith.constant 1.000000e+00 : f32
    %309 = vector.broadcast %cst_75 : f32 to vector<2x8xf32>
    %310 = arith.addf %309, %308 : vector<2x8xf32>
    %311 = arith.divf %309, %310 : vector<2x8xf32>
    %312 = vector.extract_strided_slice %299 {offsets = [0, 16], sizes = [2, 8], strides = [1, 1]} : vector<2x32xf32> to vector<2x8xf32>
    %313 = math.tanh %312 : vector<2x8xf32>
    %314 = vector.extract_strided_slice %299 {offsets = [0, 24], sizes = [2, 8], strides = [1, 1]} : vector<2x32xf32> to vector<2x8xf32>
    %315 = arith.negf %314 : vector<2x8xf32>
    %316 = math.exp %315 : vector<2x8xf32>
    %cst_76 = arith.constant 1.000000e+00 : f32
    %317 = vector.broadcast %cst_76 : f32 to vector<2x8xf32>
    %318 = arith.addf %317, %316 : vector<2x8xf32>
    %319 = arith.divf %317, %318 : vector<2x8xf32>
    %320 = arith.mulf %311, %290 : vector<2x8xf32>
    %321 = arith.mulf %305, %313 : vector<2x8xf32>
    %322 = arith.addf %320, %321 : vector<2x8xf32>
    %323 = math.tanh %322 : vector<2x8xf32>
    %324 = arith.mulf %319, %323 : vector<2x8xf32>
    %c0_77 = arith.constant 0 : index
    %c0_78 = arith.constant 0 : index
    %325 = vector.load %arg35[%c0_77, %c0_78] : memref<8x1xf32, #tpu.memory_space<vmem>>, vector<8x1xf32>
    %c0_79 = arith.constant 0 : index
    %c0_80 = arith.constant 0 : index
    %326 = vector.load %arg34[%c0_79, %c0_80] : memref<8x1xf32, #tpu.memory_space<vmem>>, vector<8x1xf32>
    %327 = vector.extract_strided_slice %36 {offsets = [0, 0], sizes = [1, 8], strides = [1, 1]} : vector<2x8xf32> to vector<1x8xf32>
    %328 = vector.extract_strided_slice %68 {offsets = [0, 0], sizes = [1, 8], strides = [1, 1]} : vector<2x8xf32> to vector<1x8xf32>
    %329 = vector.extract_strided_slice %100 {offsets = [0, 0], sizes = [1, 8], strides = [1, 1]} : vector<2x8xf32> to vector<1x8xf32>
    %330 = vector.extract_strided_slice %132 {offsets = [0, 0], sizes = [1, 8], strides = [1, 1]} : vector<2x8xf32> to vector<1x8xf32>
    %331 = vector.extract_strided_slice %164 {offsets = [0, 0], sizes = [1, 8], strides = [1, 1]} : vector<2x8xf32> to vector<1x8xf32>
    %332 = vector.extract_strided_slice %196 {offsets = [0, 0], sizes = [1, 8], strides = [1, 1]} : vector<2x8xf32> to vector<1x8xf32>
    %333 = vector.extract_strided_slice %228 {offsets = [0, 0], sizes = [1, 8], strides = [1, 1]} : vector<2x8xf32> to vector<1x8xf32>
    %334 = vector.extract_strided_slice %260 {offsets = [0, 0], sizes = [1, 8], strides = [1, 1]} : vector<2x8xf32> to vector<1x8xf32>
    %335 = vector.extract_strided_slice %292 {offsets = [0, 0], sizes = [1, 8], strides = [1, 1]} : vector<2x8xf32> to vector<1x8xf32>
    %336 = vector.extract_strided_slice %324 {offsets = [0, 0], sizes = [1, 8], strides = [1, 1]} : vector<2x8xf32> to vector<1x8xf32>
    %337 = tpu.concatenate %327, %328, %329, %330, %331, %332, %333, %334, %335, %336 in 0 : vector<1x8xf32>, vector<1x8xf32>, vector<1x8xf32>, vector<1x8xf32>, vector<1x8xf32>, vector<1x8xf32>, vector<1x8xf32>, vector<1x8xf32>, vector<1x8xf32>, vector<1x8xf32> -> vector<10x8xf32>
    %338 = tpu.transpose %337, [1, 0] : vector<10x8xf32> -> vector<8x10xf32>
    %cst_81 = arith.constant dense<0.000000e+00> : vector<8xf32>
    %339 = vector.multi_reduction <add>, %338, %cst_81 [1] : vector<8x10xf32> to vector<8xf32>
    %340 = vector.shape_cast %339 : vector<8xf32> to vector<8x1xf32>
    %cst_82 = arith.constant 1.000000e+01 : f32
    %341 = vector.broadcast %cst_82 : f32 to vector<8x1xf32>
    %342 = arith.divf %340, %341 : vector<8x1xf32>
    %343 = vector.broadcast %342 : vector<8x1xf32> to vector<8x10xf32>
    %344 = arith.subf %338, %343 : vector<8x10xf32>
    %345 = arith.mulf %344, %344 : vector<8x10xf32>
    %cst_83 = arith.constant dense<0.000000e+00> : vector<8xf32>
    %346 = vector.multi_reduction <add>, %345, %cst_83 [1] : vector<8x10xf32> to vector<8xf32>
    %347 = vector.shape_cast %346 : vector<8xf32> to vector<8x1xf32>
    %cst_84 = arith.constant 1.000000e+01 : f32
    %348 = vector.broadcast %cst_84 : f32 to vector<8x1xf32>
    %349 = arith.divf %347, %348 : vector<8x1xf32>
    %cst_85 = arith.constant 9.99999974E-6 : f32
    %350 = vector.broadcast %cst_85 : f32 to vector<8x1xf32>
    %351 = arith.maximumf %349, %350 : vector<8x1xf32>
    %352 = vector.broadcast %342 : vector<8x1xf32> to vector<8x10xf32>
    %353 = arith.subf %338, %352 : vector<8x10xf32>
    %354 = math.rsqrt %351 : vector<8x1xf32>
    %355 = vector.broadcast %354 : vector<8x1xf32> to vector<8x10xf32>
    %356 = arith.mulf %353, %355 : vector<8x10xf32>
    %357 = vector.broadcast %325 : vector<8x1xf32> to vector<8x10xf32>
    %358 = arith.mulf %356, %357 : vector<8x10xf32>
    %359 = vector.broadcast %326 : vector<8x1xf32> to vector<8x10xf32>
    %360 = arith.addf %358, %359 : vector<8x10xf32>
    %361 = math.sqrt %351 : vector<8x1xf32>
    %362 = vector.extract_strided_slice %36 {offsets = [1, 0], sizes = [1, 8], strides = [1, 1]} : vector<2x8xf32> to vector<1x8xf32>
    %363 = vector.extract_strided_slice %68 {offsets = [1, 0], sizes = [1, 8], strides = [1, 1]} : vector<2x8xf32> to vector<1x8xf32>
    %364 = vector.extract_strided_slice %100 {offsets = [1, 0], sizes = [1, 8], strides = [1, 1]} : vector<2x8xf32> to vector<1x8xf32>
    %365 = vector.extract_strided_slice %132 {offsets = [1, 0], sizes = [1, 8], strides = [1, 1]} : vector<2x8xf32> to vector<1x8xf32>
    %366 = vector.extract_strided_slice %164 {offsets = [1, 0], sizes = [1, 8], strides = [1, 1]} : vector<2x8xf32> to vector<1x8xf32>
    %367 = vector.extract_strided_slice %196 {offsets = [1, 0], sizes = [1, 8], strides = [1, 1]} : vector<2x8xf32> to vector<1x8xf32>
    %368 = vector.extract_strided_slice %228 {offsets = [1, 0], sizes = [1, 8], strides = [1, 1]} : vector<2x8xf32> to vector<1x8xf32>
    %369 = vector.extract_strided_slice %260 {offsets = [1, 0], sizes = [1, 8], strides = [1, 1]} : vector<2x8xf32> to vector<1x8xf32>
    %370 = vector.extract_strided_slice %292 {offsets = [1, 0], sizes = [1, 8], strides = [1, 1]} : vector<2x8xf32> to vector<1x8xf32>
    %371 = vector.extract_strided_slice %324 {offsets = [1, 0], sizes = [1, 8], strides = [1, 1]} : vector<2x8xf32> to vector<1x8xf32>
    %372 = tpu.concatenate %362, %363, %364, %365, %366, %367, %368, %369, %370, %371 in 0 : vector<1x8xf32>, vector<1x8xf32>, vector<1x8xf32>, vector<1x8xf32>, vector<1x8xf32>, vector<1x8xf32>, vector<1x8xf32>, vector<1x8xf32>, vector<1x8xf32>, vector<1x8xf32> -> vector<10x8xf32>
    %373 = tpu.transpose %372, [1, 0] : vector<10x8xf32> -> vector<8x10xf32>
    %cst_86 = arith.constant dense<0.000000e+00> : vector<8xf32>
    %374 = vector.multi_reduction <add>, %373, %cst_86 [1] : vector<8x10xf32> to vector<8xf32>
    %375 = vector.shape_cast %374 : vector<8xf32> to vector<8x1xf32>
    %cst_87 = arith.constant 1.000000e+01 : f32
    %376 = vector.broadcast %cst_87 : f32 to vector<8x1xf32>
    %377 = arith.divf %375, %376 : vector<8x1xf32>
    %378 = vector.broadcast %377 : vector<8x1xf32> to vector<8x10xf32>
    %379 = arith.subf %373, %378 : vector<8x10xf32>
    %380 = arith.mulf %379, %379 : vector<8x10xf32>
    %cst_88 = arith.constant dense<0.000000e+00> : vector<8xf32>
    %381 = vector.multi_reduction <add>, %380, %cst_88 [1] : vector<8x10xf32> to vector<8xf32>
    %382 = vector.shape_cast %381 : vector<8xf32> to vector<8x1xf32>
    %cst_89 = arith.constant 1.000000e+01 : f32
    %383 = vector.broadcast %cst_89 : f32 to vector<8x1xf32>
    %384 = arith.divf %382, %383 : vector<8x1xf32>
    %cst_90 = arith.constant 9.99999974E-6 : f32
    %385 = vector.broadcast %cst_90 : f32 to vector<8x1xf32>
    %386 = arith.maximumf %384, %385 : vector<8x1xf32>
    %387 = vector.broadcast %377 : vector<8x1xf32> to vector<8x10xf32>
    %388 = arith.subf %373, %387 : vector<8x10xf32>
    %389 = math.rsqrt %386 : vector<8x1xf32>
    %390 = vector.broadcast %389 : vector<8x1xf32> to vector<8x10xf32>
    %391 = arith.mulf %388, %390 : vector<8x10xf32>
    %392 = vector.broadcast %325 : vector<8x1xf32> to vector<8x10xf32>
    %393 = arith.mulf %391, %392 : vector<8x10xf32>
    %394 = vector.broadcast %326 : vector<8x1xf32> to vector<8x10xf32>
    %395 = arith.addf %393, %394 : vector<8x10xf32>
    %396 = math.sqrt %386 : vector<8x1xf32>
    %397 = tpu.concatenate %360, %395 in 0 : vector<8x10xf32>, vector<8x10xf32> -> vector<16x10xf32>
    %398 = tpu.concatenate %342, %377 in 0 : vector<8x1xf32>, vector<8x1xf32> -> vector<16x1xf32>
    %399 = tpu.concatenate %361, %396 in 0 : vector<8x1xf32>, vector<8x1xf32> -> vector<16x1xf32>
    %c0_91 = arith.constant 0 : index
    %c0_92 = arith.constant 0 : index
    %400 = vector.load %arg4[%c0_91, %c0_92] : memref<10x32xf32, #tpu.memory_space<vmem>>, vector<10x32xf32>
    %cst_93 = arith.constant dense<0.000000e+00> : vector<16x32xf32>
    %401 = tpu.matmul %397, %400, %cst_93 {dimension_numbers = #tpu.dot_dimension_numbers<[1], [0], [0], [1], [0, 0, 1, 1], [], []>} : vector<16x10xf32>, vector<10x32xf32>, vector<16x32xf32> -> vector<16x32xf32>
    %c0_94 = arith.constant 0 : index
    %c0_95 = arith.constant 0 : index
    %402 = vector.load %arg1[%c0_94, %c0_95] : memref<1x32xf32, #tpu.memory_space<vmem>>, vector<1x32xf32>
    %403 = vector.broadcast %402 : vector<1x32xf32> to vector<16x32xf32>
    %404 = arith.addf %401, %403 : vector<16x32xf32>
    %c0_96 = arith.constant 0 : index
    %c0_97 = arith.constant 0 : index
    %405 = vector.load %arg3[%c0_96, %c0_97] : memref<1x32xf32, #tpu.memory_space<vmem>>, vector<1x32xf32>
    %c0_98 = arith.constant 0 : index
    %c0_99 = arith.constant 0 : index
    %406 = vector.load %arg2[%c0_98, %c0_99] : memref<1x32xf32, #tpu.memory_space<vmem>>, vector<1x32xf32>
    %cst_100 = arith.constant dense<0.000000e+00> : vector<16xf32>
    %407 = vector.multi_reduction <add>, %404, %cst_100 [1] : vector<16x32xf32> to vector<16xf32>
    %408 = vector.shape_cast %407 : vector<16xf32> to vector<16x1xf32>
    %cst_101 = arith.constant 3.200000e+01 : f32
    %409 = vector.broadcast %cst_101 : f32 to vector<16x1xf32>
    %410 = arith.divf %408, %409 : vector<16x1xf32>
    %411 = vector.broadcast %410 : vector<16x1xf32> to vector<16x32xf32>
    %412 = arith.subf %404, %411 : vector<16x32xf32>
    %413 = arith.mulf %412, %412 : vector<16x32xf32>
    %cst_102 = arith.constant dense<0.000000e+00> : vector<16xf32>
    %414 = vector.multi_reduction <add>, %413, %cst_102 [1] : vector<16x32xf32> to vector<16xf32>
    %415 = vector.shape_cast %414 : vector<16xf32> to vector<16x1xf32>
    %cst_103 = arith.constant 3.200000e+01 : f32
    %416 = vector.broadcast %cst_103 : f32 to vector<16x1xf32>
    %417 = arith.divf %415, %416 : vector<16x1xf32>
    %418 = vector.broadcast %410 : vector<16x1xf32> to vector<16x32xf32>
    %419 = arith.subf %404, %418 : vector<16x32xf32>
    %cst_104 = arith.constant 9.99999974E-6 : f32
    %420 = vector.broadcast %cst_104 : f32 to vector<16x1xf32>
    %421 = arith.addf %417, %420 : vector<16x1xf32>
    %422 = math.rsqrt %421 : vector<16x1xf32>
    %423 = vector.broadcast %422 : vector<16x1xf32> to vector<16x32xf32>
    %424 = arith.mulf %419, %423 : vector<16x32xf32>
    %425 = vector.broadcast %405 : vector<1x32xf32> to vector<16x32xf32>
    %426 = arith.mulf %424, %425 : vector<16x32xf32>
    %427 = vector.broadcast %406 : vector<1x32xf32> to vector<16x32xf32>
    %428 = arith.addf %426, %427 : vector<16x32xf32>
    %c0_105 = arith.constant 0 : index
    %c0_106 = arith.constant 0 : index
    %429 = vector.load %arg14[%c0_105, %c0_106] : memref<32x96xf32, #tpu.memory_space<vmem>>, vector<32x96xf32>
    %cst_107 = arith.constant dense<0.000000e+00> : vector<16x96xf32>
    %430 = tpu.matmul %428, %429, %cst_107 {dimension_numbers = #tpu.dot_dimension_numbers<[1], [0], [0], [1], [0, 0, 1, 1], [], []>} : vector<16x32xf32>, vector<32x96xf32>, vector<16x96xf32> -> vector<16x96xf32>
    %431 = vector.extract_strided_slice %430 {offsets = [0, 0], sizes = [8, 96], strides = [1, 1]} : vector<16x96xf32> to vector<8x96xf32>
    %432 = vector.extract_strided_slice %431 {offsets = [0, 0], sizes = [8, 16], strides = [1, 1]} : vector<8x96xf32> to vector<8x16xf32>
    %433 = vector.extract_strided_slice %431 {offsets = [0, 32], sizes = [8, 16], strides = [1, 1]} : vector<8x96xf32> to vector<8x16xf32>
    %434 = vector.extract_strided_slice %431 {offsets = [0, 64], sizes = [8, 16], strides = [1, 1]} : vector<8x96xf32> to vector<8x16xf32>
    %435 = tpu.transpose %433, [1, 0] : vector<8x16xf32> -> vector<16x8xf32>
    %cst_108 = arith.constant dense<0.000000e+00> : vector<8x8xf32>
    %436 = tpu.matmul %432, %435, %cst_108 {dimension_numbers = #tpu.dot_dimension_numbers<[1], [0], [0], [1], [0, 0, 1, 1], [], []>} : vector<8x16xf32>, vector<16x8xf32>, vector<8x8xf32> -> vector<8x8xf32>
    %cst_109 = arith.constant 2.500000e-01 : f32
    %437 = vector.broadcast %cst_109 : f32 to vector<8x8xf32>
    %438 = arith.mulf %436, %437 : vector<8x8xf32>
    %cst_110 = arith.constant dense<0xFF800000> : vector<8xf32>
    %439 = vector.multi_reduction <maximumf>, %438, %cst_110 [1] : vector<8x8xf32> to vector<8xf32>
    %440 = vector.shape_cast %439 : vector<8xf32> to vector<8x1xf32>
    %441 = vector.broadcast %440 : vector<8x1xf32> to vector<8x8xf32>
    %442 = arith.subf %438, %441 : vector<8x8xf32>
    %443 = math.exp %442 : vector<8x8xf32>
    %cst_111 = arith.constant dense<0.000000e+00> : vector<8xf32>
    %444 = vector.multi_reduction <add>, %443, %cst_111 [1] : vector<8x8xf32> to vector<8xf32>
    %445 = vector.shape_cast %444 : vector<8xf32> to vector<8x1xf32>
    %cst_112 = arith.constant dense<0.000000e+00> : vector<8x16xf32>
    %446 = tpu.matmul %443, %434, %cst_112 {dimension_numbers = #tpu.dot_dimension_numbers<[1], [0], [0], [1], [0, 0, 1, 1], [], []>} : vector<8x8xf32>, vector<8x16xf32>, vector<8x16xf32> -> vector<8x16xf32>
    %447 = tpu.reciprocal %445 {approx = true} : vector<8x1xf32> -> vector<8x1xf32>
    %448 = vector.broadcast %447 : vector<8x1xf32> to vector<8x16xf32>
    %449 = arith.mulf %446, %448 : vector<8x16xf32>
    %450 = vector.extract_strided_slice %431 {offsets = [0, 16], sizes = [8, 16], strides = [1, 1]} : vector<8x96xf32> to vector<8x16xf32>
    %451 = vector.extract_strided_slice %431 {offsets = [0, 48], sizes = [8, 16], strides = [1, 1]} : vector<8x96xf32> to vector<8x16xf32>
    %452 = vector.extract_strided_slice %431 {offsets = [0, 80], sizes = [8, 16], strides = [1, 1]} : vector<8x96xf32> to vector<8x16xf32>
    %453 = tpu.transpose %451, [1, 0] : vector<8x16xf32> -> vector<16x8xf32>
    %cst_113 = arith.constant dense<0.000000e+00> : vector<8x8xf32>
    %454 = tpu.matmul %450, %453, %cst_113 {dimension_numbers = #tpu.dot_dimension_numbers<[1], [0], [0], [1], [0, 0, 1, 1], [], []>} : vector<8x16xf32>, vector<16x8xf32>, vector<8x8xf32> -> vector<8x8xf32>
    %cst_114 = arith.constant 2.500000e-01 : f32
    %455 = vector.broadcast %cst_114 : f32 to vector<8x8xf32>
    %456 = arith.mulf %454, %455 : vector<8x8xf32>
    %cst_115 = arith.constant dense<0xFF800000> : vector<8xf32>
    %457 = vector.multi_reduction <maximumf>, %456, %cst_115 [1] : vector<8x8xf32> to vector<8xf32>
    %458 = vector.shape_cast %457 : vector<8xf32> to vector<8x1xf32>
    %459 = vector.broadcast %458 : vector<8x1xf32> to vector<8x8xf32>
    %460 = arith.subf %456, %459 : vector<8x8xf32>
    %461 = math.exp %460 : vector<8x8xf32>
    %cst_116 = arith.constant dense<0.000000e+00> : vector<8xf32>
    %462 = vector.multi_reduction <add>, %461, %cst_116 [1] : vector<8x8xf32> to vector<8xf32>
    %463 = vector.shape_cast %462 : vector<8xf32> to vector<8x1xf32>
    %cst_117 = arith.constant dense<0.000000e+00> : vector<8x16xf32>
    %464 = tpu.matmul %461, %452, %cst_117 {dimension_numbers = #tpu.dot_dimension_numbers<[1], [0], [0], [1], [0, 0, 1, 1], [], []>} : vector<8x8xf32>, vector<8x16xf32>, vector<8x16xf32> -> vector<8x16xf32>
    %465 = tpu.reciprocal %463 {approx = true} : vector<8x1xf32> -> vector<8x1xf32>
    %466 = vector.broadcast %465 : vector<8x1xf32> to vector<8x16xf32>
    %467 = arith.mulf %464, %466 : vector<8x16xf32>
    %468 = tpu.concatenate %449, %467 in 1 : vector<8x16xf32>, vector<8x16xf32> -> vector<8x32xf32>
    %469 = vector.extract_strided_slice %430 {offsets = [8, 0], sizes = [8, 96], strides = [1, 1]} : vector<16x96xf32> to vector<8x96xf32>
    %470 = vector.extract_strided_slice %469 {offsets = [0, 0], sizes = [8, 16], strides = [1, 1]} : vector<8x96xf32> to vector<8x16xf32>
    %471 = vector.extract_strided_slice %469 {offsets = [0, 32], sizes = [8, 16], strides = [1, 1]} : vector<8x96xf32> to vector<8x16xf32>
    %472 = vector.extract_strided_slice %469 {offsets = [0, 64], sizes = [8, 16], strides = [1, 1]} : vector<8x96xf32> to vector<8x16xf32>
    %473 = tpu.transpose %471, [1, 0] : vector<8x16xf32> -> vector<16x8xf32>
    %cst_118 = arith.constant dense<0.000000e+00> : vector<8x8xf32>
    %474 = tpu.matmul %470, %473, %cst_118 {dimension_numbers = #tpu.dot_dimension_numbers<[1], [0], [0], [1], [0, 0, 1, 1], [], []>} : vector<8x16xf32>, vector<16x8xf32>, vector<8x8xf32> -> vector<8x8xf32>
    %cst_119 = arith.constant 2.500000e-01 : f32
    %475 = vector.broadcast %cst_119 : f32 to vector<8x8xf32>
    %476 = arith.mulf %474, %475 : vector<8x8xf32>
    %cst_120 = arith.constant dense<0xFF800000> : vector<8xf32>
    %477 = vector.multi_reduction <maximumf>, %476, %cst_120 [1] : vector<8x8xf32> to vector<8xf32>
    %478 = vector.shape_cast %477 : vector<8xf32> to vector<8x1xf32>
    %479 = vector.broadcast %478 : vector<8x1xf32> to vector<8x8xf32>
    %480 = arith.subf %476, %479 : vector<8x8xf32>
    %481 = math.exp %480 : vector<8x8xf32>
    %cst_121 = arith.constant dense<0.000000e+00> : vector<8xf32>
    %482 = vector.multi_reduction <add>, %481, %cst_121 [1] : vector<8x8xf32> to vector<8xf32>
    %483 = vector.shape_cast %482 : vector<8xf32> to vector<8x1xf32>
    %cst_122 = arith.constant dense<0.000000e+00> : vector<8x16xf32>
    %484 = tpu.matmul %481, %472, %cst_122 {dimension_numbers = #tpu.dot_dimension_numbers<[1], [0], [0], [1], [0, 0, 1, 1], [], []>} : vector<8x8xf32>, vector<8x16xf32>, vector<8x16xf32> -> vector<8x16xf32>
    %485 = tpu.reciprocal %483 {approx = true} : vector<8x1xf32> -> vector<8x1xf32>
    %486 = vector.broadcast %485 : vector<8x1xf32> to vector<8x16xf32>
    %487 = arith.mulf %484, %486 : vector<8x16xf32>
    %488 = vector.extract_strided_slice %469 {offsets = [0, 16], sizes = [8, 16], strides = [1, 1]} : vector<8x96xf32> to vector<8x16xf32>
    %489 = vector.extract_strided_slice %469 {offsets = [0, 48], sizes = [8, 16], strides = [1, 1]} : vector<8x96xf32> to vector<8x16xf32>
    %490 = vector.extract_strided_slice %469 {offsets = [0, 80], sizes = [8, 16], strides = [1, 1]} : vector<8x96xf32> to vector<8x16xf32>
    %491 = tpu.transpose %489, [1, 0] : vector<8x16xf32> -> vector<16x8xf32>
    %cst_123 = arith.constant dense<0.000000e+00> : vector<8x8xf32>
    %492 = tpu.matmul %488, %491, %cst_123 {dimension_numbers = #tpu.dot_dimension_numbers<[1], [0], [0], [1], [0, 0, 1, 1], [], []>} : vector<8x16xf32>, vector<16x8xf32>, vector<8x8xf32> -> vector<8x8xf32>
    %cst_124 = arith.constant 2.500000e-01 : f32
    %493 = vector.broadcast %cst_124 : f32 to vector<8x8xf32>
    %494 = arith.mulf %492, %493 : vector<8x8xf32>
    %cst_125 = arith.constant dense<0xFF800000> : vector<8xf32>
    %495 = vector.multi_reduction <maximumf>, %494, %cst_125 [1] : vector<8x8xf32> to vector<8xf32>
    %496 = vector.shape_cast %495 : vector<8xf32> to vector<8x1xf32>
    %497 = vector.broadcast %496 : vector<8x1xf32> to vector<8x8xf32>
    %498 = arith.subf %494, %497 : vector<8x8xf32>
    %499 = math.exp %498 : vector<8x8xf32>
    %cst_126 = arith.constant dense<0.000000e+00> : vector<8xf32>
    %500 = vector.multi_reduction <add>, %499, %cst_126 [1] : vector<8x8xf32> to vector<8xf32>
    %501 = vector.shape_cast %500 : vector<8xf32> to vector<8x1xf32>
    %cst_127 = arith.constant dense<0.000000e+00> : vector<8x16xf32>
    %502 = tpu.matmul %499, %490, %cst_127 {dimension_numbers = #tpu.dot_dimension_numbers<[1], [0], [0], [1], [0, 0, 1, 1], [], []>} : vector<8x8xf32>, vector<8x16xf32>, vector<8x16xf32> -> vector<8x16xf32>
    %503 = tpu.reciprocal %501 {approx = true} : vector<8x1xf32> -> vector<8x1xf32>
    %504 = vector.broadcast %503 : vector<8x1xf32> to vector<8x16xf32>
    %505 = arith.mulf %502, %504 : vector<8x16xf32>
    %506 = tpu.concatenate %487, %505 in 1 : vector<8x16xf32>, vector<8x16xf32> -> vector<8x32xf32>
    %507 = tpu.concatenate %468, %506 in 0 : vector<8x32xf32>, vector<8x32xf32> -> vector<16x32xf32>
    %c0_128 = arith.constant 0 : index
    %c0_129 = arith.constant 0 : index
    %508 = vector.load %arg13[%c0_128, %c0_129] : memref<32x32xf32, #tpu.memory_space<vmem>>, vector<32x32xf32>
    %cst_130 = arith.constant dense<0.000000e+00> : vector<16x32xf32>
    %509 = tpu.matmul %507, %508, %cst_130 {dimension_numbers = #tpu.dot_dimension_numbers<[1], [0], [0], [1], [0, 0, 1, 1], [], []>} : vector<16x32xf32>, vector<32x32xf32>, vector<16x32xf32> -> vector<16x32xf32>
    %510 = arith.addf %428, %509 : vector<16x32xf32>
    %c0_131 = arith.constant 0 : index
    %c0_132 = arith.constant 0 : index
    %511 = vector.load %arg10[%c0_131, %c0_132] : memref<1x32xf32, #tpu.memory_space<vmem>>, vector<1x32xf32>
    %c0_133 = arith.constant 0 : index
    %c0_134 = arith.constant 0 : index
    %512 = vector.load %arg9[%c0_133, %c0_134] : memref<1x32xf32, #tpu.memory_space<vmem>>, vector<1x32xf32>
    %cst_135 = arith.constant dense<0.000000e+00> : vector<16xf32>
    %513 = vector.multi_reduction <add>, %510, %cst_135 [1] : vector<16x32xf32> to vector<16xf32>
    %514 = vector.shape_cast %513 : vector<16xf32> to vector<16x1xf32>
    %cst_136 = arith.constant 3.200000e+01 : f32
    %515 = vector.broadcast %cst_136 : f32 to vector<16x1xf32>
    %516 = arith.divf %514, %515 : vector<16x1xf32>
    %517 = vector.broadcast %516 : vector<16x1xf32> to vector<16x32xf32>
    %518 = arith.subf %510, %517 : vector<16x32xf32>
    %519 = arith.mulf %518, %518 : vector<16x32xf32>
    %cst_137 = arith.constant dense<0.000000e+00> : vector<16xf32>
    %520 = vector.multi_reduction <add>, %519, %cst_137 [1] : vector<16x32xf32> to vector<16xf32>
    %521 = vector.shape_cast %520 : vector<16xf32> to vector<16x1xf32>
    %cst_138 = arith.constant 3.200000e+01 : f32
    %522 = vector.broadcast %cst_138 : f32 to vector<16x1xf32>
    %523 = arith.divf %521, %522 : vector<16x1xf32>
    %524 = vector.broadcast %516 : vector<16x1xf32> to vector<16x32xf32>
    %525 = arith.subf %510, %524 : vector<16x32xf32>
    %cst_139 = arith.constant 9.99999974E-6 : f32
    %526 = vector.broadcast %cst_139 : f32 to vector<16x1xf32>
    %527 = arith.addf %523, %526 : vector<16x1xf32>
    %528 = math.rsqrt %527 : vector<16x1xf32>
    %529 = vector.broadcast %528 : vector<16x1xf32> to vector<16x32xf32>
    %530 = arith.mulf %525, %529 : vector<16x32xf32>
    %531 = vector.broadcast %511 : vector<1x32xf32> to vector<16x32xf32>
    %532 = arith.mulf %530, %531 : vector<16x32xf32>
    %533 = vector.broadcast %512 : vector<1x32xf32> to vector<16x32xf32>
    %534 = arith.addf %532, %533 : vector<16x32xf32>
    %c0_140 = arith.constant 0 : index
    %c0_141 = arith.constant 0 : index
    %535 = vector.load %arg7[%c0_140, %c0_141] : memref<32x128xf32, #tpu.memory_space<vmem>>, vector<32x128xf32>
    %cst_142 = arith.constant dense<0.000000e+00> : vector<16x128xf32>
    %536 = tpu.matmul %534, %535, %cst_142 {dimension_numbers = #tpu.dot_dimension_numbers<[1], [0], [0], [1], [0, 0, 1, 1], [], []>} : vector<16x32xf32>, vector<32x128xf32>, vector<16x128xf32> -> vector<16x128xf32>
    %c0_143 = arith.constant 0 : index
    %c0_144 = arith.constant 0 : index
    %537 = vector.load %arg5[%c0_143, %c0_144] : memref<1x128xf32, #tpu.memory_space<vmem>>, vector<1x128xf32>
    %538 = vector.broadcast %537 : vector<1x128xf32> to vector<16x128xf32>
    %539 = arith.addf %536, %538 : vector<16x128xf32>
    %540 = arith.mulf %539, %539 : vector<16x128xf32>
    %541 = arith.mulf %539, %540 : vector<16x128xf32>
    %cst_145 = arith.constant 4.471500e-02 : f32
    %542 = vector.broadcast %cst_145 : f32 to vector<16x128xf32>
    %543 = arith.mulf %542, %541 : vector<16x128xf32>
    %544 = arith.addf %539, %543 : vector<16x128xf32>
    %cst_146 = arith.constant 0.797884583 : f32
    %545 = vector.broadcast %cst_146 : f32 to vector<16x128xf32>
    %546 = arith.mulf %545, %544 : vector<16x128xf32>
    %547 = math.tanh %546 : vector<16x128xf32>
    %cst_147 = arith.constant 1.000000e+00 : f32
    %548 = vector.broadcast %cst_147 : f32 to vector<16x128xf32>
    %549 = arith.addf %548, %547 : vector<16x128xf32>
    %cst_148 = arith.constant 5.000000e-01 : f32
    %550 = vector.broadcast %cst_148 : f32 to vector<16x128xf32>
    %551 = arith.mulf %550, %549 : vector<16x128xf32>
    %552 = arith.mulf %539, %551 : vector<16x128xf32>
    %c0_149 = arith.constant 0 : index
    %c0_150 = arith.constant 0 : index
    %553 = vector.load %arg8[%c0_149, %c0_150] : memref<128x32xf32, #tpu.memory_space<vmem>>, vector<128x32xf32>
    %cst_151 = arith.constant dense<0.000000e+00> : vector<16x32xf32>
    %554 = tpu.matmul %552, %553, %cst_151 {dimension_numbers = #tpu.dot_dimension_numbers<[1], [0], [0], [1], [0, 0, 1, 1], [], []>} : vector<16x128xf32>, vector<128x32xf32>, vector<16x32xf32> -> vector<16x32xf32>
    %c0_152 = arith.constant 0 : index
    %c0_153 = arith.constant 0 : index
    %555 = vector.load %arg6[%c0_152, %c0_153] : memref<1x32xf32, #tpu.memory_space<vmem>>, vector<1x32xf32>
    %556 = vector.broadcast %555 : vector<1x32xf32> to vector<16x32xf32>
    %557 = arith.addf %554, %556 : vector<16x32xf32>
    %558 = arith.addf %534, %557 : vector<16x32xf32>
    %c0_154 = arith.constant 0 : index
    %c0_155 = arith.constant 0 : index
    %559 = vector.load %arg12[%c0_154, %c0_155] : memref<1x32xf32, #tpu.memory_space<vmem>>, vector<1x32xf32>
    %c0_156 = arith.constant 0 : index
    %c0_157 = arith.constant 0 : index
    %560 = vector.load %arg11[%c0_156, %c0_157] : memref<1x32xf32, #tpu.memory_space<vmem>>, vector<1x32xf32>
    %cst_158 = arith.constant dense<0.000000e+00> : vector<16xf32>
    %561 = vector.multi_reduction <add>, %558, %cst_158 [1] : vector<16x32xf32> to vector<16xf32>
    %562 = vector.shape_cast %561 : vector<16xf32> to vector<16x1xf32>
    %cst_159 = arith.constant 3.200000e+01 : f32
    %563 = vector.broadcast %cst_159 : f32 to vector<16x1xf32>
    %564 = arith.divf %562, %563 : vector<16x1xf32>
    %565 = vector.broadcast %564 : vector<16x1xf32> to vector<16x32xf32>
    %566 = arith.subf %558, %565 : vector<16x32xf32>
    %567 = arith.mulf %566, %566 : vector<16x32xf32>
    %cst_160 = arith.constant dense<0.000000e+00> : vector<16xf32>
    %568 = vector.multi_reduction <add>, %567, %cst_160 [1] : vector<16x32xf32> to vector<16xf32>
    %569 = vector.shape_cast %568 : vector<16xf32> to vector<16x1xf32>
    %cst_161 = arith.constant 3.200000e+01 : f32
    %570 = vector.broadcast %cst_161 : f32 to vector<16x1xf32>
    %571 = arith.divf %569, %570 : vector<16x1xf32>
    %572 = vector.broadcast %564 : vector<16x1xf32> to vector<16x32xf32>
    %573 = arith.subf %558, %572 : vector<16x32xf32>
    %cst_162 = arith.constant 9.99999974E-6 : f32
    %574 = vector.broadcast %cst_162 : f32 to vector<16x1xf32>
    %575 = arith.addf %571, %574 : vector<16x1xf32>
    %576 = math.rsqrt %575 : vector<16x1xf32>
    %577 = vector.broadcast %576 : vector<16x1xf32> to vector<16x32xf32>
    %578 = arith.mulf %573, %577 : vector<16x32xf32>
    %579 = vector.broadcast %559 : vector<1x32xf32> to vector<16x32xf32>
    %580 = arith.mulf %578, %579 : vector<16x32xf32>
    %581 = vector.broadcast %560 : vector<1x32xf32> to vector<16x32xf32>
    %582 = arith.addf %580, %581 : vector<16x32xf32>
    %c0_163 = arith.constant 0 : index
    %c0_164 = arith.constant 0 : index
    %583 = vector.load %arg24[%c0_163, %c0_164] : memref<32x96xf32, #tpu.memory_space<vmem>>, vector<32x96xf32>
    %cst_165 = arith.constant dense<0.000000e+00> : vector<16x96xf32>
    %584 = tpu.matmul %582, %583, %cst_165 {dimension_numbers = #tpu.dot_dimension_numbers<[1], [0], [0], [1], [0, 0, 1, 1], [], []>} : vector<16x32xf32>, vector<32x96xf32>, vector<16x96xf32> -> vector<16x96xf32>
    %585 = vector.extract_strided_slice %584 {offsets = [0, 0], sizes = [8, 96], strides = [1, 1]} : vector<16x96xf32> to vector<8x96xf32>
    %586 = vector.extract_strided_slice %585 {offsets = [0, 0], sizes = [8, 16], strides = [1, 1]} : vector<8x96xf32> to vector<8x16xf32>
    %587 = vector.extract_strided_slice %585 {offsets = [0, 32], sizes = [8, 16], strides = [1, 1]} : vector<8x96xf32> to vector<8x16xf32>
    %588 = vector.extract_strided_slice %585 {offsets = [0, 64], sizes = [8, 16], strides = [1, 1]} : vector<8x96xf32> to vector<8x16xf32>
    %589 = tpu.transpose %587, [1, 0] : vector<8x16xf32> -> vector<16x8xf32>
    %cst_166 = arith.constant dense<0.000000e+00> : vector<8x8xf32>
    %590 = tpu.matmul %586, %589, %cst_166 {dimension_numbers = #tpu.dot_dimension_numbers<[1], [0], [0], [1], [0, 0, 1, 1], [], []>} : vector<8x16xf32>, vector<16x8xf32>, vector<8x8xf32> -> vector<8x8xf32>
    %cst_167 = arith.constant 2.500000e-01 : f32
    %591 = vector.broadcast %cst_167 : f32 to vector<8x8xf32>
    %592 = arith.mulf %590, %591 : vector<8x8xf32>
    %cst_168 = arith.constant dense<0xFF800000> : vector<8xf32>
    %593 = vector.multi_reduction <maximumf>, %592, %cst_168 [1] : vector<8x8xf32> to vector<8xf32>
    %594 = vector.shape_cast %593 : vector<8xf32> to vector<8x1xf32>
    %595 = vector.broadcast %594 : vector<8x1xf32> to vector<8x8xf32>
    %596 = arith.subf %592, %595 : vector<8x8xf32>
    %597 = math.exp %596 : vector<8x8xf32>
    %cst_169 = arith.constant dense<0.000000e+00> : vector<8xf32>
    %598 = vector.multi_reduction <add>, %597, %cst_169 [1] : vector<8x8xf32> to vector<8xf32>
    %599 = vector.shape_cast %598 : vector<8xf32> to vector<8x1xf32>
    %cst_170 = arith.constant dense<0.000000e+00> : vector<8x16xf32>
    %600 = tpu.matmul %597, %588, %cst_170 {dimension_numbers = #tpu.dot_dimension_numbers<[1], [0], [0], [1], [0, 0, 1, 1], [], []>} : vector<8x8xf32>, vector<8x16xf32>, vector<8x16xf32> -> vector<8x16xf32>
    %601 = tpu.reciprocal %599 {approx = true} : vector<8x1xf32> -> vector<8x1xf32>
    %602 = vector.broadcast %601 : vector<8x1xf32> to vector<8x16xf32>
    %603 = arith.mulf %600, %602 : vector<8x16xf32>
    %604 = vector.extract_strided_slice %585 {offsets = [0, 16], sizes = [8, 16], strides = [1, 1]} : vector<8x96xf32> to vector<8x16xf32>
    %605 = vector.extract_strided_slice %585 {offsets = [0, 48], sizes = [8, 16], strides = [1, 1]} : vector<8x96xf32> to vector<8x16xf32>
    %606 = vector.extract_strided_slice %585 {offsets = [0, 80], sizes = [8, 16], strides = [1, 1]} : vector<8x96xf32> to vector<8x16xf32>
    %607 = tpu.transpose %605, [1, 0] : vector<8x16xf32> -> vector<16x8xf32>
    %cst_171 = arith.constant dense<0.000000e+00> : vector<8x8xf32>
    %608 = tpu.matmul %604, %607, %cst_171 {dimension_numbers = #tpu.dot_dimension_numbers<[1], [0], [0], [1], [0, 0, 1, 1], [], []>} : vector<8x16xf32>, vector<16x8xf32>, vector<8x8xf32> -> vector<8x8xf32>
    %cst_172 = arith.constant 2.500000e-01 : f32
    %609 = vector.broadcast %cst_172 : f32 to vector<8x8xf32>
    %610 = arith.mulf %608, %609 : vector<8x8xf32>
    %cst_173 = arith.constant dense<0xFF800000> : vector<8xf32>
    %611 = vector.multi_reduction <maximumf>, %610, %cst_173 [1] : vector<8x8xf32> to vector<8xf32>
    %612 = vector.shape_cast %611 : vector<8xf32> to vector<8x1xf32>
    %613 = vector.broadcast %612 : vector<8x1xf32> to vector<8x8xf32>
    %614 = arith.subf %610, %613 : vector<8x8xf32>
    %615 = math.exp %614 : vector<8x8xf32>
    %cst_174 = arith.constant dense<0.000000e+00> : vector<8xf32>
    %616 = vector.multi_reduction <add>, %615, %cst_174 [1] : vector<8x8xf32> to vector<8xf32>
    %617 = vector.shape_cast %616 : vector<8xf32> to vector<8x1xf32>
    %cst_175 = arith.constant dense<0.000000e+00> : vector<8x16xf32>
    %618 = tpu.matmul %615, %606, %cst_175 {dimension_numbers = #tpu.dot_dimension_numbers<[1], [0], [0], [1], [0, 0, 1, 1], [], []>} : vector<8x8xf32>, vector<8x16xf32>, vector<8x16xf32> -> vector<8x16xf32>
    %619 = tpu.reciprocal %617 {approx = true} : vector<8x1xf32> -> vector<8x1xf32>
    %620 = vector.broadcast %619 : vector<8x1xf32> to vector<8x16xf32>
    %621 = arith.mulf %618, %620 : vector<8x16xf32>
    %622 = tpu.concatenate %603, %621 in 1 : vector<8x16xf32>, vector<8x16xf32> -> vector<8x32xf32>
    %623 = vector.extract_strided_slice %584 {offsets = [8, 0], sizes = [8, 96], strides = [1, 1]} : vector<16x96xf32> to vector<8x96xf32>
    %624 = vector.extract_strided_slice %623 {offsets = [0, 0], sizes = [8, 16], strides = [1, 1]} : vector<8x96xf32> to vector<8x16xf32>
    %625 = vector.extract_strided_slice %623 {offsets = [0, 32], sizes = [8, 16], strides = [1, 1]} : vector<8x96xf32> to vector<8x16xf32>
    %626 = vector.extract_strided_slice %623 {offsets = [0, 64], sizes = [8, 16], strides = [1, 1]} : vector<8x96xf32> to vector<8x16xf32>
    %627 = tpu.transpose %625, [1, 0] : vector<8x16xf32> -> vector<16x8xf32>
    %cst_176 = arith.constant dense<0.000000e+00> : vector<8x8xf32>
    %628 = tpu.matmul %624, %627, %cst_176 {dimension_numbers = #tpu.dot_dimension_numbers<[1], [0], [0], [1], [0, 0, 1, 1], [], []>} : vector<8x16xf32>, vector<16x8xf32>, vector<8x8xf32> -> vector<8x8xf32>
    %cst_177 = arith.constant 2.500000e-01 : f32
    %629 = vector.broadcast %cst_177 : f32 to vector<8x8xf32>
    %630 = arith.mulf %628, %629 : vector<8x8xf32>
    %cst_178 = arith.constant dense<0xFF800000> : vector<8xf32>
    %631 = vector.multi_reduction <maximumf>, %630, %cst_178 [1] : vector<8x8xf32> to vector<8xf32>
    %632 = vector.shape_cast %631 : vector<8xf32> to vector<8x1xf32>
    %633 = vector.broadcast %632 : vector<8x1xf32> to vector<8x8xf32>
    %634 = arith.subf %630, %633 : vector<8x8xf32>
    %635 = math.exp %634 : vector<8x8xf32>
    %cst_179 = arith.constant dense<0.000000e+00> : vector<8xf32>
    %636 = vector.multi_reduction <add>, %635, %cst_179 [1] : vector<8x8xf32> to vector<8xf32>
    %637 = vector.shape_cast %636 : vector<8xf32> to vector<8x1xf32>
    %cst_180 = arith.constant dense<0.000000e+00> : vector<8x16xf32>
    %638 = tpu.matmul %635, %626, %cst_180 {dimension_numbers = #tpu.dot_dimension_numbers<[1], [0], [0], [1], [0, 0, 1, 1], [], []>} : vector<8x8xf32>, vector<8x16xf32>, vector<8x16xf32> -> vector<8x16xf32>
    %639 = tpu.reciprocal %637 {approx = true} : vector<8x1xf32> -> vector<8x1xf32>
    %640 = vector.broadcast %639 : vector<8x1xf32> to vector<8x16xf32>
    %641 = arith.mulf %638, %640 : vector<8x16xf32>
    %642 = vector.extract_strided_slice %623 {offsets = [0, 16], sizes = [8, 16], strides = [1, 1]} : vector<8x96xf32> to vector<8x16xf32>
    %643 = vector.extract_strided_slice %623 {offsets = [0, 48], sizes = [8, 16], strides = [1, 1]} : vector<8x96xf32> to vector<8x16xf32>
    %644 = vector.extract_strided_slice %623 {offsets = [0, 80], sizes = [8, 16], strides = [1, 1]} : vector<8x96xf32> to vector<8x16xf32>
    %645 = tpu.transpose %643, [1, 0] : vector<8x16xf32> -> vector<16x8xf32>
    %cst_181 = arith.constant dense<0.000000e+00> : vector<8x8xf32>
    %646 = tpu.matmul %642, %645, %cst_181 {dimension_numbers = #tpu.dot_dimension_numbers<[1], [0], [0], [1], [0, 0, 1, 1], [], []>} : vector<8x16xf32>, vector<16x8xf32>, vector<8x8xf32> -> vector<8x8xf32>
    %cst_182 = arith.constant 2.500000e-01 : f32
    %647 = vector.broadcast %cst_182 : f32 to vector<8x8xf32>
    %648 = arith.mulf %646, %647 : vector<8x8xf32>
    %cst_183 = arith.constant dense<0xFF800000> : vector<8xf32>
    %649 = vector.multi_reduction <maximumf>, %648, %cst_183 [1] : vector<8x8xf32> to vector<8xf32>
    %650 = vector.shape_cast %649 : vector<8xf32> to vector<8x1xf32>
    %651 = vector.broadcast %650 : vector<8x1xf32> to vector<8x8xf32>
    %652 = arith.subf %648, %651 : vector<8x8xf32>
    %653 = math.exp %652 : vector<8x8xf32>
    %cst_184 = arith.constant dense<0.000000e+00> : vector<8xf32>
    %654 = vector.multi_reduction <add>, %653, %cst_184 [1] : vector<8x8xf32> to vector<8xf32>
    %655 = vector.shape_cast %654 : vector<8xf32> to vector<8x1xf32>
    %cst_185 = arith.constant dense<0.000000e+00> : vector<8x16xf32>
    %656 = tpu.matmul %653, %644, %cst_185 {dimension_numbers = #tpu.dot_dimension_numbers<[1], [0], [0], [1], [0, 0, 1, 1], [], []>} : vector<8x8xf32>, vector<8x16xf32>, vector<8x16xf32> -> vector<8x16xf32>
    %657 = tpu.reciprocal %655 {approx = true} : vector<8x1xf32> -> vector<8x1xf32>
    %658 = vector.broadcast %657 : vector<8x1xf32> to vector<8x16xf32>
    %659 = arith.mulf %656, %658 : vector<8x16xf32>
    %660 = tpu.concatenate %641, %659 in 1 : vector<8x16xf32>, vector<8x16xf32> -> vector<8x32xf32>
    %661 = tpu.concatenate %622, %660 in 0 : vector<8x32xf32>, vector<8x32xf32> -> vector<16x32xf32>
    %c0_186 = arith.constant 0 : index
    %c0_187 = arith.constant 0 : index
    %662 = vector.load %arg23[%c0_186, %c0_187] : memref<32x32xf32, #tpu.memory_space<vmem>>, vector<32x32xf32>
    %cst_188 = arith.constant dense<0.000000e+00> : vector<16x32xf32>
    %663 = tpu.matmul %661, %662, %cst_188 {dimension_numbers = #tpu.dot_dimension_numbers<[1], [0], [0], [1], [0, 0, 1, 1], [], []>} : vector<16x32xf32>, vector<32x32xf32>, vector<16x32xf32> -> vector<16x32xf32>
    %664 = arith.addf %582, %663 : vector<16x32xf32>
    %c0_189 = arith.constant 0 : index
    %c0_190 = arith.constant 0 : index
    %665 = vector.load %arg20[%c0_189, %c0_190] : memref<1x32xf32, #tpu.memory_space<vmem>>, vector<1x32xf32>
    %c0_191 = arith.constant 0 : index
    %c0_192 = arith.constant 0 : index
    %666 = vector.load %arg19[%c0_191, %c0_192] : memref<1x32xf32, #tpu.memory_space<vmem>>, vector<1x32xf32>
    %cst_193 = arith.constant dense<0.000000e+00> : vector<16xf32>
    %667 = vector.multi_reduction <add>, %664, %cst_193 [1] : vector<16x32xf32> to vector<16xf32>
    %668 = vector.shape_cast %667 : vector<16xf32> to vector<16x1xf32>
    %cst_194 = arith.constant 3.200000e+01 : f32
    %669 = vector.broadcast %cst_194 : f32 to vector<16x1xf32>
    %670 = arith.divf %668, %669 : vector<16x1xf32>
    %671 = vector.broadcast %670 : vector<16x1xf32> to vector<16x32xf32>
    %672 = arith.subf %664, %671 : vector<16x32xf32>
    %673 = arith.mulf %672, %672 : vector<16x32xf32>
    %cst_195 = arith.constant dense<0.000000e+00> : vector<16xf32>
    %674 = vector.multi_reduction <add>, %673, %cst_195 [1] : vector<16x32xf32> to vector<16xf32>
    %675 = vector.shape_cast %674 : vector<16xf32> to vector<16x1xf32>
    %cst_196 = arith.constant 3.200000e+01 : f32
    %676 = vector.broadcast %cst_196 : f32 to vector<16x1xf32>
    %677 = arith.divf %675, %676 : vector<16x1xf32>
    %678 = vector.broadcast %670 : vector<16x1xf32> to vector<16x32xf32>
    %679 = arith.subf %664, %678 : vector<16x32xf32>
    %cst_197 = arith.constant 9.99999974E-6 : f32
    %680 = vector.broadcast %cst_197 : f32 to vector<16x1xf32>
    %681 = arith.addf %677, %680 : vector<16x1xf32>
    %682 = math.rsqrt %681 : vector<16x1xf32>
    %683 = vector.broadcast %682 : vector<16x1xf32> to vector<16x32xf32>
    %684 = arith.mulf %679, %683 : vector<16x32xf32>
    %685 = vector.broadcast %665 : vector<1x32xf32> to vector<16x32xf32>
    %686 = arith.mulf %684, %685 : vector<16x32xf32>
    %687 = vector.broadcast %666 : vector<1x32xf32> to vector<16x32xf32>
    %688 = arith.addf %686, %687 : vector<16x32xf32>
    %c0_198 = arith.constant 0 : index
    %c0_199 = arith.constant 0 : index
    %689 = vector.load %arg17[%c0_198, %c0_199] : memref<32x128xf32, #tpu.memory_space<vmem>>, vector<32x128xf32>
    %cst_200 = arith.constant dense<0.000000e+00> : vector<16x128xf32>
    %690 = tpu.matmul %688, %689, %cst_200 {dimension_numbers = #tpu.dot_dimension_numbers<[1], [0], [0], [1], [0, 0, 1, 1], [], []>} : vector<16x32xf32>, vector<32x128xf32>, vector<16x128xf32> -> vector<16x128xf32>
    %c0_201 = arith.constant 0 : index
    %c0_202 = arith.constant 0 : index
    %691 = vector.load %arg15[%c0_201, %c0_202] : memref<1x128xf32, #tpu.memory_space<vmem>>, vector<1x128xf32>
    %692 = vector.broadcast %691 : vector<1x128xf32> to vector<16x128xf32>
    %693 = arith.addf %690, %692 : vector<16x128xf32>
    %694 = arith.mulf %693, %693 : vector<16x128xf32>
    %695 = arith.mulf %693, %694 : vector<16x128xf32>
    %cst_203 = arith.constant 4.471500e-02 : f32
    %696 = vector.broadcast %cst_203 : f32 to vector<16x128xf32>
    %697 = arith.mulf %696, %695 : vector<16x128xf32>
    %698 = arith.addf %693, %697 : vector<16x128xf32>
    %cst_204 = arith.constant 0.797884583 : f32
    %699 = vector.broadcast %cst_204 : f32 to vector<16x128xf32>
    %700 = arith.mulf %699, %698 : vector<16x128xf32>
    %701 = math.tanh %700 : vector<16x128xf32>
    %cst_205 = arith.constant 1.000000e+00 : f32
    %702 = vector.broadcast %cst_205 : f32 to vector<16x128xf32>
    %703 = arith.addf %702, %701 : vector<16x128xf32>
    %cst_206 = arith.constant 5.000000e-01 : f32
    %704 = vector.broadcast %cst_206 : f32 to vector<16x128xf32>
    %705 = arith.mulf %704, %703 : vector<16x128xf32>
    %706 = arith.mulf %693, %705 : vector<16x128xf32>
    %c0_207 = arith.constant 0 : index
    %c0_208 = arith.constant 0 : index
    %707 = vector.load %arg18[%c0_207, %c0_208] : memref<128x32xf32, #tpu.memory_space<vmem>>, vector<128x32xf32>
    %cst_209 = arith.constant dense<0.000000e+00> : vector<16x32xf32>
    %708 = tpu.matmul %706, %707, %cst_209 {dimension_numbers = #tpu.dot_dimension_numbers<[1], [0], [0], [1], [0, 0, 1, 1], [], []>} : vector<16x128xf32>, vector<128x32xf32>, vector<16x32xf32> -> vector<16x32xf32>
    %c0_210 = arith.constant 0 : index
    %c0_211 = arith.constant 0 : index
    %709 = vector.load %arg16[%c0_210, %c0_211] : memref<1x32xf32, #tpu.memory_space<vmem>>, vector<1x32xf32>
    %710 = vector.broadcast %709 : vector<1x32xf32> to vector<16x32xf32>
    %711 = arith.addf %708, %710 : vector<16x32xf32>
    %712 = arith.addf %688, %711 : vector<16x32xf32>
    %c0_212 = arith.constant 0 : index
    %c0_213 = arith.constant 0 : index
    %713 = vector.load %arg22[%c0_212, %c0_213] : memref<1x32xf32, #tpu.memory_space<vmem>>, vector<1x32xf32>
    %c0_214 = arith.constant 0 : index
    %c0_215 = arith.constant 0 : index
    %714 = vector.load %arg21[%c0_214, %c0_215] : memref<1x32xf32, #tpu.memory_space<vmem>>, vector<1x32xf32>
    %cst_216 = arith.constant dense<0.000000e+00> : vector<16xf32>
    %715 = vector.multi_reduction <add>, %712, %cst_216 [1] : vector<16x32xf32> to vector<16xf32>
    %716 = vector.shape_cast %715 : vector<16xf32> to vector<16x1xf32>
    %cst_217 = arith.constant 3.200000e+01 : f32
    %717 = vector.broadcast %cst_217 : f32 to vector<16x1xf32>
    %718 = arith.divf %716, %717 : vector<16x1xf32>
    %719 = vector.broadcast %718 : vector<16x1xf32> to vector<16x32xf32>
    %720 = arith.subf %712, %719 : vector<16x32xf32>
    %721 = arith.mulf %720, %720 : vector<16x32xf32>
    %cst_218 = arith.constant dense<0.000000e+00> : vector<16xf32>
    %722 = vector.multi_reduction <add>, %721, %cst_218 [1] : vector<16x32xf32> to vector<16xf32>
    %723 = vector.shape_cast %722 : vector<16xf32> to vector<16x1xf32>
    %cst_219 = arith.constant 3.200000e+01 : f32
    %724 = vector.broadcast %cst_219 : f32 to vector<16x1xf32>
    %725 = arith.divf %723, %724 : vector<16x1xf32>
    %726 = vector.broadcast %718 : vector<16x1xf32> to vector<16x32xf32>
    %727 = arith.subf %712, %726 : vector<16x32xf32>
    %cst_220 = arith.constant 9.99999974E-6 : f32
    %728 = vector.broadcast %cst_220 : f32 to vector<16x1xf32>
    %729 = arith.addf %725, %728 : vector<16x1xf32>
    %730 = math.rsqrt %729 : vector<16x1xf32>
    %731 = vector.broadcast %730 : vector<16x1xf32> to vector<16x32xf32>
    %732 = arith.mulf %727, %731 : vector<16x32xf32>
    %733 = vector.broadcast %713 : vector<1x32xf32> to vector<16x32xf32>
    %734 = arith.mulf %732, %733 : vector<16x32xf32>
    %735 = vector.broadcast %714 : vector<1x32xf32> to vector<16x32xf32>
    %736 = arith.addf %734, %735 : vector<16x32xf32>
    %cst_221 = arith.constant 0.000000e+00 : f32
    %737 = vector.broadcast %cst_221 : f32 to vector<8x1xf32>
    %738 = arith.cmpf oge, %325, %737 : vector<8x1xf32>
    %cst_222 = arith.constant 9.99999974E-6 : f32
    %739 = vector.broadcast %cst_222 : f32 to vector<8x1xf32>
    %740 = arith.maximumf %325, %739 : vector<8x1xf32>
    %cst_223 = arith.constant -9.99999974E-6 : f32
    %741 = vector.broadcast %cst_223 : f32 to vector<8x1xf32>
    %742 = arith.minimumf %325, %741 : vector<8x1xf32>
    %743 = arith.select %738, %740, %742 : vector<8x1xi1>, vector<8x1xf32>
    %cst_224 = arith.constant 1.000000e+00 : f32
    %744 = vector.broadcast %cst_224 : f32 to vector<8x1xf32>
    %745 = arith.divf %744, %743 : vector<8x1xf32>
    %746 = tpu.concatenate %745, %745 in 0 : vector<8x1xf32>, vector<8x1xf32> -> vector<16x1xf32>
    %747 = arith.mulf %746, %399 : vector<16x1xf32>
    %748 = tpu.concatenate %326, %326 in 0 : vector<8x1xf32>, vector<8x1xf32> -> vector<16x1xf32>
    %749 = vector.broadcast %748 : vector<16x1xf32> to vector<16x32xf32>
    %750 = arith.subf %736, %749 : vector<16x32xf32>
    %751 = vector.broadcast %747 : vector<16x1xf32> to vector<16x32xf32>
    %752 = arith.mulf %750, %751 : vector<16x32xf32>
    %753 = vector.broadcast %398 : vector<16x1xf32> to vector<16x32xf32>
    %754 = arith.addf %752, %753 : vector<16x32xf32>
    %c0_225 = arith.constant 0 : index
    %c0_226 = arith.constant 0 : index
    %755 = vector.load %arg33[%c0_225, %c0_226] : memref<32x10xf32, #tpu.memory_space<vmem>>, vector<32x10xf32>
    %cst_227 = arith.constant dense<0.000000e+00> : vector<16x10xf32>
    %756 = tpu.matmul %754, %755, %cst_227 {dimension_numbers = #tpu.dot_dimension_numbers<[1], [0], [0], [1], [0, 0, 1, 1], [], []>} : vector<16x32xf32>, vector<32x10xf32>, vector<16x10xf32> -> vector<16x10xf32>
    %c0_228 = arith.constant 0 : index
    %c0_229 = arith.constant 0 : index
    %757 = vector.load %arg32[%c0_228, %c0_229] : memref<1x10xf32, #tpu.memory_space<vmem>>, vector<1x10xf32>
    %758 = vector.broadcast %757 : vector<1x10xf32> to vector<16x10xf32>
    %759 = arith.addf %756, %758 : vector<16x10xf32>
    %760 = vector.extract_strided_slice %759 {offsets = [0, 0], sizes = [8, 10], strides = [1, 1]} : vector<16x10xf32> to vector<8x10xf32>
    %cst_230 = arith.constant 0.000000e+00 : f32
    %761 = vector.broadcast %cst_230 : f32 to vector<16x10xf32>
    %c0_231 = arith.constant 0 : index
    %c0_232 = arith.constant 0 : index
    %762 = vector.load %arg36[%c0_231, %c0_232] : memref<16x1xf32, #tpu.memory_space<vmem>>, vector<16x1xf32>
    %763 = vector.broadcast %762 : vector<16x1xf32> to vector<16x10xf32>
    %764 = arith.addf %761, %763 : vector<16x10xf32>
    %cst_233 = arith.constant 0.000000e+00 : f32
    %765 = vector.broadcast %cst_233 : f32 to vector<8x2xf32>
    %766 = vector.extract_strided_slice %760 {offsets = [0, 0], sizes = [8, 8], strides = [1, 1]} : vector<8x10xf32> to vector<8x8xf32>
    %767 = tpu.concatenate %765, %766 in 1 : vector<8x2xf32>, vector<8x8xf32> -> vector<8x10xf32>
    %c0_234 = arith.constant 0 : index
    %c0_235 = arith.constant 0 : index
    %c0_236 = arith.constant 0 : index
    %768 = vector.load %arg39[%c0_234, %c0_235, %c0_236] : memref<3x16x8xf32, #tpu.memory_space<vmem>>, vector<1x16x8xf32>
    %769 = vector.shape_cast %768 : vector<1x16x8xf32> to vector<16x8xf32>
    %cst_237 = arith.constant dense<0.000000e+00> : vector<16x10xf32>
    %770 = tpu.matmul %769, %767, %cst_237 {dimension_numbers = #tpu.dot_dimension_numbers<[1], [0], [0], [1], [0, 0, 1, 1], [], []>} : vector<16x8xf32>, vector<8x10xf32>, vector<16x10xf32> -> vector<16x10xf32>
    %771 = arith.addf %764, %770 : vector<16x10xf32>
    %cst_238 = arith.constant 0.000000e+00 : f32
    %772 = vector.broadcast %cst_238 : f32 to vector<8x1xf32>
    %773 = vector.extract_strided_slice %760 {offsets = [0, 0], sizes = [8, 9], strides = [1, 1]} : vector<8x10xf32> to vector<8x9xf32>
    %774 = tpu.concatenate %772, %773 in 1 : vector<8x1xf32>, vector<8x9xf32> -> vector<8x10xf32>
    %c1_239 = arith.constant 1 : index
    %c0_240 = arith.constant 0 : index
    %c0_241 = arith.constant 0 : index
    %775 = vector.load %arg39[%c1_239, %c0_240, %c0_241] : memref<3x16x8xf32, #tpu.memory_space<vmem>>, vector<1x16x8xf32>
    %776 = vector.shape_cast %775 : vector<1x16x8xf32> to vector<16x8xf32>
    %cst_242 = arith.constant dense<0.000000e+00> : vector<16x10xf32>
    %777 = tpu.matmul %776, %774, %cst_242 {dimension_numbers = #tpu.dot_dimension_numbers<[1], [0], [0], [1], [0, 0, 1, 1], [], []>} : vector<16x8xf32>, vector<8x10xf32>, vector<16x10xf32> -> vector<16x10xf32>
    %778 = arith.addf %771, %777 : vector<16x10xf32>
    %c2_243 = arith.constant 2 : index
    %c0_244 = arith.constant 0 : index
    %c0_245 = arith.constant 0 : index
    %779 = vector.load %arg39[%c2_243, %c0_244, %c0_245] : memref<3x16x8xf32, #tpu.memory_space<vmem>>, vector<1x16x8xf32>
    %780 = vector.shape_cast %779 : vector<1x16x8xf32> to vector<16x8xf32>
    %cst_246 = arith.constant dense<0.000000e+00> : vector<16x10xf32>
    %781 = tpu.matmul %780, %760, %cst_246 {dimension_numbers = #tpu.dot_dimension_numbers<[1], [0], [0], [1], [0, 0, 1, 1], [], []>} : vector<16x8xf32>, vector<8x10xf32>, vector<16x10xf32> -> vector<16x10xf32>
    %782 = arith.addf %778, %781 : vector<16x10xf32>
    %cst_247 = arith.constant 0.000000e+00 : f32
    %783 = vector.broadcast %cst_247 : f32 to vector<16x10xf32>
    %784 = arith.maximumf %782, %783 : vector<16x10xf32>
    %cst_248 = arith.constant 0.000000e+00 : f32
    %785 = vector.broadcast %cst_248 : f32 to vector<16x10xf32>
    %c0_249 = arith.constant 0 : index
    %c0_250 = arith.constant 0 : index
    %786 = vector.load %arg37[%c0_249, %c0_250] : memref<16x1xf32, #tpu.memory_space<vmem>>, vector<16x1xf32>
    %787 = vector.broadcast %786 : vector<16x1xf32> to vector<16x10xf32>
    %788 = arith.addf %785, %787 : vector<16x10xf32>
    %cst_251 = arith.constant 0.000000e+00 : f32
    %789 = vector.broadcast %cst_251 : f32 to vector<16x2xf32>
    %790 = vector.extract_strided_slice %784 {offsets = [0, 0], sizes = [16, 8], strides = [1, 1]} : vector<16x10xf32> to vector<16x8xf32>
    %791 = tpu.concatenate %789, %790 in 1 : vector<16x2xf32>, vector<16x8xf32> -> vector<16x10xf32>
    %c0_252 = arith.constant 0 : index
    %c0_253 = arith.constant 0 : index
    %c0_254 = arith.constant 0 : index
    %792 = vector.load %arg40[%c0_252, %c0_253, %c0_254] : memref<3x16x16xf32, #tpu.memory_space<vmem>>, vector<1x16x16xf32>
    %793 = vector.shape_cast %792 : vector<1x16x16xf32> to vector<16x16xf32>
    %cst_255 = arith.constant dense<0.000000e+00> : vector<16x10xf32>
    %794 = tpu.matmul %793, %791, %cst_255 {dimension_numbers = #tpu.dot_dimension_numbers<[1], [0], [0], [1], [0, 0, 1, 1], [], []>} : vector<16x16xf32>, vector<16x10xf32>, vector<16x10xf32> -> vector<16x10xf32>
    %795 = arith.addf %788, %794 : vector<16x10xf32>
    %cst_256 = arith.constant 0.000000e+00 : f32
    %796 = vector.broadcast %cst_256 : f32 to vector<16x1xf32>
    %797 = vector.extract_strided_slice %784 {offsets = [0, 0], sizes = [16, 9], strides = [1, 1]} : vector<16x10xf32> to vector<16x9xf32>
    %798 = tpu.concatenate %796, %797 in 1 : vector<16x1xf32>, vector<16x9xf32> -> vector<16x10xf32>
    %c1_257 = arith.constant 1 : index
    %c0_258 = arith.constant 0 : index
    %c0_259 = arith.constant 0 : index
    %799 = vector.load %arg40[%c1_257, %c0_258, %c0_259] : memref<3x16x16xf32, #tpu.memory_space<vmem>>, vector<1x16x16xf32>
    %800 = vector.shape_cast %799 : vector<1x16x16xf32> to vector<16x16xf32>
    %cst_260 = arith.constant dense<0.000000e+00> : vector<16x10xf32>
    %801 = tpu.matmul %800, %798, %cst_260 {dimension_numbers = #tpu.dot_dimension_numbers<[1], [0], [0], [1], [0, 0, 1, 1], [], []>} : vector<16x16xf32>, vector<16x10xf32>, vector<16x10xf32> -> vector<16x10xf32>
    %802 = arith.addf %795, %801 : vector<16x10xf32>
    %c2_261 = arith.constant 2 : index
    %c0_262 = arith.constant 0 : index
    %c0_263 = arith.constant 0 : index
    %803 = vector.load %arg40[%c2_261, %c0_262, %c0_263] : memref<3x16x16xf32, #tpu.memory_space<vmem>>, vector<1x16x16xf32>
    %804 = vector.shape_cast %803 : vector<1x16x16xf32> to vector<16x16xf32>
    %cst_264 = arith.constant dense<0.000000e+00> : vector<16x10xf32>
    %805 = tpu.matmul %804, %784, %cst_264 {dimension_numbers = #tpu.dot_dimension_numbers<[1], [0], [0], [1], [0, 0, 1, 1], [], []>} : vector<16x16xf32>, vector<16x10xf32>, vector<16x10xf32> -> vector<16x10xf32>
    %806 = arith.addf %802, %805 : vector<16x10xf32>
    %cst_265 = arith.constant 0.000000e+00 : f32
    %807 = vector.broadcast %cst_265 : f32 to vector<16x10xf32>
    %808 = arith.maximumf %806, %807 : vector<16x10xf32>
    %c0_266 = arith.constant 0 : index
    %c0_267 = arith.constant 0 : index
    %809 = vector.load %arg41[%c0_266, %c0_267] : memref<16x8xf32, #tpu.memory_space<vmem>>, vector<16x8xf32>
    %cst_268 = arith.constant dense<0.000000e+00> : vector<16x10xf32>
    %810 = tpu.matmul %809, %760, %cst_268 {dimension_numbers = #tpu.dot_dimension_numbers<[1], [0], [0], [1], [0, 0, 1, 1], [], []>} : vector<16x8xf32>, vector<8x10xf32>, vector<16x10xf32> -> vector<16x10xf32>
    %c0_269 = arith.constant 0 : index
    %c0_270 = arith.constant 0 : index
    %811 = vector.load %arg38[%c0_269, %c0_270] : memref<16x1xf32, #tpu.memory_space<vmem>>, vector<16x1xf32>
    %812 = vector.broadcast %811 : vector<16x1xf32> to vector<16x10xf32>
    %813 = arith.addf %810, %812 : vector<16x10xf32>
    %814 = arith.addf %808, %813 : vector<16x10xf32>
    %cst_271 = arith.constant 0.000000e+00 : f32
    %815 = vector.broadcast %cst_271 : f32 to vector<16x10xf32>
    %816 = arith.maximumf %814, %815 : vector<16x10xf32>
    %cst_272 = arith.constant 0.000000e+00 : f32
    %817 = vector.broadcast %cst_272 : f32 to vector<16x10xf32>
    %c0_273 = arith.constant 0 : index
    %c0_274 = arith.constant 0 : index
    %818 = vector.load %arg42[%c0_273, %c0_274] : memref<16x1xf32, #tpu.memory_space<vmem>>, vector<16x1xf32>
    %819 = vector.broadcast %818 : vector<16x1xf32> to vector<16x10xf32>
    %820 = arith.addf %817, %819 : vector<16x10xf32>
    %cst_275 = arith.constant 0.000000e+00 : f32
    %821 = vector.broadcast %cst_275 : f32 to vector<16x4xf32>
    %822 = vector.extract_strided_slice %816 {offsets = [0, 0], sizes = [16, 6], strides = [1, 1]} : vector<16x10xf32> to vector<16x6xf32>
    %823 = tpu.concatenate %821, %822 in 1 : vector<16x4xf32>, vector<16x6xf32> -> vector<16x10xf32>
    %c0_276 = arith.constant 0 : index
    %c0_277 = arith.constant 0 : index
    %c0_278 = arith.constant 0 : index
    %824 = vector.load %arg44[%c0_276, %c0_277, %c0_278] : memref<3x16x16xf32, #tpu.memory_space<vmem>>, vector<1x16x16xf32>
    %825 = vector.shape_cast %824 : vector<1x16x16xf32> to vector<16x16xf32>
    %cst_279 = arith.constant dense<0.000000e+00> : vector<16x10xf32>
    %826 = tpu.matmul %825, %823, %cst_279 {dimension_numbers = #tpu.dot_dimension_numbers<[1], [0], [0], [1], [0, 0, 1, 1], [], []>} : vector<16x16xf32>, vector<16x10xf32>, vector<16x10xf32> -> vector<16x10xf32>
    %827 = arith.addf %820, %826 : vector<16x10xf32>
    %cst_280 = arith.constant 0.000000e+00 : f32
    %828 = vector.broadcast %cst_280 : f32 to vector<16x2xf32>
    %829 = vector.extract_strided_slice %816 {offsets = [0, 0], sizes = [16, 8], strides = [1, 1]} : vector<16x10xf32> to vector<16x8xf32>
    %830 = tpu.concatenate %828, %829 in 1 : vector<16x2xf32>, vector<16x8xf32> -> vector<16x10xf32>
    %c1_281 = arith.constant 1 : index
    %c0_282 = arith.constant 0 : index
    %c0_283 = arith.constant 0 : index
    %831 = vector.load %arg44[%c1_281, %c0_282, %c0_283] : memref<3x16x16xf32, #tpu.memory_space<vmem>>, vector<1x16x16xf32>
    %832 = vector.shape_cast %831 : vector<1x16x16xf32> to vector<16x16xf32>
    %cst_284 = arith.constant dense<0.000000e+00> : vector<16x10xf32>
    %833 = tpu.matmul %832, %830, %cst_284 {dimension_numbers = #tpu.dot_dimension_numbers<[1], [0], [0], [1], [0, 0, 1, 1], [], []>} : vector<16x16xf32>, vector<16x10xf32>, vector<16x10xf32> -> vector<16x10xf32>
    %834 = arith.addf %827, %833 : vector<16x10xf32>
    %c2_285 = arith.constant 2 : index
    %c0_286 = arith.constant 0 : index
    %c0_287 = arith.constant 0 : index
    %835 = vector.load %arg44[%c2_285, %c0_286, %c0_287] : memref<3x16x16xf32, #tpu.memory_space<vmem>>, vector<1x16x16xf32>
    %836 = vector.shape_cast %835 : vector<1x16x16xf32> to vector<16x16xf32>
    %cst_288 = arith.constant dense<0.000000e+00> : vector<16x10xf32>
    %837 = tpu.matmul %836, %816, %cst_288 {dimension_numbers = #tpu.dot_dimension_numbers<[1], [0], [0], [1], [0, 0, 1, 1], [], []>} : vector<16x16xf32>, vector<16x10xf32>, vector<16x10xf32> -> vector<16x10xf32>
    %838 = arith.addf %834, %837 : vector<16x10xf32>
    %cst_289 = arith.constant 0.000000e+00 : f32
    %839 = vector.broadcast %cst_289 : f32 to vector<16x10xf32>
    %840 = arith.maximumf %838, %839 : vector<16x10xf32>
    %cst_290 = arith.constant 0.000000e+00 : f32
    %841 = vector.broadcast %cst_290 : f32 to vector<16x10xf32>
    %c0_291 = arith.constant 0 : index
    %c0_292 = arith.constant 0 : index
    %842 = vector.load %arg43[%c0_291, %c0_292] : memref<16x1xf32, #tpu.memory_space<vmem>>, vector<16x1xf32>
    %843 = vector.broadcast %842 : vector<16x1xf32> to vector<16x10xf32>
    %844 = arith.addf %841, %843 : vector<16x10xf32>
    %cst_293 = arith.constant 0.000000e+00 : f32
    %845 = vector.broadcast %cst_293 : f32 to vector<16x4xf32>
    %846 = vector.extract_strided_slice %840 {offsets = [0, 0], sizes = [16, 6], strides = [1, 1]} : vector<16x10xf32> to vector<16x6xf32>
    %847 = tpu.concatenate %845, %846 in 1 : vector<16x4xf32>, vector<16x6xf32> -> vector<16x10xf32>
    %c0_294 = arith.constant 0 : index
    %c0_295 = arith.constant 0 : index
    %c0_296 = arith.constant 0 : index
    %848 = vector.load %arg45[%c0_294, %c0_295, %c0_296] : memref<3x16x16xf32, #tpu.memory_space<vmem>>, vector<1x16x16xf32>
    %849 = vector.shape_cast %848 : vector<1x16x16xf32> to vector<16x16xf32>
    %cst_297 = arith.constant dense<0.000000e+00> : vector<16x10xf32>
    %850 = tpu.matmul %849, %847, %cst_297 {dimension_numbers = #tpu.dot_dimension_numbers<[1], [0], [0], [1], [0, 0, 1, 1], [], []>} : vector<16x16xf32>, vector<16x10xf32>, vector<16x10xf32> -> vector<16x10xf32>
    %851 = arith.addf %844, %850 : vector<16x10xf32>
    %cst_298 = arith.constant 0.000000e+00 : f32
    %852 = vector.broadcast %cst_298 : f32 to vector<16x2xf32>
    %853 = vector.extract_strided_slice %840 {offsets = [0, 0], sizes = [16, 8], strides = [1, 1]} : vector<16x10xf32> to vector<16x8xf32>
    %854 = tpu.concatenate %852, %853 in 1 : vector<16x2xf32>, vector<16x8xf32> -> vector<16x10xf32>
    %c1_299 = arith.constant 1 : index
    %c0_300 = arith.constant 0 : index
    %c0_301 = arith.constant 0 : index
    %855 = vector.load %arg45[%c1_299, %c0_300, %c0_301] : memref<3x16x16xf32, #tpu.memory_space<vmem>>, vector<1x16x16xf32>
    %856 = vector.shape_cast %855 : vector<1x16x16xf32> to vector<16x16xf32>
    %cst_302 = arith.constant dense<0.000000e+00> : vector<16x10xf32>
    %857 = tpu.matmul %856, %854, %cst_302 {dimension_numbers = #tpu.dot_dimension_numbers<[1], [0], [0], [1], [0, 0, 1, 1], [], []>} : vector<16x16xf32>, vector<16x10xf32>, vector<16x10xf32> -> vector<16x10xf32>
    %858 = arith.addf %851, %857 : vector<16x10xf32>
    %c2_303 = arith.constant 2 : index
    %c0_304 = arith.constant 0 : index
    %c0_305 = arith.constant 0 : index
    %859 = vector.load %arg45[%c2_303, %c0_304, %c0_305] : memref<3x16x16xf32, #tpu.memory_space<vmem>>, vector<1x16x16xf32>
    %860 = vector.shape_cast %859 : vector<1x16x16xf32> to vector<16x16xf32>
    %cst_306 = arith.constant dense<0.000000e+00> : vector<16x10xf32>
    %861 = tpu.matmul %860, %840, %cst_306 {dimension_numbers = #tpu.dot_dimension_numbers<[1], [0], [0], [1], [0, 0, 1, 1], [], []>} : vector<16x16xf32>, vector<16x10xf32>, vector<16x10xf32> -> vector<16x10xf32>
    %862 = arith.addf %858, %861 : vector<16x10xf32>
    %cst_307 = arith.constant 0.000000e+00 : f32
    %863 = vector.broadcast %cst_307 : f32 to vector<16x10xf32>
    %864 = arith.maximumf %862, %863 : vector<16x10xf32>
    %865 = arith.addf %864, %816 : vector<16x10xf32>
    %cst_308 = arith.constant 0.000000e+00 : f32
    %866 = vector.broadcast %cst_308 : f32 to vector<16x10xf32>
    %867 = arith.maximumf %865, %866 : vector<16x10xf32>
    %cst_309 = arith.constant 0.000000e+00 : f32
    %868 = vector.broadcast %cst_309 : f32 to vector<16x10xf32>
    %c0_310 = arith.constant 0 : index
    %c0_311 = arith.constant 0 : index
    %869 = vector.load %arg46[%c0_310, %c0_311] : memref<16x1xf32, #tpu.memory_space<vmem>>, vector<16x1xf32>
    %870 = vector.broadcast %869 : vector<16x1xf32> to vector<16x10xf32>
    %871 = arith.addf %868, %870 : vector<16x10xf32>
    %cst_312 = arith.constant 0.000000e+00 : f32
    %872 = vector.broadcast %cst_312 : f32 to vector<16x8xf32>
    %873 = vector.extract_strided_slice %867 {offsets = [0, 0], sizes = [16, 2], strides = [1, 1]} : vector<16x10xf32> to vector<16x2xf32>
    %874 = tpu.concatenate %872, %873 in 1 : vector<16x8xf32>, vector<16x2xf32> -> vector<16x10xf32>
    %c0_313 = arith.constant 0 : index
    %c0_314 = arith.constant 0 : index
    %c0_315 = arith.constant 0 : index
    %875 = vector.load %arg48[%c0_313, %c0_314, %c0_315] : memref<3x16x16xf32, #tpu.memory_space<vmem>>, vector<1x16x16xf32>
    %876 = vector.shape_cast %875 : vector<1x16x16xf32> to vector<16x16xf32>
    %cst_316 = arith.constant dense<0.000000e+00> : vector<16x10xf32>
    %877 = tpu.matmul %876, %874, %cst_316 {dimension_numbers = #tpu.dot_dimension_numbers<[1], [0], [0], [1], [0, 0, 1, 1], [], []>} : vector<16x16xf32>, vector<16x10xf32>, vector<16x10xf32> -> vector<16x10xf32>
    %878 = arith.addf %871, %877 : vector<16x10xf32>
    %cst_317 = arith.constant 0.000000e+00 : f32
    %879 = vector.broadcast %cst_317 : f32 to vector<16x4xf32>
    %880 = vector.extract_strided_slice %867 {offsets = [0, 0], sizes = [16, 6], strides = [1, 1]} : vector<16x10xf32> to vector<16x6xf32>
    %881 = tpu.concatenate %879, %880 in 1 : vector<16x4xf32>, vector<16x6xf32> -> vector<16x10xf32>
    %c1_318 = arith.constant 1 : index
    %c0_319 = arith.constant 0 : index
    %c0_320 = arith.constant 0 : index
    %882 = vector.load %arg48[%c1_318, %c0_319, %c0_320] : memref<3x16x16xf32, #tpu.memory_space<vmem>>, vector<1x16x16xf32>
    %883 = vector.shape_cast %882 : vector<1x16x16xf32> to vector<16x16xf32>
    %cst_321 = arith.constant dense<0.000000e+00> : vector<16x10xf32>
    %884 = tpu.matmul %883, %881, %cst_321 {dimension_numbers = #tpu.dot_dimension_numbers<[1], [0], [0], [1], [0, 0, 1, 1], [], []>} : vector<16x16xf32>, vector<16x10xf32>, vector<16x10xf32> -> vector<16x10xf32>
    %885 = arith.addf %878, %884 : vector<16x10xf32>
    %c2_322 = arith.constant 2 : index
    %c0_323 = arith.constant 0 : index
    %c0_324 = arith.constant 0 : index
    %886 = vector.load %arg48[%c2_322, %c0_323, %c0_324] : memref<3x16x16xf32, #tpu.memory_space<vmem>>, vector<1x16x16xf32>
    %887 = vector.shape_cast %886 : vector<1x16x16xf32> to vector<16x16xf32>
    %cst_325 = arith.constant dense<0.000000e+00> : vector<16x10xf32>
    %888 = tpu.matmul %887, %867, %cst_325 {dimension_numbers = #tpu.dot_dimension_numbers<[1], [0], [0], [1], [0, 0, 1, 1], [], []>} : vector<16x16xf32>, vector<16x10xf32>, vector<16x10xf32> -> vector<16x10xf32>
    %889 = arith.addf %885, %888 : vector<16x10xf32>
    %cst_326 = arith.constant 0.000000e+00 : f32
    %890 = vector.broadcast %cst_326 : f32 to vector<16x10xf32>
    %891 = arith.maximumf %889, %890 : vector<16x10xf32>
    %cst_327 = arith.constant 0.000000e+00 : f32
    %892 = vector.broadcast %cst_327 : f32 to vector<16x10xf32>
    %c0_328 = arith.constant 0 : index
    %c0_329 = arith.constant 0 : index
    %893 = vector.load %arg47[%c0_328, %c0_329] : memref<16x1xf32, #tpu.memory_space<vmem>>, vector<16x1xf32>
    %894 = vector.broadcast %893 : vector<16x1xf32> to vector<16x10xf32>
    %895 = arith.addf %892, %894 : vector<16x10xf32>
    %cst_330 = arith.constant 0.000000e+00 : f32
    %896 = vector.broadcast %cst_330 : f32 to vector<16x8xf32>
    %897 = vector.extract_strided_slice %891 {offsets = [0, 0], sizes = [16, 2], strides = [1, 1]} : vector<16x10xf32> to vector<16x2xf32>
    %898 = tpu.concatenate %896, %897 in 1 : vector<16x8xf32>, vector<16x2xf32> -> vector<16x10xf32>
    %c0_331 = arith.constant 0 : index
    %c0_332 = arith.constant 0 : index
    %c0_333 = arith.constant 0 : index
    %899 = vector.load %arg49[%c0_331, %c0_332, %c0_333] : memref<3x16x16xf32, #tpu.memory_space<vmem>>, vector<1x16x16xf32>
    %900 = vector.shape_cast %899 : vector<1x16x16xf32> to vector<16x16xf32>
    %cst_334 = arith.constant dense<0.000000e+00> : vector<16x10xf32>
    %901 = tpu.matmul %900, %898, %cst_334 {dimension_numbers = #tpu.dot_dimension_numbers<[1], [0], [0], [1], [0, 0, 1, 1], [], []>} : vector<16x16xf32>, vector<16x10xf32>, vector<16x10xf32> -> vector<16x10xf32>
    %902 = arith.addf %895, %901 : vector<16x10xf32>
    %cst_335 = arith.constant 0.000000e+00 : f32
    %903 = vector.broadcast %cst_335 : f32 to vector<16x4xf32>
    %904 = vector.extract_strided_slice %891 {offsets = [0, 0], sizes = [16, 6], strides = [1, 1]} : vector<16x10xf32> to vector<16x6xf32>
    %905 = tpu.concatenate %903, %904 in 1 : vector<16x4xf32>, vector<16x6xf32> -> vector<16x10xf32>
    %c1_336 = arith.constant 1 : index
    %c0_337 = arith.constant 0 : index
    %c0_338 = arith.constant 0 : index
    %906 = vector.load %arg49[%c1_336, %c0_337, %c0_338] : memref<3x16x16xf32, #tpu.memory_space<vmem>>, vector<1x16x16xf32>
    %907 = vector.shape_cast %906 : vector<1x16x16xf32> to vector<16x16xf32>
    %cst_339 = arith.constant dense<0.000000e+00> : vector<16x10xf32>
    %908 = tpu.matmul %907, %905, %cst_339 {dimension_numbers = #tpu.dot_dimension_numbers<[1], [0], [0], [1], [0, 0, 1, 1], [], []>} : vector<16x16xf32>, vector<16x10xf32>, vector<16x10xf32> -> vector<16x10xf32>
    %909 = arith.addf %902, %908 : vector<16x10xf32>
    %c2_340 = arith.constant 2 : index
    %c0_341 = arith.constant 0 : index
    %c0_342 = arith.constant 0 : index
    %910 = vector.load %arg49[%c2_340, %c0_341, %c0_342] : memref<3x16x16xf32, #tpu.memory_space<vmem>>, vector<1x16x16xf32>
    %911 = vector.shape_cast %910 : vector<1x16x16xf32> to vector<16x16xf32>
    %cst_343 = arith.constant dense<0.000000e+00> : vector<16x10xf32>
    %912 = tpu.matmul %911, %891, %cst_343 {dimension_numbers = #tpu.dot_dimension_numbers<[1], [0], [0], [1], [0, 0, 1, 1], [], []>} : vector<16x16xf32>, vector<16x10xf32>, vector<16x10xf32> -> vector<16x10xf32>
    %913 = arith.addf %909, %912 : vector<16x10xf32>
    %cst_344 = arith.constant 0.000000e+00 : f32
    %914 = vector.broadcast %cst_344 : f32 to vector<16x10xf32>
    %915 = arith.maximumf %913, %914 : vector<16x10xf32>
    %916 = arith.addf %915, %867 : vector<16x10xf32>
    %cst_345 = arith.constant 0.000000e+00 : f32
    %917 = vector.broadcast %cst_345 : f32 to vector<16x10xf32>
    %918 = arith.maximumf %916, %917 : vector<16x10xf32>
    %919 = vector.extract_strided_slice %918 {offsets = [15, 0], sizes = [1, 10], strides = [1, 1]} : vector<16x10xf32> to vector<1x10xf32>
    %920 = vector.extract_strided_slice %759 {offsets = [8, 0], sizes = [8, 10], strides = [1, 1]} : vector<16x10xf32> to vector<8x10xf32>
    %cst_346 = arith.constant 0.000000e+00 : f32
    %921 = vector.broadcast %cst_346 : f32 to vector<16x10xf32>
    %c0_347 = arith.constant 0 : index
    %c0_348 = arith.constant 0 : index
    %922 = vector.load %arg36[%c0_347, %c0_348] : memref<16x1xf32, #tpu.memory_space<vmem>>, vector<16x1xf32>
    %923 = vector.broadcast %922 : vector<16x1xf32> to vector<16x10xf32>
    %924 = arith.addf %921, %923 : vector<16x10xf32>
    %cst_349 = arith.constant 0.000000e+00 : f32
    %925 = vector.broadcast %cst_349 : f32 to vector<8x2xf32>
    %926 = vector.extract_strided_slice %920 {offsets = [0, 0], sizes = [8, 8], strides = [1, 1]} : vector<8x10xf32> to vector<8x8xf32>
    %927 = tpu.concatenate %925, %926 in 1 : vector<8x2xf32>, vector<8x8xf32> -> vector<8x10xf32>
    %c0_350 = arith.constant 0 : index
    %c0_351 = arith.constant 0 : index
    %c0_352 = arith.constant 0 : index
    %928 = vector.load %arg39[%c0_350, %c0_351, %c0_352] : memref<3x16x8xf32, #tpu.memory_space<vmem>>, vector<1x16x8xf32>
    %929 = vector.shape_cast %928 : vector<1x16x8xf32> to vector<16x8xf32>
    %cst_353 = arith.constant dense<0.000000e+00> : vector<16x10xf32>
    %930 = tpu.matmul %929, %927, %cst_353 {dimension_numbers = #tpu.dot_dimension_numbers<[1], [0], [0], [1], [0, 0, 1, 1], [], []>} : vector<16x8xf32>, vector<8x10xf32>, vector<16x10xf32> -> vector<16x10xf32>
    %931 = arith.addf %924, %930 : vector<16x10xf32>
    %cst_354 = arith.constant 0.000000e+00 : f32
    %932 = vector.broadcast %cst_354 : f32 to vector<8x1xf32>
    %933 = vector.extract_strided_slice %920 {offsets = [0, 0], sizes = [8, 9], strides = [1, 1]} : vector<8x10xf32> to vector<8x9xf32>
    %934 = tpu.concatenate %932, %933 in 1 : vector<8x1xf32>, vector<8x9xf32> -> vector<8x10xf32>
    %c1_355 = arith.constant 1 : index
    %c0_356 = arith.constant 0 : index
    %c0_357 = arith.constant 0 : index
    %935 = vector.load %arg39[%c1_355, %c0_356, %c0_357] : memref<3x16x8xf32, #tpu.memory_space<vmem>>, vector<1x16x8xf32>
    %936 = vector.shape_cast %935 : vector<1x16x8xf32> to vector<16x8xf32>
    %cst_358 = arith.constant dense<0.000000e+00> : vector<16x10xf32>
    %937 = tpu.matmul %936, %934, %cst_358 {dimension_numbers = #tpu.dot_dimension_numbers<[1], [0], [0], [1], [0, 0, 1, 1], [], []>} : vector<16x8xf32>, vector<8x10xf32>, vector<16x10xf32> -> vector<16x10xf32>
    %938 = arith.addf %931, %937 : vector<16x10xf32>
    %c2_359 = arith.constant 2 : index
    %c0_360 = arith.constant 0 : index
    %c0_361 = arith.constant 0 : index
    %939 = vector.load %arg39[%c2_359, %c0_360, %c0_361] : memref<3x16x8xf32, #tpu.memory_space<vmem>>, vector<1x16x8xf32>
    %940 = vector.shape_cast %939 : vector<1x16x8xf32> to vector<16x8xf32>
    %cst_362 = arith.constant dense<0.000000e+00> : vector<16x10xf32>
    %941 = tpu.matmul %940, %920, %cst_362 {dimension_numbers = #tpu.dot_dimension_numbers<[1], [0], [0], [1], [0, 0, 1, 1], [], []>} : vector<16x8xf32>, vector<8x10xf32>, vector<16x10xf32> -> vector<16x10xf32>
    %942 = arith.addf %938, %941 : vector<16x10xf32>
    %cst_363 = arith.constant 0.000000e+00 : f32
    %943 = vector.broadcast %cst_363 : f32 to vector<16x10xf32>
    %944 = arith.maximumf %942, %943 : vector<16x10xf32>
    %cst_364 = arith.constant 0.000000e+00 : f32
    %945 = vector.broadcast %cst_364 : f32 to vector<16x10xf32>
    %c0_365 = arith.constant 0 : index
    %c0_366 = arith.constant 0 : index
    %946 = vector.load %arg37[%c0_365, %c0_366] : memref<16x1xf32, #tpu.memory_space<vmem>>, vector<16x1xf32>
    %947 = vector.broadcast %946 : vector<16x1xf32> to vector<16x10xf32>
    %948 = arith.addf %945, %947 : vector<16x10xf32>
    %cst_367 = arith.constant 0.000000e+00 : f32
    %949 = vector.broadcast %cst_367 : f32 to vector<16x2xf32>
    %950 = vector.extract_strided_slice %944 {offsets = [0, 0], sizes = [16, 8], strides = [1, 1]} : vector<16x10xf32> to vector<16x8xf32>
    %951 = tpu.concatenate %949, %950 in 1 : vector<16x2xf32>, vector<16x8xf32> -> vector<16x10xf32>
    %c0_368 = arith.constant 0 : index
    %c0_369 = arith.constant 0 : index
    %c0_370 = arith.constant 0 : index
    %952 = vector.load %arg40[%c0_368, %c0_369, %c0_370] : memref<3x16x16xf32, #tpu.memory_space<vmem>>, vector<1x16x16xf32>
    %953 = vector.shape_cast %952 : vector<1x16x16xf32> to vector<16x16xf32>
    %cst_371 = arith.constant dense<0.000000e+00> : vector<16x10xf32>
    %954 = tpu.matmul %953, %951, %cst_371 {dimension_numbers = #tpu.dot_dimension_numbers<[1], [0], [0], [1], [0, 0, 1, 1], [], []>} : vector<16x16xf32>, vector<16x10xf32>, vector<16x10xf32> -> vector<16x10xf32>
    %955 = arith.addf %948, %954 : vector<16x10xf32>
    %cst_372 = arith.constant 0.000000e+00 : f32
    %956 = vector.broadcast %cst_372 : f32 to vector<16x1xf32>
    %957 = vector.extract_strided_slice %944 {offsets = [0, 0], sizes = [16, 9], strides = [1, 1]} : vector<16x10xf32> to vector<16x9xf32>
    %958 = tpu.concatenate %956, %957 in 1 : vector<16x1xf32>, vector<16x9xf32> -> vector<16x10xf32>
    %c1_373 = arith.constant 1 : index
    %c0_374 = arith.constant 0 : index
    %c0_375 = arith.constant 0 : index
    %959 = vector.load %arg40[%c1_373, %c0_374, %c0_375] : memref<3x16x16xf32, #tpu.memory_space<vmem>>, vector<1x16x16xf32>
    %960 = vector.shape_cast %959 : vector<1x16x16xf32> to vector<16x16xf32>
    %cst_376 = arith.constant dense<0.000000e+00> : vector<16x10xf32>
    %961 = tpu.matmul %960, %958, %cst_376 {dimension_numbers = #tpu.dot_dimension_numbers<[1], [0], [0], [1], [0, 0, 1, 1], [], []>} : vector<16x16xf32>, vector<16x10xf32>, vector<16x10xf32> -> vector<16x10xf32>
    %962 = arith.addf %955, %961 : vector<16x10xf32>
    %c2_377 = arith.constant 2 : index
    %c0_378 = arith.constant 0 : index
    %c0_379 = arith.constant 0 : index
    %963 = vector.load %arg40[%c2_377, %c0_378, %c0_379] : memref<3x16x16xf32, #tpu.memory_space<vmem>>, vector<1x16x16xf32>
    %964 = vector.shape_cast %963 : vector<1x16x16xf32> to vector<16x16xf32>
    %cst_380 = arith.constant dense<0.000000e+00> : vector<16x10xf32>
    %965 = tpu.matmul %964, %944, %cst_380 {dimension_numbers = #tpu.dot_dimension_numbers<[1], [0], [0], [1], [0, 0, 1, 1], [], []>} : vector<16x16xf32>, vector<16x10xf32>, vector<16x10xf32> -> vector<16x10xf32>
    %966 = arith.addf %962, %965 : vector<16x10xf32>
    %cst_381 = arith.constant 0.000000e+00 : f32
    %967 = vector.broadcast %cst_381 : f32 to vector<16x10xf32>
    %968 = arith.maximumf %966, %967 : vector<16x10xf32>
    %c0_382 = arith.constant 0 : index
    %c0_383 = arith.constant 0 : index
    %969 = vector.load %arg41[%c0_382, %c0_383] : memref<16x8xf32, #tpu.memory_space<vmem>>, vector<16x8xf32>
    %cst_384 = arith.constant dense<0.000000e+00> : vector<16x10xf32>
    %970 = tpu.matmul %969, %920, %cst_384 {dimension_numbers = #tpu.dot_dimension_numbers<[1], [0], [0], [1], [0, 0, 1, 1], [], []>} : vector<16x8xf32>, vector<8x10xf32>, vector<16x10xf32> -> vector<16x10xf32>
    %c0_385 = arith.constant 0 : index
    %c0_386 = arith.constant 0 : index
    %971 = vector.load %arg38[%c0_385, %c0_386] : memref<16x1xf32, #tpu.memory_space<vmem>>, vector<16x1xf32>
    %972 = vector.broadcast %971 : vector<16x1xf32> to vector<16x10xf32>
    %973 = arith.addf %970, %972 : vector<16x10xf32>
    %974 = arith.addf %968, %973 : vector<16x10xf32>
    %cst_387 = arith.constant 0.000000e+00 : f32
    %975 = vector.broadcast %cst_387 : f32 to vector<16x10xf32>
    %976 = arith.maximumf %974, %975 : vector<16x10xf32>
    %cst_388 = arith.constant 0.000000e+00 : f32
    %977 = vector.broadcast %cst_388 : f32 to vector<16x10xf32>
    %c0_389 = arith.constant 0 : index
    %c0_390 = arith.constant 0 : index
    %978 = vector.load %arg42[%c0_389, %c0_390] : memref<16x1xf32, #tpu.memory_space<vmem>>, vector<16x1xf32>
    %979 = vector.broadcast %978 : vector<16x1xf32> to vector<16x10xf32>
    %980 = arith.addf %977, %979 : vector<16x10xf32>
    %cst_391 = arith.constant 0.000000e+00 : f32
    %981 = vector.broadcast %cst_391 : f32 to vector<16x4xf32>
    %982 = vector.extract_strided_slice %976 {offsets = [0, 0], sizes = [16, 6], strides = [1, 1]} : vector<16x10xf32> to vector<16x6xf32>
    %983 = tpu.concatenate %981, %982 in 1 : vector<16x4xf32>, vector<16x6xf32> -> vector<16x10xf32>
    %c0_392 = arith.constant 0 : index
    %c0_393 = arith.constant 0 : index
    %c0_394 = arith.constant 0 : index
    %984 = vector.load %arg44[%c0_392, %c0_393, %c0_394] : memref<3x16x16xf32, #tpu.memory_space<vmem>>, vector<1x16x16xf32>
    %985 = vector.shape_cast %984 : vector<1x16x16xf32> to vector<16x16xf32>
    %cst_395 = arith.constant dense<0.000000e+00> : vector<16x10xf32>
    %986 = tpu.matmul %985, %983, %cst_395 {dimension_numbers = #tpu.dot_dimension_numbers<[1], [0], [0], [1], [0, 0, 1, 1], [], []>} : vector<16x16xf32>, vector<16x10xf32>, vector<16x10xf32> -> vector<16x10xf32>
    %987 = arith.addf %980, %986 : vector<16x10xf32>
    %cst_396 = arith.constant 0.000000e+00 : f32
    %988 = vector.broadcast %cst_396 : f32 to vector<16x2xf32>
    %989 = vector.extract_strided_slice %976 {offsets = [0, 0], sizes = [16, 8], strides = [1, 1]} : vector<16x10xf32> to vector<16x8xf32>
    %990 = tpu.concatenate %988, %989 in 1 : vector<16x2xf32>, vector<16x8xf32> -> vector<16x10xf32>
    %c1_397 = arith.constant 1 : index
    %c0_398 = arith.constant 0 : index
    %c0_399 = arith.constant 0 : index
    %991 = vector.load %arg44[%c1_397, %c0_398, %c0_399] : memref<3x16x16xf32, #tpu.memory_space<vmem>>, vector<1x16x16xf32>
    %992 = vector.shape_cast %991 : vector<1x16x16xf32> to vector<16x16xf32>
    %cst_400 = arith.constant dense<0.000000e+00> : vector<16x10xf32>
    %993 = tpu.matmul %992, %990, %cst_400 {dimension_numbers = #tpu.dot_dimension_numbers<[1], [0], [0], [1], [0, 0, 1, 1], [], []>} : vector<16x16xf32>, vector<16x10xf32>, vector<16x10xf32> -> vector<16x10xf32>
    %994 = arith.addf %987, %993 : vector<16x10xf32>
    %c2_401 = arith.constant 2 : index
    %c0_402 = arith.constant 0 : index
    %c0_403 = arith.constant 0 : index
    %995 = vector.load %arg44[%c2_401, %c0_402, %c0_403] : memref<3x16x16xf32, #tpu.memory_space<vmem>>, vector<1x16x16xf32>
    %996 = vector.shape_cast %995 : vector<1x16x16xf32> to vector<16x16xf32>
    %cst_404 = arith.constant dense<0.000000e+00> : vector<16x10xf32>
    %997 = tpu.matmul %996, %976, %cst_404 {dimension_numbers = #tpu.dot_dimension_numbers<[1], [0], [0], [1], [0, 0, 1, 1], [], []>} : vector<16x16xf32>, vector<16x10xf32>, vector<16x10xf32> -> vector<16x10xf32>
    %998 = arith.addf %994, %997 : vector<16x10xf32>
    %cst_405 = arith.constant 0.000000e+00 : f32
    %999 = vector.broadcast %cst_405 : f32 to vector<16x10xf32>
    %1000 = arith.maximumf %998, %999 : vector<16x10xf32>
    %cst_406 = arith.constant 0.000000e+00 : f32
    %1001 = vector.broadcast %cst_406 : f32 to vector<16x10xf32>
    %c0_407 = arith.constant 0 : index
    %c0_408 = arith.constant 0 : index
    %1002 = vector.load %arg43[%c0_407, %c0_408] : memref<16x1xf32, #tpu.memory_space<vmem>>, vector<16x1xf32>
    %1003 = vector.broadcast %1002 : vector<16x1xf32> to vector<16x10xf32>
    %1004 = arith.addf %1001, %1003 : vector<16x10xf32>
    %cst_409 = arith.constant 0.000000e+00 : f32
    %1005 = vector.broadcast %cst_409 : f32 to vector<16x4xf32>
    %1006 = vector.extract_strided_slice %1000 {offsets = [0, 0], sizes = [16, 6], strides = [1, 1]} : vector<16x10xf32> to vector<16x6xf32>
    %1007 = tpu.concatenate %1005, %1006 in 1 : vector<16x4xf32>, vector<16x6xf32> -> vector<16x10xf32>
    %c0_410 = arith.constant 0 : index
    %c0_411 = arith.constant 0 : index
    %c0_412 = arith.constant 0 : index
    %1008 = vector.load %arg45[%c0_410, %c0_411, %c0_412] : memref<3x16x16xf32, #tpu.memory_space<vmem>>, vector<1x16x16xf32>
    %1009 = vector.shape_cast %1008 : vector<1x16x16xf32> to vector<16x16xf32>
    %cst_413 = arith.constant dense<0.000000e+00> : vector<16x10xf32>
    %1010 = tpu.matmul %1009, %1007, %cst_413 {dimension_numbers = #tpu.dot_dimension_numbers<[1], [0], [0], [1], [0, 0, 1, 1], [], []>} : vector<16x16xf32>, vector<16x10xf32>, vector<16x10xf32> -> vector<16x10xf32>
    %1011 = arith.addf %1004, %1010 : vector<16x10xf32>
    %cst_414 = arith.constant 0.000000e+00 : f32
    %1012 = vector.broadcast %cst_414 : f32 to vector<16x2xf32>
    %1013 = vector.extract_strided_slice %1000 {offsets = [0, 0], sizes = [16, 8], strides = [1, 1]} : vector<16x10xf32> to vector<16x8xf32>
    %1014 = tpu.concatenate %1012, %1013 in 1 : vector<16x2xf32>, vector<16x8xf32> -> vector<16x10xf32>
    %c1_415 = arith.constant 1 : index
    %c0_416 = arith.constant 0 : index
    %c0_417 = arith.constant 0 : index
    %1015 = vector.load %arg45[%c1_415, %c0_416, %c0_417] : memref<3x16x16xf32, #tpu.memory_space<vmem>>, vector<1x16x16xf32>
    %1016 = vector.shape_cast %1015 : vector<1x16x16xf32> to vector<16x16xf32>
    %cst_418 = arith.constant dense<0.000000e+00> : vector<16x10xf32>
    %1017 = tpu.matmul %1016, %1014, %cst_418 {dimension_numbers = #tpu.dot_dimension_numbers<[1], [0], [0], [1], [0, 0, 1, 1], [], []>} : vector<16x16xf32>, vector<16x10xf32>, vector<16x10xf32> -> vector<16x10xf32>
    %1018 = arith.addf %1011, %1017 : vector<16x10xf32>
    %c2_419 = arith.constant 2 : index
    %c0_420 = arith.constant 0 : index
    %c0_421 = arith.constant 0 : index
    %1019 = vector.load %arg45[%c2_419, %c0_420, %c0_421] : memref<3x16x16xf32, #tpu.memory_space<vmem>>, vector<1x16x16xf32>
    %1020 = vector.shape_cast %1019 : vector<1x16x16xf32> to vector<16x16xf32>
    %cst_422 = arith.constant dense<0.000000e+00> : vector<16x10xf32>
    %1021 = tpu.matmul %1020, %1000, %cst_422 {dimension_numbers = #tpu.dot_dimension_numbers<[1], [0], [0], [1], [0, 0, 1, 1], [], []>} : vector<16x16xf32>, vector<16x10xf32>, vector<16x10xf32> -> vector<16x10xf32>
    %1022 = arith.addf %1018, %1021 : vector<16x10xf32>
    %cst_423 = arith.constant 0.000000e+00 : f32
    %1023 = vector.broadcast %cst_423 : f32 to vector<16x10xf32>
    %1024 = arith.maximumf %1022, %1023 : vector<16x10xf32>
    %1025 = arith.addf %1024, %976 : vector<16x10xf32>
    %cst_424 = arith.constant 0.000000e+00 : f32
    %1026 = vector.broadcast %cst_424 : f32 to vector<16x10xf32>
    %1027 = arith.maximumf %1025, %1026 : vector<16x10xf32>
    %cst_425 = arith.constant 0.000000e+00 : f32
    %1028 = vector.broadcast %cst_425 : f32 to vector<16x10xf32>
    %c0_426 = arith.constant 0 : index
    %c0_427 = arith.constant 0 : index
    %1029 = vector.load %arg46[%c0_426, %c0_427] : memref<16x1xf32, #tpu.memory_space<vmem>>, vector<16x1xf32>
    %1030 = vector.broadcast %1029 : vector<16x1xf32> to vector<16x10xf32>
    %1031 = arith.addf %1028, %1030 : vector<16x10xf32>
    %cst_428 = arith.constant 0.000000e+00 : f32
    %1032 = vector.broadcast %cst_428 : f32 to vector<16x8xf32>
    %1033 = vector.extract_strided_slice %1027 {offsets = [0, 0], sizes = [16, 2], strides = [1, 1]} : vector<16x10xf32> to vector<16x2xf32>
    %1034 = tpu.concatenate %1032, %1033 in 1 : vector<16x8xf32>, vector<16x2xf32> -> vector<16x10xf32>
    %c0_429 = arith.constant 0 : index
    %c0_430 = arith.constant 0 : index
    %c0_431 = arith.constant 0 : index
    %1035 = vector.load %arg48[%c0_429, %c0_430, %c0_431] : memref<3x16x16xf32, #tpu.memory_space<vmem>>, vector<1x16x16xf32>
    %1036 = vector.shape_cast %1035 : vector<1x16x16xf32> to vector<16x16xf32>
    %cst_432 = arith.constant dense<0.000000e+00> : vector<16x10xf32>
    %1037 = tpu.matmul %1036, %1034, %cst_432 {dimension_numbers = #tpu.dot_dimension_numbers<[1], [0], [0], [1], [0, 0, 1, 1], [], []>} : vector<16x16xf32>, vector<16x10xf32>, vector<16x10xf32> -> vector<16x10xf32>
    %1038 = arith.addf %1031, %1037 : vector<16x10xf32>
    %cst_433 = arith.constant 0.000000e+00 : f32
    %1039 = vector.broadcast %cst_433 : f32 to vector<16x4xf32>
    %1040 = vector.extract_strided_slice %1027 {offsets = [0, 0], sizes = [16, 6], strides = [1, 1]} : vector<16x10xf32> to vector<16x6xf32>
    %1041 = tpu.concatenate %1039, %1040 in 1 : vector<16x4xf32>, vector<16x6xf32> -> vector<16x10xf32>
    %c1_434 = arith.constant 1 : index
    %c0_435 = arith.constant 0 : index
    %c0_436 = arith.constant 0 : index
    %1042 = vector.load %arg48[%c1_434, %c0_435, %c0_436] : memref<3x16x16xf32, #tpu.memory_space<vmem>>, vector<1x16x16xf32>
    %1043 = vector.shape_cast %1042 : vector<1x16x16xf32> to vector<16x16xf32>
    %cst_437 = arith.constant dense<0.000000e+00> : vector<16x10xf32>
    %1044 = tpu.matmul %1043, %1041, %cst_437 {dimension_numbers = #tpu.dot_dimension_numbers<[1], [0], [0], [1], [0, 0, 1, 1], [], []>} : vector<16x16xf32>, vector<16x10xf32>, vector<16x10xf32> -> vector<16x10xf32>
    %1045 = arith.addf %1038, %1044 : vector<16x10xf32>
    %c2_438 = arith.constant 2 : index
    %c0_439 = arith.constant 0 : index
    %c0_440 = arith.constant 0 : index
    %1046 = vector.load %arg48[%c2_438, %c0_439, %c0_440] : memref<3x16x16xf32, #tpu.memory_space<vmem>>, vector<1x16x16xf32>
    %1047 = vector.shape_cast %1046 : vector<1x16x16xf32> to vector<16x16xf32>
    %cst_441 = arith.constant dense<0.000000e+00> : vector<16x10xf32>
    %1048 = tpu.matmul %1047, %1027, %cst_441 {dimension_numbers = #tpu.dot_dimension_numbers<[1], [0], [0], [1], [0, 0, 1, 1], [], []>} : vector<16x16xf32>, vector<16x10xf32>, vector<16x10xf32> -> vector<16x10xf32>
    %1049 = arith.addf %1045, %1048 : vector<16x10xf32>
    %cst_442 = arith.constant 0.000000e+00 : f32
    %1050 = vector.broadcast %cst_442 : f32 to vector<16x10xf32>
    %1051 = arith.maximumf %1049, %1050 : vector<16x10xf32>
    %cst_443 = arith.constant 0.000000e+00 : f32
    %1052 = vector.broadcast %cst_443 : f32 to vector<16x10xf32>
    %c0_444 = arith.constant 0 : index
    %c0_445 = arith.constant 0 : index
    %1053 = vector.load %arg47[%c0_444, %c0_445] : memref<16x1xf32, #tpu.memory_space<vmem>>, vector<16x1xf32>
    %1054 = vector.broadcast %1053 : vector<16x1xf32> to vector<16x10xf32>
    %1055 = arith.addf %1052, %1054 : vector<16x10xf32>
    %cst_446 = arith.constant 0.000000e+00 : f32
    %1056 = vector.broadcast %cst_446 : f32 to vector<16x8xf32>
    %1057 = vector.extract_strided_slice %1051 {offsets = [0, 0], sizes = [16, 2], strides = [1, 1]} : vector<16x10xf32> to vector<16x2xf32>
    %1058 = tpu.concatenate %1056, %1057 in 1 : vector<16x8xf32>, vector<16x2xf32> -> vector<16x10xf32>
    %c0_447 = arith.constant 0 : index
    %c0_448 = arith.constant 0 : index
    %c0_449 = arith.constant 0 : index
    %1059 = vector.load %arg49[%c0_447, %c0_448, %c0_449] : memref<3x16x16xf32, #tpu.memory_space<vmem>>, vector<1x16x16xf32>
    %1060 = vector.shape_cast %1059 : vector<1x16x16xf32> to vector<16x16xf32>
    %cst_450 = arith.constant dense<0.000000e+00> : vector<16x10xf32>
    %1061 = tpu.matmul %1060, %1058, %cst_450 {dimension_numbers = #tpu.dot_dimension_numbers<[1], [0], [0], [1], [0, 0, 1, 1], [], []>} : vector<16x16xf32>, vector<16x10xf32>, vector<16x10xf32> -> vector<16x10xf32>
    %1062 = arith.addf %1055, %1061 : vector<16x10xf32>
    %cst_451 = arith.constant 0.000000e+00 : f32
    %1063 = vector.broadcast %cst_451 : f32 to vector<16x4xf32>
    %1064 = vector.extract_strided_slice %1051 {offsets = [0, 0], sizes = [16, 6], strides = [1, 1]} : vector<16x10xf32> to vector<16x6xf32>
    %1065 = tpu.concatenate %1063, %1064 in 1 : vector<16x4xf32>, vector<16x6xf32> -> vector<16x10xf32>
    %c1_452 = arith.constant 1 : index
    %c0_453 = arith.constant 0 : index
    %c0_454 = arith.constant 0 : index
    %1066 = vector.load %arg49[%c1_452, %c0_453, %c0_454] : memref<3x16x16xf32, #tpu.memory_space<vmem>>, vector<1x16x16xf32>
    %1067 = vector.shape_cast %1066 : vector<1x16x16xf32> to vector<16x16xf32>
    %cst_455 = arith.constant dense<0.000000e+00> : vector<16x10xf32>
    %1068 = tpu.matmul %1067, %1065, %cst_455 {dimension_numbers = #tpu.dot_dimension_numbers<[1], [0], [0], [1], [0, 0, 1, 1], [], []>} : vector<16x16xf32>, vector<16x10xf32>, vector<16x10xf32> -> vector<16x10xf32>
    %1069 = arith.addf %1062, %1068 : vector<16x10xf32>
    %c2_456 = arith.constant 2 : index
    %c0_457 = arith.constant 0 : index
    %c0_458 = arith.constant 0 : index
    %1070 = vector.load %arg49[%c2_456, %c0_457, %c0_458] : memref<3x16x16xf32, #tpu.memory_space<vmem>>, vector<1x16x16xf32>
    %1071 = vector.shape_cast %1070 : vector<1x16x16xf32> to vector<16x16xf32>
    %cst_459 = arith.constant dense<0.000000e+00> : vector<16x10xf32>
    %1072 = tpu.matmul %1071, %1051, %cst_459 {dimension_numbers = #tpu.dot_dimension_numbers<[1], [0], [0], [1], [0, 0, 1, 1], [], []>} : vector<16x16xf32>, vector<16x10xf32>, vector<16x10xf32> -> vector<16x10xf32>
    %1073 = arith.addf %1069, %1072 : vector<16x10xf32>
    %cst_460 = arith.constant 0.000000e+00 : f32
    %1074 = vector.broadcast %cst_460 : f32 to vector<16x10xf32>
    %1075 = arith.maximumf %1073, %1074 : vector<16x10xf32>
    %1076 = arith.addf %1075, %1027 : vector<16x10xf32>
    %cst_461 = arith.constant 0.000000e+00 : f32
    %1077 = vector.broadcast %cst_461 : f32 to vector<16x10xf32>
    %1078 = arith.maximumf %1076, %1077 : vector<16x10xf32>
    %1079 = vector.extract_strided_slice %1078 {offsets = [15, 0], sizes = [1, 10], strides = [1, 1]} : vector<16x10xf32> to vector<1x10xf32>
    %1080 = tpu.concatenate %919, %1079 in 0 : vector<1x10xf32>, vector<1x10xf32> -> vector<2x10xf32>
    %c0_462 = arith.constant 0 : index
    %c0_463 = arith.constant 0 : index
    %1081 = vector.load %arg30[%c0_462, %c0_463] : memref<10x8xf32, #tpu.memory_space<vmem>>, vector<10x8xf32>
    %cst_464 = arith.constant dense<0.000000e+00> : vector<2x8xf32>
    %1082 = tpu.matmul %1080, %1081, %cst_464 {dimension_numbers = #tpu.dot_dimension_numbers<[1], [0], [0], [1], [0, 0, 1, 1], [], []>} : vector<2x10xf32>, vector<10x8xf32>, vector<2x8xf32> -> vector<2x8xf32>
    %c0_465 = arith.constant 0 : index
    %c0_466 = arith.constant 0 : index
    %1083 = vector.load %arg28[%c0_465, %c0_466] : memref<1x8xf32, #tpu.memory_space<vmem>>, vector<1x8xf32>
    %1084 = vector.broadcast %1083 : vector<1x8xf32> to vector<2x8xf32>
    %1085 = arith.addf %1082, %1084 : vector<2x8xf32>
    %cst_467 = arith.constant 0.000000e+00 : f32
    %1086 = vector.broadcast %cst_467 : f32 to vector<2x8xf32>
    %1087 = arith.maximumf %1085, %1086 : vector<2x8xf32>
    %c0_468 = arith.constant 0 : index
    %c0_469 = arith.constant 0 : index
    %1088 = vector.load %arg31[%c0_468, %c0_469] : memref<8x4xf32, #tpu.memory_space<vmem>>, vector<8x4xf32>
    %cst_470 = arith.constant dense<0.000000e+00> : vector<2x4xf32>
    %1089 = tpu.matmul %1087, %1088, %cst_470 {dimension_numbers = #tpu.dot_dimension_numbers<[1], [0], [0], [1], [0, 0, 1, 1], [], []>} : vector<2x8xf32>, vector<8x4xf32>, vector<2x4xf32> -> vector<2x4xf32>
    %c0_471 = arith.constant 0 : index
    %c0_472 = arith.constant 0 : index
    %1090 = vector.load %arg29[%c0_471, %c0_472] : memref<1x4xf32, #tpu.memory_space<vmem>>, vector<1x4xf32>
    %1091 = vector.broadcast %1090 : vector<1x4xf32> to vector<2x4xf32>
    %1092 = arith.addf %1089, %1091 : vector<2x4xf32>
    %c0_473 = arith.constant 0 : index
    %c0_474 = arith.constant 0 : index
    %1093 = vector.load %arg50[%c0_473, %c0_474] : memref<2x4xf32, #tpu.memory_space<vmem>>, vector<2x4xf32>
    tpu.vector_store %arg50[%c0_473, %c0_474], %1092 {strides = array<i32>} : memref<2x4xf32, #tpu.memory_space<vmem>>, vector<2x4xf32>,
    return
  }
}

</mosaic_0001>

<llo_original>
// kernel: forward.1
$region0: #{forward.1}
  #allocation0 [shape = 'u32[]', space=smem, size = 0x4, offset = 0x4, fixed_abs, tag = 'smem constant byte address 0x4 - core index']
  #allocation1 [shape = 'u32[144,128]{1,0:T(1,128)}', space=vmem, size = 0x12000, scoped, tag = 'internal scratch']
  %s0 = inlined_call_operand.smem [shape: u32[51], index: -1, kind: input, shape index: {}]
  %s1 = sld [smem:[%s0]]
  %s2 = scalar_lea.smem %s0, 1
  %s3 = sld [smem:[%s2]]
  %s4 = scalar_lea.smem %s0, 2
  %s5 = sld [smem:[%s4]]
  %s6 = scalar_lea.smem %s0, 3
  %s7 = sld [smem:[%s6]]
  %s8 = scalar_lea.smem %s0, 4
  %s9 = sld [smem:[%s8]]
  %s10 = scalar_lea.smem %s0, 5
  %s11 = sld [smem:[%s10]]
  %s12 = scalar_lea.smem %s0, 6
  %s13 = sld [smem:[%s12]]
  %s14 = scalar_lea.smem %s0, 7
  %s15 = sld [smem:[%s14]]
  %s16 = scalar_lea.smem %s0, 8
  %s17 = sld [smem:[%s16]]
  %s18 = scalar_lea.smem %s0, 9
  %s19 = sld [smem:[%s18]]
  %s20 = scalar_lea.smem %s0, 10
  %s21 = sld [smem:[%s20]]
  %s22 = scalar_lea.smem %s0, 11
  %s23 = sld [smem:[%s22]]
  %s24 = scalar_lea.smem %s0, 12
  %s25 = sld [smem:[%s24]]
  %s26 = scalar_lea.smem %s0, 13
  %s27 = sld [smem:[%s26]]
  %s28 = scalar_lea.smem %s0, 14
  %s29 = sld [smem:[%s28]]
  %s30 = scalar_lea.smem %s0, 15
  %s31 = sld [smem:[%s30]]
  %s32 = scalar_lea.smem %s0, 16
  %s33 = sld [smem:[%s32]]
  %s34 = scalar_lea.smem %s0, 17
  %s35 = sld [smem:[%s34]]
  %s36 = scalar_lea.smem %s0, 18
  %s37 = sld [smem:[%s36]]
  %s38 = scalar_lea.smem %s0, 19
  %s39 = sld [smem:[%s38]]
  %s40 = scalar_lea.smem %s0, 20
  %s41 = sld [smem:[%s40]]
  %s42 = scalar_lea.smem %s0, 21
  %s43 = sld [smem:[%s42]]
  %s44 = scalar_lea.smem %s0, 22
  %s45 = sld [smem:[%s44]]
  %s46 = scalar_lea.smem %s0, 23
  %s47 = sld [smem:[%s46]]
  %s48 = scalar_lea.smem %s0, 24
  %s49 = sld [smem:[%s48]]
  %s50 = scalar_lea.smem %s0, 25
  %s51 = sld [smem:[%s50]]
  %s52 = scalar_lea.smem %s0, 26
  %s53 = sld [smem:[%s52]]
  %s54 = scalar_lea.smem %s0, 27
  %s55 = sld [smem:[%s54]]
  %s56 = scalar_lea.smem %s0, 28
  %s57 = sld [smem:[%s56]]
  %s58 = scalar_lea.smem %s0, 29
  %s59 = sld [smem:[%s58]]
  %s60 = scalar_lea.smem %s0, 30
  %s61 = sld [smem:[%s60]]
  %s62 = scalar_lea.smem %s0, 31
  %s63 = sld [smem:[%s62]]
  %s64 = scalar_lea.smem %s0, 32
  %s65 = sld [smem:[%s64]]
  %s66 = scalar_lea.smem %s0, 33
  %s67 = sld [smem:[%s66]]
  %s68 = scalar_lea.smem %s0, 34
  %s69 = sld [smem:[%s68]]
  %s70 = scalar_lea.smem %s0, 35
  %s71 = sld [smem:[%s70]]
  %s72 = scalar_lea.smem %s0, 36
  %s73 = sld [smem:[%s72]]
  %s74 = scalar_lea.smem %s0, 37
  %s75 = sld [smem:[%s74]]
  %s76 = scalar_lea.smem %s0, 38
  %s77 = sld [smem:[%s76]]
  %s78 = scalar_lea.smem %s0, 39
  %s79 = sld [smem:[%s78]]
  %s80 = scalar_lea.smem %s0, 40
  %s81 = sld [smem:[%s80]]
  %s82 = scalar_lea.smem %s0, 41
  %s83 = sld [smem:[%s82]]
  %s84 = scalar_lea.smem %s0, 42
  %s85 = sld [smem:[%s84]]
  %s86 = scalar_lea.smem %s0, 43
  %s87 = sld [smem:[%s86]]
  %s88 = scalar_lea.smem %s0, 44
  %s89 = sld [smem:[%s88]]
  %s90 = scalar_lea.smem %s0, 45
  %s91 = sld [smem:[%s90]]
  %s92 = scalar_lea.smem %s0, 46
  %s93 = sld [smem:[%s92]]
  %s94 = scalar_lea.smem %s0, 47
  %s95 = sld [smem:[%s94]]
  %s96 = scalar_lea.smem %s0, 48
  %s97 = sld [smem:[%s96]]
  %s98 = scalar_lea.smem %s0, 49
  %s99 = sld [smem:[%s98]]
  %s100 = scalar_lea.smem %s0, 50
  %s101 = sld [smem:[%s100]]
  %s102 = sld [smem:[#allocation0]]
  $region210: #{forward.1} parent=0
    _
  %s104 = ssub.s32 1, %s102
  %s105 = scalar_select 0, %s104, %s102
  $region1: #{forward.1} parent=0
    #allocation2 [shape = 'u8[1024]{0}', space=vmem, size = 0x400, scoped, tag = 'output window, operand 0, single buffered']
    #allocation3 [shape = 's32[1]{0}', space=sflag, size = 0x4, scoped, tag = 'scoped memory for forward.1']
    %106 = vsyncpa [#allocation3], 0
    // Predicated region
    $region2: #{forward.1} parent=1 // pred_check
      _
    $region3: #{forward.1} parent=1 // pred_check_branch
      %108 = sbr.rel (0) target = $region5
    $region4: #{forward.1} parent=1 // pred_region
      _
    $region5: #{forward.1} parent=1 // pred_fallthru
      _
    // Predicated region
    $region6: #{forward.1} parent=1 // pred_check
      _
    $region7: #{forward.1} parent=1 // pred_check_branch
      %110 = sbr.rel (0) target = $region9
    $region8: #{forward.1} parent=1 // pred_region
      _
    $region9: #{forward.1} parent=1 // pred_fallthru
      _
    // Predicated region
    $region10: #{forward.1} parent=1 // pred_check
      _
    $region11: #{forward.1} parent=1 // pred_check_branch
      %112 = sbr.rel (0) target = $region13
    $region12: #{forward.1} parent=1 // pred_region
      _
    $region13: #{forward.1} parent=1 // pred_fallthru
      _
    // Predicated region
    $region14: #{forward.1} parent=1 // pred_check
      _
    $region15: #{forward.1} parent=1 // pred_check_branch
      %114 = sbr.rel (0) target = $region17
    $region16: #{forward.1} parent=1 // pred_region
      _
    $region17: #{forward.1} parent=1 // pred_fallthru
      _
    // Predicated region
    $region18: #{forward.1} parent=1 // pred_check
      _
    $region19: #{forward.1} parent=1 // pred_check_branch
      %116 = sbr.rel (0) target = $region21
    $region20: #{forward.1} parent=1 // pred_region
      _
    $region21: #{forward.1} parent=1 // pred_fallthru
      _
    // Predicated region
    $region22: #{forward.1} parent=1 // pred_check
      _
    $region23: #{forward.1} parent=1 // pred_check_branch
      %118 = sbr.rel (0) target = $region25
    $region24: #{forward.1} parent=1 // pred_region
      _
    $region25: #{forward.1} parent=1 // pred_fallthru
      _
    // Predicated region
    $region26: #{forward.1} parent=1 // pred_check
      _
    $region27: #{forward.1} parent=1 // pred_check_branch
      %120 = sbr.rel (0) target = $region29
    $region28: #{forward.1} parent=1 // pred_region
      _
    $region29: #{forward.1} parent=1 // pred_fallthru
      _
    // Predicated region
    $region30: #{forward.1} parent=1 // pred_check
      _
    $region31: #{forward.1} parent=1 // pred_check_branch
      %122 = sbr.rel (0) target = $region33
    $region32: #{forward.1} parent=1 // pred_region
      _
    $region33: #{forward.1} parent=1 // pred_fallthru
      _
    // Predicated region
    $region34: #{forward.1} parent=1 // pred_check
      _
    $region35: #{forward.1} parent=1 // pred_check_branch
      %124 = sbr.rel (0) target = $region37
    $region36: #{forward.1} parent=1 // pred_region
      _
    $region37: #{forward.1} parent=1 // pred_fallthru
      _
    // Predicated region
    $region38: #{forward.1} parent=1 // pred_check
      _
    $region39: #{forward.1} parent=1 // pred_check_branch
      %126 = sbr.rel (0) target = $region41
    $region40: #{forward.1} parent=1 // pred_region
      _
    $region41: #{forward.1} parent=1 // pred_fallthru
      _
    // Predicated region
    $region42: #{forward.1} parent=1 // pred_check
      _
    $region43: #{forward.1} parent=1 // pred_check_branch
      %128 = sbr.rel (0) target = $region45
    $region44: #{forward.1} parent=1 // pred_region
      _
    $region45: #{forward.1} parent=1 // pred_fallthru
      _
    // Predicated region
    $region46: #{forward.1} parent=1 // pred_check
      _
    $region47: #{forward.1} parent=1 // pred_check_branch
      %130 = sbr.rel (0) target = $region49
    $region48: #{forward.1} parent=1 // pred_region
      _
    $region49: #{forward.1} parent=1 // pred_fallthru
      _
    // Predicated region
    $region50: #{forward.1} parent=1 // pred_check
      _
    $region51: #{forward.1} parent=1 // pred_check_branch
      %132 = sbr.rel (0) target = $region53
    $region52: #{forward.1} parent=1 // pred_region
      _
    $region53: #{forward.1} parent=1 // pred_fallthru
      _
    // Predicated region
    $region54: #{forward.1} parent=1 // pred_check
      _
    $region55: #{forward.1} parent=1 // pred_check_branch
      %134 = sbr.rel (0) target = $region57
    $region56: #{forward.1} parent=1 // pred_region
      _
    $region57: #{forward.1} parent=1 // pred_fallthru
      _
    // Predicated region
    $region58: #{forward.1} parent=1 // pred_check
      _
    $region59: #{forward.1} parent=1 // pred_check_branch
      %136 = sbr.rel (0) target = $region61
    $region60: #{forward.1} parent=1 // pred_region
      _
    $region61: #{forward.1} parent=1 // pred_fallthru
      _
    // Predicated region
    $region62: #{forward.1} parent=1 // pred_check
      _
    $region63: #{forward.1} parent=1 // pred_check_branch
      %138 = sbr.rel (0) target = $region65
    $region64: #{forward.1} parent=1 // pred_region
      _
    $region65: #{forward.1} parent=1 // pred_fallthru
      _
    // Predicated region
    $region66: #{forward.1} parent=1 // pred_check
      _
    $region67: #{forward.1} parent=1 // pred_check_branch
      %140 = sbr.rel (0) target = $region69
    $region68: #{forward.1} parent=1 // pred_region
      _
    $region69: #{forward.1} parent=1 // pred_fallthru
      _
    // Predicated region
    $region70: #{forward.1} parent=1 // pred_check
      _
    $region71: #{forward.1} parent=1 // pred_check_branch
      %142 = sbr.rel (0) target = $region73
    $region72: #{forward.1} parent=1 // pred_region
      _
    $region73: #{forward.1} parent=1 // pred_fallthru
      _
    // Predicated region
    $region74: #{forward.1} parent=1 // pred_check
      _
    $region75: #{forward.1} parent=1 // pred_check_branch
      %144 = sbr.rel (0) target = $region77
    $region76: #{forward.1} parent=1 // pred_region
      _
    $region77: #{forward.1} parent=1 // pred_fallthru
      _
    // Predicated region
    $region78: #{forward.1} parent=1 // pred_check
      _
    $region79: #{forward.1} parent=1 // pred_check_branch
      %146 = sbr.rel (0) target = $region81
    $region80: #{forward.1} parent=1 // pred_region
      _
    $region81: #{forward.1} parent=1 // pred_fallthru
      _
    // Predicated region
    $region82: #{forward.1} parent=1 // pred_check
      _
    $region83: #{forward.1} parent=1 // pred_check_branch
      %148 = sbr.rel (0) target = $region85
    $region84: #{forward.1} parent=1 // pred_region
      _
    $region85: #{forward.1} parent=1 // pred_fallthru
      _
    // Predicated region
    $region86: #{forward.1} parent=1 // pred_check
      _
    $region87: #{forward.1} parent=1 // pred_check_branch
      %150 = sbr.rel (0) target = $region89
    $region88: #{forward.1} parent=1 // pred_region
      _
    $region89: #{forward.1} parent=1 // pred_fallthru
      _
    // Predicated region
    $region90: #{forward.1} parent=1 // pred_check
      _
    $region91: #{forward.1} parent=1 // pred_check_branch
      %152 = sbr.rel (0) target = $region93
    $region92: #{forward.1} parent=1 // pred_region
      _
    $region93: #{forward.1} parent=1 // pred_fallthru
      _
    // Predicated region
    $region94: #{forward.1} parent=1 // pred_check
      _
    $region95: #{forward.1} parent=1 // pred_check_branch
      %154 = sbr.rel (0) target = $region97
    $region96: #{forward.1} parent=1 // pred_region
      _
    $region97: #{forward.1} parent=1 // pred_fallthru
      _
    // Predicated region
    $region98: #{forward.1} parent=1 // pred_check
      _
    $region99: #{forward.1} parent=1 // pred_check_branch
      %156 = sbr.rel (0) target = $region101
    $region100: #{forward.1} parent=1 // pred_region
      _
    $region101: #{forward.1} parent=1 // pred_fallthru
      _
    // Predicated region
    $region102: #{forward.1} parent=1 // pred_check
      _
    $region103: #{forward.1} parent=1 // pred_check_branch
      %158 = sbr.rel (0) target = $region105
    $region104: #{forward.1} parent=1 // pred_region
      _
    $region105: #{forward.1} parent=1 // pred_fallthru
      _
    // Predicated region
    $region106: #{forward.1} parent=1 // pred_check
      _
    $region107: #{forward.1} parent=1 // pred_check_branch
      %160 = sbr.rel (0) target = $region109
    $region108: #{forward.1} parent=1 // pred_region
      _
    $region109: #{forward.1} parent=1 // pred_fallthru
      _
    // Predicated region
    $region110: #{forward.1} parent=1 // pred_check
      _
    $region111: #{forward.1} parent=1 // pred_check_branch
      %162 = sbr.rel (0) target = $region113
    $region112: #{forward.1} parent=1 // pred_region
      _
    $region113: #{forward.1} parent=1 // pred_fallthru
      _
    // Predicated region
    $region114: #{forward.1} parent=1 // pred_check
      _
    $region115: #{forward.1} parent=1 // pred_check_branch
      %164 = sbr.rel (0) target = $region117
    $region116: #{forward.1} parent=1 // pred_region
      _
    $region117: #{forward.1} parent=1 // pred_fallthru
      _
    // Predicated region
    $region118: #{forward.1} parent=1 // pred_check
      _
    $region119: #{forward.1} parent=1 // pred_check_branch
      %166 = sbr.rel (0) target = $region121
    $region120: #{forward.1} parent=1 // pred_region
      _
    $region121: #{forward.1} parent=1 // pred_fallthru
      _
    // Predicated region
    $region122: #{forward.1} parent=1 // pred_check
      _
    $region123: #{forward.1} parent=1 // pred_check_branch
      %168 = sbr.rel (0) target = $region125
    $region124: #{forward.1} parent=1 // pred_region
      _
    $region125: #{forward.1} parent=1 // pred_fallthru
      _
    // Predicated region
    $region126: #{forward.1} parent=1 // pred_check
      _
    $region127: #{forward.1} parent=1 // pred_check_branch
      %170 = sbr.rel (0) target = $region129
    $region128: #{forward.1} parent=1 // pred_region
      _
    $region129: #{forward.1} parent=1 // pred_fallthru
      _
    // Predicated region
    $region130: #{forward.1} parent=1 // pred_check
      _
    $region131: #{forward.1} parent=1 // pred_check_branch
      %172 = sbr.rel (0) target = $region133
    $region132: #{forward.1} parent=1 // pred_region
      _
    $region133: #{forward.1} parent=1 // pred_fallthru
      _
    // Predicated region
    $region134: #{forward.1} parent=1 // pred_check
      _
    $region135: #{forward.1} parent=1 // pred_check_branch
      %174 = sbr.rel (0) target = $region137
    $region136: #{forward.1} parent=1 // pred_region
      _
    $region137: #{forward.1} parent=1 // pred_fallthru
      _
    // Predicated region
    $region138: #{forward.1} parent=1 // pred_check
      _
    $region139: #{forward.1} parent=1 // pred_check_branch
      %176 = sbr.rel (0) target = $region141
    $region140: #{forward.1} parent=1 // pred_region
      _
    $region141: #{forward.1} parent=1 // pred_fallthru
      _
    // Predicated region
    $region142: #{forward.1} parent=1 // pred_check
      _
    $region143: #{forward.1} parent=1 // pred_check_branch
      %178 = sbr.rel (0) target = $region145
    $region144: #{forward.1} parent=1 // pred_region
      _
    $region145: #{forward.1} parent=1 // pred_fallthru
      _
    // Predicated region
    $region146: #{forward.1} parent=1 // pred_check
      _
    $region147: #{forward.1} parent=1 // pred_check_branch
      %180 = sbr.rel (0) target = $region149
    $region148: #{forward.1} parent=1 // pred_region
      _
    $region149: #{forward.1} parent=1 // pred_fallthru
      _
    // Predicated region
    $region150: #{forward.1} parent=1 // pred_check
      _
    $region151: #{forward.1} parent=1 // pred_check_branch
      %182 = sbr.rel (0) target = $region153
    $region152: #{forward.1} parent=1 // pred_region
      _
    $region153: #{forward.1} parent=1 // pred_fallthru
      _
    // Predicated region
    $region154: #{forward.1} parent=1 // pred_check
      _
    $region155: #{forward.1} parent=1 // pred_check_branch
      %184 = sbr.rel (0) target = $region157
    $region156: #{forward.1} parent=1 // pred_region
      _
    $region157: #{forward.1} parent=1 // pred_fallthru
      _
    // Predicated region
    $region158: #{forward.1} parent=1 // pred_check
      _
    $region159: #{forward.1} parent=1 // pred_check_branch
      %186 = sbr.rel (0) target = $region161
    $region160: #{forward.1} parent=1 // pred_region
      _
    $region161: #{forward.1} parent=1 // pred_fallthru
      _
    // Predicated region
    $region162: #{forward.1} parent=1 // pred_check
      _
    $region163: #{forward.1} parent=1 // pred_check_branch
      %188 = sbr.rel (0) target = $region165
    $region164: #{forward.1} parent=1 // pred_region
      _
    $region165: #{forward.1} parent=1 // pred_fallthru
      _
    // Predicated region
    $region166: #{forward.1} parent=1 // pred_check
      _
    $region167: #{forward.1} parent=1 // pred_check_branch
      %190 = sbr.rel (0) target = $region169
    $region168: #{forward.1} parent=1 // pred_region
      _
    $region169: #{forward.1} parent=1 // pred_fallthru
      _
    // Predicated region
    $region170: #{forward.1} parent=1 // pred_check
      _
    $region171: #{forward.1} parent=1 // pred_check_branch
      %192 = sbr.rel (0) target = $region173
    $region172: #{forward.1} parent=1 // pred_region
      _
    $region173: #{forward.1} parent=1 // pred_fallthru
      _
    // Predicated region
    $region174: #{forward.1} parent=1 // pred_check
      _
    $region175: #{forward.1} parent=1 // pred_check_branch
      %194 = sbr.rel (0) target = $region177
    $region176: #{forward.1} parent=1 // pred_region
      _
    $region177: #{forward.1} parent=1 // pred_fallthru
      _
    // Predicated region
    $region178: #{forward.1} parent=1 // pred_check
      _
    $region179: #{forward.1} parent=1 // pred_check_branch
      %196 = sbr.rel (0) target = $region181
    $region180: #{forward.1} parent=1 // pred_region
      _
    $region181: #{forward.1} parent=1 // pred_fallthru
      _
    // Predicated region
    $region182: #{forward.1} parent=1 // pred_check
      _
    $region183: #{forward.1} parent=1 // pred_check_branch
      %198 = sbr.rel (0) target = $region185
    $region184: #{forward.1} parent=1 // pred_region
      _
    $region185: #{forward.1} parent=1 // pred_fallthru
      _
    // Predicated region
    $region186: #{forward.1} parent=1 // pred_check
      _
    $region187: #{forward.1} parent=1 // pred_check_branch
      %200 = sbr.rel (0) target = $region189
    $region188: #{forward.1} parent=1 // pred_region
      _
    $region189: #{forward.1} parent=1 // pred_fallthru
      _
    // Predicated region
    $region190: #{forward.1} parent=1 // pred_check
      _
    $region191: #{forward.1} parent=1 // pred_check_branch
      %202 = sbr.rel (0) target = $region193
    $region192: #{forward.1} parent=1 // pred_region
      _
    $region193: #{forward.1} parent=1 // pred_fallthru
      _
    // Predicated region
    $region194: #{forward.1} parent=1 // pred_check
      _
    $region195: #{forward.1} parent=1 // pred_check_branch
      %204 = sbr.rel (0) target = $region197
    $region196: #{forward.1} parent=1 // pred_region
      _
    $region197: #{forward.1} parent=1 // pred_fallthru
      _
    // Predicated region
    $region198: #{forward.1} parent=1 // pred_check
      _
    $region199: #{forward.1} parent=1 // pred_check_branch
      %206 = sbr.rel (0) target = $region201
    $region200: #{forward.1} parent=1 // pred_region
      _
    $region201: #{forward.1} parent=1 // pred_fallthru
      _
    %v207 = vld [vmem:[%s55] sm:$0xff]
    %v208 = vld [vmem:[%s53] sm:$0xff]
    %v209 = vld [vmem:[%s51] sm:$0x1]
    %v210 = vld [vmem:[%s1] sm:$0x3]
    %vm211 = vcmask 64512
    %v213 = vsel %vm211, 0.0, 0
    %215 = vmatprep.subr.mxu0 0.0
    %216 = vmatpush1.msra.mxu0 %v208
    %217 = vmatprep.subr.mxu0 0.0
    %218 = vmatpush1.msra.mxu0 0.0
    %219 = vmatprep.subr.mxu0 0.0
    %220 = vmatpush1.msra.mxu0 0.0
    %221 = vmatprep.subr.mxu0 0.0
    %222 = vmatpush1.msra.mxu0 0.0
    %223 = vmatprep.subr.mxu0 0.0
    %224 = vmatpush1.msra.mxu0 0.0
    %225 = vmatprep.subr.mxu0 0.0
    %226 = vmatpush1.msra.mxu0 0.0
    %227 = vmatprep.subr.mxu0 0.0
    %228 = vmatpush1.msra.mxu0 0.0
    %229 = vmatprep.subr.mxu0 0.0
    %230 = vmatpush1.msra.mxu0 0.0
    %231 = vmatprep.subr.mxu0 0.0
    %232 = vmatpush1.msra.mxu0 0.0
    %233 = vmatprep.subr.mxu0 0.0
    %234 = vmatpush1.msra.mxu0 0.0
    %235 = vmatprep.subr.mxu0 0.0
    %236 = vmatpush1.msra.mxu0 0.0
    %237 = vmatprep.subr.mxu0 0.0
    %238 = vmatpush1.msra.mxu0 0.0
    %239 = vmatprep.subr.mxu0 0.0
    %240 = vmatpush1.msra.mxu0 0.0
    %241 = vmatprep.subr.mxu0 0.0
    %242 = vmatpush1.msra.mxu0 0.0
    %243 = vmatprep.subr.mxu0 0.0
    %244 = vmatpush1.msra.mxu0 0.0
    %245 = vmatprep.subr.mxu0 0.0
    %246 = vmatpush1.msra.mxu0 0.0
    %247 = vmatprep.subr.mxu0 0.0
    %248 = vmatpush1.msra.mxu0 0.0
    %249 = vmatprep.subr.mxu0 0.0
    %250 = vmatpush1.msra.mxu0 0.0
    %251 = vmatprep.subr.mxu0 0.0
    %252 = vmatpush1.msra.mxu0 0.0
    %253 = vmatprep.subr.mxu0 0.0
    %254 = vmatpush1.msra.mxu0 0.0
    %255 = vmatprep.subr.mxu0 0.0
    %256 = vmatpush1.msra.mxu0 0.0
    %257 = vmatprep.subr.mxu0 0.0
    %258 = vmatpush1.msra.mxu0 0.0
    %259 = vmatprep.subr.mxu0 0.0
    %260 = vmatpush1.msra.mxu0 0.0
    %261 = vmatprep.subr.mxu0 0.0
    %262 = vmatpush1.msra.mxu0 0.0
    %263 = vmatprep.subr.mxu0 0.0
    %264 = vmatpush1.msra.mxu0 0.0
    %265 = vmatprep.subr.mxu0 0.0
    %266 = vmatpush1.msra.mxu0 0.0
    %267 = vmatprep.subr.mxu0 0.0
    %268 = vmatpush1.msra.mxu0 0.0
    %269 = vmatprep.subr.mxu0 0.0
    %270 = vmatpush1.msra.mxu0 0.0
    %271 = vmatprep.subr.mxu0 0.0
    %272 = vmatpush1.msra.mxu0 0.0
    %273 = vmatprep.subr.mxu0 0.0
    %274 = vmatpush1.msra.mxu0 0.0
    %275 = vmatprep.subr.mxu0 0.0
    %276 = vmatpush1.msra.mxu0 0.0
    %277 = vmatprep.subr.mxu0 0.0
    %278 = vmatpush1.msra.mxu0 0.0
    %279 = vmatprep.mubr.f32.mxu0 0.0
    %280 = vmatmul.mubr.f32.gmra.mrb[0].mxu0 %v213
    %v281 = vpop.f32.mrb[0].mxu0
    %v282 = vadd.f32 0.0, %v281
    %v283 = vpop.f32.mrb[0].mxu0
    %284 = vdwg.mxu0
    %v286 = vsel %vm211, %v210, 0
    %288 = vmatprep.subr.mxu0 0.0
    %289 = vmatpush1.msra.mxu0 %v207
    %290 = vmatprep.subr.mxu0 0.0
    %291 = vmatpush1.msra.mxu0 0.0
    %292 = vmatprep.subr.mxu0 0.0
    %293 = vmatpush1.msra.mxu0 0.0
    %294 = vmatprep.subr.mxu0 0.0
    %295 = vmatpush1.msra.mxu0 0.0
    %296 = vmatprep.subr.mxu0 0.0
    %297 = vmatpush1.msra.mxu0 0.0
    %298 = vmatprep.subr.mxu0 0.0
    %299 = vmatpush1.msra.mxu0 0.0
    %300 = vmatprep.subr.mxu0 0.0
    %301 = vmatpush1.msra.mxu0 0.0
    %302 = vmatprep.subr.mxu0 0.0
    %303 = vmatpush1.msra.mxu0 0.0
    %304 = vmatprep.subr.mxu0 0.0
    %305 = vmatpush1.msra.mxu0 0.0
    %306 = vmatprep.subr.mxu0 0.0
    %307 = vmatpush1.msra.mxu0 0.0
    %308 = vmatprep.subr.mxu0 0.0
    %309 = vmatpush1.msra.mxu0 0.0
    %310 = vmatprep.subr.mxu0 0.0
    %311 = vmatpush1.msra.mxu0 0.0
    %312 = vmatprep.subr.mxu0 0.0
    %313 = vmatpush1.msra.mxu0 0.0
    %314 = vmatprep.subr.mxu0 0.0
    %315 = vmatpush1.msra.mxu0 0.0
    %316 = vmatprep.subr.mxu0 0.0
    %317 = vmatpush1.msra.mxu0 0.0
    %318 = vmatprep.subr.mxu0 0.0
    %319 = vmatpush1.msra.mxu0 0.0
    %320 = vmatprep.subr.mxu0 0.0
    %321 = vmatpush1.msra.mxu0 0.0
    %322 = vmatprep.subr.mxu0 0.0
    %323 = vmatpush1.msra.mxu0 0.0
    %324 = vmatprep.subr.mxu0 0.0
    %325 = vmatpush1.msra.mxu0 0.0
    %326 = vmatprep.subr.mxu0 0.0
    %327 = vmatpush1.msra.mxu0 0.0
    %328 = vmatprep.subr.mxu0 0.0
    %329 = vmatpush1.msra.mxu0 0.0
    %330 = vmatprep.subr.mxu0 0.0
    %331 = vmatpush1.msra.mxu0 0.0
    %332 = vmatprep.subr.mxu0 0.0
    %333 = vmatpush1.msra.mxu0 0.0
    %334 = vmatprep.subr.mxu0 0.0
    %335 = vmatpush1.msra.mxu0 0.0
    %336 = vmatprep.subr.mxu0 0.0
    %337 = vmatpush1.msra.mxu0 0.0
    %338 = vmatprep.subr.mxu0 0.0
    %339 = vmatpush1.msra.mxu0 0.0
    %340 = vmatprep.subr.mxu0 0.0
    %341 = vmatpush1.msra.mxu0 0.0
    %342 = vmatprep.subr.mxu0 0.0
    %343 = vmatpush1.msra.mxu0 0.0
    %344 = vmatprep.subr.mxu0 0.0
    %345 = vmatpush1.msra.mxu0 0.0
    %346 = vmatprep.subr.mxu0 0.0
    %347 = vmatpush1.msra.mxu0 0.0
    %348 = vmatprep.subr.mxu0 0.0
    %349 = vmatpush1.msra.mxu0 0.0
    %350 = vmatprep.subr.mxu0 0.0
    %351 = vmatpush1.msra.mxu0 0.0
    %352 = vmatprep.mubr.f32.mxu0 0.0
    %353 = vmatmul.mubr.f32.gmra.mrb[0].mxu0 %v286
    %v354 = vpop.f32.mrb[0].mxu0
    %v355 = vadd.f32 %v282, %v354
    %v356 = vpop.f32.mrb[0].mxu0
    %357 = vdwg.mxu0
    %v359 = vlaneseq
    %v360 = vshrl.u32 %v359, 7
    %v361 = vsub.s32 0, %v360
    %v362 = vrot.slane %v209, %v361
    %v364 = vadd.f32 %v355, %v362
    %v365 = vxor.u32 %v364, 2147483648
    %v366 = vmul.f32 %v365, 1.442695
    %v367 = vpow.pop %v366
    %v368 = vadd.f32 %v367, 1.0
    %v369 = vrcp.pop %v368
    %v370 = vmul.f32 1.0, %v369
    %v371 = vtanh.pop %v364
    %v372 = vmul.f32 %v370, 0.0
    %374 = vrot.lane.b32.xlu0 %v371, 112
    %v375 = vpop.permute.xlu0 %374
    %v377 = vmul.f32 %v370, %v375
    %379 = vrot.lane.b32.xlu0 %v377, 8
    %v380 = vpop.permute.xlu0 %379
    %v382 = vadd.f32 %v372, %v380
    %v383 = vtanh.pop %v382
    %385 = vrot.lane.b32.xlu0 %v383, 16
    %v386 = vpop.permute.xlu0 %385
    %v388 = vmul.f32 %v370, %v386
    %s389 = scalar_lea.vmem %s1, 2
    %v390 = vld [vmem:[%s389] sm:$0x3]
    %392 = vrot.lane.b32.xlu0 %v388, 104
    %v393 = vpop.permute.xlu0 %392
    %v394 = vsel %vm211, %v393, 0
    %396 = vmatprep.subr.mxu0 0.0
    %397 = vmatpush1.msra.mxu0 %v208
    %398 = vmatprep.subr.mxu0 0.0
    %399 = vmatpush1.msra.mxu0 0.0
    %400 = vmatprep.subr.mxu0 0.0
    %401 = vmatpush1.msra.mxu0 0.0
    %402 = vmatprep.subr.mxu0 0.0
    %403 = vmatpush1.msra.mxu0 0.0
    %404 = vmatprep.subr.mxu0 0.0
    %405 = vmatpush1.msra.mxu0 0.0
    %406 = vmatprep.subr.mxu0 0.0
    %407 = vmatpush1.msra.mxu0 0.0
    %408 = vmatprep.subr.mxu0 0.0
    %409 = vmatpush1.msra.mxu0 0.0
    %410 = vmatprep.subr.mxu0 0.0
    %411 = vmatpush1.msra.mxu0 0.0
    %412 = vmatprep.subr.mxu0 0.0
    %413 = vmatpush1.msra.mxu0 0.0
    %414 = vmatprep.subr.mxu0 0.0
    %415 = vmatpush1.msra.mxu0 0.0
    %416 = vmatprep.subr.mxu0 0.0
    %417 = vmatpush1.msra.mxu0 0.0
    %418 = vmatprep.subr.mxu0 0.0
    %419 = vmatpush1.msra.mxu0 0.0
    %420 = vmatprep.subr.mxu0 0.0
    %421 = vmatpush1.msra.mxu0 0.0
    %422 = vmatprep.subr.mxu0 0.0
    %423 = vmatpush1.msra.mxu0 0.0
    %424 = vmatprep.subr.mxu0 0.0
    %425 = vmatpush1.msra.mxu0 0.0
    %426 = vmatprep.subr.mxu0 0.0
    %427 = vmatpush1.msra.mxu0 0.0
    %428 = vmatprep.subr.mxu0 0.0
    %429 = vmatpush1.msra.mxu0 0.0
    %430 = vmatprep.subr.mxu0 0.0
    %431 = vmatpush1.msra.mxu0 0.0
    %432 = vmatprep.subr.mxu0 0.0
    %433 = vmatpush1.msra.mxu0 0.0
    %434 = vmatprep.subr.mxu0 0.0
    %435 = vmatpush1.msra.mxu0 0.0
    %436 = vmatprep.subr.mxu0 0.0
    %437 = vmatpush1.msra.mxu0 0.0
    %438 = vmatprep.subr.mxu0 0.0
    %439 = vmatpush1.msra.mxu0 0.0
    %440 = vmatprep.subr.mxu0 0.0
    %441 = vmatpush1.msra.mxu0 0.0
    %442 = vmatprep.subr.mxu0 0.0
    %443 = vmatpush1.msra.mxu0 0.0
    %444 = vmatprep.subr.mxu0 0.0
    %445 = vmatpush1.msra.mxu0 0.0
    %446 = vmatprep.subr.mxu0 0.0
    %447 = vmatpush1.msra.mxu0 0.0
    %448 = vmatprep.subr.mxu0 0.0
    %449 = vmatpush1.msra.mxu0 0.0
    %450 = vmatprep.subr.mxu0 0.0
    %451 = vmatpush1.msra.mxu0 0.0
    %452 = vmatprep.subr.mxu0 0.0
    %453 = vmatpush1.msra.mxu0 0.0
    %454 = vmatprep.subr.mxu0 0.0
    %455 = vmatpush1.msra.mxu0 0.0
    %456 = vmatprep.subr.mxu0 0.0
    %457 = vmatpush1.msra.mxu0 0.0
    %458 = vmatprep.subr.mxu0 0.0
    %459 = vmatpush1.msra.mxu0 0.0
    %460 = vmatprep.mubr.f32.mxu0 0.0
    %461 = vmatmul.mubr.f32.gmra.mrb[0].mxu0 %v394
    %v462 = vpop.f32.mrb[0].mxu0
    %v463 = vadd.f32 0.0, %v462
    %v464 = vpop.f32.mrb[0].mxu0
    %465 = vdwg.mxu0
    %v467 = vsel %vm211, %v390, 0
    %469 = vmatprep.subr.mxu0 0.0
    %470 = vmatpush1.msra.mxu0 %v207
    %471 = vmatprep.subr.mxu0 0.0
    %472 = vmatpush1.msra.mxu0 0.0
    %473 = vmatprep.subr.mxu0 0.0
    %474 = vmatpush1.msra.mxu0 0.0
    %475 = vmatprep.subr.mxu0 0.0
    %476 = vmatpush1.msra.mxu0 0.0
    %477 = vmatprep.subr.mxu0 0.0
    %478 = vmatpush1.msra.mxu0 0.0
    %479 = vmatprep.subr.mxu0 0.0
    %480 = vmatpush1.msra.mxu0 0.0
    %481 = vmatprep.subr.mxu0 0.0
    %482 = vmatpush1.msra.mxu0 0.0
    %483 = vmatprep.subr.mxu0 0.0
    %484 = vmatpush1.msra.mxu0 0.0
    %485 = vmatprep.subr.mxu0 0.0
    %486 = vmatpush1.msra.mxu0 0.0
    %487 = vmatprep.subr.mxu0 0.0
    %488 = vmatpush1.msra.mxu0 0.0
    %489 = vmatprep.subr.mxu0 0.0
    %490 = vmatpush1.msra.mxu0 0.0
    %491 = vmatprep.subr.mxu0 0.0
    %492 = vmatpush1.msra.mxu0 0.0
    %493 = vmatprep.subr.mxu0 0.0
    %494 = vmatpush1.msra.mxu0 0.0
    %495 = vmatprep.subr.mxu0 0.0
    %496 = vmatpush1.msra.mxu0 0.0
    %497 = vmatprep.subr.mxu0 0.0
    %498 = vmatpush1.msra.mxu0 0.0
    %499 = vmatprep.subr.mxu0 0.0
    %500 = vmatpush1.msra.mxu0 0.0
    %501 = vmatprep.subr.mxu0 0.0
    %502 = vmatpush1.msra.mxu0 0.0
    %503 = vmatprep.subr.mxu0 0.0
    %504 = vmatpush1.msra.mxu0 0.0
    %505 = vmatprep.subr.mxu0 0.0
    %506 = vmatpush1.msra.mxu0 0.0
    %507 = vmatprep.subr.mxu0 0.0
    %508 = vmatpush1.msra.mxu0 0.0
    %509 = vmatprep.subr.mxu0 0.0
    %510 = vmatpush1.msra.mxu0 0.0
    %511 = vmatprep.subr.mxu0 0.0
    %512 = vmatpush1.msra.mxu0 0.0
    %513 = vmatprep.subr.mxu0 0.0
    %514 = vmatpush1.msra.mxu0 0.0
    %515 = vmatprep.subr.mxu0 0.0
    %516 = vmatpush1.msra.mxu0 0.0
    %517 = vmatprep.subr.mxu0 0.0
    %518 = vmatpush1.msra.mxu0 0.0
    %519 = vmatprep.subr.mxu0 0.0
    %520 = vmatpush1.msra.mxu0 0.0
    %521 = vmatprep.subr.mxu0 0.0
    %522 = vmatpush1.msra.mxu0 0.0
    %523 = vmatprep.subr.mxu0 0.0
    %524 = vmatpush1.msra.mxu0 0.0
    %525 = vmatprep.subr.mxu0 0.0
    %526 = vmatpush1.msra.mxu0 0.0
    %527 = vmatprep.subr.mxu0 0.0
    %528 = vmatpush1.msra.mxu0 0.0
    %529 = vmatprep.subr.mxu0 0.0
    %530 = vmatpush1.msra.mxu0 0.0
    %531 = vmatprep.subr.mxu0 0.0
    %532 = vmatpush1.msra.mxu0 0.0
    %533 = vmatprep.mubr.f32.mxu0 0.0
    %534 = vmatmul.mubr.f32.gmra.mrb[0].mxu0 %v467
    %v535 = vpop.f32.mrb[0].mxu0
    %v536 = vadd.f32 %v463, %v535
    %v537 = vpop.f32.mrb[0].mxu0
    %538 = vdwg.mxu0
    %v539 = vadd.f32 %v536, %v362
    %v540 = vxor.u32 %v539, 2147483648
    %v541 = vmul.f32 %v540, 1.442695
    %v542 = vpow.pop %v541
    %v543 = vadd.f32 %v542, 1.0
    %v544 = vrcp.pop %v543
    %v545 = vmul.f32 1.0, %v544
    %v546 = vtanh.pop %v539
    %v547 = vmul.f32 %v545, %v382
    %549 = vrot.lane.b32.xlu0 %v546, 112
    %v550 = vpop.permute.xlu0 %549
    %v552 = vmul.f32 %v545, %v550
    %554 = vrot.lane.b32.xlu0 %v552, 8
    %v555 = vpop.permute.xlu0 %554
    %v557 = vadd.f32 %v547, %v555
    %v558 = vtanh.pop %v557
    %560 = vrot.lane.b32.xlu0 %v558, 16
    %v561 = vpop.permute.xlu0 %560
    %v563 = vmul.f32 %v545, %v561
    %s564 = scalar_lea.vmem %s1, 4
    %v565 = vld [vmem:[%s564] sm:$0x3]
    %567 = vrot.lane.b32.xlu0 %v563, 104
    %v568 = vpop.permute.xlu0 %567
    %v569 = vsel %vm211, %v568, 0
    %571 = vmatprep.subr.mxu0 0.0
    %572 = vmatpush1.msra.mxu0 %v208
    %573 = vmatprep.subr.mxu0 0.0
    %574 = vmatpush1.msra.mxu0 0.0
    %575 = vmatprep.subr.mxu0 0.0
    %576 = vmatpush1.msra.mxu0 0.0
    %577 = vmatprep.subr.mxu0 0.0
    %578 = vmatpush1.msra.mxu0 0.0
    %579 = vmatprep.subr.mxu0 0.0
    %580 = vmatpush1.msra.mxu0 0.0
    %581 = vmatprep.subr.mxu0 0.0
    %582 = vmatpush1.msra.mxu0 0.0
    %583 = vmatprep.subr.mxu0 0.0
    %584 = vmatpush1.msra.mxu0 0.0
    %585 = vmatprep.subr.mxu0 0.0
    %586 = vmatpush1.msra.mxu0 0.0
    %587 = vmatprep.subr.mxu0 0.0
    %588 = vmatpush1.msra.mxu0 0.0
    %589 = vmatprep.subr.mxu0 0.0
    %590 = vmatpush1.msra.mxu0 0.0
    %591 = vmatprep.subr.mxu0 0.0
    %592 = vmatpush1.msra.mxu0 0.0
    %593 = vmatprep.subr.mxu0 0.0
    %594 = vmatpush1.msra.mxu0 0.0
    %595 = vmatprep.subr.mxu0 0.0
    %596 = vmatpush1.msra.mxu0 0.0
    %597 = vmatprep.subr.mxu0 0.0
    %598 = vmatpush1.msra.mxu0 0.0
    %599 = vmatprep.subr.mxu0 0.0
    %600 = vmatpush1.msra.mxu0 0.0
    %601 = vmatprep.subr.mxu0 0.0
    %602 = vmatpush1.msra.mxu0 0.0
    %603 = vmatprep.subr.mxu0 0.0
    %604 = vmatpush1.msra.mxu0 0.0
    %605 = vmatprep.subr.mxu0 0.0
    %606 = vmatpush1.msra.mxu0 0.0
    %607 = vmatprep.subr.mxu0 0.0
    %608 = vmatpush1.msra.mxu0 0.0
    %609 = vmatprep.subr.mxu0 0.0
    %610 = vmatpush1.msra.mxu0 0.0
    %611 = vmatprep.subr.mxu0 0.0
    %612 = vmatpush1.msra.mxu0 0.0
    %613 = vmatprep.subr.mxu0 0.0
    %614 = vmatpush1.msra.mxu0 0.0
    %615 = vmatprep.subr.mxu0 0.0
    %616 = vmatpush1.msra.mxu0 0.0
    %617 = vmatprep.subr.mxu0 0.0
    %618 = vmatpush1.msra.mxu0 0.0
    %619 = vmatprep.subr.mxu0 0.0
    %620 = vmatpush1.msra.mxu0 0.0
    %621 = vmatprep.subr.mxu0 0.0
    %622 = vmatpush1.msra.mxu0 0.0
    %623 = vmatprep.subr.mxu0 0.0
    %624 = vmatpush1.msra.mxu0 0.0
    %625 = vmatprep.subr.mxu0 0.0
    %626 = vmatpush1.msra.mxu0 0.0
    %627 = vmatprep.subr.mxu0 0.0
    %628 = vmatpush1.msra.mxu0 0.0
    %629 = vmatprep.subr.mxu0 0.0
    %630 = vmatpush1.msra.mxu0 0.0
    %631 = vmatprep.subr.mxu0 0.0
    %632 = vmatpush1.msra.mxu0 0.0
    %633 = vmatprep.subr.mxu0 0.0
    %634 = vmatpush1.msra.mxu0 0.0
    %635 = vmatprep.mubr.f32.mxu0 0.0
    %636 = vmatmul.mubr.f32.gmra.mrb[0].mxu0 %v569
    %v637 = vpop.f32.mrb[0].mxu0
    %v638 = vadd.f32 0.0, %v637
    %v639 = vpop.f32.mrb[0].mxu0
    %640 = vdwg.mxu0
    %v642 = vsel %vm211, %v565, 0
    %644 = vmatprep.subr.mxu0 0.0
    %645 = vmatpush1.msra.mxu0 %v207
    %646 = vmatprep.subr.mxu0 0.0
    %647 = vmatpush1.msra.mxu0 0.0
    %648 = vmatprep.subr.mxu0 0.0
    %649 = vmatpush1.msra.mxu0 0.0
    %650 = vmatprep.subr.mxu0 0.0
    %651 = vmatpush1.msra.mxu0 0.0
    %652 = vmatprep.subr.mxu0 0.0
    %653 = vmatpush1.msra.mxu0 0.0
    %654 = vmatprep.subr.mxu0 0.0
    %655 = vmatpush1.msra.mxu0 0.0
    %656 = vmatprep.subr.mxu0 0.0
    %657 = vmatpush1.msra.mxu0 0.0
    %658 = vmatprep.subr.mxu0 0.0
    %659 = vmatpush1.msra.mxu0 0.0
    %660 = vmatprep.subr.mxu0 0.0
    %661 = vmatpush1.msra.mxu0 0.0
    %662 = vmatprep.subr.mxu0 0.0
    %663 = vmatpush1.msra.mxu0 0.0
    %664 = vmatprep.subr.mxu0 0.0
    %665 = vmatpush1.msra.mxu0 0.0
    %666 = vmatprep.subr.mxu0 0.0
    %667 = vmatpush1.msra.mxu0 0.0
    %668 = vmatprep.subr.mxu0 0.0
    %669 = vmatpush1.msra.mxu0 0.0
    %670 = vmatprep.subr.mxu0 0.0
    %671 = vmatpush1.msra.mxu0 0.0
    %672 = vmatprep.subr.mxu0 0.0
    %673 = vmatpush1.msra.mxu0 0.0
    %674 = vmatprep.subr.mxu0 0.0
    %675 = vmatpush1.msra.mxu0 0.0
    %676 = vmatprep.subr.mxu0 0.0
    %677 = vmatpush1.msra.mxu0 0.0
    %678 = vmatprep.subr.mxu0 0.0
    %679 = vmatpush1.msra.mxu0 0.0
    %680 = vmatprep.subr.mxu0 0.0
    %681 = vmatpush1.msra.mxu0 0.0
    %682 = vmatprep.subr.mxu0 0.0
    %683 = vmatpush1.msra.mxu0 0.0
    %684 = vmatprep.subr.mxu0 0.0
    %685 = vmatpush1.msra.mxu0 0.0
    %686 = vmatprep.subr.mxu0 0.0
    %687 = vmatpush1.msra.mxu0 0.0
    %688 = vmatprep.subr.mxu0 0.0
    %689 = vmatpush1.msra.mxu0 0.0
    %690 = vmatprep.subr.mxu0 0.0
    %691 = vmatpush1.msra.mxu0 0.0
    %692 = vmatprep.subr.mxu0 0.0
    %693 = vmatpush1.msra.mxu0 0.0
    %694 = vmatprep.subr.mxu0 0.0
    %695 = vmatpush1.msra.mxu0 0.0
    %696 = vmatprep.subr.mxu0 0.0
    %697 = vmatpush1.msra.mxu0 0.0
    %698 = vmatprep.subr.mxu0 0.0
    %699 = vmatpush1.msra.mxu0 0.0
    %700 = vmatprep.subr.mxu0 0.0
    %701 = vmatpush1.msra.mxu0 0.0
    %702 = vmatprep.subr.mxu0 0.0
    %703 = vmatpush1.msra.mxu0 0.0
    %704 = vmatprep.subr.mxu0 0.0
    %705 = vmatpush1.msra.mxu0 0.0
    %706 = vmatprep.subr.mxu0 0.0
    %707 = vmatpush1.msra.mxu0 0.0
    %708 = vmatprep.mubr.f32.mxu0 0.0
    %709 = vmatmul.mubr.f32.gmra.mrb[0].mxu0 %v642
    %v710 = vpop.f32.mrb[0].mxu0
    %v711 = vadd.f32 %v638, %v710
    %v712 = vpop.f32.mrb[0].mxu0
    %713 = vdwg.mxu0
    %v714 = vadd.f32 %v711, %v362
    %v715 = vxor.u32 %v714, 2147483648
    %v716 = vmul.f32 %v715, 1.442695
    %v717 = vpow.pop %v716
    %v718 = vadd.f32 %v717, 1.0
    %v719 = vrcp.pop %v718
    %v720 = vmul.f32 1.0, %v719
    %v721 = vtanh.pop %v714
    %v722 = vmul.f32 %v720, %v557
    %724 = vrot.lane.b32.xlu0 %v721, 112
    %v725 = vpop.permute.xlu0 %724
    %v727 = vmul.f32 %v720, %v725
    %729 = vrot.lane.b32.xlu0 %v727, 8
    %v730 = vpop.permute.xlu0 %729
    %v732 = vadd.f32 %v722, %v730
    %v733 = vtanh.pop %v732
    %735 = vrot.lane.b32.xlu0 %v733, 16
    %v736 = vpop.permute.xlu0 %735
    %v738 = vmul.f32 %v720, %v736
    %s739 = scalar_lea.vmem %s1, 6
    %v740 = vld [vmem:[%s739] sm:$0x3]
    %742 = vrot.lane.b32.xlu0 %v738, 104
    %v743 = vpop.permute.xlu0 %742
    %v744 = vsel %vm211, %v743, 0
    %746 = vmatprep.subr.mxu0 0.0
    %747 = vmatpush1.msra.mxu0 %v208
    %748 = vmatprep.subr.mxu0 0.0
    %749 = vmatpush1.msra.mxu0 0.0
    %750 = vmatprep.subr.mxu0 0.0
    %751 = vmatpush1.msra.mxu0 0.0
    %752 = vmatprep.subr.mxu0 0.0
    %753 = vmatpush1.msra.mxu0 0.0
    %754 = vmatprep.subr.mxu0 0.0
    %755 = vmatpush1.msra.mxu0 0.0
    %756 = vmatprep.subr.mxu0 0.0
    %757 = vmatpush1.msra.mxu0 0.0
    %758 = vmatprep.subr.mxu0 0.0
    %759 = vmatpush1.msra.mxu0 0.0
    %760 = vmatprep.subr.mxu0 0.0
    %761 = vmatpush1.msra.mxu0 0.0
    %762 = vmatprep.subr.mxu0 0.0
    %763 = vmatpush1.msra.mxu0 0.0
    %764 = vmatprep.subr.mxu0 0.0
    %765 = vmatpush1.msra.mxu0 0.0
    %766 = vmatprep.subr.mxu0 0.0
    %767 = vmatpush1.msra.mxu0 0.0
    %768 = vmatprep.subr.mxu0 0.0
    %769 = vmatpush1.msra.mxu0 0.0
    %770 = vmatprep.subr.mxu0 0.0
    %771 = vmatpush1.msra.mxu0 0.0
    %772 = vmatprep.subr.mxu0 0.0
    %773 = vmatpush1.msra.mxu0 0.0
    %774 = vmatprep.subr.mxu0 0.0
    %775 = vmatpush1.msra.mxu0 0.0
    %776 = vmatprep.subr.mxu0 0.0
    %777 = vmatpush1.msra.mxu0 0.0
    %778 = vmatprep.subr.mxu0 0.0
    %779 = vmatpush1.msra.mxu0 0.0
    %780 = vmatprep.subr.mxu0 0.0
    %781 = vmatpush1.msra.mxu0 0.0
    %782 = vmatprep.subr.mxu0 0.0
    %783 = vmatpush1.msra.mxu0 0.0
    %784 = vmatprep.subr.mxu0 0.0
    %785 = vmatpush1.msra.mxu0 0.0
    %786 = vmatprep.subr.mxu0 0.0
    %787 = vmatpush1.msra.mxu0 0.0
    %788 = vmatprep.subr.mxu0 0.0
    %789 = vmatpush1.msra.mxu0 0.0
    %790 = vmatprep.subr.mxu0 0.0
    %791 = vmatpush1.msra.mxu0 0.0
    %792 = vmatprep.subr.mxu0 0.0
    %793 = vmatpush1.msra.mxu0 0.0
    %794 = vmatprep.subr.mxu0 0.0
    %795 = vmatpush1.msra.mxu0 0.0
    %796 = vmatprep.subr.mxu0 0.0
    %797 = vmatpush1.msra.mxu0 0.0
    %798 = vmatprep.subr.mxu0 0.0
    %799 = vmatpush1.msra.mxu0 0.0
    %800 = vmatprep.subr.mxu0 0.0
    %801 = vmatpush1.msra.mxu0 0.0
    %802 = vmatprep.subr.mxu0 0.0
    %803 = vmatpush1.msra.mxu0 0.0
    %804 = vmatprep.subr.mxu0 0.0
    %805 = vmatpush1.msra.mxu0 0.0
    %806 = vmatprep.subr.mxu0 0.0
    %807 = vmatpush1.msra.mxu0 0.0
    %808 = vmatprep.subr.mxu0 0.0
    %809 = vmatpush1.msra.mxu0 0.0
    %810 = vmatprep.mubr.f32.mxu0 0.0
    %811 = vmatmul.mubr.f32.gmra.mrb[0].mxu0 %v744
    %v812 = vpop.f32.mrb[0].mxu0
    %v813 = vadd.f32 0.0, %v812
    %v814 = vpop.f32.mrb[0].mxu0
    %815 = vdwg.mxu0
    %v817 = vsel %vm211, %v740, 0
    %819 = vmatprep.subr.mxu0 0.0
    %820 = vmatpush1.msra.mxu0 %v207
    %821 = vmatprep.subr.mxu0 0.0
    %822 = vmatpush1.msra.mxu0 0.0
    %823 = vmatprep.subr.mxu0 0.0
    %824 = vmatpush1.msra.mxu0 0.0
    %825 = vmatprep.subr.mxu0 0.0
    %826 = vmatpush1.msra.mxu0 0.0
    %827 = vmatprep.subr.mxu0 0.0
    %828 = vmatpush1.msra.mxu0 0.0
    %829 = vmatprep.subr.mxu0 0.0
    %830 = vmatpush1.msra.mxu0 0.0
    %831 = vmatprep.subr.mxu0 0.0
    %832 = vmatpush1.msra.mxu0 0.0
    %833 = vmatprep.subr.mxu0 0.0
    %834 = vmatpush1.msra.mxu0 0.0
    %835 = vmatprep.subr.mxu0 0.0
    %836 = vmatpush1.msra.mxu0 0.0
    %837 = vmatprep.subr.mxu0 0.0
    %838 = vmatpush1.msra.mxu0 0.0
    %839 = vmatprep.subr.mxu0 0.0
    %840 = vmatpush1.msra.mxu0 0.0
    %841 = vmatprep.subr.mxu0 0.0
    %842 = vmatpush1.msra.mxu0 0.0
    %843 = vmatprep.subr.mxu0 0.0
    %844 = vmatpush1.msra.mxu0 0.0
    %845 = vmatprep.subr.mxu0 0.0
    %846 = vmatpush1.msra.mxu0 0.0
    %847 = vmatprep.subr.mxu0 0.0
    %848 = vmatpush1.msra.mxu0 0.0
    %849 = vmatprep.subr.mxu0 0.0
    %850 = vmatpush1.msra.mxu0 0.0
    %851 = vmatprep.subr.mxu0 0.0
    %852 = vmatpush1.msra.mxu0 0.0
    %853 = vmatprep.subr.mxu0 0.0
    %854 = vmatpush1.msra.mxu0 0.0
    %855 = vmatprep.subr.mxu0 0.0
    %856 = vmatpush1.msra.mxu0 0.0
    %857 = vmatprep.subr.mxu0 0.0
    %858 = vmatpush1.msra.mxu0 0.0
    %859 = vmatprep.subr.mxu0 0.0
    %860 = vmatpush1.msra.mxu0 0.0
    %861 = vmatprep.subr.mxu0 0.0
    %862 = vmatpush1.msra.mxu0 0.0
    %863 = vmatprep.subr.mxu0 0.0
    %864 = vmatpush1.msra.mxu0 0.0
    %865 = vmatprep.subr.mxu0 0.0
    %866 = vmatpush1.msra.mxu0 0.0
    %867 = vmatprep.subr.mxu0 0.0
    %868 = vmatpush1.msra.mxu0 0.0
    %869 = vmatprep.subr.mxu0 0.0
    %870 = vmatpush1.msra.mxu0 0.0
    %871 = vmatprep.subr.mxu0 0.0
    %872 = vmatpush1.msra.mxu0 0.0
    %873 = vmatprep.subr.mxu0 0.0
    %874 = vmatpush1.msra.mxu0 0.0
    %875 = vmatprep.subr.mxu0 0.0
    %876 = vmatpush1.msra.mxu0 0.0
    %877 = vmatprep.subr.mxu0 0.0
    %878 = vmatpush1.msra.mxu0 0.0
    %879 = vmatprep.subr.mxu0 0.0
    %880 = vmatpush1.msra.mxu0 0.0
    %881 = vmatprep.subr.mxu0 0.0
    %882 = vmatpush1.msra.mxu0 0.0
    %883 = vmatprep.mubr.f32.mxu0 0.0
    %884 = vmatmul.mubr.f32.gmra.mrb[0].mxu0 %v817
    %v885 = vpop.f32.mrb[0].mxu0
    %v886 = vadd.f32 %v813, %v885
    %v887 = vpop.f32.mrb[0].mxu0
    %888 = vdwg.mxu0
    %v889 = vadd.f32 %v886, %v362
    %v890 = vxor.u32 %v889, 2147483648
    %v891 = vmul.f32 %v890, 1.442695
    %v892 = vpow.pop %v891
    %v893 = vadd.f32 %v892, 1.0
    %v894 = vrcp.pop %v893
    %v895 = vmul.f32 1.0, %v894
    %v896 = vtanh.pop %v889
    %v897 = vmul.f32 %v895, %v732
    %899 = vrot.lane.b32.xlu0 %v896, 112
    %v900 = vpop.permute.xlu0 %899
    %v902 = vmul.f32 %v895, %v900
    %904 = vrot.lane.b32.xlu0 %v902, 8
    %v905 = vpop.permute.xlu0 %904
    %v907 = vadd.f32 %v897, %v905
    %v908 = vtanh.pop %v907
    %910 = vrot.lane.b32.xlu0 %v908, 16
    %v911 = vpop.permute.xlu0 %910
    %v913 = vmul.f32 %v895, %v911
    %s914 = scalar_lea.vmem %s1, 8
    %v915 = vld [vmem:[%s914] sm:$0x3]
    %917 = vrot.lane.b32.xlu0 %v913, 104
    %v918 = vpop.permute.xlu0 %917
    %v919 = vsel %vm211, %v918, 0
    %921 = vmatprep.subr.mxu0 0.0
    %922 = vmatpush1.msra.mxu0 %v208
    %923 = vmatprep.subr.mxu0 0.0
    %924 = vmatpush1.msra.mxu0 0.0
    %925 = vmatprep.subr.mxu0 0.0
    %926 = vmatpush1.msra.mxu0 0.0
    %927 = vmatprep.subr.mxu0 0.0
    %928 = vmatpush1.msra.mxu0 0.0
    %929 = vmatprep.subr.mxu0 0.0
    %930 = vmatpush1.msra.mxu0 0.0
    %931 = vmatprep.subr.mxu0 0.0
    %932 = vmatpush1.msra.mxu0 0.0
    %933 = vmatprep.subr.mxu0 0.0
    %934 = vmatpush1.msra.mxu0 0.0
    %935 = vmatprep.subr.mxu0 0.0
    %936 = vmatpush1.msra.mxu0 0.0
    %937 = vmatprep.subr.mxu0 0.0
    %938 = vmatpush1.msra.mxu0 0.0
    %939 = vmatprep.subr.mxu0 0.0
    %940 = vmatpush1.msra.mxu0 0.0
    %941 = vmatprep.subr.mxu0 0.0
    %942 = vmatpush1.msra.mxu0 0.0
    %943 = vmatprep.subr.mxu0 0.0
    %944 = vmatpush1.msra.mxu0 0.0
    %945 = vmatprep.subr.mxu0 0.0
    %946 = vmatpush1.msra.mxu0 0.0
    %947 = vmatprep.subr.mxu0 0.0
    %948 = vmatpush1.msra.mxu0 0.0
    %949 = vmatprep.subr.mxu0 0.0
    %950 = vmatpush1.msra.mxu0 0.0
    %951 = vmatprep.subr.mxu0 0.0
    %952 = vmatpush1.msra.mxu0 0.0
    %953 = vmatprep.subr.mxu0 0.0
    %954 = vmatpush1.msra.mxu0 0.0
    %955 = vmatprep.subr.mxu0 0.0
    %956 = vmatpush1.msra.mxu0 0.0
    %957 = vmatprep.subr.mxu0 0.0
    %958 = vmatpush1.msra.mxu0 0.0
    %959 = vmatprep.subr.mxu0 0.0
    %960 = vmatpush1.msra.mxu0 0.0
    %961 = vmatprep.subr.mxu0 0.0
    %962 = vmatpush1.msra.mxu0 0.0
    %963 = vmatprep.subr.mxu0 0.0
    %964 = vmatpush1.msra.mxu0 0.0
    %965 = vmatprep.subr.mxu0 0.0
    %966 = vmatpush1.msra.mxu0 0.0
    %967 = vmatprep.subr.mxu0 0.0
    %968 = vmatpush1.msra.mxu0 0.0
    %969 = vmatprep.subr.mxu0 0.0
    %970 = vmatpush1.msra.mxu0 0.0
    %971 = vmatprep.subr.mxu0 0.0
    %972 = vmatpush1.msra.mxu0 0.0
    %973 = vmatprep.subr.mxu0 0.0
    %974 = vmatpush1.msra.mxu0 0.0
    %975 = vmatprep.subr.mxu0 0.0
    %976 = vmatpush1.msra.mxu0 0.0
    %977 = vmatprep.subr.mxu0 0.0
    %978 = vmatpush1.msra.mxu0 0.0
    %979 = vmatprep.subr.mxu0 0.0
    %980 = vmatpush1.msra.mxu0 0.0
    %981 = vmatprep.subr.mxu0 0.0
    %982 = vmatpush1.msra.mxu0 0.0
    %983 = vmatprep.subr.mxu0 0.0
    %984 = vmatpush1.msra.mxu0 0.0
    %985 = vmatprep.mubr.f32.mxu0 0.0
    %986 = vmatmul.mubr.f32.gmra.mrb[0].mxu0 %v919
    %v987 = vpop.f32.mrb[0].mxu0
    %v988 = vadd.f32 0.0, %v987
    %v989 = vpop.f32.mrb[0].mxu0
    %990 = vdwg.mxu0
    %v992 = vsel %vm211, %v915, 0
    %994 = vmatprep.subr.mxu0 0.0
    %995 = vmatpush1.msra.mxu0 %v207
    %996 = vmatprep.subr.mxu0 0.0
    %997 = vmatpush1.msra.mxu0 0.0
    %998 = vmatprep.subr.mxu0 0.0
    %999 = vmatpush1.msra.mxu0 0.0
    %1000 = vmatprep.subr.mxu0 0.0
    %1001 = vmatpush1.msra.mxu0 0.0
    %1002 = vmatprep.subr.mxu0 0.0
    %1003 = vmatpush1.msra.mxu0 0.0
    %1004 = vmatprep.subr.mxu0 0.0
    %1005 = vmatpush1.msra.mxu0 0.0
    %1006 = vmatprep.subr.mxu0 0.0
    %1007 = vmatpush1.msra.mxu0 0.0
    %1008 = vmatprep.subr.mxu0 0.0
    %1009 = vmatpush1.msra.mxu0 0.0
    %1010 = vmatprep.subr.mxu0 0.0
    %1011 = vmatpush1.msra.mxu0 0.0
    %1012 = vmatprep.subr.mxu0 0.0
    %1013 = vmatpush1.msra.mxu0 0.0
    %1014 = vmatprep.subr.mxu0 0.0
    %1015 = vmatpush1.msra.mxu0 0.0
    %1016 = vmatprep.subr.mxu0 0.0
    %1017 = vmatpush1.msra.mxu0 0.0
    %1018 = vmatprep.subr.mxu0 0.0
    %1019 = vmatpush1.msra.mxu0 0.0
    %1020 = vmatprep.subr.mxu0 0.0
    %1021 = vmatpush1.msra.mxu0 0.0
    %1022 = vmatprep.subr.mxu0 0.0
    %1023 = vmatpush1.msra.mxu0 0.0
    %1024 = vmatprep.subr.mxu0 0.0
    %1025 = vmatpush1.msra.mxu0 0.0
    %1026 = vmatprep.subr.mxu0 0.0
    %1027 = vmatpush1.msra.mxu0 0.0
    %1028 = vmatprep.subr.mxu0 0.0
    %1029 = vmatpush1.msra.mxu0 0.0
    %1030 = vmatprep.subr.mxu0 0.0
    %1031 = vmatpush1.msra.mxu0 0.0
    %1032 = vmatprep.subr.mxu0 0.0
    %1033 = vmatpush1.msra.mxu0 0.0
    %1034 = vmatprep.subr.mxu0 0.0
    %1035 = vmatpush1.msra.mxu0 0.0
    %1036 = vmatprep.subr.mxu0 0.0
    %1037 = vmatpush1.msra.mxu0 0.0
    %1038 = vmatprep.subr.mxu0 0.0
    %1039 = vmatpush1.msra.mxu0 0.0
    %1040 = vmatprep.subr.mxu0 0.0
    %1041 = vmatpush1.msra.mxu0 0.0
    %1042 = vmatprep.subr.mxu0 0.0
    %1043 = vmatpush1.msra.mxu0 0.0
    %1044 = vmatprep.subr.mxu0 0.0
    %1045 = vmatpush1.msra.mxu0 0.0
    %1046 = vmatprep.subr.mxu0 0.0
    %1047 = vmatpush1.msra.mxu0 0.0
    %1048 = vmatprep.subr.mxu0 0.0
    %1049 = vmatpush1.msra.mxu0 0.0
    %1050 = vmatprep.subr.mxu0 0.0
    %1051 = vmatpush1.msra.mxu0 0.0
    %1052 = vmatprep.subr.mxu0 0.0
    %1053 = vmatpush1.msra.mxu0 0.0
    %1054 = vmatprep.subr.mxu0 0.0
    %1055 = vmatpush1.msra.mxu0 0.0
    %1056 = vmatprep.subr.mxu0 0.0
    %1057 = vmatpush1.msra.mxu0 0.0
    %1058 = vmatprep.mubr.f32.mxu0 0.0
    %1059 = vmatmul.mubr.f32.gmra.mrb[0].mxu0 %v992
    %v1060 = vpop.f32.mrb[0].mxu0
    %v1061 = vadd.f32 %v988, %v1060
    %v1062 = vpop.f32.mrb[0].mxu0
    %1063 = vdwg.mxu0
    %v1064 = vadd.f32 %v1061, %v362
    %v1065 = vxor.u32 %v1064, 2147483648
    %v1066 = vmul.f32 %v1065, 1.442695
    %v1067 = vpow.pop %v1066
    %v1068 = vadd.f32 %v1067, 1.0
    %v1069 = vrcp.pop %v1068
    %v1070 = vmul.f32 1.0, %v1069
    %v1071 = vtanh.pop %v1064
    %v1072 = vmul.f32 %v1070, %v907
    %1074 = vrot.lane.b32.xlu0 %v1071, 112
    %v1075 = vpop.permute.xlu0 %1074
    %v1077 = vmul.f32 %v1070, %v1075
    %1079 = vrot.lane.b32.xlu0 %v1077, 8
    %v1080 = vpop.permute.xlu0 %1079
    %v1082 = vadd.f32 %v1072, %v1080
    %v1083 = vtanh.pop %v1082
    %1085 = vrot.lane.b32.xlu0 %v1083, 16
    %v1086 = vpop.permute.xlu0 %1085
    %v1088 = vmul.f32 %v1070, %v1086
    %s1089 = scalar_lea.vmem %s1, 10
    %v1090 = vld [vmem:[%s1089] sm:$0x3]
    %1092 = vrot.lane.b32.xlu0 %v1088, 104
    %v1093 = vpop.permute.xlu0 %1092
    %v1094 = vsel %vm211, %v1093, 0
    %1096 = vmatprep.subr.mxu0 0.0
    %1097 = vmatpush1.msra.mxu0 %v208
    %1098 = vmatprep.subr.mxu0 0.0
    %1099 = vmatpush1.msra.mxu0 0.0
    %1100 = vmatprep.subr.mxu0 0.0
    %1101 = vmatpush1.msra.mxu0 0.0
    %1102 = vmatprep.subr.mxu0 0.0
    %1103 = vmatpush1.msra.mxu0 0.0
    %1104 = vmatprep.subr.mxu0 0.0
    %1105 = vmatpush1.msra.mxu0 0.0
    %1106 = vmatprep.subr.mxu0 0.0
    %1107 = vmatpush1.msra.mxu0 0.0
    %1108 = vmatprep.subr.mxu0 0.0
    %1109 = vmatpush1.msra.mxu0 0.0
    %1110 = vmatprep.subr.mxu0 0.0
    %1111 = vmatpush1.msra.mxu0 0.0
    %1112 = vmatprep.subr.mxu0 0.0
    %1113 = vmatpush1.msra.mxu0 0.0
    %1114 = vmatprep.subr.mxu0 0.0
    %1115 = vmatpush1.msra.mxu0 0.0
    %1116 = vmatprep.subr.mxu0 0.0
    %1117 = vmatpush1.msra.mxu0 0.0
    %1118 = vmatprep.subr.mxu0 0.0
    %1119 = vmatpush1.msra.mxu0 0.0
    %1120 = vmatprep.subr.mxu0 0.0
    %1121 = vmatpush1.msra.mxu0 0.0
    %1122 = vmatprep.subr.mxu0 0.0
    %1123 = vmatpush1.msra.mxu0 0.0
    %1124 = vmatprep.subr.mxu0 0.0
    %1125 = vmatpush1.msra.mxu0 0.0
    %1126 = vmatprep.subr.mxu0 0.0
    %1127 = vmatpush1.msra.mxu0 0.0
    %1128 = vmatprep.subr.mxu0 0.0
    %1129 = vmatpush1.msra.mxu0 0.0
    %1130 = vmatprep.subr.mxu0 0.0
    %1131 = vmatpush1.msra.mxu0 0.0
    %1132 = vmatprep.subr.mxu0 0.0
    %1133 = vmatpush1.msra.mxu0 0.0
    %1134 = vmatprep.subr.mxu0 0.0
    %1135 = vmatpush1.msra.mxu0 0.0
    %1136 = vmatprep.subr.mxu0 0.0
    %1137 = vmatpush1.msra.mxu0 0.0
    %1138 = vmatprep.subr.mxu0 0.0
    %1139 = vmatpush1.msra.mxu0 0.0
    %1140 = vmatprep.subr.mxu0 0.0
    %1141 = vmatpush1.msra.mxu0 0.0
    %1142 = vmatprep.subr.mxu0 0.0
    %1143 = vmatpush1.msra.mxu0 0.0
    %1144 = vmatprep.subr.mxu0 0.0
    %1145 = vmatpush1.msra.mxu0 0.0
    %1146 = vmatprep.subr.mxu0 0.0
    %1147 = vmatpush1.msra.mxu0 0.0
    %1148 = vmatprep.subr.mxu0 0.0
    %1149 = vmatpush1.msra.mxu0 0.0
    %1150 = vmatprep.subr.mxu0 0.0
    %1151 = vmatpush1.msra.mxu0 0.0
    %1152 = vmatprep.subr.mxu0 0.0
    %1153 = vmatpush1.msra.mxu0 0.0
    %1154 = vmatprep.subr.mxu0 0.0
    %1155 = vmatpush1.msra.mxu0 0.0
    %1156 = vmatprep.subr.mxu0 0.0
    %1157 = vmatpush1.msra.mxu0 0.0
    %1158 = vmatprep.subr.mxu0 0.0
    %1159 = vmatpush1.msra.mxu0 0.0
    %1160 = vmatprep.mubr.f32.mxu0 0.0
    %1161 = vmatmul.mubr.f32.gmra.mrb[0].mxu0 %v1094
    %v1162 = vpop.f32.mrb[0].mxu0
    %v1163 = vadd.f32 0.0, %v1162
    %v1164 = vpop.f32.mrb[0].mxu0
    %1165 = vdwg.mxu0
    %v1167 = vsel %vm211, %v1090, 0
    %1169 = vmatprep.subr.mxu0 0.0
    %1170 = vmatpush1.msra.mxu0 %v207
    %1171 = vmatprep.subr.mxu0 0.0
    %1172 = vmatpush1.msra.mxu0 0.0
    %1173 = vmatprep.subr.mxu0 0.0
    %1174 = vmatpush1.msra.mxu0 0.0
    %1175 = vmatprep.subr.mxu0 0.0
    %1176 = vmatpush1.msra.mxu0 0.0
    %1177 = vmatprep.subr.mxu0 0.0
    %1178 = vmatpush1.msra.mxu0 0.0
    %1179 = vmatprep.subr.mxu0 0.0
    %1180 = vmatpush1.msra.mxu0 0.0
    %1181 = vmatprep.subr.mxu0 0.0
    %1182 = vmatpush1.msra.mxu0 0.0
    %1183 = vmatprep.subr.mxu0 0.0
    %1184 = vmatpush1.msra.mxu0 0.0
    %1185 = vmatprep.subr.mxu0 0.0
    %1186 = vmatpush1.msra.mxu0 0.0
    %1187 = vmatprep.subr.mxu0 0.0
    %1188 = vmatpush1.msra.mxu0 0.0
    %1189 = vmatprep.subr.mxu0 0.0
    %1190 = vmatpush1.msra.mxu0 0.0
    %1191 = vmatprep.subr.mxu0 0.0
    %1192 = vmatpush1.msra.mxu0 0.0
    %1193 = vmatprep.subr.mxu0 0.0
    %1194 = vmatpush1.msra.mxu0 0.0
    %1195 = vmatprep.subr.mxu0 0.0
    %1196 = vmatpush1.msra.mxu0 0.0
    %1197 = vmatprep.subr.mxu0 0.0
    %1198 = vmatpush1.msra.mxu0 0.0
    %1199 = vmatprep.subr.mxu0 0.0
    %1200 = vmatpush1.msra.mxu0 0.0
    %1201 = vmatprep.subr.mxu0 0.0
    %1202 = vmatpush1.msra.mxu0 0.0
    %1203 = vmatprep.subr.mxu0 0.0
    %1204 = vmatpush1.msra.mxu0 0.0
    %1205 = vmatprep.subr.mxu0 0.0
    %1206 = vmatpush1.msra.mxu0 0.0
    %1207 = vmatprep.subr.mxu0 0.0
    %1208 = vmatpush1.msra.mxu0 0.0
    %1209 = vmatprep.subr.mxu0 0.0
    %1210 = vmatpush1.msra.mxu0 0.0
    %1211 = vmatprep.subr.mxu0 0.0
    %1212 = vmatpush1.msra.mxu0 0.0
    %1213 = vmatprep.subr.mxu0 0.0
    %1214 = vmatpush1.msra.mxu0 0.0
    %1215 = vmatprep.subr.mxu0 0.0
    %1216 = vmatpush1.msra.mxu0 0.0
    %1217 = vmatprep.subr.mxu0 0.0
    %1218 = vmatpush1.msra.mxu0 0.0
    %1219 = vmatprep.subr.mxu0 0.0
    %1220 = vmatpush1.msra.mxu0 0.0
    %1221 = vmatprep.subr.mxu0 0.0
    %1222 = vmatpush1.msra.mxu0 0.0
    %1223 = vmatprep.subr.mxu0 0.0
    %1224 = vmatpush1.msra.mxu0 0.0
    %1225 = vmatprep.subr.mxu0 0.0
    %1226 = vmatpush1.msra.mxu0 0.0
    %1227 = vmatprep.subr.mxu0 0.0
    %1228 = vmatpush1.msra.mxu0 0.0
    %1229 = vmatprep.subr.mxu0 0.0
    %1230 = vmatpush1.msra.mxu0 0.0
    %1231 = vmatprep.subr.mxu0 0.0
    %1232 = vmatpush1.msra.mxu0 0.0
    %1233 = vmatprep.mubr.f32.mxu0 0.0
    %1234 = vmatmul.mubr.f32.gmra.mrb[0].mxu0 %v1167
    %v1235 = vpop.f32.mrb[0].mxu0
    %v1236 = vadd.f32 %v1163, %v1235
    %v1237 = vpop.f32.mrb[0].mxu0
    %1238 = vdwg.mxu0
    %v1239 = vadd.f32 %v1236, %v362
    %v1240 = vxor.u32 %v1239, 2147483648
    %v1241 = vmul.f32 %v1240, 1.442695
    %v1242 = vpow.pop %v1241
    %v1243 = vadd.f32 %v1242, 1.0
    %v1244 = vrcp.pop %v1243
    %v1245 = vmul.f32 1.0, %v1244
    %v1246 = vtanh.pop %v1239
    %v1247 = vmul.f32 %v1245, %v1082
    %1249 = vrot.lane.b32.xlu0 %v1246, 112
    %v1250 = vpop.permute.xlu0 %1249
    %v1252 = vmul.f32 %v1245, %v1250
    %1254 = vrot.lane.b32.xlu0 %v1252, 8
    %v1255 = vpop.permute.xlu0 %1254
    %v1257 = vadd.f32 %v1247, %v1255
    %v1258 = vtanh.pop %v1257
    %1260 = vrot.lane.b32.xlu0 %v1258, 16
    %v1261 = vpop.permute.xlu0 %1260
    %v1263 = vmul.f32 %v1245, %v1261
    %s1264 = scalar_lea.vmem %s1, 12
    %v1265 = vld [vmem:[%s1264] sm:$0x3]
    %1267 = vrot.lane.b32.xlu0 %v1263, 104
    %v1268 = vpop.permute.xlu0 %1267
    %v1269 = vsel %vm211, %v1268, 0
    %1271 = vmatprep.subr.mxu0 0.0
    %1272 = vmatpush1.msra.mxu0 %v208
    %1273 = vmatprep.subr.mxu0 0.0
    %1274 = vmatpush1.msra.mxu0 0.0
    %1275 = vmatprep.subr.mxu0 0.0
    %1276 = vmatpush1.msra.mxu0 0.0
    %1277 = vmatprep.subr.mxu0 0.0
    %1278 = vmatpush1.msra.mxu0 0.0
    %1279 = vmatprep.subr.mxu0 0.0
    %1280 = vmatpush1.msra.mxu0 0.0
    %1281 = vmatprep.subr.mxu0 0.0
    %1282 = vmatpush1.msra.mxu0 0.0
    %1283 = vmatprep.subr.mxu0 0.0
    %1284 = vmatpush1.msra.mxu0 0.0
    %1285 = vmatprep.subr.mxu0 0.0
    %1286 = vmatpush1.msra.mxu0 0.0
    %1287 = vmatprep.subr.mxu0 0.0
    %1288 = vmatpush1.msra.mxu0 0.0
    %1289 = vmatprep.subr.mxu0 0.0
    %1290 = vmatpush1.msra.mxu0 0.0
    %1291 = vmatprep.subr.mxu0 0.0
    %1292 = vmatpush1.msra.mxu0 0.0
    %1293 = vmatprep.subr.mxu0 0.0
    %1294 = vmatpush1.msra.mxu0 0.0
    %1295 = vmatprep.subr.mxu0 0.0
    %1296 = vmatpush1.msra.mxu0 0.0
    %1297 = vmatprep.subr.mxu0 0.0
    %1298 = vmatpush1.msra.mxu0 0.0
    %1299 = vmatprep.subr.mxu0 0.0
    %1300 = vmatpush1.msra.mxu0 0.0
    %1301 = vmatprep.subr.mxu0 0.0
    %1302 = vmatpush1.msra.mxu0 0.0
    %1303 = vmatprep.subr.mxu0 0.0
    %1304 = vmatpush1.msra.mxu0 0.0
    %1305 = vmatprep.subr.mxu0 0.0
    %1306 = vmatpush1.msra.mxu0 0.0
    %1307 = vmatprep.subr.mxu0 0.0
    %1308 = vmatpush1.msra.mxu0 0.0
    %1309 = vmatprep.subr.mxu0 0.0
    %1310 = vmatpush1.msra.mxu0 0.0
    %1311 = vmatprep.subr.mxu0 0.0
    %1312 = vmatpush1.msra.mxu0 0.0
    %1313 = vmatprep.subr.mxu0 0.0
    %1314 = vmatpush1.msra.mxu0 0.0
    %1315 = vmatprep.subr.mxu0 0.0
    %1316 = vmatpush1.msra.mxu0 0.0
    %1317 = vmatprep.subr.mxu0 0.0
    %1318 = vmatpush1.msra.mxu0 0.0
    %1319 = vmatprep.subr.mxu0 0.0
    %1320 = vmatpush1.msra.mxu0 0.0
    %1321 = vmatprep.subr.mxu0 0.0
    %1322 = vmatpush1.msra.mxu0 0.0
    %1323 = vmatprep.subr.mxu0 0.0
    %1324 = vmatpush1.msra.mxu0 0.0
    %1325 = vmatprep.subr.mxu0 0.0
    %1326 = vmatpush1.msra.mxu0 0.0
    %1327 = vmatprep.subr.mxu0 0.0
    %1328 = vmatpush1.msra.mxu0 0.0
    %1329 = vmatprep.subr.mxu0 0.0
    %1330 = vmatpush1.msra.mxu0 0.0
    %1331 = vmatprep.subr.mxu0 0.0
    %1332 = vmatpush1.msra.mxu0 0.0
    %1333 = vmatprep.subr.mxu0 0.0
    %1334 = vmatpush1.msra.mxu0 0.0
    %1335 = vmatprep.mubr.f32.mxu0 0.0
    %1336 = vmatmul.mubr.f32.gmra.mrb[0].mxu0 %v1269
    %v1337 = vpop.f32.mrb[0].mxu0
    %v1338 = vadd.f32 0.0, %v1337
    %v1339 = vpop.f32.mrb[0].mxu0
    %1340 = vdwg.mxu0
    %v1342 = vsel %vm211, %v1265, 0
    %1344 = vmatprep.subr.mxu0 0.0
    %1345 = vmatpush1.msra.mxu0 %v207
    %1346 = vmatprep.subr.mxu0 0.0
    %1347 = vmatpush1.msra.mxu0 0.0
    %1348 = vmatprep.subr.mxu0 0.0
    %1349 = vmatpush1.msra.mxu0 0.0
    %1350 = vmatprep.subr.mxu0 0.0
    %1351 = vmatpush1.msra.mxu0 0.0
    %1352 = vmatprep.subr.mxu0 0.0
    %1353 = vmatpush1.msra.mxu0 0.0
    %1354 = vmatprep.subr.mxu0 0.0
    %1355 = vmatpush1.msra.mxu0 0.0
    %1356 = vmatprep.subr.mxu0 0.0
    %1357 = vmatpush1.msra.mxu0 0.0
    %1358 = vmatprep.subr.mxu0 0.0
    %1359 = vmatpush1.msra.mxu0 0.0
    %1360 = vmatprep.subr.mxu0 0.0
    %1361 = vmatpush1.msra.mxu0 0.0
    %1362 = vmatprep.subr.mxu0 0.0
    %1363 = vmatpush1.msra.mxu0 0.0
    %1364 = vmatprep.subr.mxu0 0.0
    %1365 = vmatpush1.msra.mxu0 0.0
    %1366 = vmatprep.subr.mxu0 0.0
    %1367 = vmatpush1.msra.mxu0 0.0
    %1368 = vmatprep.subr.mxu0 0.0
    %1369 = vmatpush1.msra.mxu0 0.0
    %1370 = vmatprep.subr.mxu0 0.0
    %1371 = vmatpush1.msra.mxu0 0.0
    %1372 = vmatprep.subr.mxu0 0.0
    %1373 = vmatpush1.msra.mxu0 0.0
    %1374 = vmatprep.subr.mxu0 0.0
    %1375 = vmatpush1.msra.mxu0 0.0
    %1376 = vmatprep.subr.mxu0 0.0
    %1377 = vmatpush1.msra.mxu0 0.0
    %1378 = vmatprep.subr.mxu0 0.0
    %1379 = vmatpush1.msra.mxu0 0.0
    %1380 = vmatprep.subr.mxu0 0.0
    %1381 = vmatpush1.msra.mxu0 0.0
    %1382 = vmatprep.subr.mxu0 0.0
    %1383 = vmatpush1.msra.mxu0 0.0
    %1384 = vmatprep.subr.mxu0 0.0
    %1385 = vmatpush1.msra.mxu0 0.0
    %1386 = vmatprep.subr.mxu0 0.0
    %1387 = vmatpush1.msra.mxu0 0.0
    %1388 = vmatprep.subr.mxu0 0.0
    %1389 = vmatpush1.msra.mxu0 0.0
    %1390 = vmatprep.subr.mxu0 0.0
    %1391 = vmatpush1.msra.mxu0 0.0
    %1392 = vmatprep.subr.mxu0 0.0
    %1393 = vmatpush1.msra.mxu0 0.0
    %1394 = vmatprep.subr.mxu0 0.0
    %1395 = vmatpush1.msra.mxu0 0.0
    %1396 = vmatprep.subr.mxu0 0.0
    %1397 = vmatpush1.msra.mxu0 0.0
    %1398 = vmatprep.subr.mxu0 0.0
    %1399 = vmatpush1.msra.mxu0 0.0
    %1400 = vmatprep.subr.mxu0 0.0
    %1401 = vmatpush1.msra.mxu0 0.0
    %1402 = vmatprep.subr.mxu0 0.0
    %1403 = vmatpush1.msra.mxu0 0.0
    %1404 = vmatprep.subr.mxu0 0.0
    %1405 = vmatpush1.msra.mxu0 0.0
    %1406 = vmatprep.subr.mxu0 0.0
    %1407 = vmatpush1.msra.mxu0 0.0
    %1408 = vmatprep.mubr.f32.mxu0 0.0
    %1409 = vmatmul.mubr.f32.gmra.mrb[0].mxu0 %v1342
    %v1410 = vpop.f32.mrb[0].mxu0
    %v1411 = vadd.f32 %v1338, %v1410
    %v1412 = vpop.f32.mrb[0].mxu0
    %1413 = vdwg.mxu0
    %v1414 = vadd.f32 %v1411, %v362
    %v1415 = vxor.u32 %v1414, 2147483648
    %v1416 = vmul.f32 %v1415, 1.442695
    %v1417 = vpow.pop %v1416
    %v1418 = vadd.f32 %v1417, 1.0
    %v1419 = vrcp.pop %v1418
    %v1420 = vmul.f32 1.0, %v1419
    %v1421 = vtanh.pop %v1414
    %v1422 = vmul.f32 %v1420, %v1257
    %1424 = vrot.lane.b32.xlu0 %v1421, 112
    %v1425 = vpop.permute.xlu0 %1424
    %v1427 = vmul.f32 %v1420, %v1425
    %1429 = vrot.lane.b32.xlu0 %v1427, 8
    %v1430 = vpop.permute.xlu0 %1429
    %v1432 = vadd.f32 %v1422, %v1430
    %v1433 = vtanh.pop %v1432
    %1435 = vrot.lane.b32.xlu0 %v1433, 16
    %v1436 = vpop.permute.xlu0 %1435
    %v1438 = vmul.f32 %v1420, %v1436
    %s1439 = scalar_lea.vmem %s1, 14
    %v1440 = vld [vmem:[%s1439] sm:$0x3]
    %1442 = vrot.lane.b32.xlu0 %v1438, 104
    %v1443 = vpop.permute.xlu0 %1442
    %v1444 = vsel %vm211, %v1443, 0
    %1446 = vmatprep.subr.mxu0 0.0
    %1447 = vmatpush1.msra.mxu0 %v208
    %1448 = vmatprep.subr.mxu0 0.0
    %1449 = vmatpush1.msra.mxu0 0.0
    %1450 = vmatprep.subr.mxu0 0.0
    %1451 = vmatpush1.msra.mxu0 0.0
    %1452 = vmatprep.subr.mxu0 0.0
    %1453 = vmatpush1.msra.mxu0 0.0
    %1454 = vmatprep.subr.mxu0 0.0
    %1455 = vmatpush1.msra.mxu0 0.0
    %1456 = vmatprep.subr.mxu0 0.0
    %1457 = vmatpush1.msra.mxu0 0.0
    %1458 = vmatprep.subr.mxu0 0.0
    %1459 = vmatpush1.msra.mxu0 0.0
    %1460 = vmatprep.subr.mxu0 0.0
    %1461 = vmatpush1.msra.mxu0 0.0
    %1462 = vmatprep.subr.mxu0 0.0
    %1463 = vmatpush1.msra.mxu0 0.0
    %1464 = vmatprep.subr.mxu0 0.0
    %1465 = vmatpush1.msra.mxu0 0.0
    %1466 = vmatprep.subr.mxu0 0.0
    %1467 = vmatpush1.msra.mxu0 0.0
    %1468 = vmatprep.subr.mxu0 0.0
    %1469 = vmatpush1.msra.mxu0 0.0
    %1470 = vmatprep.subr.mxu0 0.0
    %1471 = vmatpush1.msra.mxu0 0.0
    %1472 = vmatprep.subr.mxu0 0.0
    %1473 = vmatpush1.msra.mxu0 0.0
    %1474 = vmatprep.subr.mxu0 0.0
    %1475 = vmatpush1.msra.mxu0 0.0
    %1476 = vmatprep.subr.mxu0 0.0
    %1477 = vmatpush1.msra.mxu0 0.0
    %1478 = vmatprep.subr.mxu0 0.0
    %1479 = vmatpush1.msra.mxu0 0.0
    %1480 = vmatprep.subr.mxu0 0.0
    %1481 = vmatpush1.msra.mxu0 0.0
    %1482 = vmatprep.subr.mxu0 0.0
    %1483 = vmatpush1.msra.mxu0 0.0
    %1484 = vmatprep.subr.mxu0 0.0
    %1485 = vmatpush1.msra.mxu0 0.0
    %1486 = vmatprep.subr.mxu0 0.0
    %1487 = vmatpush1.msra.mxu0 0.0
    %1488 = vmatprep.subr.mxu0 0.0
    %1489 = vmatpush1.msra.mxu0 0.0
    %1490 = vmatprep.subr.mxu0 0.0
    %1491 = vmatpush1.msra.mxu0 0.0
    %1492 = vmatprep.subr.mxu0 0.0
    %1493 = vmatpush1.msra.mxu0 0.0
    %1494 = vmatprep.subr.mxu0 0.0
    %1495 = vmatpush1.msra.mxu0 0.0
    %1496 = vmatprep.subr.mxu0 0.0
    %1497 = vmatpush1.msra.mxu0 0.0
    %1498 = vmatprep.subr.mxu0 0.0
    %1499 = vmatpush1.msra.mxu0 0.0
    %1500 = vmatprep.subr.mxu0 0.0
    %1501 = vmatpush1.msra.mxu0 0.0
    %1502 = vmatprep.subr.mxu0 0.0
    %1503 = vmatpush1.msra.mxu0 0.0
    %1504 = vmatprep.subr.mxu0 0.0
    %1505 = vmatpush1.msra.mxu0 0.0
    %1506 = vmatprep.subr.mxu0 0.0
    %1507 = vmatpush1.msra.mxu0 0.0
    %1508 = vmatprep.subr.mxu0 0.0
    %1509 = vmatpush1.msra.mxu0 0.0
    %1510 = vmatprep.mubr.f32.mxu0 0.0
    %1511 = vmatmul.mubr.f32.gmra.mrb[0].mxu0 %v1444
    %v1512 = vpop.f32.mrb[0].mxu0
    %v1513 = vadd.f32 0.0, %v1512
    %v1514 = vpop.f32.mrb[0].mxu0
    %1515 = vdwg.mxu0
    %v1517 = vsel %vm211, %v1440, 0
    %1519 = vmatprep.subr.mxu0 0.0
    %1520 = vmatpush1.msra.mxu0 %v207
    %1521 = vmatprep.subr.mxu0 0.0
    %1522 = vmatpush1.msra.mxu0 0.0
    %1523 = vmatprep.subr.mxu0 0.0
    %1524 = vmatpush1.msra.mxu0 0.0
    %1525 = vmatprep.subr.mxu0 0.0
    %1526 = vmatpush1.msra.mxu0 0.0
    %1527 = vmatprep.subr.mxu0 0.0
    %1528 = vmatpush1.msra.mxu0 0.0
    %1529 = vmatprep.subr.mxu0 0.0
    %1530 = vmatpush1.msra.mxu0 0.0
    %1531 = vmatprep.subr.mxu0 0.0
    %1532 = vmatpush1.msra.mxu0 0.0
    %1533 = vmatprep.subr.mxu0 0.0
    %1534 = vmatpush1.msra.mxu0 0.0
    %1535 = vmatprep.subr.mxu0 0.0
    %1536 = vmatpush1.msra.mxu0 0.0
    %1537 = vmatprep.subr.mxu0 0.0
    %1538 = vmatpush1.msra.mxu0 0.0
    %1539 = vmatprep.subr.mxu0 0.0
    %1540 = vmatpush1.msra.mxu0 0.0
    %1541 = vmatprep.subr.mxu0 0.0
    %1542 = vmatpush1.msra.mxu0 0.0
    %1543 = vmatprep.subr.mxu0 0.0
    %1544 = vmatpush1.msra.mxu0 0.0
    %1545 = vmatprep.subr.mxu0 0.0
    %1546 = vmatpush1.msra.mxu0 0.0
    %1547 = vmatprep.subr.mxu0 0.0
    %1548 = vmatpush1.msra.mxu0 0.0
    %1549 = vmatprep.subr.mxu0 0.0
    %1550 = vmatpush1.msra.mxu0 0.0
    %1551 = vmatprep.subr.mxu0 0.0
    %1552 = vmatpush1.msra.mxu0 0.0
    %1553 = vmatprep.subr.mxu0 0.0
    %1554 = vmatpush1.msra.mxu0 0.0
    %1555 = vmatprep.subr.mxu0 0.0
    %1556 = vmatpush1.msra.mxu0 0.0
    %1557 = vmatprep.subr.mxu0 0.0
    %1558 = vmatpush1.msra.mxu0 0.0
    %1559 = vmatprep.subr.mxu0 0.0
    %1560 = vmatpush1.msra.mxu0 0.0
    %1561 = vmatprep.subr.mxu0 0.0
    %1562 = vmatpush1.msra.mxu0 0.0
    %1563 = vmatprep.subr.mxu0 0.0
    %1564 = vmatpush1.msra.mxu0 0.0
    %1565 = vmatprep.subr.mxu0 0.0
    %1566 = vmatpush1.msra.mxu0 0.0
    %1567 = vmatprep.subr.mxu0 0.0
    %1568 = vmatpush1.msra.mxu0 0.0
    %1569 = vmatprep.subr.mxu0 0.0
    %1570 = vmatpush1.msra.mxu0 0.0
    %1571 = vmatprep.subr.mxu0 0.0
    %1572 = vmatpush1.msra.mxu0 0.0
    %1573 = vmatprep.subr.mxu0 0.0
    %1574 = vmatpush1.msra.mxu0 0.0
    %1575 = vmatprep.subr.mxu0 0.0
    %1576 = vmatpush1.msra.mxu0 0.0
    %1577 = vmatprep.subr.mxu0 0.0
    %1578 = vmatpush1.msra.mxu0 0.0
    %1579 = vmatprep.subr.mxu0 0.0
    %1580 = vmatpush1.msra.mxu0 0.0
    %1581 = vmatprep.subr.mxu0 0.0
    %1582 = vmatpush1.msra.mxu0 0.0
    %1583 = vmatprep.mubr.f32.mxu0 0.0
    %1584 = vmatmul.mubr.f32.gmra.mrb[0].mxu0 %v1517
    %v1585 = vpop.f32.mrb[0].mxu0
    %v1586 = vadd.f32 %v1513, %v1585
    %v1587 = vpop.f32.mrb[0].mxu0
    %1588 = vdwg.mxu0
    %v1589 = vadd.f32 %v1586, %v362
    %v1590 = vxor.u32 %v1589, 2147483648
    %v1591 = vmul.f32 %v1590, 1.442695
    %v1592 = vpow.pop %v1591
    %v1593 = vadd.f32 %v1592, 1.0
    %v1594 = vrcp.pop %v1593
    %v1595 = vmul.f32 1.0, %v1594
    %v1596 = vtanh.pop %v1589
    %v1597 = vmul.f32 %v1595, %v1432
    %1599 = vrot.lane.b32.xlu0 %v1596, 112
    %v1600 = vpop.permute.xlu0 %1599
    %v1602 = vmul.f32 %v1595, %v1600
    %1604 = vrot.lane.b32.xlu0 %v1602, 8
    %v1605 = vpop.permute.xlu0 %1604
    %v1607 = vadd.f32 %v1597, %v1605
    %v1608 = vtanh.pop %v1607
    %1610 = vrot.lane.b32.xlu0 %v1608, 16
    %v1611 = vpop.permute.xlu0 %1610
    %v1613 = vmul.f32 %v1595, %v1611
    %s1614 = scalar_lea.vmem %s1, 16
    %v1615 = vld [vmem:[%s1614] sm:$0x3]
    %1617 = vrot.lane.b32.xlu0 %v1613, 104
    %v1618 = vpop.permute.xlu0 %1617
    %v1619 = vsel %vm211, %v1618, 0
    %1621 = vmatprep.subr.mxu0 0.0
    %1622 = vmatpush1.msra.mxu0 %v208
    %1623 = vmatprep.subr.mxu0 0.0
    %1624 = vmatpush1.msra.mxu0 0.0
    %1625 = vmatprep.subr.mxu0 0.0
    %1626 = vmatpush1.msra.mxu0 0.0
    %1627 = vmatprep.subr.mxu0 0.0
    %1628 = vmatpush1.msra.mxu0 0.0
    %1629 = vmatprep.subr.mxu0 0.0
    %1630 = vmatpush1.msra.mxu0 0.0
    %1631 = vmatprep.subr.mxu0 0.0
    %1632 = vmatpush1.msra.mxu0 0.0
    %1633 = vmatprep.subr.mxu0 0.0
    %1634 = vmatpush1.msra.mxu0 0.0
    %1635 = vmatprep.subr.mxu0 0.0
    %1636 = vmatpush1.msra.mxu0 0.0
    %1637 = vmatprep.subr.mxu0 0.0
    %1638 = vmatpush1.msra.mxu0 0.0
    %1639 = vmatprep.subr.mxu0 0.0
    %1640 = vmatpush1.msra.mxu0 0.0
    %1641 = vmatprep.subr.mxu0 0.0
    %1642 = vmatpush1.msra.mxu0 0.0
    %1643 = vmatprep.subr.mxu0 0.0
    %1644 = vmatpush1.msra.mxu0 0.0
    %1645 = vmatprep.subr.mxu0 0.0
    %1646 = vmatpush1.msra.mxu0 0.0
    %1647 = vmatprep.subr.mxu0 0.0
    %1648 = vmatpush1.msra.mxu0 0.0
    %1649 = vmatprep.subr.mxu0 0.0
    %1650 = vmatpush1.msra.mxu0 0.0
    %1651 = vmatprep.subr.mxu0 0.0
    %1652 = vmatpush1.msra.mxu0 0.0
    %1653 = vmatprep.subr.mxu0 0.0
    %1654 = vmatpush1.msra.mxu0 0.0
    %1655 = vmatprep.subr.mxu0 0.0
    %1656 = vmatpush1.msra.mxu0 0.0
    %1657 = vmatprep.subr.mxu0 0.0
    %1658 = vmatpush1.msra.mxu0 0.0
    %1659 = vmatprep.subr.mxu0 0.0
    %1660 = vmatpush1.msra.mxu0 0.0
    %1661 = vmatprep.subr.mxu0 0.0
    %1662 = vmatpush1.msra.mxu0 0.0
    %1663 = vmatprep.subr.mxu0 0.0
    %1664 = vmatpush1.msra.mxu0 0.0
    %1665 = vmatprep.subr.mxu0 0.0
    %1666 = vmatpush1.msra.mxu0 0.0
    %1667 = vmatprep.subr.mxu0 0.0
    %1668 = vmatpush1.msra.mxu0 0.0
    %1669 = vmatprep.subr.mxu0 0.0
    %1670 = vmatpush1.msra.mxu0 0.0
    %1671 = vmatprep.subr.mxu0 0.0
    %1672 = vmatpush1.msra.mxu0 0.0
    %1673 = vmatprep.subr.mxu0 0.0
    %1674 = vmatpush1.msra.mxu0 0.0
    %1675 = vmatprep.subr.mxu0 0.0
    %1676 = vmatpush1.msra.mxu0 0.0
    %1677 = vmatprep.subr.mxu0 0.0
    %1678 = vmatpush1.msra.mxu0 0.0
    %1679 = vmatprep.subr.mxu0 0.0
    %1680 = vmatpush1.msra.mxu0 0.0
    %1681 = vmatprep.subr.mxu0 0.0
    %1682 = vmatpush1.msra.mxu0 0.0
    %1683 = vmatprep.subr.mxu0 0.0
    %1684 = vmatpush1.msra.mxu0 0.0
    %1685 = vmatprep.mubr.f32.mxu0 0.0
    %1686 = vmatmul.mubr.f32.gmra.mrb[0].mxu0 %v1619
    %v1687 = vpop.f32.mrb[0].mxu0
    %v1688 = vadd.f32 0.0, %v1687
    %v1689 = vpop.f32.mrb[0].mxu0
    %1690 = vdwg.mxu0
    %v1692 = vsel %vm211, %v1615, 0
    %1694 = vmatprep.subr.mxu0 0.0
    %1695 = vmatpush1.msra.mxu0 %v207
    %1696 = vmatprep.subr.mxu0 0.0
    %1697 = vmatpush1.msra.mxu0 0.0
    %1698 = vmatprep.subr.mxu0 0.0
    %1699 = vmatpush1.msra.mxu0 0.0
    %1700 = vmatprep.subr.mxu0 0.0
    %1701 = vmatpush1.msra.mxu0 0.0
    %1702 = vmatprep.subr.mxu0 0.0
    %1703 = vmatpush1.msra.mxu0 0.0
    %1704 = vmatprep.subr.mxu0 0.0
    %1705 = vmatpush1.msra.mxu0 0.0
    %1706 = vmatprep.subr.mxu0 0.0
    %1707 = vmatpush1.msra.mxu0 0.0
    %1708 = vmatprep.subr.mxu0 0.0
    %1709 = vmatpush1.msra.mxu0 0.0
    %1710 = vmatprep.subr.mxu0 0.0
    %1711 = vmatpush1.msra.mxu0 0.0
    %1712 = vmatprep.subr.mxu0 0.0
    %1713 = vmatpush1.msra.mxu0 0.0
    %1714 = vmatprep.subr.mxu0 0.0
    %1715 = vmatpush1.msra.mxu0 0.0
    %1716 = vmatprep.subr.mxu0 0.0
    %1717 = vmatpush1.msra.mxu0 0.0
    %1718 = vmatprep.subr.mxu0 0.0
    %1719 = vmatpush1.msra.mxu0 0.0
    %1720 = vmatprep.subr.mxu0 0.0
    %1721 = vmatpush1.msra.mxu0 0.0
    %1722 = vmatprep.subr.mxu0 0.0
    %1723 = vmatpush1.msra.mxu0 0.0
    %1724 = vmatprep.subr.mxu0 0.0
    %1725 = vmatpush1.msra.mxu0 0.0
    %1726 = vmatprep.subr.mxu0 0.0
    %1727 = vmatpush1.msra.mxu0 0.0
    %1728 = vmatprep.subr.mxu0 0.0
    %1729 = vmatpush1.msra.mxu0 0.0
    %1730 = vmatprep.subr.mxu0 0.0
    %1731 = vmatpush1.msra.mxu0 0.0
    %1732 = vmatprep.subr.mxu0 0.0
    %1733 = vmatpush1.msra.mxu0 0.0
    %1734 = vmatprep.subr.mxu0 0.0
    %1735 = vmatpush1.msra.mxu0 0.0
    %1736 = vmatprep.subr.mxu0 0.0
    %1737 = vmatpush1.msra.mxu0 0.0
    %1738 = vmatprep.subr.mxu0 0.0
    %1739 = vmatpush1.msra.mxu0 0.0
    %1740 = vmatprep.subr.mxu0 0.0
    %1741 = vmatpush1.msra.mxu0 0.0
    %1742 = vmatprep.subr.mxu0 0.0
    %1743 = vmatpush1.msra.mxu0 0.0
    %1744 = vmatprep.subr.mxu0 0.0
    %1745 = vmatpush1.msra.mxu0 0.0
    %1746 = vmatprep.subr.mxu0 0.0
    %1747 = vmatpush1.msra.mxu0 0.0
    %1748 = vmatprep.subr.mxu0 0.0
    %1749 = vmatpush1.msra.mxu0 0.0
    %1750 = vmatprep.subr.mxu0 0.0
    %1751 = vmatpush1.msra.mxu0 0.0
    %1752 = vmatprep.subr.mxu0 0.0
    %1753 = vmatpush1.msra.mxu0 0.0
    %1754 = vmatprep.subr.mxu0 0.0
    %1755 = vmatpush1.msra.mxu0 0.0
    %1756 = vmatprep.subr.mxu0 0.0
    %1757 = vmatpush1.msra.mxu0 0.0
    %1758 = vmatprep.mubr.f32.mxu0 0.0
    %1759 = vmatmul.mubr.f32.gmra.mrb[0].mxu0 %v1692
    %v1760 = vpop.f32.mrb[0].mxu0
    %v1761 = vadd.f32 %v1688, %v1760
    %v1762 = vpop.f32.mrb[0].mxu0
    %1763 = vdwg.mxu0
    %v1764 = vadd.f32 %v1761, %v362
    %v1765 = vxor.u32 %v1764, 2147483648
    %v1766 = vmul.f32 %v1765, 1.442695
    %v1767 = vpow.pop %v1766
    %v1768 = vadd.f32 %v1767, 1.0
    %v1769 = vrcp.pop %v1768
    %v1770 = vmul.f32 1.0, %v1769
    %v1771 = vtanh.pop %v1764
    %v1772 = vmul.f32 %v1770, %v1607
    %1774 = vrot.lane.b32.xlu0 %v1771, 112
    %v1775 = vpop.permute.xlu0 %1774
    %v1777 = vmul.f32 %v1770, %v1775
    %1779 = vrot.lane.b32.xlu0 %v1777, 8
    %v1780 = vpop.permute.xlu0 %1779
    %v1782 = vadd.f32 %v1772, %v1780
    %v1783 = vtanh.pop %v1782
    %1785 = vrot.lane.b32.xlu0 %v1783, 16
    %v1786 = vpop.permute.xlu0 %1785
    %v1788 = vmul.f32 %v1770, %v1786
    %s1789 = scalar_lea.vmem %s1, 18
    %v1790 = vld [vmem:[%s1789] sm:$0x3]
    %1792 = vrot.lane.b32.xlu0 %v1788, 104
    %v1793 = vpop.permute.xlu0 %1792
    %v1794 = vsel %vm211, %v1793, 0
    %1796 = vmatprep.subr.mxu0 0.0
    %1797 = vmatpush1.msra.mxu0 %v208
    %1798 = vmatprep.subr.mxu0 0.0
    %1799 = vmatpush1.msra.mxu0 0.0
    %1800 = vmatprep.subr.mxu0 0.0
    %1801 = vmatpush1.msra.mxu0 0.0
    %1802 = vmatprep.subr.mxu0 0.0
    %1803 = vmatpush1.msra.mxu0 0.0
    %1804 = vmatprep.subr.mxu0 0.0
    %1805 = vmatpush1.msra.mxu0 0.0
    %1806 = vmatprep.subr.mxu0 0.0
    %1807 = vmatpush1.msra.mxu0 0.0
    %1808 = vmatprep.subr.mxu0 0.0
    %1809 = vmatpush1.msra.mxu0 0.0
    %1810 = vmatprep.subr.mxu0 0.0
    %1811 = vmatpush1.msra.mxu0 0.0
    %1812 = vmatprep.subr.mxu0 0.0
    %1813 = vmatpush1.msra.mxu0 0.0
    %1814 = vmatprep.subr.mxu0 0.0
    %1815 = vmatpush1.msra.mxu0 0.0
    %1816 = vmatprep.subr.mxu0 0.0
    %1817 = vmatpush1.msra.mxu0 0.0
    %1818 = vmatprep.subr.mxu0 0.0
    %1819 = vmatpush1.msra.mxu0 0.0
    %1820 = vmatprep.subr.mxu0 0.0
    %1821 = vmatpush1.msra.mxu0 0.0
    %1822 = vmatprep.subr.mxu0 0.0
    %1823 = vmatpush1.msra.mxu0 0.0
    %1824 = vmatprep.subr.mxu0 0.0
    %1825 = vmatpush1.msra.mxu0 0.0
    %1826 = vmatprep.subr.mxu0 0.0
    %1827 = vmatpush1.msra.mxu0 0.0
    %1828 = vmatprep.subr.mxu0 0.0
    %1829 = vmatpush1.msra.mxu0 0.0
    %1830 = vmatprep.subr.mxu0 0.0
    %1831 = vmatpush1.msra.mxu0 0.0
    %1832 = vmatprep.subr.mxu0 0.0
    %1833 = vmatpush1.msra.mxu0 0.0
    %1834 = vmatprep.subr.mxu0 0.0
    %1835 = vmatpush1.msra.mxu0 0.0
    %1836 = vmatprep.subr.mxu0 0.0
    %1837 = vmatpush1.msra.mxu0 0.0
    %1838 = vmatprep.subr.mxu0 0.0
    %1839 = vmatpush1.msra.mxu0 0.0
    %1840 = vmatprep.subr.mxu0 0.0
    %1841 = vmatpush1.msra.mxu0 0.0
    %1842 = vmatprep.subr.mxu0 0.0
    %1843 = vmatpush1.msra.mxu0 0.0
    %1844 = vmatprep.subr.mxu0 0.0
    %1845 = vmatpush1.msra.mxu0 0.0
    %1846 = vmatprep.subr.mxu0 0.0
    %1847 = vmatpush1.msra.mxu0 0.0
    %1848 = vmatprep.subr.mxu0 0.0
    %1849 = vmatpush1.msra.mxu0 0.0
    %1850 = vmatprep.subr.mxu0 0.0
    %1851 = vmatpush1.msra.mxu0 0.0
    %1852 = vmatprep.subr.mxu0 0.0
    %1853 = vmatpush1.msra.mxu0 0.0
    %1854 = vmatprep.subr.mxu0 0.0
    %1855 = vmatpush1.msra.mxu0 0.0
    %1856 = vmatprep.subr.mxu0 0.0
    %1857 = vmatpush1.msra.mxu0 0.0
    %1858 = vmatprep.subr.mxu0 0.0
    %1859 = vmatpush1.msra.mxu0 0.0
    %1860 = vmatprep.mubr.f32.mxu0 0.0
    %1861 = vmatmul.mubr.f32.gmra.mrb[0].mxu0 %v1794
    %v1862 = vpop.f32.mrb[0].mxu0
    %v1863 = vadd.f32 0.0, %v1862
    %v1864 = vpop.f32.mrb[0].mxu0
    %1865 = vdwg.mxu0
    %v1867 = vsel %vm211, %v1790, 0
    %1869 = vmatprep.subr.mxu0 0.0
    %1870 = vmatpush1.msra.mxu0 %v207
    %1871 = vmatprep.subr.mxu0 0.0
    %1872 = vmatpush1.msra.mxu0 0.0
    %1873 = vmatprep.subr.mxu0 0.0
    %1874 = vmatpush1.msra.mxu0 0.0
    %1875 = vmatprep.subr.mxu0 0.0
    %1876 = vmatpush1.msra.mxu0 0.0
    %1877 = vmatprep.subr.mxu0 0.0
    %1878 = vmatpush1.msra.mxu0 0.0
    %1879 = vmatprep.subr.mxu0 0.0
    %1880 = vmatpush1.msra.mxu0 0.0
    %1881 = vmatprep.subr.mxu0 0.0
    %1882 = vmatpush1.msra.mxu0 0.0
    %1883 = vmatprep.subr.mxu0 0.0
    %1884 = vmatpush1.msra.mxu0 0.0
    %1885 = vmatprep.subr.mxu0 0.0
    %1886 = vmatpush1.msra.mxu0 0.0
    %1887 = vmatprep.subr.mxu0 0.0
    %1888 = vmatpush1.msra.mxu0 0.0
    %1889 = vmatprep.subr.mxu0 0.0
    %1890 = vmatpush1.msra.mxu0 0.0
    %1891 = vmatprep.subr.mxu0 0.0
    %1892 = vmatpush1.msra.mxu0 0.0
    %1893 = vmatprep.subr.mxu0 0.0
    %1894 = vmatpush1.msra.mxu0 0.0
    %1895 = vmatprep.subr.mxu0 0.0
    %1896 = vmatpush1.msra.mxu0 0.0
    %1897 = vmatprep.subr.mxu0 0.0
    %1898 = vmatpush1.msra.mxu0 0.0
    %1899 = vmatprep.subr.mxu0 0.0
    %1900 = vmatpush1.msra.mxu0 0.0
    %1901 = vmatprep.subr.mxu0 0.0
    %1902 = vmatpush1.msra.mxu0 0.0
    %1903 = vmatprep.subr.mxu0 0.0
    %1904 = vmatpush1.msra.mxu0 0.0
    %1905 = vmatprep.subr.mxu0 0.0
    %1906 = vmatpush1.msra.mxu0 0.0
    %1907 = vmatprep.subr.mxu0 0.0
    %1908 = vmatpush1.msra.mxu0 0.0
    %1909 = vmatprep.subr.mxu0 0.0
    %1910 = vmatpush1.msra.mxu0 0.0
    %1911 = vmatprep.subr.mxu0 0.0
    %1912 = vmatpush1.msra.mxu0 0.0
    %1913 = vmatprep.subr.mxu0 0.0
    %1914 = vmatpush1.msra.mxu0 0.0
    %1915 = vmatprep.subr.mxu0 0.0
    %1916 = vmatpush1.msra.mxu0 0.0
    %1917 = vmatprep.subr.mxu0 0.0
    %1918 = vmatpush1.msra.mxu0 0.0
    %1919 = vmatprep.subr.mxu0 0.0
    %1920 = vmatpush1.msra.mxu0 0.0
    %1921 = vmatprep.subr.mxu0 0.0
    %1922 = vmatpush1.msra.mxu0 0.0
    %1923 = vmatprep.subr.mxu0 0.0
    %1924 = vmatpush1.msra.mxu0 0.0
    %1925 = vmatprep.subr.mxu0 0.0
    %1926 = vmatpush1.msra.mxu0 0.0
    %1927 = vmatprep.subr.mxu0 0.0
    %1928 = vmatpush1.msra.mxu0 0.0
    %1929 = vmatprep.subr.mxu0 0.0
    %1930 = vmatpush1.msra.mxu0 0.0
    %1931 = vmatprep.subr.mxu0 0.0
    %1932 = vmatpush1.msra.mxu0 0.0
    %1933 = vmatprep.mubr.f32.mxu0 0.0
    %1934 = vmatmul.mubr.f32.gmra.mrb[0].mxu0 %v1867
    %v1935 = vpop.f32.mrb[0].mxu0
    %v1936 = vadd.f32 %v1863, %v1935
    %v1937 = vpop.f32.mrb[0].mxu0
    %1938 = vdwg.mxu0
    %v1939 = vadd.f32 %v1936, %v362
    %v1940 = vxor.u32 %v1939, 2147483648
    %v1941 = vmul.f32 %v1940, 1.442695
    %v1942 = vpow.pop %v1941
    %v1943 = vadd.f32 %v1942, 1.0
    %v1944 = vrcp.pop %v1943
    %v1945 = vmul.f32 1.0, %v1944
    %v1946 = vtanh.pop %v1939
    %v1947 = vmul.f32 %v1945, %v1782
    %1949 = vrot.lane.b32.xlu0 %v1946, 112
    %v1950 = vpop.permute.xlu0 %1949
    %v1952 = vmul.f32 %v1945, %v1950
    %1954 = vrot.lane.b32.xlu0 %v1952, 8
    %v1955 = vpop.permute.xlu0 %1954
    %v1957 = vadd.f32 %v1947, %v1955
    %v1958 = vtanh.pop %v1957
    %1960 = vrot.lane.b32.xlu0 %v1958, 16
    %v1961 = vpop.permute.xlu0 %1960
    %v1963 = vmul.f32 %v1945, %v1961
    %v1964 = vld [vmem:[%s71] sm:$0xff]
    %v1965 = vld [vmem:[%s69] sm:$0xff]
    %v1966 = vrot.slane %v563, 7
    %v1968 = vrot.slane %v738, 6
    %v1970 = vrot.slane %v913, 5
    %v1972 = vrot.slane %v1088, 4
    %v1974 = vrot.slane %v1263, 3
    %v1976 = vrot.slane %v1438, 2
    %v1978 = vrot.slane %v1613, 1
    %v1981 = vrot.slane %v1963, 7
    %vm1983 = vcmask 1040384
    %v1984 = vsel %vm1983, %v388, %v1966
    %vm1985 = vcmask 1041408
    %v1986 = vsel %vm1985, %v1984, %v1968
    %vm1987 = vcmask 1042432
    %v1988 = vsel %vm1987, %v1986, %v1970
    %vm1989 = vcmask 1043456
    %v1990 = vsel %vm1989, %v1988, %v1972
    %vm1991 = vcmask 1044480
    %v1992 = vsel %vm1991, %v1990, %v1974
    %vm1993 = vcmask 1045504
    %v1994 = vsel %vm1993, %v1992, %v1976
    %vm1995 = vcmask 1046528
    %v1996 = vsel %vm1995, %v1994, %v1978
    %v1997 = vsel %vm1983, %v1788, %v1981
    %2000 = vrot.lane.b32.xlu0 %v1996, 104
    %v2001 = vpop.permute.xlu0 %2000
    %2002 = vrot.lane.b32.xlu0 %v1997, 104
    %v2003 = vpop.permute.xlu0 %2002
    %2006 = vxpose.xlu0.b32.start [1/16] %v2001, 128
    %2007 = vxpose.xlu0.b32.cont [2/16] %v2003, 128
    %2008 = vxpose.xlu0.b32.cont [3/16] 0.0, 128
    %2009 = vxpose.xlu0.b32.cont [4/16] 0.0, 128
    %2010 = vxpose.xlu0.b32.cont [5/16] 0.0, 128
    %2011 = vxpose.xlu0.b32.cont [6/16] 0.0, 128
    %2012 = vxpose.xlu0.b32.cont [7/16] 0.0, 128
    %2013 = vxpose.xlu0.b32.cont [8/16] 0.0, 128
    %2014 = vxpose.xlu0.b32.cont [9/16] 0.0, 128
    %2015 = vxpose.xlu0.b32.cont [10/16] 0.0, 128
    %2016 = vxpose.xlu0.b32.cont [11/16] 0.0, 128
    %2017 = vxpose.xlu0.b32.cont [12/16] 0.0, 128
    %2018 = vxpose.xlu0.b32.cont [13/16] 0.0, 128
    %2019 = vxpose.xlu0.b32.cont [14/16] 0.0, 128
    %2020 = vxpose.xlu0.b32.cont [15/16] 0.0, 128
    %2021 = vxpose.xlu0.b32.end [16/16] 0.0, 128
    %v2022 = vpop.trf.xlu0
    %v2023 = vpop.trf.xlu0
    %v2024 = vpop.trf.xlu0
    %v2025 = vpop.trf.xlu0
    %v2026 = vpop.trf.xlu0
    %v2027 = vpop.trf.xlu0
    %v2028 = vpop.trf.xlu0
    %v2029 = vpop.trf.xlu0
    %v2030 = vpop.trf.xlu0
    %v2031 = vpop.trf.xlu0
    %v2032 = vpop.trf.xlu0
    %v2033 = vpop.trf.xlu0
    %v2034 = vpop.trf.xlu0
    %v2035 = vpop.trf.xlu0
    %v2036 = vpop.trf.xlu0
    %v2037 = vpop.trf.xlu0
    %vm2038 = vcmask 80896
    %v2039 = vsel %vm2038, %v2022, 0.0
    %2040 = vadd.xlane.f32.xlu0 %v2039
    %v2041 = vpop.xlane.xlu0 %2040
    %v2042 = vrcp.pop 10.0
    %v2043 = vmul.f32 %v2041, %v2042
    %v2044 = vsub.f32 %v2022, %v2043
    %v2045 = vmul.f32 %v2044, %v2044
    %v2046 = vsel %vm2038, %v2045, 0.0
    %2047 = vadd.xlane.f32.xlu0 %v2046
    %v2048 = vpop.xlane.xlu0 %2047
    %v2049 = vmul.f32 %v2048, %v2042
    %v2050 = vmax.f32 %v2049, 1e-05
    %v2051 = vrsqrt.pop %v2050
    %v2052 = vmul.f32 %v2044, %v2051
    %2054 = vset.pattern.permute.xlu0 0
    %2055 = vperm.xlu0 %2054, %v1964
    %v2056 = vpop.permute.xlu0 %2055
    %v2058 = vmul.f32 %v2052, %v2056
    %2060 = vset.pattern.permute.xlu0 0
    %2061 = vperm.xlu0 %2060, %v1965
    %v2062 = vpop.permute.xlu0 %2061
    %v2064 = vadd.f32 %v2058, %v2062
    %v2065 = vrsqrt.pop %v2050
    %v2066 = vmul.f32 %v2050, %v2065
    %vm2067 = vcmp.eq.f32.partialorder %v2050, inf
    %v2068 = vsel %vm2067, %v2050, %v2066
    %vm2069 = vcmp.eq.f32.partialorder %v2050, 0.0
    %v2070 = vand.u32 %v2050, 2147483648
    %v2071 = vsel %vm2069, %v2070, %v2068
    %v2072 = vrot.slane %v388, 1
    %v2074 = vrot.slane %v738, 7
    %v2076 = vrot.slane %v913, 6
    %v2078 = vrot.slane %v1088, 5
    %v2080 = vrot.slane %v1263, 4
    %v2082 = vrot.slane %v1438, 3
    %v2084 = vrot.slane %v1613, 2
    %v2086 = vrot.slane %v1788, 1
    %v2088 = vsel %vm1983, %v2072, %v563
    %v2089 = vsel %vm1985, %v2088, %v2074
    %v2090 = vsel %vm1987, %v2089, %v2076
    %v2091 = vsel %vm1989, %v2090, %v2078
    %v2092 = vsel %vm1991, %v2091, %v2080
    %v2093 = vsel %vm1993, %v2092, %v2082
    %v2094 = vsel %vm1995, %v2093, %v2084
    %v2095 = vsel %vm1983, %v2086, %v1963
    %2098 = vrot.lane.b32.xlu0 %v2094, 104
    %v2099 = vpop.permute.xlu0 %2098
    %2100 = vrot.lane.b32.xlu0 %v2095, 104
    %v2101 = vpop.permute.xlu0 %2100
    %2104 = vxpose.xlu0.b32.start [1/16] %v2099, 128
    %2105 = vxpose.xlu0.b32.cont [2/16] %v2101, 128
    %2106 = vxpose.xlu0.b32.cont [3/16] 0.0, 128
    %2107 = vxpose.xlu0.b32.cont [4/16] 0.0, 128
    %2108 = vxpose.xlu0.b32.cont [5/16] 0.0, 128
    %2109 = vxpose.xlu0.b32.cont [6/16] 0.0, 128
    %2110 = vxpose.xlu0.b32.cont [7/16] 0.0, 128
    %2111 = vxpose.xlu0.b32.cont [8/16] 0.0, 128
    %2112 = vxpose.xlu0.b32.cont [9/16] 0.0, 128
    %2113 = vxpose.xlu0.b32.cont [10/16] 0.0, 128
    %2114 = vxpose.xlu0.b32.cont [11/16] 0.0, 128
    %2115 = vxpose.xlu0.b32.cont [12/16] 0.0, 128
    %2116 = vxpose.xlu0.b32.cont [13/16] 0.0, 128
    %2117 = vxpose.xlu0.b32.cont [14/16] 0.0, 128
    %2118 = vxpose.xlu0.b32.cont [15/16] 0.0, 128
    %2119 = vxpose.xlu0.b32.end [16/16] 0.0, 128
    %v2120 = vpop.trf.xlu0
    %v2121 = vpop.trf.xlu0
    %v2122 = vpop.trf.xlu0
    %v2123 = vpop.trf.xlu0
    %v2124 = vpop.trf.xlu0
    %v2125 = vpop.trf.xlu0
    %v2126 = vpop.trf.xlu0
    %v2127 = vpop.trf.xlu0
    %v2128 = vpop.trf.xlu0
    %v2129 = vpop.trf.xlu0
    %v2130 = vpop.trf.xlu0
    %v2131 = vpop.trf.xlu0
    %v2132 = vpop.trf.xlu0
    %v2133 = vpop.trf.xlu0
    %v2134 = vpop.trf.xlu0
    %v2135 = vpop.trf.xlu0
    %v2136 = vsel %vm2038, %v2120, 0.0
    %2137 = vadd.xlane.f32.xlu0 %v2136
    %v2138 = vpop.xlane.xlu0 %2137
    %v2139 = vmul.f32 %v2138, %v2042
    %v2140 = vsub.f32 %v2120, %v2139
    %v2141 = vmul.f32 %v2140, %v2140
    %v2142 = vsel %vm2038, %v2141, 0.0
    %2143 = vadd.xlane.f32.xlu0 %v2142
    %v2144 = vpop.xlane.xlu0 %2143
    %v2145 = vmul.f32 %v2144, %v2042
    %v2146 = vmax.f32 %v2145, 1e-05
    %v2147 = vrsqrt.pop %v2146
    %v2148 = vmul.f32 %v2140, %v2147
    %v2149 = vmul.f32 %v2148, %v2056
    %v2150 = vadd.f32 %v2149, %v2062
    %v2151 = vrsqrt.pop %v2146
    %v2152 = vmul.f32 %v2146, %v2151
    %vm2153 = vcmp.eq.f32.partialorder %v2146, inf
    %v2154 = vsel %vm2153, %v2146, %v2152
    %vm2155 = vcmp.eq.f32.partialorder %v2146, 0.0
    %v2156 = vand.u32 %v2146, 2147483648
    %v2157 = vsel %vm2155, %v2156, %v2154
    %v2158 = vld [vmem:[%s9] sm:$0xff]
    %v2159 = vld [vmem:[%s9 + $0x8] sm:$0x3]
    %v2160 = vld [vmem:[%s3] sm:$0x1]
    %v2162 = vlaneseq
    %v2163 = vshrl.u32 %v2162, 7
    %v2164 = vsub.s32 0, %v2163
    %v2165 = vrot.slane %v2160, %v2164
    %v2168 = vsel %vm2038, %v2064, 0
    %v2171 = vsel %vm2038, %v2150, 0
    %v2174 = vsel %vm1985, %v2159, 0
    %2176 = vmatprep.subr.mxu0 0.0
    %2177 = vmatpush1.msra.mxu0 %v2158
    %2178 = vmatprep.subr.mxu0 0.0
    %2179 = vmatpush1.msra.mxu0 %v2174
    %2180 = vmatprep.subr.mxu0 0.0
    %2181 = vmatpush1.msra.mxu0 0.0
    %2182 = vmatprep.subr.mxu0 0.0
    %2183 = vmatpush1.msra.mxu0 0.0
    %2184 = vmatprep.subr.mxu0 0.0
    %2185 = vmatpush1.msra.mxu0 0.0
    %2186 = vmatprep.subr.mxu0 0.0
    %2187 = vmatpush1.msra.mxu0 0.0
    %2188 = vmatprep.subr.mxu0 0.0
    %2189 = vmatpush1.msra.mxu0 0.0
    %2190 = vmatprep.subr.mxu0 0.0
    %2191 = vmatpush1.msra.mxu0 0.0
    %2192 = vmatprep.subr.mxu0 0.0
    %2193 = vmatpush1.msra.mxu0 0.0
    %2194 = vmatprep.subr.mxu0 0.0
    %2195 = vmatpush1.msra.mxu0 0.0
    %2196 = vmatprep.subr.mxu0 0.0
    %2197 = vmatpush1.msra.mxu0 0.0
    %2198 = vmatprep.subr.mxu0 0.0
    %2199 = vmatpush1.msra.mxu0 0.0
    %2200 = vmatprep.subr.mxu0 0.0
    %2201 = vmatpush1.msra.mxu0 0.0
    %2202 = vmatprep.subr.mxu0 0.0
    %2203 = vmatpush1.msra.mxu0 0.0
    %2204 = vmatprep.subr.mxu0 0.0
    %2205 = vmatpush1.msra.mxu0 0.0
    %2206 = vmatprep.subr.mxu0 0.0
    %2207 = vmatpush1.msra.mxu0 0.0
    %2208 = vmatprep.subr.mxu0 0.0
    %2209 = vmatpush1.msra.mxu0 0.0
    %2210 = vmatprep.subr.mxu0 0.0
    %2211 = vmatpush1.msra.mxu0 0.0
    %2212 = vmatprep.subr.mxu0 0.0
    %2213 = vmatpush1.msra.mxu0 0.0
    %2214 = vmatprep.subr.mxu0 0.0
    %2215 = vmatpush1.msra.mxu0 0.0
    %2216 = vmatprep.subr.mxu0 0.0
    %2217 = vmatpush1.msra.mxu0 0.0
    %2218 = vmatprep.subr.mxu0 0.0
    %2219 = vmatpush1.msra.mxu0 0.0
    %2220 = vmatprep.subr.mxu0 0.0
    %2221 = vmatpush1.msra.mxu0 0.0
    %2222 = vmatprep.subr.mxu0 0.0
    %2223 = vmatpush1.msra.mxu0 0.0
    %2224 = vmatprep.subr.mxu0 0.0
    %2225 = vmatpush1.msra.mxu0 0.0
    %2226 = vmatprep.subr.mxu0 0.0
    %2227 = vmatpush1.msra.mxu0 0.0
    %2228 = vmatprep.subr.mxu0 0.0
    %2229 = vmatpush1.msra.mxu0 0.0
    %2230 = vmatprep.subr.mxu0 0.0
    %2231 = vmatpush1.msra.mxu0 0.0
    %2232 = vmatprep.subr.mxu0 0.0
    %2233 = vmatpush1.msra.mxu0 0.0
    %2234 = vmatprep.subr.mxu0 0.0
    %2235 = vmatpush1.msra.mxu0 0.0
    %2236 = vmatprep.subr.mxu0 0.0
    %2237 = vmatpush1.msra.mxu0 0.0
    %2238 = vmatprep.subr.mxu0 0.0
    %2239 = vmatpush1.msra.mxu0 0.0
    %2240 = vmatprep.mubr.f32.mxu0 0.0
    %2241 = vmatmul.mubr.f32.gmra.mrb[0].mxu0 %v2168
    %v2242 = vpop.f32.mrb[0].mxu0
    %v2243 = vadd.f32 %v2165, %v2242
    %v2244 = vpop.f32.mrb[0].mxu0
    %2245 = vmatprep.mubr.f32.mxu0 0.0
    %2246 = vmatmul.mubr.f32.gmra.mrb[0].mxu0 %v2171
    %v2247 = vpop.f32.mrb[0].mxu0
    %v2248 = vadd.f32 %v2165, %v2247
    %v2249 = vpop.f32.mrb[0].mxu0
    %2250 = vdwg.mxu0
    %v2251 = vld [vmem:[%s7] sm:$0x1]
    %v2252 = vld [vmem:[%s5] sm:$0x1]
    %vm2253 = vcmask 261120
    %v2254 = vsel %vm2253, %v2243, 0.0
    %2255 = vadd.xlane.f32.xlu0 %v2254
    %v2256 = vpop.xlane.xlu0 %2255
    %v2257 = vsel %vm2253, %v2248, 0.0
    %2258 = vadd.xlane.f32.xlu0 %v2257
    %v2259 = vpop.xlane.xlu0 %2258
    %v2260 = vrcp.pop 32.0
    %v2261 = vmul.f32 %v2256, %v2260
    %v2262 = vmul.f32 %v2259, %v2260
    %v2263 = vsub.f32 %v2243, %v2261
    %v2264 = vsub.f32 %v2248, %v2262
    %v2265 = vmul.f32 %v2263, %v2263
    %v2266 = vmul.f32 %v2264, %v2264
    %v2267 = vsel %vm2253, %v2265, 0.0
    %2268 = vadd.xlane.f32.xlu0 %v2267
    %v2269 = vpop.xlane.xlu0 %2268
    %v2270 = vsel %vm2253, %v2266, 0.0
    %2271 = vadd.xlane.f32.xlu0 %v2270
    %v2272 = vpop.xlane.xlu0 %2271
    %v2273 = vmul.f32 %v2269, %v2260
    %v2274 = vmul.f32 %v2272, %v2260
    %v2275 = vadd.f32 %v2273, 1e-05
    %v2276 = vadd.f32 %v2274, 1e-05
    %v2277 = vrsqrt.pop %v2275
    %v2278 = vrsqrt.pop %v2276
    %v2279 = vmul.f32 %v2263, %v2277
    %v2280 = vmul.f32 %v2264, %v2278
    %v2282 = vlaneseq
    %v2283 = vshrl.u32 %v2282, 7
    %v2284 = vsub.s32 0, %v2283
    %v2285 = vrot.slane %v2251, %v2284
    %v2287 = vmul.f32 %v2279, %v2285
    %v2288 = vmul.f32 %v2280, %v2285
    %v2290 = vlaneseq
    %v2291 = vshrl.u32 %v2290, 7
    %v2292 = vsub.s32 0, %v2291
    %v2293 = vrot.slane %v2252, %v2292
    %v2295 = vadd.f32 %v2287, %v2293
    %v2296 = vadd.f32 %v2288, %v2293
    %v2297 = vld [vmem:[%s29] sm:$0xff]
    %v2298 = vld [vmem:[%s29 + $0x8] sm:$0xff]
    %v2299 = vld [vmem:[%s29 + $0x10] sm:$0xff]
    %v2300 = vld [vmem:[%s29 + $0x18] sm:$0xff]
    %v2302 = vsel %vm2253, %v2295, 0
    %v2305 = vsel %vm2253, %v2296, 0
    %2307 = vmatprep.subr.mxu0 0.0
    %2308 = vmatpush1.msra.mxu0 %v2297
    %2309 = vmatprep.subr.mxu0 0.0
    %2310 = vmatpush1.msra.mxu0 %v2298
    %2311 = vmatprep.subr.mxu0 0.0
    %2312 = vmatpush1.msra.mxu0 %v2299
    %2313 = vmatprep.subr.mxu0 0.0
    %2314 = vmatpush1.msra.mxu0 %v2300
    %2315 = vmatprep.subr.mxu0 0.0
    %2316 = vmatpush1.msra.mxu0 0.0
    %2317 = vmatprep.subr.mxu0 0.0
    %2318 = vmatpush1.msra.mxu0 0.0
    %2319 = vmatprep.subr.mxu0 0.0
    %2320 = vmatpush1.msra.mxu0 0.0
    %2321 = vmatprep.subr.mxu0 0.0
    %2322 = vmatpush1.msra.mxu0 0.0
    %2323 = vmatprep.subr.mxu0 0.0
    %2324 = vmatpush1.msra.mxu0 0.0
    %2325 = vmatprep.subr.mxu0 0.0
    %2326 = vmatpush1.msra.mxu0 0.0
    %2327 = vmatprep.subr.mxu0 0.0
    %2328 = vmatpush1.msra.mxu0 0.0
    %2329 = vmatprep.subr.mxu0 0.0
    %2330 = vmatpush1.msra.mxu0 0.0
    %2331 = vmatprep.subr.mxu0 0.0
    %2332 = vmatpush1.msra.mxu0 0.0
    %2333 = vmatprep.subr.mxu0 0.0
    %2334 = vmatpush1.msra.mxu0 0.0
    %2335 = vmatprep.subr.mxu0 0.0
    %2336 = vmatpush1.msra.mxu0 0.0
    %2337 = vmatprep.subr.mxu0 0.0
    %2338 = vmatpush1.msra.mxu0 0.0
    %2339 = vmatprep.subr.mxu0 0.0
    %2340 = vmatpush1.msra.mxu0 0.0
    %2341 = vmatprep.subr.mxu0 0.0
    %2342 = vmatpush1.msra.mxu0 0.0
    %2343 = vmatprep.subr.mxu0 0.0
    %2344 = vmatpush1.msra.mxu0 0.0
    %2345 = vmatprep.subr.mxu0 0.0
    %2346 = vmatpush1.msra.mxu0 0.0
    %2347 = vmatprep.subr.mxu0 0.0
    %2348 = vmatpush1.msra.mxu0 0.0
    %2349 = vmatprep.subr.mxu0 0.0
    %2350 = vmatpush1.msra.mxu0 0.0
    %2351 = vmatprep.subr.mxu0 0.0
    %2352 = vmatpush1.msra.mxu0 0.0
    %2353 = vmatprep.subr.mxu0 0.0
    %2354 = vmatpush1.msra.mxu0 0.0
    %2355 = vmatprep.subr.mxu0 0.0
    %2356 = vmatpush1.msra.mxu0 0.0
    %2357 = vmatprep.subr.mxu0 0.0
    %2358 = vmatpush1.msra.mxu0 0.0
    %2359 = vmatprep.subr.mxu0 0.0
    %2360 = vmatpush1.msra.mxu0 0.0
    %2361 = vmatprep.subr.mxu0 0.0
    %2362 = vmatpush1.msra.mxu0 0.0
    %2363 = vmatprep.subr.mxu0 0.0
    %2364 = vmatpush1.msra.mxu0 0.0
    %2365 = vmatprep.subr.mxu0 0.0
    %2366 = vmatpush1.msra.mxu0 0.0
    %2367 = vmatprep.subr.mxu0 0.0
    %2368 = vmatpush1.msra.mxu0 0.0
    %2369 = vmatprep.subr.mxu0 0.0
    %2370 = vmatpush1.msra.mxu0 0.0
    %2371 = vmatprep.mubr.f32.mxu0 0.0
    %2372 = vmatmul.mubr.f32.gmra.mrb[0].mxu0 %v2302
    %v2373 = vpop.f32.mrb[0].mxu0
    %v2374 = vadd.f32 0.0, %v2373
    %v2375 = vpop.f32.mrb[0].mxu0
    %2376 = vmatprep.mubr.f32.mxu0 0.0
    %2377 = vmatmul.mubr.f32.gmra.mrb[0].mxu0 %v2305
    %v2378 = vpop.f32.mrb[0].mxu0
    %v2379 = vadd.f32 0.0, %v2378
    %v2380 = vpop.f32.mrb[0].mxu0
    %2381 = vdwg.mxu0
    %2383 = vrot.lane.b32.xlu0 %v2374, 96
    %v2384 = vpop.permute.xlu0 %2383
    %vm2385 = vcmask 130048
    %v2386 = vsel %vm2385, %v2374, 0
    %v2388 = vsel %vm2385, %v2384, 0
    %2390 = vmatprep.subr.mxu0 0.0
    %2391 = vmatpush1.xpose.msra.mxu0 %v2388
    %2392 = vmatprep.subr.mxu0 0.0
    %2393 = vmatpush1.xpose.msra.mxu0 0.0
    %2394 = vmatprep.subr.mxu0 0.0
    %2395 = vmatpush1.xpose.msra.mxu0 0.0
    %2396 = vmatprep.subr.mxu0 0.0
    %2397 = vmatpush1.xpose.msra.mxu0 0.0
    %2398 = vmatprep.subr.mxu0 0.0
    %2399 = vmatpush1.xpose.msra.mxu0 0.0
    %2400 = vmatprep.subr.mxu0 0.0
    %2401 = vmatpush1.xpose.msra.mxu0 0.0
    %2402 = vmatprep.subr.mxu0 0.0
    %2403 = vmatpush1.xpose.msra.mxu0 0.0
    %2404 = vmatprep.subr.mxu0 0.0
    %2405 = vmatpush1.xpose.msra.mxu0 0.0
    %2406 = vmatprep.subr.mxu0 0.0
    %2407 = vmatpush1.xpose.msra.mxu0 0.0
    %2408 = vmatprep.subr.mxu0 0.0
    %2409 = vmatpush1.xpose.msra.mxu0 0.0
    %2410 = vmatprep.subr.mxu0 0.0
    %2411 = vmatpush1.xpose.msra.mxu0 0.0
    %2412 = vmatprep.subr.mxu0 0.0
    %2413 = vmatpush1.xpose.msra.mxu0 0.0
    %2414 = vmatprep.subr.mxu0 0.0
    %2415 = vmatpush1.xpose.msra.mxu0 0.0
    %2416 = vmatprep.subr.mxu0 0.0
    %2417 = vmatpush1.xpose.msra.mxu0 0.0
    %2418 = vmatprep.subr.mxu0 0.0
    %2419 = vmatpush1.xpose.msra.mxu0 0.0
    %2420 = vmatprep.subr.mxu0 0.0
    %2421 = vmatpush1.xpose.msra.mxu0 0.0
    %2422 = vmatprep.subr.mxu0 0.0
    %2423 = vmatpush1.xpose.msra.mxu0 0.0
    %2424 = vmatprep.subr.mxu0 0.0
    %2425 = vmatpush1.xpose.msra.mxu0 0.0
    %2426 = vmatprep.subr.mxu0 0.0
    %2427 = vmatpush1.xpose.msra.mxu0 0.0
    %2428 = vmatprep.subr.mxu0 0.0
    %2429 = vmatpush1.xpose.msra.mxu0 0.0
    %2430 = vmatprep.subr.mxu0 0.0
    %2431 = vmatpush1.xpose.msra.mxu0 0.0
    %2432 = vmatprep.subr.mxu0 0.0
    %2433 = vmatpush1.xpose.msra.mxu0 0.0
    %2434 = vmatprep.subr.mxu0 0.0
    %2435 = vmatpush1.xpose.msra.mxu0 0.0
    %2436 = vmatprep.subr.mxu0 0.0
    %2437 = vmatpush1.xpose.msra.mxu0 0.0
    %2438 = vmatprep.subr.mxu0 0.0
    %2439 = vmatpush1.xpose.msra.mxu0 0.0
    %2440 = vmatprep.subr.mxu0 0.0
    %2441 = vmatpush1.xpose.msra.mxu0 0.0
    %2442 = vmatprep.subr.mxu0 0.0
    %2443 = vmatpush1.xpose.msra.mxu0 0.0
    %2444 = vmatprep.subr.mxu0 0.0
    %2445 = vmatpush1.xpose.msra.mxu0 0.0
    %2446 = vmatprep.subr.mxu0 0.0
    %2447 = vmatpush1.xpose.msra.mxu0 0.0
    %2448 = vmatprep.subr.mxu0 0.0
    %2449 = vmatpush1.xpose.msra.mxu0 0.0
    %2450 = vmatprep.subr.mxu0 0.0
    %2451 = vmatpush1.xpose.msra.mxu0 0.0
    %2452 = vmatprep.subr.mxu0 0.0
    %2453 = vmatpush1.xpose.msra.mxu0 0.0
    %2454 = vmatprep.mubr.f32.mxu0 0.0
    %2455 = vmatmul.mubr.f32.gmra.mrb[0].mxu0 %v2386
    %v2456 = vpop.f32.mrb[0].mxu0
    %v2457 = vadd.f32 0.0, %v2456
    %v2458 = vpop.f32.mrb[0].mxu0
    %2459 = vdwg.mxu0
    %v2460 = vmul.f32 %v2457, 0.25
    %v2461 = vsel %vm211, %v2460, -inf
    %2462 = vmax.xlane.f32.xlu0 %v2461
    %v2463 = vpop.xlane.xlu0 %2462
    %v2464 = vsub.f32 %v2460, %v2463
    %v2465 = vmul.f32 %v2464, 1.442695
    %v2466 = vpow.pop %v2465
    %v2467 = vsel %vm211, %v2466, 0.0
    %2468 = vadd.xlane.f32.xlu0 %v2467
    %v2469 = vpop.xlane.xlu0 %2468
    %2470 = vrot.lane.b32.xlu0 %v2374, 64
    %v2471 = vpop.permute.xlu0 %2470
    %v2474 = vsel %vm211, %v2466, 0
    %2476 = vmatprep.subr.mxu0 0.0
    %2477 = vmatpush1.msra.mxu0 %v2471
    %2478 = vmatprep.subr.mxu0 0.0
    %2479 = vmatpush1.msra.mxu0 0.0
    %2480 = vmatprep.subr.mxu0 0.0
    %2481 = vmatpush1.msra.mxu0 0.0
    %2482 = vmatprep.subr.mxu0 0.0
    %2483 = vmatpush1.msra.mxu0 0.0
    %2484 = vmatprep.subr.mxu0 0.0
    %2485 = vmatpush1.msra.mxu0 0.0
    %2486 = vmatprep.subr.mxu0 0.0
    %2487 = vmatpush1.msra.mxu0 0.0
    %2488 = vmatprep.subr.mxu0 0.0
    %2489 = vmatpush1.msra.mxu0 0.0
    %2490 = vmatprep.subr.mxu0 0.0
    %2491 = vmatpush1.msra.mxu0 0.0
    %2492 = vmatprep.subr.mxu0 0.0
    %2493 = vmatpush1.msra.mxu0 0.0
    %2494 = vmatprep.subr.mxu0 0.0
    %2495 = vmatpush1.msra.mxu0 0.0
    %2496 = vmatprep.subr.mxu0 0.0
    %2497 = vmatpush1.msra.mxu0 0.0
    %2498 = vmatprep.subr.mxu0 0.0
    %2499 = vmatpush1.msra.mxu0 0.0
    %2500 = vmatprep.subr.mxu0 0.0
    %2501 = vmatpush1.msra.mxu0 0.0
    %2502 = vmatprep.subr.mxu0 0.0
    %2503 = vmatpush1.msra.mxu0 0.0
    %2504 = vmatprep.subr.mxu0 0.0
    %2505 = vmatpush1.msra.mxu0 0.0
    %2506 = vmatprep.subr.mxu0 0.0
    %2507 = vmatpush1.msra.mxu0 0.0
    %2508 = vmatprep.subr.mxu0 0.0
    %2509 = vmatpush1.msra.mxu0 0.0
    %2510 = vmatprep.subr.mxu0 0.0
    %2511 = vmatpush1.msra.mxu0 0.0
    %2512 = vmatprep.subr.mxu0 0.0
    %2513 = vmatpush1.msra.mxu0 0.0
    %2514 = vmatprep.subr.mxu0 0.0
    %2515 = vmatpush1.msra.mxu0 0.0
    %2516 = vmatprep.subr.mxu0 0.0
    %2517 = vmatpush1.msra.mxu0 0.0
    %2518 = vmatprep.subr.mxu0 0.0
    %2519 = vmatpush1.msra.mxu0 0.0
    %2520 = vmatprep.subr.mxu0 0.0
    %2521 = vmatpush1.msra.mxu0 0.0
    %2522 = vmatprep.subr.mxu0 0.0
    %2523 = vmatpush1.msra.mxu0 0.0
    %2524 = vmatprep.subr.mxu0 0.0
    %2525 = vmatpush1.msra.mxu0 0.0
    %2526 = vmatprep.subr.mxu0 0.0
    %2527 = vmatpush1.msra.mxu0 0.0
    %2528 = vmatprep.subr.mxu0 0.0
    %2529 = vmatpush1.msra.mxu0 0.0
    %2530 = vmatprep.subr.mxu0 0.0
    %2531 = vmatpush1.msra.mxu0 0.0
    %2532 = vmatprep.subr.mxu0 0.0
    %2533 = vmatpush1.msra.mxu0 0.0
    %2534 = vmatprep.subr.mxu0 0.0
    %2535 = vmatpush1.msra.mxu0 0.0
    %2536 = vmatprep.subr.mxu0 0.0
    %2537 = vmatpush1.msra.mxu0 0.0
    %2538 = vmatprep.subr.mxu0 0.0
    %2539 = vmatpush1.msra.mxu0 0.0
    %2540 = vmatprep.mubr.f32.mxu0 0.0
    %2541 = vmatmul.mubr.f32.gmra.mrb[0].mxu0 %v2474
    %v2542 = vpop.f32.mrb[0].mxu0
    %v2543 = vadd.f32 0.0, %v2542
    %v2544 = vpop.f32.mrb[0].mxu0
    %2545 = vdwg.mxu0
    %v2546 = vrcp.pop %v2469
    %v2547 = vmul.f32 %v2543, %v2546
    %2548 = vrot.lane.b32.xlu0 %v2374, 112
    %v2549 = vpop.permute.xlu0 %2548
    %2550 = vrot.lane.b32.xlu0 %v2374, 80
    %v2551 = vpop.permute.xlu0 %2550
    %v2552 = vsel %vm2385, %v2549, 0
    %v2554 = vsel %vm2385, %v2551, 0
    %2556 = vmatprep.subr.mxu0 0.0
    %2557 = vmatpush1.xpose.msra.mxu0 %v2554
    %2558 = vmatprep.subr.mxu0 0.0
    %2559 = vmatpush1.xpose.msra.mxu0 0.0
    %2560 = vmatprep.subr.mxu0 0.0
    %2561 = vmatpush1.xpose.msra.mxu0 0.0
    %2562 = vmatprep.subr.mxu0 0.0
    %2563 = vmatpush1.xpose.msra.mxu0 0.0
    %2564 = vmatprep.subr.mxu0 0.0
    %2565 = vmatpush1.xpose.msra.mxu0 0.0
    %2566 = vmatprep.subr.mxu0 0.0
    %2567 = vmatpush1.xpose.msra.mxu0 0.0
    %2568 = vmatprep.subr.mxu0 0.0
    %2569 = vmatpush1.xpose.msra.mxu0 0.0
    %2570 = vmatprep.subr.mxu0 0.0
    %2571 = vmatpush1.xpose.msra.mxu0 0.0
    %2572 = vmatprep.subr.mxu0 0.0
    %2573 = vmatpush1.xpose.msra.mxu0 0.0
    %2574 = vmatprep.subr.mxu0 0.0
    %2575 = vmatpush1.xpose.msra.mxu0 0.0
    %2576 = vmatprep.subr.mxu0 0.0
    %2577 = vmatpush1.xpose.msra.mxu0 0.0
    %2578 = vmatprep.subr.mxu0 0.0
    %2579 = vmatpush1.xpose.msra.mxu0 0.0
    %2580 = vmatprep.subr.mxu0 0.0
    %2581 = vmatpush1.xpose.msra.mxu0 0.0
    %2582 = vmatprep.subr.mxu0 0.0
    %2583 = vmatpush1.xpose.msra.mxu0 0.0
    %2584 = vmatprep.subr.mxu0 0.0
    %2585 = vmatpush1.xpose.msra.mxu0 0.0
    %2586 = vmatprep.subr.mxu0 0.0
    %2587 = vmatpush1.xpose.msra.mxu0 0.0
    %2588 = vmatprep.subr.mxu0 0.0
    %2589 = vmatpush1.xpose.msra.mxu0 0.0
    %2590 = vmatprep.subr.mxu0 0.0
    %2591 = vmatpush1.xpose.msra.mxu0 0.0
    %2592 = vmatprep.subr.mxu0 0.0
    %2593 = vmatpush1.xpose.msra.mxu0 0.0
    %2594 = vmatprep.subr.mxu0 0.0
    %2595 = vmatpush1.xpose.msra.mxu0 0.0
    %2596 = vmatprep.subr.mxu0 0.0
    %2597 = vmatpush1.xpose.msra.mxu0 0.0
    %2598 = vmatprep.subr.mxu0 0.0
    %2599 = vmatpush1.xpose.msra.mxu0 0.0
    %2600 = vmatprep.subr.mxu0 0.0
    %2601 = vmatpush1.xpose.msra.mxu0 0.0
    %2602 = vmatprep.subr.mxu0 0.0
    %2603 = vmatpush1.xpose.msra.mxu0 0.0
    %2604 = vmatprep.subr.mxu0 0.0
    %2605 = vmatpush1.xpose.msra.mxu0 0.0
    %2606 = vmatprep.subr.mxu0 0.0
    %2607 = vmatpush1.xpose.msra.mxu0 0.0
    %2608 = vmatprep.subr.mxu0 0.0
    %2609 = vmatpush1.xpose.msra.mxu0 0.0
    %2610 = vmatprep.subr.mxu0 0.0
    %2611 = vmatpush1.xpose.msra.mxu0 0.0
    %2612 = vmatprep.subr.mxu0 0.0
    %2613 = vmatpush1.xpose.msra.mxu0 0.0
    %2614 = vmatprep.subr.mxu0 0.0
    %2615 = vmatpush1.xpose.msra.mxu0 0.0
    %2616 = vmatprep.subr.mxu0 0.0
    %2617 = vmatpush1.xpose.msra.mxu0 0.0
    %2618 = vmatprep.subr.mxu0 0.0
    %2619 = vmatpush1.xpose.msra.mxu0 0.0
    %2620 = vmatprep.mubr.f32.mxu0 0.0
    %2621 = vmatmul.mubr.f32.gmra.mrb[0].mxu0 %v2552
    %v2622 = vpop.f32.mrb[0].mxu0
    %v2623 = vadd.f32 0.0, %v2622
    %v2624 = vpop.f32.mrb[0].mxu0
    %2625 = vdwg.mxu0
    %v2626 = vmul.f32 %v2623, 0.25
    %v2627 = vsel %vm211, %v2626, -inf
    %2628 = vmax.xlane.f32.xlu0 %v2627
    %v2629 = vpop.xlane.xlu0 %2628
    %v2630 = vsub.f32 %v2626, %v2629
    %v2631 = vmul.f32 %v2630, 1.442695
    %v2632 = vpow.pop %v2631
    %v2633 = vsel %vm211, %v2632, 0.0
    %2634 = vadd.xlane.f32.xlu0 %v2633
    %v2635 = vpop.xlane.xlu0 %2634
    %2636 = vrot.lane.b32.xlu0 %v2374, 48
    %v2637 = vpop.permute.xlu0 %2636
    %v2640 = vsel %vm211, %v2632, 0
    %2642 = vmatprep.subr.mxu0 0.0
    %2643 = vmatpush1.msra.mxu0 %v2637
    %2644 = vmatprep.subr.mxu0 0.0
    %2645 = vmatpush1.msra.mxu0 0.0
    %2646 = vmatprep.subr.mxu0 0.0
    %2647 = vmatpush1.msra.mxu0 0.0
    %2648 = vmatprep.subr.mxu0 0.0
    %2649 = vmatpush1.msra.mxu0 0.0
    %2650 = vmatprep.subr.mxu0 0.0
    %2651 = vmatpush1.msra.mxu0 0.0
    %2652 = vmatprep.subr.mxu0 0.0
    %2653 = vmatpush1.msra.mxu0 0.0
    %2654 = vmatprep.subr.mxu0 0.0
    %2655 = vmatpush1.msra.mxu0 0.0
    %2656 = vmatprep.subr.mxu0 0.0
    %2657 = vmatpush1.msra.mxu0 0.0
    %2658 = vmatprep.subr.mxu0 0.0
    %2659 = vmatpush1.msra.mxu0 0.0
    %2660 = vmatprep.subr.mxu0 0.0
    %2661 = vmatpush1.msra.mxu0 0.0
    %2662 = vmatprep.subr.mxu0 0.0
    %2663 = vmatpush1.msra.mxu0 0.0
    %2664 = vmatprep.subr.mxu0 0.0
    %2665 = vmatpush1.msra.mxu0 0.0
    %2666 = vmatprep.subr.mxu0 0.0
    %2667 = vmatpush1.msra.mxu0 0.0
    %2668 = vmatprep.subr.mxu0 0.0
    %2669 = vmatpush1.msra.mxu0 0.0
    %2670 = vmatprep.subr.mxu0 0.0
    %2671 = vmatpush1.msra.mxu0 0.0
    %2672 = vmatprep.subr.mxu0 0.0
    %2673 = vmatpush1.msra.mxu0 0.0
    %2674 = vmatprep.subr.mxu0 0.0
    %2675 = vmatpush1.msra.mxu0 0.0
    %2676 = vmatprep.subr.mxu0 0.0
    %2677 = vmatpush1.msra.mxu0 0.0
    %2678 = vmatprep.subr.mxu0 0.0
    %2679 = vmatpush1.msra.mxu0 0.0
    %2680 = vmatprep.subr.mxu0 0.0
    %2681 = vmatpush1.msra.mxu0 0.0
    %2682 = vmatprep.subr.mxu0 0.0
    %2683 = vmatpush1.msra.mxu0 0.0
    %2684 = vmatprep.subr.mxu0 0.0
    %2685 = vmatpush1.msra.mxu0 0.0
    %2686 = vmatprep.subr.mxu0 0.0
    %2687 = vmatpush1.msra.mxu0 0.0
    %2688 = vmatprep.subr.mxu0 0.0
    %2689 = vmatpush1.msra.mxu0 0.0
    %2690 = vmatprep.subr.mxu0 0.0
    %2691 = vmatpush1.msra.mxu0 0.0
    %2692 = vmatprep.subr.mxu0 0.0
    %2693 = vmatpush1.msra.mxu0 0.0
    %2694 = vmatprep.subr.mxu0 0.0
    %2695 = vmatpush1.msra.mxu0 0.0
    %2696 = vmatprep.subr.mxu0 0.0
    %2697 = vmatpush1.msra.mxu0 0.0
    %2698 = vmatprep.subr.mxu0 0.0
    %2699 = vmatpush1.msra.mxu0 0.0
    %2700 = vmatprep.subr.mxu0 0.0
    %2701 = vmatpush1.msra.mxu0 0.0
    %2702 = vmatprep.subr.mxu0 0.0
    %2703 = vmatpush1.msra.mxu0 0.0
    %2704 = vmatprep.subr.mxu0 0.0
    %2705 = vmatpush1.msra.mxu0 0.0
    %2706 = vmatprep.mubr.f32.mxu0 0.0
    %2707 = vmatmul.mubr.f32.gmra.mrb[0].mxu0 %v2640
    %v2708 = vpop.f32.mrb[0].mxu0
    %v2709 = vadd.f32 0.0, %v2708
    %v2710 = vpop.f32.mrb[0].mxu0
    %2711 = vdwg.mxu0
    %v2712 = vrcp.pop %v2635
    %v2713 = vmul.f32 %v2709, %v2712
    %2715 = vrot.lane.b32.xlu0 %v2713, 16
    %v2716 = vpop.permute.xlu0 %2715
    %v2718 = vsel %vm2385, %v2547, %v2716
    %2720 = vrot.lane.b32.xlu0 %v2379, 96
    %v2721 = vpop.permute.xlu0 %2720
    %v2722 = vsel %vm2385, %v2379, 0
    %v2724 = vsel %vm2385, %v2721, 0
    %2726 = vmatprep.subr.mxu0 0.0
    %2727 = vmatpush1.xpose.msra.mxu0 %v2724
    %2728 = vmatprep.subr.mxu0 0.0
    %2729 = vmatpush1.xpose.msra.mxu0 0.0
    %2730 = vmatprep.subr.mxu0 0.0
    %2731 = vmatpush1.xpose.msra.mxu0 0.0
    %2732 = vmatprep.subr.mxu0 0.0
    %2733 = vmatpush1.xpose.msra.mxu0 0.0
    %2734 = vmatprep.subr.mxu0 0.0
    %2735 = vmatpush1.xpose.msra.mxu0 0.0
    %2736 = vmatprep.subr.mxu0 0.0
    %2737 = vmatpush1.xpose.msra.mxu0 0.0
    %2738 = vmatprep.subr.mxu0 0.0
    %2739 = vmatpush1.xpose.msra.mxu0 0.0
    %2740 = vmatprep.subr.mxu0 0.0
    %2741 = vmatpush1.xpose.msra.mxu0 0.0
    %2742 = vmatprep.subr.mxu0 0.0
    %2743 = vmatpush1.xpose.msra.mxu0 0.0
    %2744 = vmatprep.subr.mxu0 0.0
    %2745 = vmatpush1.xpose.msra.mxu0 0.0
    %2746 = vmatprep.subr.mxu0 0.0
    %2747 = vmatpush1.xpose.msra.mxu0 0.0
    %2748 = vmatprep.subr.mxu0 0.0
    %2749 = vmatpush1.xpose.msra.mxu0 0.0
    %2750 = vmatprep.subr.mxu0 0.0
    %2751 = vmatpush1.xpose.msra.mxu0 0.0
    %2752 = vmatprep.subr.mxu0 0.0
    %2753 = vmatpush1.xpose.msra.mxu0 0.0
    %2754 = vmatprep.subr.mxu0 0.0
    %2755 = vmatpush1.xpose.msra.mxu0 0.0
    %2756 = vmatprep.subr.mxu0 0.0
    %2757 = vmatpush1.xpose.msra.mxu0 0.0
    %2758 = vmatprep.subr.mxu0 0.0
    %2759 = vmatpush1.xpose.msra.mxu0 0.0
    %2760 = vmatprep.subr.mxu0 0.0
    %2761 = vmatpush1.xpose.msra.mxu0 0.0
    %2762 = vmatprep.subr.mxu0 0.0
    %2763 = vmatpush1.xpose.msra.mxu0 0.0
    %2764 = vmatprep.subr.mxu0 0.0
    %2765 = vmatpush1.xpose.msra.mxu0 0.0
    %2766 = vmatprep.subr.mxu0 0.0
    %2767 = vmatpush1.xpose.msra.mxu0 0.0
    %2768 = vmatprep.subr.mxu0 0.0
    %2769 = vmatpush1.xpose.msra.mxu0 0.0
    %2770 = vmatprep.subr.mxu0 0.0
    %2771 = vmatpush1.xpose.msra.mxu0 0.0
    %2772 = vmatprep.subr.mxu0 0.0
    %2773 = vmatpush1.xpose.msra.mxu0 0.0
    %2774 = vmatprep.subr.mxu0 0.0
    %2775 = vmatpush1.xpose.msra.mxu0 0.0
    %2776 = vmatprep.subr.mxu0 0.0
    %2777 = vmatpush1.xpose.msra.mxu0 0.0
    %2778 = vmatprep.subr.mxu0 0.0
    %2779 = vmatpush1.xpose.msra.mxu0 0.0
    %2780 = vmatprep.subr.mxu0 0.0
    %2781 = vmatpush1.xpose.msra.mxu0 0.0
    %2782 = vmatprep.subr.mxu0 0.0
    %2783 = vmatpush1.xpose.msra.mxu0 0.0
    %2784 = vmatprep.subr.mxu0 0.0
    %2785 = vmatpush1.xpose.msra.mxu0 0.0
    %2786 = vmatprep.subr.mxu0 0.0
    %2787 = vmatpush1.xpose.msra.mxu0 0.0
    %2788 = vmatprep.subr.mxu0 0.0
    %2789 = vmatpush1.xpose.msra.mxu0 0.0
    %2790 = vmatprep.mubr.f32.mxu0 0.0
    %2791 = vmatmul.mubr.f32.gmra.mrb[0].mxu0 %v2722
    %v2792 = vpop.f32.mrb[0].mxu0
    %v2793 = vadd.f32 0.0, %v2792
    %v2794 = vpop.f32.mrb[0].mxu0
    %2795 = vdwg.mxu0
    %v2796 = vmul.f32 %v2793, 0.25
    %v2797 = vsel %vm211, %v2796, -inf
    %2798 = vmax.xlane.f32.xlu0 %v2797
    %v2799 = vpop.xlane.xlu0 %2798
    %v2800 = vsub.f32 %v2796, %v2799
    %v2801 = vmul.f32 %v2800, 1.442695
    %v2802 = vpow.pop %v2801
    %v2803 = vsel %vm211, %v2802, 0.0
    %2804 = vadd.xlane.f32.xlu0 %v2803
    %v2805 = vpop.xlane.xlu0 %2804
    %2806 = vrot.lane.b32.xlu0 %v2379, 64
    %v2807 = vpop.permute.xlu0 %2806
    %v2810 = vsel %vm211, %v2802, 0
    %2812 = vmatprep.subr.mxu0 0.0
    %2813 = vmatpush1.msra.mxu0 %v2807
    %2814 = vmatprep.subr.mxu0 0.0
    %2815 = vmatpush1.msra.mxu0 0.0
    %2816 = vmatprep.subr.mxu0 0.0
    %2817 = vmatpush1.msra.mxu0 0.0
    %2818 = vmatprep.subr.mxu0 0.0
    %2819 = vmatpush1.msra.mxu0 0.0
    %2820 = vmatprep.subr.mxu0 0.0
    %2821 = vmatpush1.msra.mxu0 0.0
    %2822 = vmatprep.subr.mxu0 0.0
    %2823 = vmatpush1.msra.mxu0 0.0
    %2824 = vmatprep.subr.mxu0 0.0
    %2825 = vmatpush1.msra.mxu0 0.0
    %2826 = vmatprep.subr.mxu0 0.0
    %2827 = vmatpush1.msra.mxu0 0.0
    %2828 = vmatprep.subr.mxu0 0.0
    %2829 = vmatpush1.msra.mxu0 0.0
    %2830 = vmatprep.subr.mxu0 0.0
    %2831 = vmatpush1.msra.mxu0 0.0
    %2832 = vmatprep.subr.mxu0 0.0
    %2833 = vmatpush1.msra.mxu0 0.0
    %2834 = vmatprep.subr.mxu0 0.0
    %2835 = vmatpush1.msra.mxu0 0.0
    %2836 = vmatprep.subr.mxu0 0.0
    %2837 = vmatpush1.msra.mxu0 0.0
    %2838 = vmatprep.subr.mxu0 0.0
    %2839 = vmatpush1.msra.mxu0 0.0
    %2840 = vmatprep.subr.mxu0 0.0
    %2841 = vmatpush1.msra.mxu0 0.0
    %2842 = vmatprep.subr.mxu0 0.0
    %2843 = vmatpush1.msra.mxu0 0.0
    %2844 = vmatprep.subr.mxu0 0.0
    %2845 = vmatpush1.msra.mxu0 0.0
    %2846 = vmatprep.subr.mxu0 0.0
    %2847 = vmatpush1.msra.mxu0 0.0
    %2848 = vmatprep.subr.mxu0 0.0
    %2849 = vmatpush1.msra.mxu0 0.0
    %2850 = vmatprep.subr.mxu0 0.0
    %2851 = vmatpush1.msra.mxu0 0.0
    %2852 = vmatprep.subr.mxu0 0.0
    %2853 = vmatpush1.msra.mxu0 0.0
    %2854 = vmatprep.subr.mxu0 0.0
    %2855 = vmatpush1.msra.mxu0 0.0
    %2856 = vmatprep.subr.mxu0 0.0
    %2857 = vmatpush1.msra.mxu0 0.0
    %2858 = vmatprep.subr.mxu0 0.0
    %2859 = vmatpush1.msra.mxu0 0.0
    %2860 = vmatprep.subr.mxu0 0.0
    %2861 = vmatpush1.msra.mxu0 0.0
    %2862 = vmatprep.subr.mxu0 0.0
    %2863 = vmatpush1.msra.mxu0 0.0
    %2864 = vmatprep.subr.mxu0 0.0
    %2865 = vmatpush1.msra.mxu0 0.0
    %2866 = vmatprep.subr.mxu0 0.0
    %2867 = vmatpush1.msra.mxu0 0.0
    %2868 = vmatprep.subr.mxu0 0.0
    %2869 = vmatpush1.msra.mxu0 0.0
    %2870 = vmatprep.subr.mxu0 0.0
    %2871 = vmatpush1.msra.mxu0 0.0
    %2872 = vmatprep.subr.mxu0 0.0
    %2873 = vmatpush1.msra.mxu0 0.0
    %2874 = vmatprep.subr.mxu0 0.0
    %2875 = vmatpush1.msra.mxu0 0.0
    %2876 = vmatprep.mubr.f32.mxu0 0.0
    %2877 = vmatmul.mubr.f32.gmra.mrb[0].mxu0 %v2810
    %v2878 = vpop.f32.mrb[0].mxu0
    %v2879 = vadd.f32 0.0, %v2878
    %v2880 = vpop.f32.mrb[0].mxu0
    %2881 = vdwg.mxu0
    %v2882 = vrcp.pop %v2805
    %v2883 = vmul.f32 %v2879, %v2882
    %2884 = vrot.lane.b32.xlu0 %v2379, 112
    %v2885 = vpop.permute.xlu0 %2884
    %2886 = vrot.lane.b32.xlu0 %v2379, 80
    %v2887 = vpop.permute.xlu0 %2886
    %v2888 = vsel %vm2385, %v2885, 0
    %v2890 = vsel %vm2385, %v2887, 0
    %2892 = vmatprep.subr.mxu0 0.0
    %2893 = vmatpush1.xpose.msra.mxu0 %v2890
    %2894 = vmatprep.subr.mxu0 0.0
    %2895 = vmatpush1.xpose.msra.mxu0 0.0
    %2896 = vmatprep.subr.mxu0 0.0
    %2897 = vmatpush1.xpose.msra.mxu0 0.0
    %2898 = vmatprep.subr.mxu0 0.0
    %2899 = vmatpush1.xpose.msra.mxu0 0.0
    %2900 = vmatprep.subr.mxu0 0.0
    %2901 = vmatpush1.xpose.msra.mxu0 0.0
    %2902 = vmatprep.subr.mxu0 0.0
    %2903 = vmatpush1.xpose.msra.mxu0 0.0
    %2904 = vmatprep.subr.mxu0 0.0
    %2905 = vmatpush1.xpose.msra.mxu0 0.0
    %2906 = vmatprep.subr.mxu0 0.0
    %2907 = vmatpush1.xpose.msra.mxu0 0.0
    %2908 = vmatprep.subr.mxu0 0.0
    %2909 = vmatpush1.xpose.msra.mxu0 0.0
    %2910 = vmatprep.subr.mxu0 0.0
    %2911 = vmatpush1.xpose.msra.mxu0 0.0
    %2912 = vmatprep.subr.mxu0 0.0
    %2913 = vmatpush1.xpose.msra.mxu0 0.0
    %2914 = vmatprep.subr.mxu0 0.0
    %2915 = vmatpush1.xpose.msra.mxu0 0.0
    %2916 = vmatprep.subr.mxu0 0.0
    %2917 = vmatpush1.xpose.msra.mxu0 0.0
    %2918 = vmatprep.subr.mxu0 0.0
    %2919 = vmatpush1.xpose.msra.mxu0 0.0
    %2920 = vmatprep.subr.mxu0 0.0
    %2921 = vmatpush1.xpose.msra.mxu0 0.0
    %2922 = vmatprep.subr.mxu0 0.0
    %2923 = vmatpush1.xpose.msra.mxu0 0.0
    %2924 = vmatprep.subr.mxu0 0.0
    %2925 = vmatpush1.xpose.msra.mxu0 0.0
    %2926 = vmatprep.subr.mxu0 0.0
    %2927 = vmatpush1.xpose.msra.mxu0 0.0
    %2928 = vmatprep.subr.mxu0 0.0
    %2929 = vmatpush1.xpose.msra.mxu0 0.0
    %2930 = vmatprep.subr.mxu0 0.0
    %2931 = vmatpush1.xpose.msra.mxu0 0.0
    %2932 = vmatprep.subr.mxu0 0.0
    %2933 = vmatpush1.xpose.msra.mxu0 0.0
    %2934 = vmatprep.subr.mxu0 0.0
    %2935 = vmatpush1.xpose.msra.mxu0 0.0
    %2936 = vmatprep.subr.mxu0 0.0
    %2937 = vmatpush1.xpose.msra.mxu0 0.0
    %2938 = vmatprep.subr.mxu0 0.0
    %2939 = vmatpush1.xpose.msra.mxu0 0.0
    %2940 = vmatprep.subr.mxu0 0.0
    %2941 = vmatpush1.xpose.msra.mxu0 0.0
    %2942 = vmatprep.subr.mxu0 0.0
    %2943 = vmatpush1.xpose.msra.mxu0 0.0
    %2944 = vmatprep.subr.mxu0 0.0
    %2945 = vmatpush1.xpose.msra.mxu0 0.0
    %2946 = vmatprep.subr.mxu0 0.0
    %2947 = vmatpush1.xpose.msra.mxu0 0.0
    %2948 = vmatprep.subr.mxu0 0.0
    %2949 = vmatpush1.xpose.msra.mxu0 0.0
    %2950 = vmatprep.subr.mxu0 0.0
    %2951 = vmatpush1.xpose.msra.mxu0 0.0
    %2952 = vmatprep.subr.mxu0 0.0
    %2953 = vmatpush1.xpose.msra.mxu0 0.0
    %2954 = vmatprep.subr.mxu0 0.0
    %2955 = vmatpush1.xpose.msra.mxu0 0.0
    %2956 = vmatprep.mubr.f32.mxu0 0.0
    %2957 = vmatmul.mubr.f32.gmra.mrb[0].mxu0 %v2888
    %v2958 = vpop.f32.mrb[0].mxu0
    %v2959 = vadd.f32 0.0, %v2958
    %v2960 = vpop.f32.mrb[0].mxu0
    %2961 = vdwg.mxu0
    %v2962 = vmul.f32 %v2959, 0.25
    %v2963 = vsel %vm211, %v2962, -inf
    %2964 = vmax.xlane.f32.xlu0 %v2963
    %v2965 = vpop.xlane.xlu0 %2964
    %v2966 = vsub.f32 %v2962, %v2965
    %v2967 = vmul.f32 %v2966, 1.442695
    %v2968 = vpow.pop %v2967
    %v2969 = vsel %vm211, %v2968, 0.0
    %2970 = vadd.xlane.f32.xlu0 %v2969
    %v2971 = vpop.xlane.xlu0 %2970
    %2972 = vrot.lane.b32.xlu0 %v2379, 48
    %v2973 = vpop.permute.xlu0 %2972
    %v2976 = vsel %vm211, %v2968, 0
    %2978 = vmatprep.subr.mxu0 0.0
    %2979 = vmatpush1.msra.mxu0 %v2973
    %2980 = vmatprep.subr.mxu0 0.0
    %2981 = vmatpush1.msra.mxu0 0.0
    %2982 = vmatprep.subr.mxu0 0.0
    %2983 = vmatpush1.msra.mxu0 0.0
    %2984 = vmatprep.subr.mxu0 0.0
    %2985 = vmatpush1.msra.mxu0 0.0
    %2986 = vmatprep.subr.mxu0 0.0
    %2987 = vmatpush1.msra.mxu0 0.0
    %2988 = vmatprep.subr.mxu0 0.0
    %2989 = vmatpush1.msra.mxu0 0.0
    %2990 = vmatprep.subr.mxu0 0.0
    %2991 = vmatpush1.msra.mxu0 0.0
    %2992 = vmatprep.subr.mxu0 0.0
    %2993 = vmatpush1.msra.mxu0 0.0
    %2994 = vmatprep.subr.mxu0 0.0
    %2995 = vmatpush1.msra.mxu0 0.0
    %2996 = vmatprep.subr.mxu0 0.0
    %2997 = vmatpush1.msra.mxu0 0.0
    %2998 = vmatprep.subr.mxu0 0.0
    %2999 = vmatpush1.msra.mxu0 0.0
    %3000 = vmatprep.subr.mxu0 0.0
    %3001 = vmatpush1.msra.mxu0 0.0
    %3002 = vmatprep.subr.mxu0 0.0
    %3003 = vmatpush1.msra.mxu0 0.0
    %3004 = vmatprep.subr.mxu0 0.0
    %3005 = vmatpush1.msra.mxu0 0.0
    %3006 = vmatprep.subr.mxu0 0.0
    %3007 = vmatpush1.msra.mxu0 0.0
    %3008 = vmatprep.subr.mxu0 0.0
    %3009 = vmatpush1.msra.mxu0 0.0
    %3010 = vmatprep.subr.mxu0 0.0
    %3011 = vmatpush1.msra.mxu0 0.0
    %3012 = vmatprep.subr.mxu0 0.0
    %3013 = vmatpush1.msra.mxu0 0.0
    %3014 = vmatprep.subr.mxu0 0.0
    %3015 = vmatpush1.msra.mxu0 0.0
    %3016 = vmatprep.subr.mxu0 0.0
    %3017 = vmatpush1.msra.mxu0 0.0
    %3018 = vmatprep.subr.mxu0 0.0
    %3019 = vmatpush1.msra.mxu0 0.0
    %3020 = vmatprep.subr.mxu0 0.0
    %3021 = vmatpush1.msra.mxu0 0.0
    %3022 = vmatprep.subr.mxu0 0.0
    %3023 = vmatpush1.msra.mxu0 0.0
    %3024 = vmatprep.subr.mxu0 0.0
    %3025 = vmatpush1.msra.mxu0 0.0
    %3026 = vmatprep.subr.mxu0 0.0
    %3027 = vmatpush1.msra.mxu0 0.0
    %3028 = vmatprep.subr.mxu0 0.0
    %3029 = vmatpush1.msra.mxu0 0.0
    %3030 = vmatprep.subr.mxu0 0.0
    %3031 = vmatpush1.msra.mxu0 0.0
    %3032 = vmatprep.subr.mxu0 0.0
    %3033 = vmatpush1.msra.mxu0 0.0
    %3034 = vmatprep.subr.mxu0 0.0
    %3035 = vmatpush1.msra.mxu0 0.0
    %3036 = vmatprep.subr.mxu0 0.0
    %3037 = vmatpush1.msra.mxu0 0.0
    %3038 = vmatprep.subr.mxu0 0.0
    %3039 = vmatpush1.msra.mxu0 0.0
    %3040 = vmatprep.subr.mxu0 0.0
    %3041 = vmatpush1.msra.mxu0 0.0
    %3042 = vmatprep.mubr.f32.mxu0 0.0
    %3043 = vmatmul.mubr.f32.gmra.mrb[0].mxu0 %v2976
    %v3044 = vpop.f32.mrb[0].mxu0
    %v3045 = vadd.f32 0.0, %v3044
    %v3046 = vpop.f32.mrb[0].mxu0
    %3047 = vdwg.mxu0
    %v3048 = vrcp.pop %v2971
    %v3049 = vmul.f32 %v3045, %v3048
    %3051 = vrot.lane.b32.xlu0 %v3049, 16
    %v3052 = vpop.permute.xlu0 %3051
    %v3054 = vsel %vm2385, %v2883, %v3052
    %v3055 = vld [vmem:[%s27] sm:$0xff]
    %v3056 = vld [vmem:[%s27 + $0x8] sm:$0xff]
    %v3057 = vld [vmem:[%s27 + $0x10] sm:$0xff]
    %v3058 = vld [vmem:[%s27 + $0x18] sm:$0xff]
    %v3060 = vsel %vm2253, %v2718, 0
    %v3063 = vsel %vm2253, %v3054, 0
    %3065 = vmatprep.subr.mxu0 0.0
    %3066 = vmatpush1.msra.mxu0 %v3055
    %3067 = vmatprep.subr.mxu0 0.0
    %3068 = vmatpush1.msra.mxu0 %v3056
    %3069 = vmatprep.subr.mxu0 0.0
    %3070 = vmatpush1.msra.mxu0 %v3057
    %3071 = vmatprep.subr.mxu0 0.0
    %3072 = vmatpush1.msra.mxu0 %v3058
    %3073 = vmatprep.subr.mxu0 0.0
    %3074 = vmatpush1.msra.mxu0 0.0
    %3075 = vmatprep.subr.mxu0 0.0
    %3076 = vmatpush1.msra.mxu0 0.0
    %3077 = vmatprep.subr.mxu0 0.0
    %3078 = vmatpush1.msra.mxu0 0.0
    %3079 = vmatprep.subr.mxu0 0.0
    %3080 = vmatpush1.msra.mxu0 0.0
    %3081 = vmatprep.subr.mxu0 0.0
    %3082 = vmatpush1.msra.mxu0 0.0
    %3083 = vmatprep.subr.mxu0 0.0
    %3084 = vmatpush1.msra.mxu0 0.0
    %3085 = vmatprep.subr.mxu0 0.0
    %3086 = vmatpush1.msra.mxu0 0.0
    %3087 = vmatprep.subr.mxu0 0.0
    %3088 = vmatpush1.msra.mxu0 0.0
    %3089 = vmatprep.subr.mxu0 0.0
    %3090 = vmatpush1.msra.mxu0 0.0
    %3091 = vmatprep.subr.mxu0 0.0
    %3092 = vmatpush1.msra.mxu0 0.0
    %3093 = vmatprep.subr.mxu0 0.0
    %3094 = vmatpush1.msra.mxu0 0.0
    %3095 = vmatprep.subr.mxu0 0.0
    %3096 = vmatpush1.msra.mxu0 0.0
    %3097 = vmatprep.subr.mxu0 0.0
    %3098 = vmatpush1.msra.mxu0 0.0
    %3099 = vmatprep.subr.mxu0 0.0
    %3100 = vmatpush1.msra.mxu0 0.0
    %3101 = vmatprep.subr.mxu0 0.0
    %3102 = vmatpush1.msra.mxu0 0.0
    %3103 = vmatprep.subr.mxu0 0.0
    %3104 = vmatpush1.msra.mxu0 0.0
    %3105 = vmatprep.subr.mxu0 0.0
    %3106 = vmatpush1.msra.mxu0 0.0
    %3107 = vmatprep.subr.mxu0 0.0
    %3108 = vmatpush1.msra.mxu0 0.0
    %3109 = vmatprep.subr.mxu0 0.0
    %3110 = vmatpush1.msra.mxu0 0.0
    %3111 = vmatprep.subr.mxu0 0.0
    %3112 = vmatpush1.msra.mxu0 0.0
    %3113 = vmatprep.subr.mxu0 0.0
    %3114 = vmatpush1.msra.mxu0 0.0
    %3115 = vmatprep.subr.mxu0 0.0
    %3116 = vmatpush1.msra.mxu0 0.0
    %3117 = vmatprep.subr.mxu0 0.0
    %3118 = vmatpush1.msra.mxu0 0.0
    %3119 = vmatprep.subr.mxu0 0.0
    %3120 = vmatpush1.msra.mxu0 0.0
    %3121 = vmatprep.subr.mxu0 0.0
    %3122 = vmatpush1.msra.mxu0 0.0
    %3123 = vmatprep.subr.mxu0 0.0
    %3124 = vmatpush1.msra.mxu0 0.0
    %3125 = vmatprep.subr.mxu0 0.0
    %3126 = vmatpush1.msra.mxu0 0.0
    %3127 = vmatprep.subr.mxu0 0.0
    %3128 = vmatpush1.msra.mxu0 0.0
    %3129 = vmatprep.mubr.f32.mxu0 0.0
    %3130 = vmatmul.mubr.f32.gmra.mrb[0].mxu0 %v3060
    %v3131 = vpop.f32.mrb[0].mxu0
    %v3132 = vadd.f32 0.0, %v3131
    %v3133 = vpop.f32.mrb[0].mxu0
    %3134 = vmatprep.mubr.f32.mxu0 0.0
    %3135 = vmatmul.mubr.f32.gmra.mrb[0].mxu0 %v3063
    %v3136 = vpop.f32.mrb[0].mxu0
    %v3137 = vadd.f32 0.0, %v3136
    %v3138 = vpop.f32.mrb[0].mxu0
    %3139 = vdwg.mxu0
    %v3140 = vadd.f32 %v2295, %v3132
    %v3141 = vadd.f32 %v2296, %v3137
    %v3142 = vld [vmem:[%s21] sm:$0x1]
    %v3143 = vld [vmem:[%s19] sm:$0x1]
    %v3144 = vsel %vm2253, %v3140, 0.0
    %3145 = vadd.xlane.f32.xlu0 %v3144
    %v3146 = vpop.xlane.xlu0 %3145
    %v3147 = vsel %vm2253, %v3141, 0.0
    %3148 = vadd.xlane.f32.xlu0 %v3147
    %v3149 = vpop.xlane.xlu0 %3148
    %v3150 = vmul.f32 %v3146, %v2260
    %v3151 = vmul.f32 %v3149, %v2260
    %v3152 = vsub.f32 %v3140, %v3150
    %v3153 = vsub.f32 %v3141, %v3151
    %v3154 = vmul.f32 %v3152, %v3152
    %v3155 = vmul.f32 %v3153, %v3153
    %v3156 = vsel %vm2253, %v3154, 0.0
    %3157 = vadd.xlane.f32.xlu0 %v3156
    %v3158 = vpop.xlane.xlu0 %3157
    %v3159 = vsel %vm2253, %v3155, 0.0
    %3160 = vadd.xlane.f32.xlu0 %v3159
    %v3161 = vpop.xlane.xlu0 %3160
    %v3162 = vmul.f32 %v3158, %v2260
    %v3163 = vmul.f32 %v3161, %v2260
    %v3164 = vadd.f32 %v3162, 1e-05
    %v3165 = vadd.f32 %v3163, 1e-05
    %v3166 = vrsqrt.pop %v3164
    %v3167 = vrsqrt.pop %v3165
    %v3168 = vmul.f32 %v3152, %v3166
    %v3169 = vmul.f32 %v3153, %v3167
    %v3171 = vlaneseq
    %v3172 = vshrl.u32 %v3171, 7
    %v3173 = vsub.s32 0, %v3172
    %v3174 = vrot.slane %v3142, %v3173
    %v3176 = vmul.f32 %v3168, %v3174
    %v3177 = vmul.f32 %v3169, %v3174
    %v3179 = vlaneseq
    %v3180 = vshrl.u32 %v3179, 7
    %v3181 = vsub.s32 0, %v3180
    %v3182 = vrot.slane %v3143, %v3181
    %v3184 = vadd.f32 %v3176, %v3182
    %v3185 = vadd.f32 %v3177, %v3182
    %v3186 = vld [vmem:[%s15] sm:$0xff]
    %v3187 = vld [vmem:[%s15 + $0x8] sm:$0xff]
    %v3188 = vld [vmem:[%s15 + $0x10] sm:$0xff]
    %v3189 = vld [vmem:[%s15 + $0x18] sm:$0xff]
    %v3190 = vld [vmem:[%s11] sm:$0x1]
    %v3192 = vlaneseq
    %v3193 = vshrl.u32 %v3192, 7
    %v3194 = vsub.s32 0, %v3193
    %v3195 = vrot.slane %v3190, %v3194
    %v3198 = vsel %vm2253, %v3184, 0
    %v3201 = vsel %vm2253, %v3185, 0
    %3203 = vmatprep.subr.mxu0 0.0
    %3204 = vmatpush1.msra.mxu0 %v3186
    %3205 = vmatprep.subr.mxu0 0.0
    %3206 = vmatpush1.msra.mxu0 %v3187
    %3207 = vmatprep.subr.mxu0 0.0
    %3208 = vmatpush1.msra.mxu0 %v3188
    %3209 = vmatprep.subr.mxu0 0.0
    %3210 = vmatpush1.msra.mxu0 %v3189
    %3211 = vmatprep.subr.mxu0 0.0
    %3212 = vmatpush1.msra.mxu0 0.0
    %3213 = vmatprep.subr.mxu0 0.0
    %3214 = vmatpush1.msra.mxu0 0.0
    %3215 = vmatprep.subr.mxu0 0.0
    %3216 = vmatpush1.msra.mxu0 0.0
    %3217 = vmatprep.subr.mxu0 0.0
    %3218 = vmatpush1.msra.mxu0 0.0
    %3219 = vmatprep.subr.mxu0 0.0
    %3220 = vmatpush1.msra.mxu0 0.0
    %3221 = vmatprep.subr.mxu0 0.0
    %3222 = vmatpush1.msra.mxu0 0.0
    %3223 = vmatprep.subr.mxu0 0.0
    %3224 = vmatpush1.msra.mxu0 0.0
    %3225 = vmatprep.subr.mxu0 0.0
    %3226 = vmatpush1.msra.mxu0 0.0
    %3227 = vmatprep.subr.mxu0 0.0
    %3228 = vmatpush1.msra.mxu0 0.0
    %3229 = vmatprep.subr.mxu0 0.0
    %3230 = vmatpush1.msra.mxu0 0.0
    %3231 = vmatprep.subr.mxu0 0.0
    %3232 = vmatpush1.msra.mxu0 0.0
    %3233 = vmatprep.subr.mxu0 0.0
    %3234 = vmatpush1.msra.mxu0 0.0
    %3235 = vmatprep.subr.mxu0 0.0
    %3236 = vmatpush1.msra.mxu0 0.0
    %3237 = vmatprep.subr.mxu0 0.0
    %3238 = vmatpush1.msra.mxu0 0.0
    %3239 = vmatprep.subr.mxu0 0.0
    %3240 = vmatpush1.msra.mxu0 0.0
    %3241 = vmatprep.subr.mxu0 0.0
    %3242 = vmatpush1.msra.mxu0 0.0
    %3243 = vmatprep.subr.mxu0 0.0
    %3244 = vmatpush1.msra.mxu0 0.0
    %3245 = vmatprep.subr.mxu0 0.0
    %3246 = vmatpush1.msra.mxu0 0.0
    %3247 = vmatprep.subr.mxu0 0.0
    %3248 = vmatpush1.msra.mxu0 0.0
    %3249 = vmatprep.subr.mxu0 0.0
    %3250 = vmatpush1.msra.mxu0 0.0
    %3251 = vmatprep.subr.mxu0 0.0
    %3252 = vmatpush1.msra.mxu0 0.0
    %3253 = vmatprep.subr.mxu0 0.0
    %3254 = vmatpush1.msra.mxu0 0.0
    %3255 = vmatprep.subr.mxu0 0.0
    %3256 = vmatpush1.msra.mxu0 0.0
    %3257 = vmatprep.subr.mxu0 0.0
    %3258 = vmatpush1.msra.mxu0 0.0
    %3259 = vmatprep.subr.mxu0 0.0
    %3260 = vmatpush1.msra.mxu0 0.0
    %3261 = vmatprep.subr.mxu0 0.0
    %3262 = vmatpush1.msra.mxu0 0.0
    %3263 = vmatprep.subr.mxu0 0.0
    %3264 = vmatpush1.msra.mxu0 0.0
    %3265 = vmatprep.subr.mxu0 0.0
    %3266 = vmatpush1.msra.mxu0 0.0
    %3267 = vmatprep.mubr.f32.mxu0 0.0
    %3268 = vmatmul.mubr.f32.gmra.mrb[0].mxu0 %v3198
    %v3269 = vpop.f32.mrb[0].mxu0
    %v3270 = vadd.f32 %v3195, %v3269
    %v3271 = vpop.f32.mrb[0].mxu0
    %3272 = vmatprep.mubr.f32.mxu0 0.0
    %3273 = vmatmul.mubr.f32.gmra.mrb[0].mxu0 %v3201
    %v3274 = vpop.f32.mrb[0].mxu0
    %v3275 = vadd.f32 %v3195, %v3274
    %v3276 = vpop.f32.mrb[0].mxu0
    %3277 = vdwg.mxu0
    %v3278 = vmul.f32 %v3270, %v3270
    %v3279 = vmul.f32 %v3275, %v3275
    %v3280 = vmul.f32 %v3270, %v3278
    %v3281 = vmul.f32 %v3275, %v3279
    %v3282 = vmul.f32 %v3280, 0.044715
    %v3283 = vmul.f32 %v3281, 0.044715
    %v3284 = vadd.f32 %v3270, %v3282
    %v3285 = vadd.f32 %v3275, %v3283
    %v3286 = vmul.f32 %v3284, 0.7978846
    %v3287 = vmul.f32 %v3285, 0.7978846
    %v3288 = vtanh.pop %v3286
    %v3289 = vtanh.pop %v3287
    %v3290 = vadd.f32 %v3288, 1.0
    %v3291 = vadd.f32 %v3289, 1.0
    %v3292 = vmul.f32 %v3290, 0.5
    %v3293 = vmul.f32 %v3291, 0.5
    %v3294 = vmul.f32 %v3270, %v3292
    %v3295 = vmul.f32 %v3275, %v3293
    %v3296 = vld [vmem:[%s17] sm:$0xff]
    %v3297 = vld [vmem:[%s17 + $0x8] sm:$0xff]
    %v3298 = vld [vmem:[%s17 + $0x10] sm:$0xff]
    %v3299 = vld [vmem:[%s17 + $0x18] sm:$0xff]
    %v3300 = vld [vmem:[%s17 + $0x20] sm:$0xff]
    %v3301 = vld [vmem:[%s17 + $0x28] sm:$0xff]
    %v3302 = vld [vmem:[%s17 + $0x30] sm:$0xff]
    %v3303 = vld [vmem:[%s17 + $0x38] sm:$0xff]
    %v3304 = vld [vmem:[%s17 + $0x40] sm:$0xff]
    %v3305 = vld [vmem:[%s17 + $0x48] sm:$0xff]
    %v3306 = vld [vmem:[%s17 + $0x50] sm:$0xff]
    %v3307 = vld [vmem:[%s17 + $0x58] sm:$0xff]
    %v3308 = vld [vmem:[%s17 + $0x60] sm:$0xff]
    %v3309 = vld [vmem:[%s17 + $0x68] sm:$0xff]
    %v3310 = vld [vmem:[%s17 + $0x70] sm:$0xff]
    %v3311 = vld [vmem:[%s17 + $0x78] sm:$0xff]
    %v3312 = vld [vmem:[%s13] sm:$0x1]
    %v3314 = vlaneseq
    %v3315 = vshrl.u32 %v3314, 7
    %v3316 = vsub.s32 0, %v3315
    %v3317 = vrot.slane %v3312, %v3316
    %3319 = vmatprep.subr.mxu0 0.0
    %3320 = vmatpush1.msra.mxu0 %v3296
    %3321 = vmatprep.subr.mxu0 0.0
    %3322 = vmatpush1.msra.mxu0 %v3297
    %3323 = vmatprep.subr.mxu0 0.0
    %3324 = vmatpush1.msra.mxu0 %v3298
    %3325 = vmatprep.subr.mxu0 0.0
    %3326 = vmatpush1.msra.mxu0 %v3299
    %3327 = vmatprep.subr.mxu0 0.0
    %3328 = vmatpush1.msra.mxu0 %v3300
    %3329 = vmatprep.subr.mxu0 0.0
    %3330 = vmatpush1.msra.mxu0 %v3301
    %3331 = vmatprep.subr.mxu0 0.0
    %3332 = vmatpush1.msra.mxu0 %v3302
    %3333 = vmatprep.subr.mxu0 0.0
    %3334 = vmatpush1.msra.mxu0 %v3303
    %3335 = vmatprep.subr.mxu0 0.0
    %3336 = vmatpush1.msra.mxu0 %v3304
    %3337 = vmatprep.subr.mxu0 0.0
    %3338 = vmatpush1.msra.mxu0 %v3305
    %3339 = vmatprep.subr.mxu0 0.0
    %3340 = vmatpush1.msra.mxu0 %v3306
    %3341 = vmatprep.subr.mxu0 0.0
    %3342 = vmatpush1.msra.mxu0 %v3307
    %3343 = vmatprep.subr.mxu0 0.0
    %3344 = vmatpush1.msra.mxu0 %v3308
    %3345 = vmatprep.subr.mxu0 0.0
    %3346 = vmatpush1.msra.mxu0 %v3309
    %3347 = vmatprep.subr.mxu0 0.0
    %3348 = vmatpush1.msra.mxu0 %v3310
    %3349 = vmatprep.subr.mxu0 0.0
    %3350 = vmatpush1.msra.mxu0 %v3311
    %3351 = vmatprep.subr.mxu0 0.0
    %3352 = vmatpush1.msra.mxu0 0.0
    %3353 = vmatprep.subr.mxu0 0.0
    %3354 = vmatpush1.msra.mxu0 0.0
    %3355 = vmatprep.subr.mxu0 0.0
    %3356 = vmatpush1.msra.mxu0 0.0
    %3357 = vmatprep.subr.mxu0 0.0
    %3358 = vmatpush1.msra.mxu0 0.0
    %3359 = vmatprep.subr.mxu0 0.0
    %3360 = vmatpush1.msra.mxu0 0.0
    %3361 = vmatprep.subr.mxu0 0.0
    %3362 = vmatpush1.msra.mxu0 0.0
    %3363 = vmatprep.subr.mxu0 0.0
    %3364 = vmatpush1.msra.mxu0 0.0
    %3365 = vmatprep.subr.mxu0 0.0
    %3366 = vmatpush1.msra.mxu0 0.0
    %3367 = vmatprep.subr.mxu0 0.0
    %3368 = vmatpush1.msra.mxu0 0.0
    %3369 = vmatprep.subr.mxu0 0.0
    %3370 = vmatpush1.msra.mxu0 0.0
    %3371 = vmatprep.subr.mxu0 0.0
    %3372 = vmatpush1.msra.mxu0 0.0
    %3373 = vmatprep.subr.mxu0 0.0
    %3374 = vmatpush1.msra.mxu0 0.0
    %3375 = vmatprep.subr.mxu0 0.0
    %3376 = vmatpush1.msra.mxu0 0.0
    %3377 = vmatprep.subr.mxu0 0.0
    %3378 = vmatpush1.msra.mxu0 0.0
    %3379 = vmatprep.subr.mxu0 0.0
    %3380 = vmatpush1.msra.mxu0 0.0
    %3381 = vmatprep.subr.mxu0 0.0
    %3382 = vmatpush1.msra.mxu0 0.0
    %3383 = vmatprep.mubr.f32.mxu0 0.0
    %3384 = vmatmul.mubr.f32.gmra.mrb[0].mxu0 %v3294
    %v3385 = vpop.f32.mrb[0].mxu0
    %v3386 = vadd.f32 %v3317, %v3385
    %v3387 = vpop.f32.mrb[0].mxu0
    %3388 = vmatprep.mubr.f32.mxu0 0.0
    %3389 = vmatmul.mubr.f32.gmra.mrb[0].mxu0 %v3295
    %v3390 = vpop.f32.mrb[0].mxu0
    %v3391 = vadd.f32 %v3317, %v3390
    %v3392 = vpop.f32.mrb[0].mxu0
    %3393 = vdwg.mxu0
    %v3394 = vadd.f32 %v3184, %v3386
    %v3395 = vadd.f32 %v3185, %v3391
    %v3396 = vld [vmem:[%s25] sm:$0x1]
    %v3397 = vld [vmem:[%s23] sm:$0x1]
    %v3398 = vsel %vm2253, %v3394, 0.0
    %3399 = vadd.xlane.f32.xlu0 %v3398
    %v3400 = vpop.xlane.xlu0 %3399
    %v3401 = vsel %vm2253, %v3395, 0.0
    %3402 = vadd.xlane.f32.xlu0 %v3401
    %v3403 = vpop.xlane.xlu0 %3402
    %v3404 = vmul.f32 %v3400, %v2260
    %v3405 = vmul.f32 %v3403, %v2260
    %v3406 = vsub.f32 %v3394, %v3404
    %v3407 = vsub.f32 %v3395, %v3405
    %v3408 = vmul.f32 %v3406, %v3406
    %v3409 = vmul.f32 %v3407, %v3407
    %v3410 = vsel %vm2253, %v3408, 0.0
    %3411 = vadd.xlane.f32.xlu0 %v3410
    %v3412 = vpop.xlane.xlu0 %3411
    %v3413 = vsel %vm2253, %v3409, 0.0
    %3414 = vadd.xlane.f32.xlu0 %v3413
    %v3415 = vpop.xlane.xlu0 %3414
    %v3416 = vmul.f32 %v3412, %v2260
    %v3417 = vmul.f32 %v3415, %v2260
    %v3418 = vadd.f32 %v3416, 1e-05
    %v3419 = vadd.f32 %v3417, 1e-05
    %v3420 = vrsqrt.pop %v3418
    %v3421 = vrsqrt.pop %v3419
    %v3422 = vmul.f32 %v3406, %v3420
    %v3423 = vmul.f32 %v3407, %v3421
    %v3425 = vlaneseq
    %v3426 = vshrl.u32 %v3425, 7
    %v3427 = vsub.s32 0, %v3426
    %v3428 = vrot.slane %v3396, %v3427
    %v3430 = vmul.f32 %v3422, %v3428
    %v3431 = vmul.f32 %v3423, %v3428
    %v3433 = vlaneseq
    %v3434 = vshrl.u32 %v3433, 7
    %v3435 = vsub.s32 0, %v3434
    %v3436 = vrot.slane %v3397, %v3435
    %v3438 = vadd.f32 %v3430, %v3436
    %v3439 = vadd.f32 %v3431, %v3436
    %v3440 = vld [vmem:[%s49] sm:$0xff]
    %v3441 = vld [vmem:[%s49 + $0x8] sm:$0xff]
    %v3442 = vld [vmem:[%s49 + $0x10] sm:$0xff]
    %v3443 = vld [vmem:[%s49 + $0x18] sm:$0xff]
    %v3445 = vsel %vm2253, %v3438, 0
    %v3448 = vsel %vm2253, %v3439, 0
    %3450 = vmatprep.subr.mxu0 0.0
    %3451 = vmatpush1.msra.mxu0 %v3440
    %3452 = vmatprep.subr.mxu0 0.0
    %3453 = vmatpush1.msra.mxu0 %v3441
    %3454 = vmatprep.subr.mxu0 0.0
    %3455 = vmatpush1.msra.mxu0 %v3442
    %3456 = vmatprep.subr.mxu0 0.0
    %3457 = vmatpush1.msra.mxu0 %v3443
    %3458 = vmatprep.subr.mxu0 0.0
    %3459 = vmatpush1.msra.mxu0 0.0
    %3460 = vmatprep.subr.mxu0 0.0
    %3461 = vmatpush1.msra.mxu0 0.0
    %3462 = vmatprep.subr.mxu0 0.0
    %3463 = vmatpush1.msra.mxu0 0.0
    %3464 = vmatprep.subr.mxu0 0.0
    %3465 = vmatpush1.msra.mxu0 0.0
    %3466 = vmatprep.subr.mxu0 0.0
    %3467 = vmatpush1.msra.mxu0 0.0
    %3468 = vmatprep.subr.mxu0 0.0
    %3469 = vmatpush1.msra.mxu0 0.0
    %3470 = vmatprep.subr.mxu0 0.0
    %3471 = vmatpush1.msra.mxu0 0.0
    %3472 = vmatprep.subr.mxu0 0.0
    %3473 = vmatpush1.msra.mxu0 0.0
    %3474 = vmatprep.subr.mxu0 0.0
    %3475 = vmatpush1.msra.mxu0 0.0
    %3476 = vmatprep.subr.mxu0 0.0
    %3477 = vmatpush1.msra.mxu0 0.0
    %3478 = vmatprep.subr.mxu0 0.0
    %3479 = vmatpush1.msra.mxu0 0.0
    %3480 = vmatprep.subr.mxu0 0.0
    %3481 = vmatpush1.msra.mxu0 0.0
    %3482 = vmatprep.subr.mxu0 0.0
    %3483 = vmatpush1.msra.mxu0 0.0
    %3484 = vmatprep.subr.mxu0 0.0
    %3485 = vmatpush1.msra.mxu0 0.0
    %3486 = vmatprep.subr.mxu0 0.0
    %3487 = vmatpush1.msra.mxu0 0.0
    %3488 = vmatprep.subr.mxu0 0.0
    %3489 = vmatpush1.msra.mxu0 0.0
    %3490 = vmatprep.subr.mxu0 0.0
    %3491 = vmatpush1.msra.mxu0 0.0
    %3492 = vmatprep.subr.mxu0 0.0
    %3493 = vmatpush1.msra.mxu0 0.0
    %3494 = vmatprep.subr.mxu0 0.0
    %3495 = vmatpush1.msra.mxu0 0.0
    %3496 = vmatprep.subr.mxu0 0.0
    %3497 = vmatpush1.msra.mxu0 0.0
    %3498 = vmatprep.subr.mxu0 0.0
    %3499 = vmatpush1.msra.mxu0 0.0
    %3500 = vmatprep.subr.mxu0 0.0
    %3501 = vmatpush1.msra.mxu0 0.0
    %3502 = vmatprep.subr.mxu0 0.0
    %3503 = vmatpush1.msra.mxu0 0.0
    %3504 = vmatprep.subr.mxu0 0.0
    %3505 = vmatpush1.msra.mxu0 0.0
    %3506 = vmatprep.subr.mxu0 0.0
    %3507 = vmatpush1.msra.mxu0 0.0
    %3508 = vmatprep.subr.mxu0 0.0
    %3509 = vmatpush1.msra.mxu0 0.0
    %3510 = vmatprep.subr.mxu0 0.0
    %3511 = vmatpush1.msra.mxu0 0.0
    %3512 = vmatprep.subr.mxu0 0.0
    %3513 = vmatpush1.msra.mxu0 0.0
    %3514 = vmatprep.mubr.f32.mxu0 0.0
    %3515 = vmatmul.mubr.f32.gmra.mrb[0].mxu0 %v3445
    %v3516 = vpop.f32.mrb[0].mxu0
    %v3517 = vadd.f32 0.0, %v3516
    %v3518 = vpop.f32.mrb[0].mxu0
    %3519 = vmatprep.mubr.f32.mxu0 0.0
    %3520 = vmatmul.mubr.f32.gmra.mrb[0].mxu0 %v3448
    %v3521 = vpop.f32.mrb[0].mxu0
    %v3522 = vadd.f32 0.0, %v3521
    %v3523 = vpop.f32.mrb[0].mxu0
    %3524 = vdwg.mxu0
    %3526 = vrot.lane.b32.xlu0 %v3517, 96
    %v3527 = vpop.permute.xlu0 %3526
    %v3528 = vsel %vm2385, %v3517, 0
    %v3530 = vsel %vm2385, %v3527, 0
    %3532 = vmatprep.subr.mxu0 0.0
    %3533 = vmatpush1.xpose.msra.mxu0 %v3530
    %3534 = vmatprep.subr.mxu0 0.0
    %3535 = vmatpush1.xpose.msra.mxu0 0.0
    %3536 = vmatprep.subr.mxu0 0.0
    %3537 = vmatpush1.xpose.msra.mxu0 0.0
    %3538 = vmatprep.subr.mxu0 0.0
    %3539 = vmatpush1.xpose.msra.mxu0 0.0
    %3540 = vmatprep.subr.mxu0 0.0
    %3541 = vmatpush1.xpose.msra.mxu0 0.0
    %3542 = vmatprep.subr.mxu0 0.0
    %3543 = vmatpush1.xpose.msra.mxu0 0.0
    %3544 = vmatprep.subr.mxu0 0.0
    %3545 = vmatpush1.xpose.msra.mxu0 0.0
    %3546 = vmatprep.subr.mxu0 0.0
    %3547 = vmatpush1.xpose.msra.mxu0 0.0
    %3548 = vmatprep.subr.mxu0 0.0
    %3549 = vmatpush1.xpose.msra.mxu0 0.0
    %3550 = vmatprep.subr.mxu0 0.0
    %3551 = vmatpush1.xpose.msra.mxu0 0.0
    %3552 = vmatprep.subr.mxu0 0.0
    %3553 = vmatpush1.xpose.msra.mxu0 0.0
    %3554 = vmatprep.subr.mxu0 0.0
    %3555 = vmatpush1.xpose.msra.mxu0 0.0
    %3556 = vmatprep.subr.mxu0 0.0
    %3557 = vmatpush1.xpose.msra.mxu0 0.0
    %3558 = vmatprep.subr.mxu0 0.0
    %3559 = vmatpush1.xpose.msra.mxu0 0.0
    %3560 = vmatprep.subr.mxu0 0.0
    %3561 = vmatpush1.xpose.msra.mxu0 0.0
    %3562 = vmatprep.subr.mxu0 0.0
    %3563 = vmatpush1.xpose.msra.mxu0 0.0
    %3564 = vmatprep.subr.mxu0 0.0
    %3565 = vmatpush1.xpose.msra.mxu0 0.0
    %3566 = vmatprep.subr.mxu0 0.0
    %3567 = vmatpush1.xpose.msra.mxu0 0.0
    %3568 = vmatprep.subr.mxu0 0.0
    %3569 = vmatpush1.xpose.msra.mxu0 0.0
    %3570 = vmatprep.subr.mxu0 0.0
    %3571 = vmatpush1.xpose.msra.mxu0 0.0
    %3572 = vmatprep.subr.mxu0 0.0
    %3573 = vmatpush1.xpose.msra.mxu0 0.0
    %3574 = vmatprep.subr.mxu0 0.0
    %3575 = vmatpush1.xpose.msra.mxu0 0.0
    %3576 = vmatprep.subr.mxu0 0.0
    %3577 = vmatpush1.xpose.msra.mxu0 0.0
    %3578 = vmatprep.subr.mxu0 0.0
    %3579 = vmatpush1.xpose.msra.mxu0 0.0
    %3580 = vmatprep.subr.mxu0 0.0
    %3581 = vmatpush1.xpose.msra.mxu0 0.0
    %3582 = vmatprep.subr.mxu0 0.0
    %3583 = vmatpush1.xpose.msra.mxu0 0.0
    %3584 = vmatprep.subr.mxu0 0.0
    %3585 = vmatpush1.xpose.msra.mxu0 0.0
    %3586 = vmatprep.subr.mxu0 0.0
    %3587 = vmatpush1.xpose.msra.mxu0 0.0
    %3588 = vmatprep.subr.mxu0 0.0
    %3589 = vmatpush1.xpose.msra.mxu0 0.0
    %3590 = vmatprep.subr.mxu0 0.0
    %3591 = vmatpush1.xpose.msra.mxu0 0.0
    %3592 = vmatprep.subr.mxu0 0.0
    %3593 = vmatpush1.xpose.msra.mxu0 0.0
    %3594 = vmatprep.subr.mxu0 0.0
    %3595 = vmatpush1.xpose.msra.mxu0 0.0
    %3596 = vmatprep.mubr.f32.mxu0 0.0
    %3597 = vmatmul.mubr.f32.gmra.mrb[0].mxu0 %v3528
    %v3598 = vpop.f32.mrb[0].mxu0
    %v3599 = vadd.f32 0.0, %v3598
    %v3600 = vpop.f32.mrb[0].mxu0
    %3601 = vdwg.mxu0
    %v3602 = vmul.f32 %v3599, 0.25
    %v3603 = vsel %vm211, %v3602, -inf
    %3604 = vmax.xlane.f32.xlu0 %v3603
    %v3605 = vpop.xlane.xlu0 %3604
    %v3606 = vsub.f32 %v3602, %v3605
    %v3607 = vmul.f32 %v3606, 1.442695
    %v3608 = vpow.pop %v3607
    %v3609 = vsel %vm211, %v3608, 0.0
    %3610 = vadd.xlane.f32.xlu0 %v3609
    %v3611 = vpop.xlane.xlu0 %3610
    %3612 = vrot.lane.b32.xlu0 %v3517, 64
    %v3613 = vpop.permute.xlu0 %3612
    %v3616 = vsel %vm211, %v3608, 0
    %3618 = vmatprep.subr.mxu0 0.0
    %3619 = vmatpush1.msra.mxu0 %v3613
    %3620 = vmatprep.subr.mxu0 0.0
    %3621 = vmatpush1.msra.mxu0 0.0
    %3622 = vmatprep.subr.mxu0 0.0
    %3623 = vmatpush1.msra.mxu0 0.0
    %3624 = vmatprep.subr.mxu0 0.0
    %3625 = vmatpush1.msra.mxu0 0.0
    %3626 = vmatprep.subr.mxu0 0.0
    %3627 = vmatpush1.msra.mxu0 0.0
    %3628 = vmatprep.subr.mxu0 0.0
    %3629 = vmatpush1.msra.mxu0 0.0
    %3630 = vmatprep.subr.mxu0 0.0
    %3631 = vmatpush1.msra.mxu0 0.0
    %3632 = vmatprep.subr.mxu0 0.0
    %3633 = vmatpush1.msra.mxu0 0.0
    %3634 = vmatprep.subr.mxu0 0.0
    %3635 = vmatpush1.msra.mxu0 0.0
    %3636 = vmatprep.subr.mxu0 0.0
    %3637 = vmatpush1.msra.mxu0 0.0
    %3638 = vmatprep.subr.mxu0 0.0
    %3639 = vmatpush1.msra.mxu0 0.0
    %3640 = vmatprep.subr.mxu0 0.0
    %3641 = vmatpush1.msra.mxu0 0.0
    %3642 = vmatprep.subr.mxu0 0.0
    %3643 = vmatpush1.msra.mxu0 0.0
    %3644 = vmatprep.subr.mxu0 0.0
    %3645 = vmatpush1.msra.mxu0 0.0
    %3646 = vmatprep.subr.mxu0 0.0
    %3647 = vmatpush1.msra.mxu0 0.0
    %3648 = vmatprep.subr.mxu0 0.0
    %3649 = vmatpush1.msra.mxu0 0.0
    %3650 = vmatprep.subr.mxu0 0.0
    %3651 = vmatpush1.msra.mxu0 0.0
    %3652 = vmatprep.subr.mxu0 0.0
    %3653 = vmatpush1.msra.mxu0 0.0
    %3654 = vmatprep.subr.mxu0 0.0
    %3655 = vmatpush1.msra.mxu0 0.0
    %3656 = vmatprep.subr.mxu0 0.0
    %3657 = vmatpush1.msra.mxu0 0.0
    %3658 = vmatprep.subr.mxu0 0.0
    %3659 = vmatpush1.msra.mxu0 0.0
    %3660 = vmatprep.subr.mxu0 0.0
    %3661 = vmatpush1.msra.mxu0 0.0
    %3662 = vmatprep.subr.mxu0 0.0
    %3663 = vmatpush1.msra.mxu0 0.0
    %3664 = vmatprep.subr.mxu0 0.0
    %3665 = vmatpush1.msra.mxu0 0.0
    %3666 = vmatprep.subr.mxu0 0.0
    %3667 = vmatpush1.msra.mxu0 0.0
    %3668 = vmatprep.subr.mxu0 0.0
    %3669 = vmatpush1.msra.mxu0 0.0
    %3670 = vmatprep.subr.mxu0 0.0
    %3671 = vmatpush1.msra.mxu0 0.0
    %3672 = vmatprep.subr.mxu0 0.0
    %3673 = vmatpush1.msra.mxu0 0.0
    %3674 = vmatprep.subr.mxu0 0.0
    %3675 = vmatpush1.msra.mxu0 0.0
    %3676 = vmatprep.subr.mxu0 0.0
    %3677 = vmatpush1.msra.mxu0 0.0
    %3678 = vmatprep.subr.mxu0 0.0
    %3679 = vmatpush1.msra.mxu0 0.0
    %3680 = vmatprep.subr.mxu0 0.0
    %3681 = vmatpush1.msra.mxu0 0.0
    %3682 = vmatprep.mubr.f32.mxu0 0.0
    %3683 = vmatmul.mubr.f32.gmra.mrb[0].mxu0 %v3616
    %v3684 = vpop.f32.mrb[0].mxu0
    %v3685 = vadd.f32 0.0, %v3684
    %v3686 = vpop.f32.mrb[0].mxu0
    %3687 = vdwg.mxu0
    %v3688 = vrcp.pop %v3611
    %v3689 = vmul.f32 %v3685, %v3688
    %3690 = vrot.lane.b32.xlu0 %v3517, 112
    %v3691 = vpop.permute.xlu0 %3690
    %3692 = vrot.lane.b32.xlu0 %v3517, 80
    %v3693 = vpop.permute.xlu0 %3692
    %v3694 = vsel %vm2385, %v3691, 0
    %v3696 = vsel %vm2385, %v3693, 0
    %3698 = vmatprep.subr.mxu0 0.0
    %3699 = vmatpush1.xpose.msra.mxu0 %v3696
    %3700 = vmatprep.subr.mxu0 0.0
    %3701 = vmatpush1.xpose.msra.mxu0 0.0
    %3702 = vmatprep.subr.mxu0 0.0
    %3703 = vmatpush1.xpose.msra.mxu0 0.0
    %3704 = vmatprep.subr.mxu0 0.0
    %3705 = vmatpush1.xpose.msra.mxu0 0.0
    %3706 = vmatprep.subr.mxu0 0.0
    %3707 = vmatpush1.xpose.msra.mxu0 0.0
    %3708 = vmatprep.subr.mxu0 0.0
    %3709 = vmatpush1.xpose.msra.mxu0 0.0
    %3710 = vmatprep.subr.mxu0 0.0
    %3711 = vmatpush1.xpose.msra.mxu0 0.0
    %3712 = vmatprep.subr.mxu0 0.0
    %3713 = vmatpush1.xpose.msra.mxu0 0.0
    %3714 = vmatprep.subr.mxu0 0.0
    %3715 = vmatpush1.xpose.msra.mxu0 0.0
    %3716 = vmatprep.subr.mxu0 0.0
    %3717 = vmatpush1.xpose.msra.mxu0 0.0
    %3718 = vmatprep.subr.mxu0 0.0
    %3719 = vmatpush1.xpose.msra.mxu0 0.0
    %3720 = vmatprep.subr.mxu0 0.0
    %3721 = vmatpush1.xpose.msra.mxu0 0.0
    %3722 = vmatprep.subr.mxu0 0.0
    %3723 = vmatpush1.xpose.msra.mxu0 0.0
    %3724 = vmatprep.subr.mxu0 0.0
    %3725 = vmatpush1.xpose.msra.mxu0 0.0
    %3726 = vmatprep.subr.mxu0 0.0
    %3727 = vmatpush1.xpose.msra.mxu0 0.0
    %3728 = vmatprep.subr.mxu0 0.0
    %3729 = vmatpush1.xpose.msra.mxu0 0.0
    %3730 = vmatprep.subr.mxu0 0.0
    %3731 = vmatpush1.xpose.msra.mxu0 0.0
    %3732 = vmatprep.subr.mxu0 0.0
    %3733 = vmatpush1.xpose.msra.mxu0 0.0
    %3734 = vmatprep.subr.mxu0 0.0
    %3735 = vmatpush1.xpose.msra.mxu0 0.0
    %3736 = vmatprep.subr.mxu0 0.0
    %3737 = vmatpush1.xpose.msra.mxu0 0.0
    %3738 = vmatprep.subr.mxu0 0.0
    %3739 = vmatpush1.xpose.msra.mxu0 0.0
    %3740 = vmatprep.subr.mxu0 0.0
    %3741 = vmatpush1.xpose.msra.mxu0 0.0
    %3742 = vmatprep.subr.mxu0 0.0
    %3743 = vmatpush1.xpose.msra.mxu0 0.0
    %3744 = vmatprep.subr.mxu0 0.0
    %3745 = vmatpush1.xpose.msra.mxu0 0.0
    %3746 = vmatprep.subr.mxu0 0.0
    %3747 = vmatpush1.xpose.msra.mxu0 0.0
    %3748 = vmatprep.subr.mxu0 0.0
    %3749 = vmatpush1.xpose.msra.mxu0 0.0
    %3750 = vmatprep.subr.mxu0 0.0
    %3751 = vmatpush1.xpose.msra.mxu0 0.0
    %3752 = vmatprep.subr.mxu0 0.0
    %3753 = vmatpush1.xpose.msra.mxu0 0.0
    %3754 = vmatprep.subr.mxu0 0.0
    %3755 = vmatpush1.xpose.msra.mxu0 0.0
    %3756 = vmatprep.subr.mxu0 0.0
    %3757 = vmatpush1.xpose.msra.mxu0 0.0
    %3758 = vmatprep.subr.mxu0 0.0
    %3759 = vmatpush1.xpose.msra.mxu0 0.0
    %3760 = vmatprep.subr.mxu0 0.0
    %3761 = vmatpush1.xpose.msra.mxu0 0.0
    %3762 = vmatprep.mubr.f32.mxu0 0.0
    %3763 = vmatmul.mubr.f32.gmra.mrb[0].mxu0 %v3694
    %v3764 = vpop.f32.mrb[0].mxu0
    %v3765 = vadd.f32 0.0, %v3764
    %v3766 = vpop.f32.mrb[0].mxu0
    %3767 = vdwg.mxu0
    %v3768 = vmul.f32 %v3765, 0.25
    %v3769 = vsel %vm211, %v3768, -inf
    %3770 = vmax.xlane.f32.xlu0 %v3769
    %v3771 = vpop.xlane.xlu0 %3770
    %v3772 = vsub.f32 %v3768, %v3771
    %v3773 = vmul.f32 %v3772, 1.442695
    %v3774 = vpow.pop %v3773
    %v3775 = vsel %vm211, %v3774, 0.0
    %3776 = vadd.xlane.f32.xlu0 %v3775
    %v3777 = vpop.xlane.xlu0 %3776
    %3778 = vrot.lane.b32.xlu0 %v3517, 48
    %v3779 = vpop.permute.xlu0 %3778
    %v3782 = vsel %vm211, %v3774, 0
    %3784 = vmatprep.subr.mxu0 0.0
    %3785 = vmatpush1.msra.mxu0 %v3779
    %3786 = vmatprep.subr.mxu0 0.0
    %3787 = vmatpush1.msra.mxu0 0.0
    %3788 = vmatprep.subr.mxu0 0.0
    %3789 = vmatpush1.msra.mxu0 0.0
    %3790 = vmatprep.subr.mxu0 0.0
    %3791 = vmatpush1.msra.mxu0 0.0
    %3792 = vmatprep.subr.mxu0 0.0
    %3793 = vmatpush1.msra.mxu0 0.0
    %3794 = vmatprep.subr.mxu0 0.0
    %3795 = vmatpush1.msra.mxu0 0.0
    %3796 = vmatprep.subr.mxu0 0.0
    %3797 = vmatpush1.msra.mxu0 0.0
    %3798 = vmatprep.subr.mxu0 0.0
    %3799 = vmatpush1.msra.mxu0 0.0
    %3800 = vmatprep.subr.mxu0 0.0
    %3801 = vmatpush1.msra.mxu0 0.0
    %3802 = vmatprep.subr.mxu0 0.0
    %3803 = vmatpush1.msra.mxu0 0.0
    %3804 = vmatprep.subr.mxu0 0.0
    %3805 = vmatpush1.msra.mxu0 0.0
    %3806 = vmatprep.subr.mxu0 0.0
    %3807 = vmatpush1.msra.mxu0 0.0
    %3808 = vmatprep.subr.mxu0 0.0
    %3809 = vmatpush1.msra.mxu0 0.0
    %3810 = vmatprep.subr.mxu0 0.0
    %3811 = vmatpush1.msra.mxu0 0.0
    %3812 = vmatprep.subr.mxu0 0.0
    %3813 = vmatpush1.msra.mxu0 0.0
    %3814 = vmatprep.subr.mxu0 0.0
    %3815 = vmatpush1.msra.mxu0 0.0
    %3816 = vmatprep.subr.mxu0 0.0
    %3817 = vmatpush1.msra.mxu0 0.0
    %3818 = vmatprep.subr.mxu0 0.0
    %3819 = vmatpush1.msra.mxu0 0.0
    %3820 = vmatprep.subr.mxu0 0.0
    %3821 = vmatpush1.msra.mxu0 0.0
    %3822 = vmatprep.subr.mxu0 0.0
    %3823 = vmatpush1.msra.mxu0 0.0
    %3824 = vmatprep.subr.mxu0 0.0
    %3825 = vmatpush1.msra.mxu0 0.0
    %3826 = vmatprep.subr.mxu0 0.0
    %3827 = vmatpush1.msra.mxu0 0.0
    %3828 = vmatprep.subr.mxu0 0.0
    %3829 = vmatpush1.msra.mxu0 0.0
    %3830 = vmatprep.subr.mxu0 0.0
    %3831 = vmatpush1.msra.mxu0 0.0
    %3832 = vmatprep.subr.mxu0 0.0
    %3833 = vmatpush1.msra.mxu0 0.0
    %3834 = vmatprep.subr.mxu0 0.0
    %3835 = vmatpush1.msra.mxu0 0.0
    %3836 = vmatprep.subr.mxu0 0.0
    %3837 = vmatpush1.msra.mxu0 0.0
    %3838 = vmatprep.subr.mxu0 0.0
    %3839 = vmatpush1.msra.mxu0 0.0
    %3840 = vmatprep.subr.mxu0 0.0
    %3841 = vmatpush1.msra.mxu0 0.0
    %3842 = vmatprep.subr.mxu0 0.0
    %3843 = vmatpush1.msra.mxu0 0.0
    %3844 = vmatprep.subr.mxu0 0.0
    %3845 = vmatpush1.msra.mxu0 0.0
    %3846 = vmatprep.subr.mxu0 0.0
    %3847 = vmatpush1.msra.mxu0 0.0
    %3848 = vmatprep.mubr.f32.mxu0 0.0
    %3849 = vmatmul.mubr.f32.gmra.mrb[0].mxu0 %v3782
    %v3850 = vpop.f32.mrb[0].mxu0
    %v3851 = vadd.f32 0.0, %v3850
    %v3852 = vpop.f32.mrb[0].mxu0
    %3853 = vdwg.mxu0
    %v3854 = vrcp.pop %v3777
    %v3855 = vmul.f32 %v3851, %v3854
    %3857 = vrot.lane.b32.xlu0 %v3855, 16
    %v3858 = vpop.permute.xlu0 %3857
    %v3860 = vsel %vm2385, %v3689, %v3858
    %3862 = vrot.lane.b32.xlu0 %v3522, 96
    %v3863 = vpop.permute.xlu0 %3862
    %v3864 = vsel %vm2385, %v3522, 0
    %v3866 = vsel %vm2385, %v3863, 0
    %3868 = vmatprep.subr.mxu0 0.0
    %3869 = vmatpush1.xpose.msra.mxu0 %v3866
    %3870 = vmatprep.subr.mxu0 0.0
    %3871 = vmatpush1.xpose.msra.mxu0 0.0
    %3872 = vmatprep.subr.mxu0 0.0
    %3873 = vmatpush1.xpose.msra.mxu0 0.0
    %3874 = vmatprep.subr.mxu0 0.0
    %3875 = vmatpush1.xpose.msra.mxu0 0.0
    %3876 = vmatprep.subr.mxu0 0.0
    %3877 = vmatpush1.xpose.msra.mxu0 0.0
    %3878 = vmatprep.subr.mxu0 0.0
    %3879 = vmatpush1.xpose.msra.mxu0 0.0
    %3880 = vmatprep.subr.mxu0 0.0
    %3881 = vmatpush1.xpose.msra.mxu0 0.0
    %3882 = vmatprep.subr.mxu0 0.0
    %3883 = vmatpush1.xpose.msra.mxu0 0.0
    %3884 = vmatprep.subr.mxu0 0.0
    %3885 = vmatpush1.xpose.msra.mxu0 0.0
    %3886 = vmatprep.subr.mxu0 0.0
    %3887 = vmatpush1.xpose.msra.mxu0 0.0
    %3888 = vmatprep.subr.mxu0 0.0
    %3889 = vmatpush1.xpose.msra.mxu0 0.0
    %3890 = vmatprep.subr.mxu0 0.0
    %3891 = vmatpush1.xpose.msra.mxu0 0.0
    %3892 = vmatprep.subr.mxu0 0.0
    %3893 = vmatpush1.xpose.msra.mxu0 0.0
    %3894 = vmatprep.subr.mxu0 0.0
    %3895 = vmatpush1.xpose.msra.mxu0 0.0
    %3896 = vmatprep.subr.mxu0 0.0
    %3897 = vmatpush1.xpose.msra.mxu0 0.0
    %3898 = vmatprep.subr.mxu0 0.0
    %3899 = vmatpush1.xpose.msra.mxu0 0.0
    %3900 = vmatprep.subr.mxu0 0.0
    %3901 = vmatpush1.xpose.msra.mxu0 0.0
    %3902 = vmatprep.subr.mxu0 0.0
    %3903 = vmatpush1.xpose.msra.mxu0 0.0
    %3904 = vmatprep.subr.mxu0 0.0
    %3905 = vmatpush1.xpose.msra.mxu0 0.0
    %3906 = vmatprep.subr.mxu0 0.0
    %3907 = vmatpush1.xpose.msra.mxu0 0.0
    %3908 = vmatprep.subr.mxu0 0.0
    %3909 = vmatpush1.xpose.msra.mxu0 0.0
    %3910 = vmatprep.subr.mxu0 0.0
    %3911 = vmatpush1.xpose.msra.mxu0 0.0
    %3912 = vmatprep.subr.mxu0 0.0
    %3913 = vmatpush1.xpose.msra.mxu0 0.0
    %3914 = vmatprep.subr.mxu0 0.0
    %3915 = vmatpush1.xpose.msra.mxu0 0.0
    %3916 = vmatprep.subr.mxu0 0.0
    %3917 = vmatpush1.xpose.msra.mxu0 0.0
    %3918 = vmatprep.subr.mxu0 0.0
    %3919 = vmatpush1.xpose.msra.mxu0 0.0
    %3920 = vmatprep.subr.mxu0 0.0
    %3921 = vmatpush1.xpose.msra.mxu0 0.0
    %3922 = vmatprep.subr.mxu0 0.0
    %3923 = vmatpush1.xpose.msra.mxu0 0.0
    %3924 = vmatprep.subr.mxu0 0.0
    %3925 = vmatpush1.xpose.msra.mxu0 0.0
    %3926 = vmatprep.subr.mxu0 0.0
    %3927 = vmatpush1.xpose.msra.mxu0 0.0
    %3928 = vmatprep.subr.mxu0 0.0
    %3929 = vmatpush1.xpose.msra.mxu0 0.0
    %3930 = vmatprep.subr.mxu0 0.0
    %3931 = vmatpush1.xpose.msra.mxu0 0.0
    %3932 = vmatprep.mubr.f32.mxu0 0.0
    %3933 = vmatmul.mubr.f32.gmra.mrb[0].mxu0 %v3864
    %v3934 = vpop.f32.mrb[0].mxu0
    %v3935 = vadd.f32 0.0, %v3934
    %v3936 = vpop.f32.mrb[0].mxu0
    %3937 = vdwg.mxu0
    %v3938 = vmul.f32 %v3935, 0.25
    %v3939 = vsel %vm211, %v3938, -inf
    %3940 = vmax.xlane.f32.xlu0 %v3939
    %v3941 = vpop.xlane.xlu0 %3940
    %v3942 = vsub.f32 %v3938, %v3941
    %v3943 = vmul.f32 %v3942, 1.442695
    %v3944 = vpow.pop %v3943
    %v3945 = vsel %vm211, %v3944, 0.0
    %3946 = vadd.xlane.f32.xlu0 %v3945
    %v3947 = vpop.xlane.xlu0 %3946
    %3948 = vrot.lane.b32.xlu0 %v3522, 64
    %v3949 = vpop.permute.xlu0 %3948
    %v3952 = vsel %vm211, %v3944, 0
    %3954 = vmatprep.subr.mxu0 0.0
    %3955 = vmatpush1.msra.mxu0 %v3949
    %3956 = vmatprep.subr.mxu0 0.0
    %3957 = vmatpush1.msra.mxu0 0.0
    %3958 = vmatprep.subr.mxu0 0.0
    %3959 = vmatpush1.msra.mxu0 0.0
    %3960 = vmatprep.subr.mxu0 0.0
    %3961 = vmatpush1.msra.mxu0 0.0
    %3962 = vmatprep.subr.mxu0 0.0
    %3963 = vmatpush1.msra.mxu0 0.0
    %3964 = vmatprep.subr.mxu0 0.0
    %3965 = vmatpush1.msra.mxu0 0.0
    %3966 = vmatprep.subr.mxu0 0.0
    %3967 = vmatpush1.msra.mxu0 0.0
    %3968 = vmatprep.subr.mxu0 0.0
    %3969 = vmatpush1.msra.mxu0 0.0
    %3970 = vmatprep.subr.mxu0 0.0
    %3971 = vmatpush1.msra.mxu0 0.0
    %3972 = vmatprep.subr.mxu0 0.0
    %3973 = vmatpush1.msra.mxu0 0.0
    %3974 = vmatprep.subr.mxu0 0.0
    %3975 = vmatpush1.msra.mxu0 0.0
    %3976 = vmatprep.subr.mxu0 0.0
    %3977 = vmatpush1.msra.mxu0 0.0
    %3978 = vmatprep.subr.mxu0 0.0
    %3979 = vmatpush1.msra.mxu0 0.0
    %3980 = vmatprep.subr.mxu0 0.0
    %3981 = vmatpush1.msra.mxu0 0.0
    %3982 = vmatprep.subr.mxu0 0.0
    %3983 = vmatpush1.msra.mxu0 0.0
    %3984 = vmatprep.subr.mxu0 0.0
    %3985 = vmatpush1.msra.mxu0 0.0
    %3986 = vmatprep.subr.mxu0 0.0
    %3987 = vmatpush1.msra.mxu0 0.0
    %3988 = vmatprep.subr.mxu0 0.0
    %3989 = vmatpush1.msra.mxu0 0.0
    %3990 = vmatprep.subr.mxu0 0.0
    %3991 = vmatpush1.msra.mxu0 0.0
    %3992 = vmatprep.subr.mxu0 0.0
    %3993 = vmatpush1.msra.mxu0 0.0
    %3994 = vmatprep.subr.mxu0 0.0
    %3995 = vmatpush1.msra.mxu0 0.0
    %3996 = vmatprep.subr.mxu0 0.0
    %3997 = vmatpush1.msra.mxu0 0.0
    %3998 = vmatprep.subr.mxu0 0.0
    %3999 = vmatpush1.msra.mxu0 0.0
    %4000 = vmatprep.subr.mxu0 0.0
    %4001 = vmatpush1.msra.mxu0 0.0
    %4002 = vmatprep.subr.mxu0 0.0
    %4003 = vmatpush1.msra.mxu0 0.0
    %4004 = vmatprep.subr.mxu0 0.0
    %4005 = vmatpush1.msra.mxu0 0.0
    %4006 = vmatprep.subr.mxu0 0.0
    %4007 = vmatpush1.msra.mxu0 0.0
    %4008 = vmatprep.subr.mxu0 0.0
    %4009 = vmatpush1.msra.mxu0 0.0
    %4010 = vmatprep.subr.mxu0 0.0
    %4011 = vmatpush1.msra.mxu0 0.0
    %4012 = vmatprep.subr.mxu0 0.0
    %4013 = vmatpush1.msra.mxu0 0.0
    %4014 = vmatprep.subr.mxu0 0.0
    %4015 = vmatpush1.msra.mxu0 0.0
    %4016 = vmatprep.subr.mxu0 0.0
    %4017 = vmatpush1.msra.mxu0 0.0
    %4018 = vmatprep.mubr.f32.mxu0 0.0
    %4019 = vmatmul.mubr.f32.gmra.mrb[0].mxu0 %v3952
    %v4020 = vpop.f32.mrb[0].mxu0
    %v4021 = vadd.f32 0.0, %v4020
    %v4022 = vpop.f32.mrb[0].mxu0
    %4023 = vdwg.mxu0
    %v4024 = vrcp.pop %v3947
    %v4025 = vmul.f32 %v4021, %v4024
    %4026 = vrot.lane.b32.xlu0 %v3522, 112
    %v4027 = vpop.permute.xlu0 %4026
    %4028 = vrot.lane.b32.xlu0 %v3522, 80
    %v4029 = vpop.permute.xlu0 %4028
    %v4030 = vsel %vm2385, %v4027, 0
    %v4032 = vsel %vm2385, %v4029, 0
    %4034 = vmatprep.subr.mxu0 0.0
    %4035 = vmatpush1.xpose.msra.mxu0 %v4032
    %4036 = vmatprep.subr.mxu0 0.0
    %4037 = vmatpush1.xpose.msra.mxu0 0.0
    %4038 = vmatprep.subr.mxu0 0.0
    %4039 = vmatpush1.xpose.msra.mxu0 0.0
    %4040 = vmatprep.subr.mxu0 0.0
    %4041 = vmatpush1.xpose.msra.mxu0 0.0
    %4042 = vmatprep.subr.mxu0 0.0
    %4043 = vmatpush1.xpose.msra.mxu0 0.0
    %4044 = vmatprep.subr.mxu0 0.0
    %4045 = vmatpush1.xpose.msra.mxu0 0.0
    %4046 = vmatprep.subr.mxu0 0.0
    %4047 = vmatpush1.xpose.msra.mxu0 0.0
    %4048 = vmatprep.subr.mxu0 0.0
    %4049 = vmatpush1.xpose.msra.mxu0 0.0
    %4050 = vmatprep.subr.mxu0 0.0
    %4051 = vmatpush1.xpose.msra.mxu0 0.0
    %4052 = vmatprep.subr.mxu0 0.0
    %4053 = vmatpush1.xpose.msra.mxu0 0.0
    %4054 = vmatprep.subr.mxu0 0.0
    %4055 = vmatpush1.xpose.msra.mxu0 0.0
    %4056 = vmatprep.subr.mxu0 0.0
    %4057 = vmatpush1.xpose.msra.mxu0 0.0
    %4058 = vmatprep.subr.mxu0 0.0
    %4059 = vmatpush1.xpose.msra.mxu0 0.0
    %4060 = vmatprep.subr.mxu0 0.0
    %4061 = vmatpush1.xpose.msra.mxu0 0.0
    %4062 = vmatprep.subr.mxu0 0.0
    %4063 = vmatpush1.xpose.msra.mxu0 0.0
    %4064 = vmatprep.subr.mxu0 0.0
    %4065 = vmatpush1.xpose.msra.mxu0 0.0
    %4066 = vmatprep.subr.mxu0 0.0
    %4067 = vmatpush1.xpose.msra.mxu0 0.0
    %4068 = vmatprep.subr.mxu0 0.0
    %4069 = vmatpush1.xpose.msra.mxu0 0.0
    %4070 = vmatprep.subr.mxu0 0.0
    %4071 = vmatpush1.xpose.msra.mxu0 0.0
    %4072 = vmatprep.subr.mxu0 0.0
    %4073 = vmatpush1.xpose.msra.mxu0 0.0
    %4074 = vmatprep.subr.mxu0 0.0
    %4075 = vmatpush1.xpose.msra.mxu0 0.0
    %4076 = vmatprep.subr.mxu0 0.0
    %4077 = vmatpush1.xpose.msra.mxu0 0.0
    %4078 = vmatprep.subr.mxu0 0.0
    %4079 = vmatpush1.xpose.msra.mxu0 0.0
    %4080 = vmatprep.subr.mxu0 0.0
    %4081 = vmatpush1.xpose.msra.mxu0 0.0
    %4082 = vmatprep.subr.mxu0 0.0
    %4083 = vmatpush1.xpose.msra.mxu0 0.0
    %4084 = vmatprep.subr.mxu0 0.0
    %4085 = vmatpush1.xpose.msra.mxu0 0.0
    %4086 = vmatprep.subr.mxu0 0.0
    %4087 = vmatpush1.xpose.msra.mxu0 0.0
    %4088 = vmatprep.subr.mxu0 0.0
    %4089 = vmatpush1.xpose.msra.mxu0 0.0
    %4090 = vmatprep.subr.mxu0 0.0
    %4091 = vmatpush1.xpose.msra.mxu0 0.0
    %4092 = vmatprep.subr.mxu0 0.0
    %4093 = vmatpush1.xpose.msra.mxu0 0.0
    %4094 = vmatprep.subr.mxu0 0.0
    %4095 = vmatpush1.xpose.msra.mxu0 0.0
    %4096 = vmatprep.subr.mxu0 0.0
    %4097 = vmatpush1.xpose.msra.mxu0 0.0
    %4098 = vmatprep.mubr.f32.mxu0 0.0
    %4099 = vmatmul.mubr.f32.gmra.mrb[0].mxu0 %v4030
    %v4100 = vpop.f32.mrb[0].mxu0
    %v4101 = vadd.f32 0.0, %v4100
    %v4102 = vpop.f32.mrb[0].mxu0
    %4103 = vdwg.mxu0
    %v4104 = vmul.f32 %v4101, 0.25
    %v4105 = vsel %vm211, %v4104, -inf
    %4106 = vmax.xlane.f32.xlu0 %v4105
    %v4107 = vpop.xlane.xlu0 %4106
    %v4108 = vsub.f32 %v4104, %v4107
    %v4109 = vmul.f32 %v4108, 1.442695
    %v4110 = vpow.pop %v4109
    %v4111 = vsel %vm211, %v4110, 0.0
    %4112 = vadd.xlane.f32.xlu0 %v4111
    %v4113 = vpop.xlane.xlu0 %4112
    %4114 = vrot.lane.b32.xlu0 %v3522, 48
    %v4115 = vpop.permute.xlu0 %4114
    %v4118 = vsel %vm211, %v4110, 0
    %4120 = vmatprep.subr.mxu0 0.0
    %4121 = vmatpush1.msra.mxu0 %v4115
    %4122 = vmatprep.subr.mxu0 0.0
    %4123 = vmatpush1.msra.mxu0 0.0
    %4124 = vmatprep.subr.mxu0 0.0
    %4125 = vmatpush1.msra.mxu0 0.0
    %4126 = vmatprep.subr.mxu0 0.0
    %4127 = vmatpush1.msra.mxu0 0.0
    %4128 = vmatprep.subr.mxu0 0.0
    %4129 = vmatpush1.msra.mxu0 0.0
    %4130 = vmatprep.subr.mxu0 0.0
    %4131 = vmatpush1.msra.mxu0 0.0
    %4132 = vmatprep.subr.mxu0 0.0
    %4133 = vmatpush1.msra.mxu0 0.0
    %4134 = vmatprep.subr.mxu0 0.0
    %4135 = vmatpush1.msra.mxu0 0.0
    %4136 = vmatprep.subr.mxu0 0.0
    %4137 = vmatpush1.msra.mxu0 0.0
    %4138 = vmatprep.subr.mxu0 0.0
    %4139 = vmatpush1.msra.mxu0 0.0
    %4140 = vmatprep.subr.mxu0 0.0
    %4141 = vmatpush1.msra.mxu0 0.0
    %4142 = vmatprep.subr.mxu0 0.0
    %4143 = vmatpush1.msra.mxu0 0.0
    %4144 = vmatprep.subr.mxu0 0.0
    %4145 = vmatpush1.msra.mxu0 0.0
    %4146 = vmatprep.subr.mxu0 0.0
    %4147 = vmatpush1.msra.mxu0 0.0
    %4148 = vmatprep.subr.mxu0 0.0
    %4149 = vmatpush1.msra.mxu0 0.0
    %4150 = vmatprep.subr.mxu0 0.0
    %4151 = vmatpush1.msra.mxu0 0.0
    %4152 = vmatprep.subr.mxu0 0.0
    %4153 = vmatpush1.msra.mxu0 0.0
    %4154 = vmatprep.subr.mxu0 0.0
    %4155 = vmatpush1.msra.mxu0 0.0
    %4156 = vmatprep.subr.mxu0 0.0
    %4157 = vmatpush1.msra.mxu0 0.0
    %4158 = vmatprep.subr.mxu0 0.0
    %4159 = vmatpush1.msra.mxu0 0.0
    %4160 = vmatprep.subr.mxu0 0.0
    %4161 = vmatpush1.msra.mxu0 0.0
    %4162 = vmatprep.subr.mxu0 0.0
    %4163 = vmatpush1.msra.mxu0 0.0
    %4164 = vmatprep.subr.mxu0 0.0
    %4165 = vmatpush1.msra.mxu0 0.0
    %4166 = vmatprep.subr.mxu0 0.0
    %4167 = vmatpush1.msra.mxu0 0.0
    %4168 = vmatprep.subr.mxu0 0.0
    %4169 = vmatpush1.msra.mxu0 0.0
    %4170 = vmatprep.subr.mxu0 0.0
    %4171 = vmatpush1.msra.mxu0 0.0
    %4172 = vmatprep.subr.mxu0 0.0
    %4173 = vmatpush1.msra.mxu0 0.0
    %4174 = vmatprep.subr.mxu0 0.0
    %4175 = vmatpush1.msra.mxu0 0.0
    %4176 = vmatprep.subr.mxu0 0.0
    %4177 = vmatpush1.msra.mxu0 0.0
    %4178 = vmatprep.subr.mxu0 0.0
    %4179 = vmatpush1.msra.mxu0 0.0
    %4180 = vmatprep.subr.mxu0 0.0
    %4181 = vmatpush1.msra.mxu0 0.0
    %4182 = vmatprep.subr.mxu0 0.0
    %4183 = vmatpush1.msra.mxu0 0.0
    %4184 = vmatprep.mubr.f32.mxu0 0.0
    %4185 = vmatmul.mubr.f32.gmra.mrb[0].mxu0 %v4118
    %v4186 = vpop.f32.mrb[0].mxu0
    %v4187 = vadd.f32 0.0, %v4186
    %v4188 = vpop.f32.mrb[0].mxu0
    %4189 = vdwg.mxu0
    %v4190 = vrcp.pop %v4113
    %v4191 = vmul.f32 %v4187, %v4190
    %4193 = vrot.lane.b32.xlu0 %v4191, 16
    %v4194 = vpop.permute.xlu0 %4193
    %v4196 = vsel %vm2385, %v4025, %v4194
    %v4197 = vld [vmem:[%s47] sm:$0xff]
    %v4198 = vld [vmem:[%s47 + $0x8] sm:$0xff]
    %v4199 = vld [vmem:[%s47 + $0x10] sm:$0xff]
    %v4200 = vld [vmem:[%s47 + $0x18] sm:$0xff]
    %v4202 = vsel %vm2253, %v3860, 0
    %v4205 = vsel %vm2253, %v4196, 0
    %4207 = vmatprep.subr.mxu0 0.0
    %4208 = vmatpush1.msra.mxu0 %v4197
    %4209 = vmatprep.subr.mxu0 0.0
    %4210 = vmatpush1.msra.mxu0 %v4198
    %4211 = vmatprep.subr.mxu0 0.0
    %4212 = vmatpush1.msra.mxu0 %v4199
    %4213 = vmatprep.subr.mxu0 0.0
    %4214 = vmatpush1.msra.mxu0 %v4200
    %4215 = vmatprep.subr.mxu0 0.0
    %4216 = vmatpush1.msra.mxu0 0.0
    %4217 = vmatprep.subr.mxu0 0.0
    %4218 = vmatpush1.msra.mxu0 0.0
    %4219 = vmatprep.subr.mxu0 0.0
    %4220 = vmatpush1.msra.mxu0 0.0
    %4221 = vmatprep.subr.mxu0 0.0
    %4222 = vmatpush1.msra.mxu0 0.0
    %4223 = vmatprep.subr.mxu0 0.0
    %4224 = vmatpush1.msra.mxu0 0.0
    %4225 = vmatprep.subr.mxu0 0.0
    %4226 = vmatpush1.msra.mxu0 0.0
    %4227 = vmatprep.subr.mxu0 0.0
    %4228 = vmatpush1.msra.mxu0 0.0
    %4229 = vmatprep.subr.mxu0 0.0
    %4230 = vmatpush1.msra.mxu0 0.0
    %4231 = vmatprep.subr.mxu0 0.0
    %4232 = vmatpush1.msra.mxu0 0.0
    %4233 = vmatprep.subr.mxu0 0.0
    %4234 = vmatpush1.msra.mxu0 0.0
    %4235 = vmatprep.subr.mxu0 0.0
    %4236 = vmatpush1.msra.mxu0 0.0
    %4237 = vmatprep.subr.mxu0 0.0
    %4238 = vmatpush1.msra.mxu0 0.0
    %4239 = vmatprep.subr.mxu0 0.0
    %4240 = vmatpush1.msra.mxu0 0.0
    %4241 = vmatprep.subr.mxu0 0.0
    %4242 = vmatpush1.msra.mxu0 0.0
    %4243 = vmatprep.subr.mxu0 0.0
    %4244 = vmatpush1.msra.mxu0 0.0
    %4245 = vmatprep.subr.mxu0 0.0
    %4246 = vmatpush1.msra.mxu0 0.0
    %4247 = vmatprep.subr.mxu0 0.0
    %4248 = vmatpush1.msra.mxu0 0.0
    %4249 = vmatprep.subr.mxu0 0.0
    %4250 = vmatpush1.msra.mxu0 0.0
    %4251 = vmatprep.subr.mxu0 0.0
    %4252 = vmatpush1.msra.mxu0 0.0
    %4253 = vmatprep.subr.mxu0 0.0
    %4254 = vmatpush1.msra.mxu0 0.0
    %4255 = vmatprep.subr.mxu0 0.0
    %4256 = vmatpush1.msra.mxu0 0.0
    %4257 = vmatprep.subr.mxu0 0.0
    %4258 = vmatpush1.msra.mxu0 0.0
    %4259 = vmatprep.subr.mxu0 0.0
    %4260 = vmatpush1.msra.mxu0 0.0
    %4261 = vmatprep.subr.mxu0 0.0
    %4262 = vmatpush1.msra.mxu0 0.0
    %4263 = vmatprep.subr.mxu0 0.0
    %4264 = vmatpush1.msra.mxu0 0.0
    %4265 = vmatprep.subr.mxu0 0.0
    %4266 = vmatpush1.msra.mxu0 0.0
    %4267 = vmatprep.subr.mxu0 0.0
    %4268 = vmatpush1.msra.mxu0 0.0
    %4269 = vmatprep.subr.mxu0 0.0
    %4270 = vmatpush1.msra.mxu0 0.0
    %4271 = vmatprep.mubr.f32.mxu0 0.0
    %4272 = vmatmul.mubr.f32.gmra.mrb[0].mxu0 %v4202
    %v4273 = vpop.f32.mrb[0].mxu0
    %v4274 = vadd.f32 0.0, %v4273
    %v4275 = vpop.f32.mrb[0].mxu0
    %4276 = vmatprep.mubr.f32.mxu0 0.0
    %4277 = vmatmul.mubr.f32.gmra.mrb[0].mxu0 %v4205
    %v4278 = vpop.f32.mrb[0].mxu0
    %v4279 = vadd.f32 0.0, %v4278
    %v4280 = vpop.f32.mrb[0].mxu0
    %4281 = vdwg.mxu0
    %v4282 = vadd.f32 %v3438, %v4274
    %v4283 = vadd.f32 %v3439, %v4279
    %v4284 = vld [vmem:[%s41] sm:$0x1]
    %v4285 = vld [vmem:[%s39] sm:$0x1]
    %v4286 = vsel %vm2253, %v4282, 0.0
    %4287 = vadd.xlane.f32.xlu0 %v4286
    %v4288 = vpop.xlane.xlu0 %4287
    %v4289 = vsel %vm2253, %v4283, 0.0
    %4290 = vadd.xlane.f32.xlu0 %v4289
    %v4291 = vpop.xlane.xlu0 %4290
    %v4292 = vmul.f32 %v4288, %v2260
    %v4293 = vmul.f32 %v4291, %v2260
    %v4294 = vsub.f32 %v4282, %v4292
    %v4295 = vsub.f32 %v4283, %v4293
    %v4296 = vmul.f32 %v4294, %v4294
    %v4297 = vmul.f32 %v4295, %v4295
    %v4298 = vsel %vm2253, %v4296, 0.0
    %4299 = vadd.xlane.f32.xlu0 %v4298
    %v4300 = vpop.xlane.xlu0 %4299
    %v4301 = vsel %vm2253, %v4297, 0.0
    %4302 = vadd.xlane.f32.xlu0 %v4301
    %v4303 = vpop.xlane.xlu0 %4302
    %v4304 = vmul.f32 %v4300, %v2260
    %v4305 = vmul.f32 %v4303, %v2260
    %v4306 = vadd.f32 %v4304, 1e-05
    %v4307 = vadd.f32 %v4305, 1e-05
    %v4308 = vrsqrt.pop %v4306
    %v4309 = vrsqrt.pop %v4307
    %v4310 = vmul.f32 %v4294, %v4308
    %v4311 = vmul.f32 %v4295, %v4309
    %v4313 = vlaneseq
    %v4314 = vshrl.u32 %v4313, 7
    %v4315 = vsub.s32 0, %v4314
    %v4316 = vrot.slane %v4284, %v4315
    %v4318 = vmul.f32 %v4310, %v4316
    %v4319 = vmul.f32 %v4311, %v4316
    %v4321 = vlaneseq
    %v4322 = vshrl.u32 %v4321, 7
    %v4323 = vsub.s32 0, %v4322
    %v4324 = vrot.slane %v4285, %v4323
    %v4326 = vadd.f32 %v4318, %v4324
    %v4327 = vadd.f32 %v4319, %v4324
    %v4328 = vld [vmem:[%s35] sm:$0xff]
    %v4329 = vld [vmem:[%s35 + $0x8] sm:$0xff]
    %v4330 = vld [vmem:[%s35 + $0x10] sm:$0xff]
    %v4331 = vld [vmem:[%s35 + $0x18] sm:$0xff]
    %v4332 = vld [vmem:[%s31] sm:$0x1]
    %v4334 = vlaneseq
    %v4335 = vshrl.u32 %v4334, 7
    %v4336 = vsub.s32 0, %v4335
    %v4337 = vrot.slane %v4332, %v4336
    %v4340 = vsel %vm2253, %v4326, 0
    %v4343 = vsel %vm2253, %v4327, 0
    %4345 = vmatprep.subr.mxu0 0.0
    %4346 = vmatpush1.msra.mxu0 %v4328
    %4347 = vmatprep.subr.mxu0 0.0
    %4348 = vmatpush1.msra.mxu0 %v4329
    %4349 = vmatprep.subr.mxu0 0.0
    %4350 = vmatpush1.msra.mxu0 %v4330
    %4351 = vmatprep.subr.mxu0 0.0
    %4352 = vmatpush1.msra.mxu0 %v4331
    %4353 = vmatprep.subr.mxu0 0.0
    %4354 = vmatpush1.msra.mxu0 0.0
    %4355 = vmatprep.subr.mxu0 0.0
    %4356 = vmatpush1.msra.mxu0 0.0
    %4357 = vmatprep.subr.mxu0 0.0
    %4358 = vmatpush1.msra.mxu0 0.0
    %4359 = vmatprep.subr.mxu0 0.0
    %4360 = vmatpush1.msra.mxu0 0.0
    %4361 = vmatprep.subr.mxu0 0.0
    %4362 = vmatpush1.msra.mxu0 0.0
    %4363 = vmatprep.subr.mxu0 0.0
    %4364 = vmatpush1.msra.mxu0 0.0
    %4365 = vmatprep.subr.mxu0 0.0
    %4366 = vmatpush1.msra.mxu0 0.0
    %4367 = vmatprep.subr.mxu0 0.0
    %4368 = vmatpush1.msra.mxu0 0.0
    %4369 = vmatprep.subr.mxu0 0.0
    %4370 = vmatpush1.msra.mxu0 0.0
    %4371 = vmatprep.subr.mxu0 0.0
    %4372 = vmatpush1.msra.mxu0 0.0
    %4373 = vmatprep.subr.mxu0 0.0
    %4374 = vmatpush1.msra.mxu0 0.0
    %4375 = vmatprep.subr.mxu0 0.0
    %4376 = vmatpush1.msra.mxu0 0.0
    %4377 = vmatprep.subr.mxu0 0.0
    %4378 = vmatpush1.msra.mxu0 0.0
    %4379 = vmatprep.subr.mxu0 0.0
    %4380 = vmatpush1.msra.mxu0 0.0
    %4381 = vmatprep.subr.mxu0 0.0
    %4382 = vmatpush1.msra.mxu0 0.0
    %4383 = vmatprep.subr.mxu0 0.0
    %4384 = vmatpush1.msra.mxu0 0.0
    %4385 = vmatprep.subr.mxu0 0.0
    %4386 = vmatpush1.msra.mxu0 0.0
    %4387 = vmatprep.subr.mxu0 0.0
    %4388 = vmatpush1.msra.mxu0 0.0
    %4389 = vmatprep.subr.mxu0 0.0
    %4390 = vmatpush1.msra.mxu0 0.0
    %4391 = vmatprep.subr.mxu0 0.0
    %4392 = vmatpush1.msra.mxu0 0.0
    %4393 = vmatprep.subr.mxu0 0.0
    %4394 = vmatpush1.msra.mxu0 0.0
    %4395 = vmatprep.subr.mxu0 0.0
    %4396 = vmatpush1.msra.mxu0 0.0
    %4397 = vmatprep.subr.mxu0 0.0
    %4398 = vmatpush1.msra.mxu0 0.0
    %4399 = vmatprep.subr.mxu0 0.0
    %4400 = vmatpush1.msra.mxu0 0.0
    %4401 = vmatprep.subr.mxu0 0.0
    %4402 = vmatpush1.msra.mxu0 0.0
    %4403 = vmatprep.subr.mxu0 0.0
    %4404 = vmatpush1.msra.mxu0 0.0
    %4405 = vmatprep.subr.mxu0 0.0
    %4406 = vmatpush1.msra.mxu0 0.0
    %4407 = vmatprep.subr.mxu0 0.0
    %4408 = vmatpush1.msra.mxu0 0.0
    %4409 = vmatprep.mubr.f32.mxu0 0.0
    %4410 = vmatmul.mubr.f32.gmra.mrb[0].mxu0 %v4340
    %v4411 = vpop.f32.mrb[0].mxu0
    %v4412 = vadd.f32 %v4337, %v4411
    %v4413 = vpop.f32.mrb[0].mxu0
    %4414 = vmatprep.mubr.f32.mxu0 0.0
    %4415 = vmatmul.mubr.f32.gmra.mrb[0].mxu0 %v4343
    %v4416 = vpop.f32.mrb[0].mxu0
    %v4417 = vadd.f32 %v4337, %v4416
    %v4418 = vpop.f32.mrb[0].mxu0
    %4419 = vdwg.mxu0
    %v4420 = vmul.f32 %v4412, %v4412
    %v4421 = vmul.f32 %v4417, %v4417
    %v4422 = vmul.f32 %v4412, %v4420
    %v4423 = vmul.f32 %v4417, %v4421
    %v4424 = vmul.f32 %v4422, 0.044715
    %v4425 = vmul.f32 %v4423, 0.044715
    %v4426 = vadd.f32 %v4412, %v4424
    %v4427 = vadd.f32 %v4417, %v4425
    %v4428 = vmul.f32 %v4426, 0.7978846
    %v4429 = vmul.f32 %v4427, 0.7978846
    %v4430 = vtanh.pop %v4428
    %v4431 = vtanh.pop %v4429
    %v4432 = vadd.f32 %v4430, 1.0
    %v4433 = vadd.f32 %v4431, 1.0
    %v4434 = vmul.f32 %v4432, 0.5
    %v4435 = vmul.f32 %v4433, 0.5
    %v4436 = vmul.f32 %v4412, %v4434
    %v4437 = vmul.f32 %v4417, %v4435
    %v4438 = vld [vmem:[%s37] sm:$0xff]
    %v4439 = vld [vmem:[%s37 + $0x8] sm:$0xff]
    %v4440 = vld [vmem:[%s37 + $0x10] sm:$0xff]
    %v4441 = vld [vmem:[%s37 + $0x18] sm:$0xff]
    %v4442 = vld [vmem:[%s37 + $0x20] sm:$0xff]
    %v4443 = vld [vmem:[%s37 + $0x28] sm:$0xff]
    %v4444 = vld [vmem:[%s37 + $0x30] sm:$0xff]
    %v4445 = vld [vmem:[%s37 + $0x38] sm:$0xff]
    %v4446 = vld [vmem:[%s37 + $0x40] sm:$0xff]
    %v4447 = vld [vmem:[%s37 + $0x48] sm:$0xff]
    %v4448 = vld [vmem:[%s37 + $0x50] sm:$0xff]
    %v4449 = vld [vmem:[%s37 + $0x58] sm:$0xff]
    %v4450 = vld [vmem:[%s37 + $0x60] sm:$0xff]
    %v4451 = vld [vmem:[%s37 + $0x68] sm:$0xff]
    %v4452 = vld [vmem:[%s37 + $0x70] sm:$0xff]
    %v4453 = vld [vmem:[%s37 + $0x78] sm:$0xff]
    %v4454 = vld [vmem:[%s33] sm:$0x1]
    %v4456 = vlaneseq
    %v4457 = vshrl.u32 %v4456, 7
    %v4458 = vsub.s32 0, %v4457
    %v4459 = vrot.slane %v4454, %v4458
    %4461 = vmatprep.subr.mxu0 0.0
    %4462 = vmatpush1.msra.mxu0 %v4438
    %4463 = vmatprep.subr.mxu0 0.0
    %4464 = vmatpush1.msra.mxu0 %v4439
    %4465 = vmatprep.subr.mxu0 0.0
    %4466 = vmatpush1.msra.mxu0 %v4440
    %4467 = vmatprep.subr.mxu0 0.0
    %4468 = vmatpush1.msra.mxu0 %v4441
    %4469 = vmatprep.subr.mxu0 0.0
    %4470 = vmatpush1.msra.mxu0 %v4442
    %4471 = vmatprep.subr.mxu0 0.0
    %4472 = vmatpush1.msra.mxu0 %v4443
    %4473 = vmatprep.subr.mxu0 0.0
    %4474 = vmatpush1.msra.mxu0 %v4444
    %4475 = vmatprep.subr.mxu0 0.0
    %4476 = vmatpush1.msra.mxu0 %v4445
    %4477 = vmatprep.subr.mxu0 0.0
    %4478 = vmatpush1.msra.mxu0 %v4446
    %4479 = vmatprep.subr.mxu0 0.0
    %4480 = vmatpush1.msra.mxu0 %v4447
    %4481 = vmatprep.subr.mxu0 0.0
    %4482 = vmatpush1.msra.mxu0 %v4448
    %4483 = vmatprep.subr.mxu0 0.0
    %4484 = vmatpush1.msra.mxu0 %v4449
    %4485 = vmatprep.subr.mxu0 0.0
    %4486 = vmatpush1.msra.mxu0 %v4450
    %4487 = vmatprep.subr.mxu0 0.0
    %4488 = vmatpush1.msra.mxu0 %v4451
    %4489 = vmatprep.subr.mxu0 0.0
    %4490 = vmatpush1.msra.mxu0 %v4452
    %4491 = vmatprep.subr.mxu0 0.0
    %4492 = vmatpush1.msra.mxu0 %v4453
    %4493 = vmatprep.subr.mxu0 0.0
    %4494 = vmatpush1.msra.mxu0 0.0
    %4495 = vmatprep.subr.mxu0 0.0
    %4496 = vmatpush1.msra.mxu0 0.0
    %4497 = vmatprep.subr.mxu0 0.0
    %4498 = vmatpush1.msra.mxu0 0.0
    %4499 = vmatprep.subr.mxu0 0.0
    %4500 = vmatpush1.msra.mxu0 0.0
    %4501 = vmatprep.subr.mxu0 0.0
    %4502 = vmatpush1.msra.mxu0 0.0
    %4503 = vmatprep.subr.mxu0 0.0
    %4504 = vmatpush1.msra.mxu0 0.0
    %4505 = vmatprep.subr.mxu0 0.0
    %4506 = vmatpush1.msra.mxu0 0.0
    %4507 = vmatprep.subr.mxu0 0.0
    %4508 = vmatpush1.msra.mxu0 0.0
    %4509 = vmatprep.subr.mxu0 0.0
    %4510 = vmatpush1.msra.mxu0 0.0
    %4511 = vmatprep.subr.mxu0 0.0
    %4512 = vmatpush1.msra.mxu0 0.0
    %4513 = vmatprep.subr.mxu0 0.0
    %4514 = vmatpush1.msra.mxu0 0.0
    %4515 = vmatprep.subr.mxu0 0.0
    %4516 = vmatpush1.msra.mxu0 0.0
    %4517 = vmatprep.subr.mxu0 0.0
    %4518 = vmatpush1.msra.mxu0 0.0
    %4519 = vmatprep.subr.mxu0 0.0
    %4520 = vmatpush1.msra.mxu0 0.0
    %4521 = vmatprep.subr.mxu0 0.0
    %4522 = vmatpush1.msra.mxu0 0.0
    %4523 = vmatprep.subr.mxu0 0.0
    %4524 = vmatpush1.msra.mxu0 0.0
    %4525 = vmatprep.mubr.f32.mxu0 0.0
    %4526 = vmatmul.mubr.f32.gmra.mrb[0].mxu0 %v4436
    %v4527 = vpop.f32.mrb[0].mxu0
    %v4528 = vadd.f32 %v4459, %v4527
    %v4529 = vpop.f32.mrb[0].mxu0
    %4530 = vmatprep.mubr.f32.mxu0 0.0
    %4531 = vmatmul.mubr.f32.gmra.mrb[0].mxu0 %v4437
    %v4532 = vpop.f32.mrb[0].mxu0
    %v4533 = vadd.f32 %v4459, %v4532
    %v4534 = vpop.f32.mrb[0].mxu0
    %4535 = vdwg.mxu0
    %v4536 = vadd.f32 %v4326, %v4528
    %v4537 = vadd.f32 %v4327, %v4533
    %v4538 = vld [vmem:[%s45] sm:$0x1]
    %v4539 = vld [vmem:[%s43] sm:$0x1]
    %v4540 = vsel %vm2253, %v4536, 0.0
    %4541 = vadd.xlane.f32.xlu0 %v4540
    %v4542 = vpop.xlane.xlu0 %4541
    %v4543 = vsel %vm2253, %v4537, 0.0
    %4544 = vadd.xlane.f32.xlu0 %v4543
    %v4545 = vpop.xlane.xlu0 %4544
    %v4546 = vmul.f32 %v4542, %v2260
    %v4547 = vmul.f32 %v4545, %v2260
    %v4548 = vsub.f32 %v4536, %v4546
    %v4549 = vsub.f32 %v4537, %v4547
    %v4550 = vmul.f32 %v4548, %v4548
    %v4551 = vmul.f32 %v4549, %v4549
    %v4552 = vsel %vm2253, %v4550, 0.0
    %4553 = vadd.xlane.f32.xlu0 %v4552
    %v4554 = vpop.xlane.xlu0 %4553
    %v4555 = vsel %vm2253, %v4551, 0.0
    %4556 = vadd.xlane.f32.xlu0 %v4555
    %v4557 = vpop.xlane.xlu0 %4556
    %v4558 = vmul.f32 %v4554, %v2260
    %v4559 = vmul.f32 %v4557, %v2260
    %v4560 = vadd.f32 %v4558, 1e-05
    %v4561 = vadd.f32 %v4559, 1e-05
    %v4562 = vrsqrt.pop %v4560
    %v4563 = vrsqrt.pop %v4561
    %v4564 = vmul.f32 %v4548, %v4562
    %v4565 = vmul.f32 %v4549, %v4563
    %v4567 = vlaneseq
    %v4568 = vshrl.u32 %v4567, 7
    %v4569 = vsub.s32 0, %v4568
    %v4570 = vrot.slane %v4538, %v4569
    %v4572 = vmul.f32 %v4564, %v4570
    %v4573 = vmul.f32 %v4565, %v4570
    %v4575 = vlaneseq
    %v4576 = vshrl.u32 %v4575, 7
    %v4577 = vsub.s32 0, %v4576
    %v4578 = vrot.slane %v4539, %v4577
    %v4580 = vadd.f32 %v4572, %v4578
    %v4581 = vadd.f32 %v4573, %v4578
    %vm4582 = vcmp.ge.f32.partialorder %v1964, 0.0
    %v4583 = vmax.f32 %v1964, 1e-05
    %v4584 = vmin.f32 %v1964, -1e-05
    %v4585 = vsel %vm4582, %v4583, %v4584
    %v4586 = vrcp.pop %v4585
    %v4587 = vmul.f32 1.0, %v4586
    %v4588 = vmul.f32 %v4587, %v2071
    %v4589 = vmul.f32 %v4587, %v2157
    %v4590 = vsub.f32 %v4580, %v2062
    %v4591 = vsub.f32 %v4581, %v2062
    %4593 = vset.pattern.permute.xlu0 0
    %4594 = vperm.xlu0 %4593, %v4588
    %v4595 = vpop.permute.xlu0 %4594
    %4598 = vset.pattern.permute.xlu0 0
    %4599 = vperm.xlu0 %4598, %v4589
    %v4600 = vpop.permute.xlu0 %4599
    %v4602 = vmul.f32 %v4590, %v4595
    %v4603 = vmul.f32 %v4591, %v4600
    %4605 = vset.pattern.permute.xlu0 0
    %4606 = vperm.xlu0 %4605, %v2043
    %v4607 = vpop.permute.xlu0 %4606
    %4610 = vset.pattern.permute.xlu0 0
    %4611 = vperm.xlu0 %4610, %v2139
    %v4612 = vpop.permute.xlu0 %4611
    %v4614 = vadd.f32 %v4602, %v4607
    %v4615 = vadd.f32 %v4603, %v4612
    %v4616 = vld [vmem:[%s67] sm:$0xff]
    %v4617 = vld [vmem:[%s67 + $0x8] sm:$0xff]
    %v4618 = vld [vmem:[%s67 + $0x10] sm:$0xff]
    %v4619 = vld [vmem:[%s67 + $0x18] sm:$0xff]
    %v4620 = vld [vmem:[%s65] sm:$0x1]
    %v4622 = vlaneseq
    %v4623 = vshrl.u32 %v4622, 7
    %v4624 = vsub.s32 0, %v4623
    %v4625 = vrot.slane %v4620, %v4624
    %v4628 = vsel %vm2253, %v4614, 0
    %v4631 = vsel %vm2253, %v4615, 0
    %4633 = vmatprep.subr.mxu0 0.0
    %4634 = vmatpush1.msra.mxu0 %v4616
    %4635 = vmatprep.subr.mxu0 0.0
    %4636 = vmatpush1.msra.mxu0 %v4617
    %4637 = vmatprep.subr.mxu0 0.0
    %4638 = vmatpush1.msra.mxu0 %v4618
    %4639 = vmatprep.subr.mxu0 0.0
    %4640 = vmatpush1.msra.mxu0 %v4619
    %4641 = vmatprep.subr.mxu0 0.0
    %4642 = vmatpush1.msra.mxu0 0.0
    %4643 = vmatprep.subr.mxu0 0.0
    %4644 = vmatpush1.msra.mxu0 0.0
    %4645 = vmatprep.subr.mxu0 0.0
    %4646 = vmatpush1.msra.mxu0 0.0
    %4647 = vmatprep.subr.mxu0 0.0
    %4648 = vmatpush1.msra.mxu0 0.0
    %4649 = vmatprep.subr.mxu0 0.0
    %4650 = vmatpush1.msra.mxu0 0.0
    %4651 = vmatprep.subr.mxu0 0.0
    %4652 = vmatpush1.msra.mxu0 0.0
    %4653 = vmatprep.subr.mxu0 0.0
    %4654 = vmatpush1.msra.mxu0 0.0
    %4655 = vmatprep.subr.mxu0 0.0
    %4656 = vmatpush1.msra.mxu0 0.0
    %4657 = vmatprep.subr.mxu0 0.0
    %4658 = vmatpush1.msra.mxu0 0.0
    %4659 = vmatprep.subr.mxu0 0.0
    %4660 = vmatpush1.msra.mxu0 0.0
    %4661 = vmatprep.subr.mxu0 0.0
    %4662 = vmatpush1.msra.mxu0 0.0
    %4663 = vmatprep.subr.mxu0 0.0
    %4664 = vmatpush1.msra.mxu0 0.0
    %4665 = vmatprep.subr.mxu0 0.0
    %4666 = vmatpush1.msra.mxu0 0.0
    %4667 = vmatprep.subr.mxu0 0.0
    %4668 = vmatpush1.msra.mxu0 0.0
    %4669 = vmatprep.subr.mxu0 0.0
    %4670 = vmatpush1.msra.mxu0 0.0
    %4671 = vmatprep.subr.mxu0 0.0
    %4672 = vmatpush1.msra.mxu0 0.0
    %4673 = vmatprep.subr.mxu0 0.0
    %4674 = vmatpush1.msra.mxu0 0.0
    %4675 = vmatprep.subr.mxu0 0.0
    %4676 = vmatpush1.msra.mxu0 0.0
    %4677 = vmatprep.subr.mxu0 0.0
    %4678 = vmatpush1.msra.mxu0 0.0
    %4679 = vmatprep.subr.mxu0 0.0
    %4680 = vmatpush1.msra.mxu0 0.0
    %4681 = vmatprep.subr.mxu0 0.0
    %4682 = vmatpush1.msra.mxu0 0.0
    %4683 = vmatprep.subr.mxu0 0.0
    %4684 = vmatpush1.msra.mxu0 0.0
    %4685 = vmatprep.subr.mxu0 0.0
    %4686 = vmatpush1.msra.mxu0 0.0
    %4687 = vmatprep.subr.mxu0 0.0
    %4688 = vmatpush1.msra.mxu0 0.0
    %4689 = vmatprep.subr.mxu0 0.0
    %4690 = vmatpush1.msra.mxu0 0.0
    %4691 = vmatprep.subr.mxu0 0.0
    %4692 = vmatpush1.msra.mxu0 0.0
    %4693 = vmatprep.subr.mxu0 0.0
    %4694 = vmatpush1.msra.mxu0 0.0
    %4695 = vmatprep.subr.mxu0 0.0
    %4696 = vmatpush1.msra.mxu0 0.0
    %4697 = vmatprep.mubr.f32.mxu0 0.0
    %4698 = vmatmul.mubr.f32.gmra.mrb[0].mxu0 %v4628
    %v4699 = vpop.f32.mrb[0].mxu0
    %v4700 = vadd.f32 %v4625, %v4699
    %v4701 = vpop.f32.mrb[0].mxu0
    %4702 = vmatprep.mubr.f32.mxu0 0.0
    %4703 = vmatmul.mubr.f32.gmra.mrb[0].mxu0 %v4631
    %v4704 = vpop.f32.mrb[0].mxu0
    %v4705 = vadd.f32 %v4625, %v4704
    %v4706 = vpop.f32.mrb[0].mxu0
    %4707 = vdwg.mxu0
    %v4708 = vld [vmem:[%s73] sm:$0xff]
    %v4709 = vld [vmem:[%s73 + $0x8] sm:$0xff]
    %4711 = vset.pattern.permute.xlu0 0
    %4712 = vperm.xlu0 %4711, %v4708
    %v4713 = vpop.permute.xlu0 %4712
    %4716 = vset.pattern.permute.xlu0 0
    %4717 = vperm.xlu0 %4716, %v4709
    %v4718 = vpop.permute.xlu0 %4717
    %v4720 = vadd.f32 %v4713, 0.0
    %v4721 = vadd.f32 %v4718, 0.0
    %4723 = vrot.lane.b32.xlu0 %v4700, 2
    %v4724 = vpop.permute.xlu0 %4723
    %vm4726 = vcmask 15360
    %v4727 = vsel %vm4726, 0.0, %v4724
    %v4728 = vld [vmem:[%s79] sm:$0xff]
    %v4729 = vld [vmem:[%s79 + $0x8] sm:$0xff]
    %v4731 = vsel %vm211, %v4728, 0
    %v4734 = vsel %vm211, %v4729, 0
    %4736 = vmatprep.subr.mxu0 0.0
    %4737 = vmatpush1.msra.mxu0 %v4727
    %4738 = vmatprep.subr.mxu0 0.0
    %4739 = vmatpush1.msra.mxu0 0.0
    %4740 = vmatprep.subr.mxu0 0.0
    %4741 = vmatpush1.msra.mxu0 0.0
    %4742 = vmatprep.subr.mxu0 0.0
    %4743 = vmatpush1.msra.mxu0 0.0
    %4744 = vmatprep.subr.mxu0 0.0
    %4745 = vmatpush1.msra.mxu0 0.0
    %4746 = vmatprep.subr.mxu0 0.0
    %4747 = vmatpush1.msra.mxu0 0.0
    %4748 = vmatprep.subr.mxu0 0.0
    %4749 = vmatpush1.msra.mxu0 0.0
    %4750 = vmatprep.subr.mxu0 0.0
    %4751 = vmatpush1.msra.mxu0 0.0
    %4752 = vmatprep.subr.mxu0 0.0
    %4753 = vmatpush1.msra.mxu0 0.0
    %4754 = vmatprep.subr.mxu0 0.0
    %4755 = vmatpush1.msra.mxu0 0.0
    %4756 = vmatprep.subr.mxu0 0.0
    %4757 = vmatpush1.msra.mxu0 0.0
    %4758 = vmatprep.subr.mxu0 0.0
    %4759 = vmatpush1.msra.mxu0 0.0
    %4760 = vmatprep.subr.mxu0 0.0
    %4761 = vmatpush1.msra.mxu0 0.0
    %4762 = vmatprep.subr.mxu0 0.0
    %4763 = vmatpush1.msra.mxu0 0.0
    %4764 = vmatprep.subr.mxu0 0.0
    %4765 = vmatpush1.msra.mxu0 0.0
    %4766 = vmatprep.subr.mxu0 0.0
    %4767 = vmatpush1.msra.mxu0 0.0
    %4768 = vmatprep.subr.mxu0 0.0
    %4769 = vmatpush1.msra.mxu0 0.0
    %4770 = vmatprep.subr.mxu0 0.0
    %4771 = vmatpush1.msra.mxu0 0.0
    %4772 = vmatprep.subr.mxu0 0.0
    %4773 = vmatpush1.msra.mxu0 0.0
    %4774 = vmatprep.subr.mxu0 0.0
    %4775 = vmatpush1.msra.mxu0 0.0
    %4776 = vmatprep.subr.mxu0 0.0
    %4777 = vmatpush1.msra.mxu0 0.0
    %4778 = vmatprep.subr.mxu0 0.0
    %4779 = vmatpush1.msra.mxu0 0.0
    %4780 = vmatprep.subr.mxu0 0.0
    %4781 = vmatpush1.msra.mxu0 0.0
    %4782 = vmatprep.subr.mxu0 0.0
    %4783 = vmatpush1.msra.mxu0 0.0
    %4784 = vmatprep.subr.mxu0 0.0
    %4785 = vmatpush1.msra.mxu0 0.0
    %4786 = vmatprep.subr.mxu0 0.0
    %4787 = vmatpush1.msra.mxu0 0.0
    %4788 = vmatprep.subr.mxu0 0.0
    %4789 = vmatpush1.msra.mxu0 0.0
    %4790 = vmatprep.subr.mxu0 0.0
    %4791 = vmatpush1.msra.mxu0 0.0
    %4792 = vmatprep.subr.mxu0 0.0
    %4793 = vmatpush1.msra.mxu0 0.0
    %4794 = vmatprep.subr.mxu0 0.0
    %4795 = vmatpush1.msra.mxu0 0.0
    %4796 = vmatprep.subr.mxu0 0.0
    %4797 = vmatpush1.msra.mxu0 0.0
    %4798 = vmatprep.subr.mxu0 0.0
    %4799 = vmatpush1.msra.mxu0 0.0
    %4800 = vmatprep.mubr.f32.mxu0 0.0
    %4801 = vmatmul.mubr.f32.gmra.mrb[0].mxu0 %v4731
    %v4802 = vpop.f32.mrb[0].mxu0
    %v4803 = vadd.f32 0.0, %v4802
    %v4804 = vpop.f32.mrb[0].mxu0
    %4805 = vmatprep.mubr.f32.mxu0 0.0
    %4806 = vmatmul.mubr.f32.gmra.mrb[0].mxu0 %v4734
    %v4807 = vpop.f32.mrb[0].mxu0
    %v4808 = vadd.f32 0.0, %v4807
    %v4809 = vpop.f32.mrb[0].mxu0
    %4810 = vdwg.mxu0
    %v4811 = vadd.f32 %v4720, %v4803
    %v4812 = vadd.f32 %v4721, %v4808
    %4813 = vrot.lane.b32.xlu0 %v4700, 1
    %v4814 = vpop.permute.xlu0 %4813
    %vm4816 = vcmask 7168
    %v4817 = vsel %vm4816, 0.0, %v4814
    %s4818 = scalar_lea.vmem %s79, 16
    %v4819 = vld [vmem:[%s4818] sm:$0xff]
    %v4820 = vld [vmem:[%s4818 + $0x8] sm:$0xff]
    %v4822 = vsel %vm211, %v4819, 0
    %v4825 = vsel %vm211, %v4820, 0
    %4827 = vmatprep.subr.mxu0 0.0
    %4828 = vmatpush1.msra.mxu0 %v4817
    %4829 = vmatprep.subr.mxu0 0.0
    %4830 = vmatpush1.msra.mxu0 0.0
    %4831 = vmatprep.subr.mxu0 0.0
    %4832 = vmatpush1.msra.mxu0 0.0
    %4833 = vmatprep.subr.mxu0 0.0
    %4834 = vmatpush1.msra.mxu0 0.0
    %4835 = vmatprep.subr.mxu0 0.0
    %4836 = vmatpush1.msra.mxu0 0.0
    %4837 = vmatprep.subr.mxu0 0.0
    %4838 = vmatpush1.msra.mxu0 0.0
    %4839 = vmatprep.subr.mxu0 0.0
    %4840 = vmatpush1.msra.mxu0 0.0
    %4841 = vmatprep.subr.mxu0 0.0
    %4842 = vmatpush1.msra.mxu0 0.0
    %4843 = vmatprep.subr.mxu0 0.0
    %4844 = vmatpush1.msra.mxu0 0.0
    %4845 = vmatprep.subr.mxu0 0.0
    %4846 = vmatpush1.msra.mxu0 0.0
    %4847 = vmatprep.subr.mxu0 0.0
    %4848 = vmatpush1.msra.mxu0 0.0
    %4849 = vmatprep.subr.mxu0 0.0
    %4850 = vmatpush1.msra.mxu0 0.0
    %4851 = vmatprep.subr.mxu0 0.0
    %4852 = vmatpush1.msra.mxu0 0.0
    %4853 = vmatprep.subr.mxu0 0.0
    %4854 = vmatpush1.msra.mxu0 0.0
    %4855 = vmatprep.subr.mxu0 0.0
    %4856 = vmatpush1.msra.mxu0 0.0
    %4857 = vmatprep.subr.mxu0 0.0
    %4858 = vmatpush1.msra.mxu0 0.0
    %4859 = vmatprep.subr.mxu0 0.0
    %4860 = vmatpush1.msra.mxu0 0.0
    %4861 = vmatprep.subr.mxu0 0.0
    %4862 = vmatpush1.msra.mxu0 0.0
    %4863 = vmatprep.subr.mxu0 0.0
    %4864 = vmatpush1.msra.mxu0 0.0
    %4865 = vmatprep.subr.mxu0 0.0
    %4866 = vmatpush1.msra.mxu0 0.0
    %4867 = vmatprep.subr.mxu0 0.0
    %4868 = vmatpush1.msra.mxu0 0.0
    %4869 = vmatprep.subr.mxu0 0.0
    %4870 = vmatpush1.msra.mxu0 0.0
    %4871 = vmatprep.subr.mxu0 0.0
    %4872 = vmatpush1.msra.mxu0 0.0
    %4873 = vmatprep.subr.mxu0 0.0
    %4874 = vmatpush1.msra.mxu0 0.0
    %4875 = vmatprep.subr.mxu0 0.0
    %4876 = vmatpush1.msra.mxu0 0.0
    %4877 = vmatprep.subr.mxu0 0.0
    %4878 = vmatpush1.msra.mxu0 0.0
    %4879 = vmatprep.subr.mxu0 0.0
    %4880 = vmatpush1.msra.mxu0 0.0
    %4881 = vmatprep.subr.mxu0 0.0
    %4882 = vmatpush1.msra.mxu0 0.0
    %4883 = vmatprep.subr.mxu0 0.0
    %4884 = vmatpush1.msra.mxu0 0.0
    %4885 = vmatprep.subr.mxu0 0.0
    %4886 = vmatpush1.msra.mxu0 0.0
    %4887 = vmatprep.subr.mxu0 0.0
    %4888 = vmatpush1.msra.mxu0 0.0
    %4889 = vmatprep.subr.mxu0 0.0
    %4890 = vmatpush1.msra.mxu0 0.0
    %4891 = vmatprep.mubr.f32.mxu0 0.0
    %4892 = vmatmul.mubr.f32.gmra.mrb[0].mxu0 %v4822
    %v4893 = vpop.f32.mrb[0].mxu0
    %v4894 = vadd.f32 0.0, %v4893
    %v4895 = vpop.f32.mrb[0].mxu0
    %4896 = vmatprep.mubr.f32.mxu0 0.0
    %4897 = vmatmul.mubr.f32.gmra.mrb[0].mxu0 %v4825
    %v4898 = vpop.f32.mrb[0].mxu0
    %v4899 = vadd.f32 0.0, %v4898
    %v4900 = vpop.f32.mrb[0].mxu0
    %4901 = vdwg.mxu0
    %v4902 = vadd.f32 %v4811, %v4894
    %v4903 = vadd.f32 %v4812, %v4899
    %s4904 = scalar_lea.vmem %s79, 32
    %v4905 = vld [vmem:[%s4904] sm:$0xff]
    %v4906 = vld [vmem:[%s4904 + $0x8] sm:$0xff]
    %v4908 = vsel %vm211, %v4905, 0
    %v4911 = vsel %vm211, %v4906, 0
    %4913 = vmatprep.subr.mxu0 0.0
    %4914 = vmatpush1.msra.mxu0 %v4700
    %4915 = vmatprep.subr.mxu0 0.0
    %4916 = vmatpush1.msra.mxu0 0.0
    %4917 = vmatprep.subr.mxu0 0.0
    %4918 = vmatpush1.msra.mxu0 0.0
    %4919 = vmatprep.subr.mxu0 0.0
    %4920 = vmatpush1.msra.mxu0 0.0
    %4921 = vmatprep.subr.mxu0 0.0
    %4922 = vmatpush1.msra.mxu0 0.0
    %4923 = vmatprep.subr.mxu0 0.0
    %4924 = vmatpush1.msra.mxu0 0.0
    %4925 = vmatprep.subr.mxu0 0.0
    %4926 = vmatpush1.msra.mxu0 0.0
    %4927 = vmatprep.subr.mxu0 0.0
    %4928 = vmatpush1.msra.mxu0 0.0
    %4929 = vmatprep.subr.mxu0 0.0
    %4930 = vmatpush1.msra.mxu0 0.0
    %4931 = vmatprep.subr.mxu0 0.0
    %4932 = vmatpush1.msra.mxu0 0.0
    %4933 = vmatprep.subr.mxu0 0.0
    %4934 = vmatpush1.msra.mxu0 0.0
    %4935 = vmatprep.subr.mxu0 0.0
    %4936 = vmatpush1.msra.mxu0 0.0
    %4937 = vmatprep.subr.mxu0 0.0
    %4938 = vmatpush1.msra.mxu0 0.0
    %4939 = vmatprep.subr.mxu0 0.0
    %4940 = vmatpush1.msra.mxu0 0.0
    %4941 = vmatprep.subr.mxu0 0.0
    %4942 = vmatpush1.msra.mxu0 0.0
    %4943 = vmatprep.subr.mxu0 0.0
    %4944 = vmatpush1.msra.mxu0 0.0
    %4945 = vmatprep.subr.mxu0 0.0
    %4946 = vmatpush1.msra.mxu0 0.0
    %4947 = vmatprep.subr.mxu0 0.0
    %4948 = vmatpush1.msra.mxu0 0.0
    %4949 = vmatprep.subr.mxu0 0.0
    %4950 = vmatpush1.msra.mxu0 0.0
    %4951 = vmatprep.subr.mxu0 0.0
    %4952 = vmatpush1.msra.mxu0 0.0
    %4953 = vmatprep.subr.mxu0 0.0
    %4954 = vmatpush1.msra.mxu0 0.0
    %4955 = vmatprep.subr.mxu0 0.0
    %4956 = vmatpush1.msra.mxu0 0.0
    %4957 = vmatprep.subr.mxu0 0.0
    %4958 = vmatpush1.msra.mxu0 0.0
    %4959 = vmatprep.subr.mxu0 0.0
    %4960 = vmatpush1.msra.mxu0 0.0
    %4961 = vmatprep.subr.mxu0 0.0
    %4962 = vmatpush1.msra.mxu0 0.0
    %4963 = vmatprep.subr.mxu0 0.0
    %4964 = vmatpush1.msra.mxu0 0.0
    %4965 = vmatprep.subr.mxu0 0.0
    %4966 = vmatpush1.msra.mxu0 0.0
    %4967 = vmatprep.subr.mxu0 0.0
    %4968 = vmatpush1.msra.mxu0 0.0
    %4969 = vmatprep.subr.mxu0 0.0
    %4970 = vmatpush1.msra.mxu0 0.0
    %4971 = vmatprep.subr.mxu0 0.0
    %4972 = vmatpush1.msra.mxu0 0.0
    %4973 = vmatprep.subr.mxu0 0.0
    %4974 = vmatpush1.msra.mxu0 0.0
    %4975 = vmatprep.subr.mxu0 0.0
    %4976 = vmatpush1.msra.mxu0 0.0
    %4977 = vmatprep.mubr.f32.mxu0 0.0
    %4978 = vmatmul.mubr.f32.gmra.mrb[0].mxu0 %v4908
    %v4979 = vpop.f32.mrb[0].mxu0
    %v4980 = vadd.f32 0.0, %v4979
    %v4981 = vpop.f32.mrb[0].mxu0
    %4982 = vmatprep.mubr.f32.mxu0 0.0
    %4983 = vmatmul.mubr.f32.gmra.mrb[0].mxu0 %v4911
    %v4984 = vpop.f32.mrb[0].mxu0
    %v4985 = vadd.f32 0.0, %v4984
    %v4986 = vpop.f32.mrb[0].mxu0
    %4987 = vdwg.mxu0
    %v4988 = vadd.f32 %v4902, %v4980
    %v4989 = vadd.f32 %v4903, %v4985
    %v4990 = vmax.f32 %v4988, 0.0
    %v4991 = vmax.f32 %v4989, 0.0
    %v4992 = vld [vmem:[%s75] sm:$0xff]
    %v4993 = vld [vmem:[%s75 + $0x8] sm:$0xff]
    %4995 = vset.pattern.permute.xlu0 0
    %4996 = vperm.xlu0 %4995, %v4992
    %v4997 = vpop.permute.xlu0 %4996
    %5000 = vset.pattern.permute.xlu0 0
    %5001 = vperm.xlu0 %5000, %v4993
    %v5002 = vpop.permute.xlu0 %5001
    %v5004 = vadd.f32 %v4997, 0.0
    %v5005 = vadd.f32 %v5002, 0.0
    %5008 = vrot.lane.b32.xlu0 %v4990, 2
    %v5009 = vpop.permute.xlu0 %5008
    %5010 = vrot.lane.b32.xlu0 %v4991, 2
    %v5011 = vpop.permute.xlu0 %5010
    %v5014 = vsel %vm4726, 0.0, %v5009
    %v5015 = vsel %vm4726, 0.0, %v5011
    %v5016 = vld [vmem:[%s81] sm:$0xff]
    %v5017 = vld [vmem:[%s81 + $0x8] sm:$0xff]
    %v5019 = vsel %vm2385, %v5016, 0
    %v5022 = vsel %vm2385, %v5017, 0
    %5024 = vmatprep.subr.mxu0 0.0
    %5025 = vmatpush1.msra.mxu0 %v5014
    %5026 = vmatprep.subr.mxu0 0.0
    %5027 = vmatpush1.msra.mxu0 %v5015
    %5028 = vmatprep.subr.mxu0 0.0
    %5029 = vmatpush1.msra.mxu0 0.0
    %5030 = vmatprep.subr.mxu0 0.0
    %5031 = vmatpush1.msra.mxu0 0.0
    %5032 = vmatprep.subr.mxu0 0.0
    %5033 = vmatpush1.msra.mxu0 0.0
    %5034 = vmatprep.subr.mxu0 0.0
    %5035 = vmatpush1.msra.mxu0 0.0
    %5036 = vmatprep.subr.mxu0 0.0
    %5037 = vmatpush1.msra.mxu0 0.0
    %5038 = vmatprep.subr.mxu0 0.0
    %5039 = vmatpush1.msra.mxu0 0.0
    %5040 = vmatprep.subr.mxu0 0.0
    %5041 = vmatpush1.msra.mxu0 0.0
    %5042 = vmatprep.subr.mxu0 0.0
    %5043 = vmatpush1.msra.mxu0 0.0
    %5044 = vmatprep.subr.mxu0 0.0
    %5045 = vmatpush1.msra.mxu0 0.0
    %5046 = vmatprep.subr.mxu0 0.0
    %5047 = vmatpush1.msra.mxu0 0.0
    %5048 = vmatprep.subr.mxu0 0.0
    %5049 = vmatpush1.msra.mxu0 0.0
    %5050 = vmatprep.subr.mxu0 0.0
    %5051 = vmatpush1.msra.mxu0 0.0
    %5052 = vmatprep.subr.mxu0 0.0
    %5053 = vmatpush1.msra.mxu0 0.0
    %5054 = vmatprep.subr.mxu0 0.0
    %5055 = vmatpush1.msra.mxu0 0.0
    %5056 = vmatprep.subr.mxu0 0.0
    %5057 = vmatpush1.msra.mxu0 0.0
    %5058 = vmatprep.subr.mxu0 0.0
    %5059 = vmatpush1.msra.mxu0 0.0
    %5060 = vmatprep.subr.mxu0 0.0
    %5061 = vmatpush1.msra.mxu0 0.0
    %5062 = vmatprep.subr.mxu0 0.0
    %5063 = vmatpush1.msra.mxu0 0.0
    %5064 = vmatprep.subr.mxu0 0.0
    %5065 = vmatpush1.msra.mxu0 0.0
    %5066 = vmatprep.subr.mxu0 0.0
    %5067 = vmatpush1.msra.mxu0 0.0
    %5068 = vmatprep.subr.mxu0 0.0
    %5069 = vmatpush1.msra.mxu0 0.0
    %5070 = vmatprep.subr.mxu0 0.0
    %5071 = vmatpush1.msra.mxu0 0.0
    %5072 = vmatprep.subr.mxu0 0.0
    %5073 = vmatpush1.msra.mxu0 0.0
    %5074 = vmatprep.subr.mxu0 0.0
    %5075 = vmatpush1.msra.mxu0 0.0
    %5076 = vmatprep.subr.mxu0 0.0
    %5077 = vmatpush1.msra.mxu0 0.0
    %5078 = vmatprep.subr.mxu0 0.0
    %5079 = vmatpush1.msra.mxu0 0.0
    %5080 = vmatprep.subr.mxu0 0.0
    %5081 = vmatpush1.msra.mxu0 0.0
    %5082 = vmatprep.subr.mxu0 0.0
    %5083 = vmatpush1.msra.mxu0 0.0
    %5084 = vmatprep.subr.mxu0 0.0
    %5085 = vmatpush1.msra.mxu0 0.0
    %5086 = vmatprep.subr.mxu0 0.0
    %5087 = vmatpush1.msra.mxu0 0.0
    %5088 = vmatprep.mubr.f32.mxu0 0.0
    %5089 = vmatmul.mubr.f32.gmra.mrb[0].mxu0 %v5019
    %v5090 = vpop.f32.mrb[0].mxu0
    %v5091 = vadd.f32 0.0, %v5090
    %v5092 = vpop.f32.mrb[0].mxu0
    %5093 = vmatprep.mubr.f32.mxu0 0.0
    %5094 = vmatmul.mubr.f32.gmra.mrb[0].mxu0 %v5022
    %v5095 = vpop.f32.mrb[0].mxu0
    %v5096 = vadd.f32 0.0, %v5095
    %v5097 = vpop.f32.mrb[0].mxu0
    %5098 = vdwg.mxu0
    %v5099 = vadd.f32 %v5004, %v5091
    %v5100 = vadd.f32 %v5005, %v5096
    %5101 = vrot.lane.b32.xlu0 %v4990, 1
    %v5102 = vpop.permute.xlu0 %5101
    %5103 = vrot.lane.b32.xlu0 %v4991, 1
    %v5104 = vpop.permute.xlu0 %5103
    %v5107 = vsel %vm4816, 0.0, %v5102
    %v5108 = vsel %vm4816, 0.0, %v5104
    %s5109 = scalar_lea.vmem %s81, 16
    %v5110 = vld [vmem:[%s5109] sm:$0xff]
    %v5111 = vld [vmem:[%s5109 + $0x8] sm:$0xff]
    %v5113 = vsel %vm2385, %v5110, 0
    %v5116 = vsel %vm2385, %v5111, 0
    %5118 = vmatprep.subr.mxu0 0.0
    %5119 = vmatpush1.msra.mxu0 %v5107
    %5120 = vmatprep.subr.mxu0 0.0
    %5121 = vmatpush1.msra.mxu0 %v5108
    %5122 = vmatprep.subr.mxu0 0.0
    %5123 = vmatpush1.msra.mxu0 0.0
    %5124 = vmatprep.subr.mxu0 0.0
    %5125 = vmatpush1.msra.mxu0 0.0
    %5126 = vmatprep.subr.mxu0 0.0
    %5127 = vmatpush1.msra.mxu0 0.0
    %5128 = vmatprep.subr.mxu0 0.0
    %5129 = vmatpush1.msra.mxu0 0.0
    %5130 = vmatprep.subr.mxu0 0.0
    %5131 = vmatpush1.msra.mxu0 0.0
    %5132 = vmatprep.subr.mxu0 0.0
    %5133 = vmatpush1.msra.mxu0 0.0
    %5134 = vmatprep.subr.mxu0 0.0
    %5135 = vmatpush1.msra.mxu0 0.0
    %5136 = vmatprep.subr.mxu0 0.0
    %5137 = vmatpush1.msra.mxu0 0.0
    %5138 = vmatprep.subr.mxu0 0.0
    %5139 = vmatpush1.msra.mxu0 0.0
    %5140 = vmatprep.subr.mxu0 0.0
    %5141 = vmatpush1.msra.mxu0 0.0
    %5142 = vmatprep.subr.mxu0 0.0
    %5143 = vmatpush1.msra.mxu0 0.0
    %5144 = vmatprep.subr.mxu0 0.0
    %5145 = vmatpush1.msra.mxu0 0.0
    %5146 = vmatprep.subr.mxu0 0.0
    %5147 = vmatpush1.msra.mxu0 0.0
    %5148 = vmatprep.subr.mxu0 0.0
    %5149 = vmatpush1.msra.mxu0 0.0
    %5150 = vmatprep.subr.mxu0 0.0
    %5151 = vmatpush1.msra.mxu0 0.0
    %5152 = vmatprep.subr.mxu0 0.0
    %5153 = vmatpush1.msra.mxu0 0.0
    %5154 = vmatprep.subr.mxu0 0.0
    %5155 = vmatpush1.msra.mxu0 0.0
    %5156 = vmatprep.subr.mxu0 0.0
    %5157 = vmatpush1.msra.mxu0 0.0
    %5158 = vmatprep.subr.mxu0 0.0
    %5159 = vmatpush1.msra.mxu0 0.0
    %5160 = vmatprep.subr.mxu0 0.0
    %5161 = vmatpush1.msra.mxu0 0.0
    %5162 = vmatprep.subr.mxu0 0.0
    %5163 = vmatpush1.msra.mxu0 0.0
    %5164 = vmatprep.subr.mxu0 0.0
    %5165 = vmatpush1.msra.mxu0 0.0
    %5166 = vmatprep.subr.mxu0 0.0
    %5167 = vmatpush1.msra.mxu0 0.0
    %5168 = vmatprep.subr.mxu0 0.0
    %5169 = vmatpush1.msra.mxu0 0.0
    %5170 = vmatprep.subr.mxu0 0.0
    %5171 = vmatpush1.msra.mxu0 0.0
    %5172 = vmatprep.subr.mxu0 0.0
    %5173 = vmatpush1.msra.mxu0 0.0
    %5174 = vmatprep.subr.mxu0 0.0
    %5175 = vmatpush1.msra.mxu0 0.0
    %5176 = vmatprep.subr.mxu0 0.0
    %5177 = vmatpush1.msra.mxu0 0.0
    %5178 = vmatprep.subr.mxu0 0.0
    %5179 = vmatpush1.msra.mxu0 0.0
    %5180 = vmatprep.subr.mxu0 0.0
    %5181 = vmatpush1.msra.mxu0 0.0
    %5182 = vmatprep.mubr.f32.mxu0 0.0
    %5183 = vmatmul.mubr.f32.gmra.mrb[0].mxu0 %v5113
    %v5184 = vpop.f32.mrb[0].mxu0
    %v5185 = vadd.f32 0.0, %v5184
    %v5186 = vpop.f32.mrb[0].mxu0
    %5187 = vmatprep.mubr.f32.mxu0 0.0
    %5188 = vmatmul.mubr.f32.gmra.mrb[0].mxu0 %v5116
    %v5189 = vpop.f32.mrb[0].mxu0
    %v5190 = vadd.f32 0.0, %v5189
    %v5191 = vpop.f32.mrb[0].mxu0
    %5192 = vdwg.mxu0
    %v5193 = vadd.f32 %v5099, %v5185
    %v5194 = vadd.f32 %v5100, %v5190
    %s5195 = scalar_lea.vmem %s81, 32
    %v5196 = vld [vmem:[%s5195] sm:$0xff]
    %v5197 = vld [vmem:[%s5195 + $0x8] sm:$0xff]
    %v5199 = vsel %vm2385, %v5196, 0
    %v5202 = vsel %vm2385, %v5197, 0
    %5204 = vmatprep.subr.mxu0 0.0
    %5205 = vmatpush1.msra.mxu0 %v4990
    %5206 = vmatprep.subr.mxu0 0.0
    %5207 = vmatpush1.msra.mxu0 %v4991
    %5208 = vmatprep.subr.mxu0 0.0
    %5209 = vmatpush1.msra.mxu0 0.0
    %5210 = vmatprep.subr.mxu0 0.0
    %5211 = vmatpush1.msra.mxu0 0.0
    %5212 = vmatprep.subr.mxu0 0.0
    %5213 = vmatpush1.msra.mxu0 0.0
    %5214 = vmatprep.subr.mxu0 0.0
    %5215 = vmatpush1.msra.mxu0 0.0
    %5216 = vmatprep.subr.mxu0 0.0
    %5217 = vmatpush1.msra.mxu0 0.0
    %5218 = vmatprep.subr.mxu0 0.0
    %5219 = vmatpush1.msra.mxu0 0.0
    %5220 = vmatprep.subr.mxu0 0.0
    %5221 = vmatpush1.msra.mxu0 0.0
    %5222 = vmatprep.subr.mxu0 0.0
    %5223 = vmatpush1.msra.mxu0 0.0
    %5224 = vmatprep.subr.mxu0 0.0
    %5225 = vmatpush1.msra.mxu0 0.0
    %5226 = vmatprep.subr.mxu0 0.0
    %5227 = vmatpush1.msra.mxu0 0.0
    %5228 = vmatprep.subr.mxu0 0.0
    %5229 = vmatpush1.msra.mxu0 0.0
    %5230 = vmatprep.subr.mxu0 0.0
    %5231 = vmatpush1.msra.mxu0 0.0
    %5232 = vmatprep.subr.mxu0 0.0
    %5233 = vmatpush1.msra.mxu0 0.0
    %5234 = vmatprep.subr.mxu0 0.0
    %5235 = vmatpush1.msra.mxu0 0.0
    %5236 = vmatprep.subr.mxu0 0.0
    %5237 = vmatpush1.msra.mxu0 0.0
    %5238 = vmatprep.subr.mxu0 0.0
    %5239 = vmatpush1.msra.mxu0 0.0
    %5240 = vmatprep.subr.mxu0 0.0
    %5241 = vmatpush1.msra.mxu0 0.0
    %5242 = vmatprep.subr.mxu0 0.0
    %5243 = vmatpush1.msra.mxu0 0.0
    %5244 = vmatprep.subr.mxu0 0.0
    %5245 = vmatpush1.msra.mxu0 0.0
    %5246 = vmatprep.subr.mxu0 0.0
    %5247 = vmatpush1.msra.mxu0 0.0
    %5248 = vmatprep.subr.mxu0 0.0
    %5249 = vmatpush1.msra.mxu0 0.0
    %5250 = vmatprep.subr.mxu0 0.0
    %5251 = vmatpush1.msra.mxu0 0.0
    %5252 = vmatprep.subr.mxu0 0.0
    %5253 = vmatpush1.msra.mxu0 0.0
    %5254 = vmatprep.subr.mxu0 0.0
    %5255 = vmatpush1.msra.mxu0 0.0
    %5256 = vmatprep.subr.mxu0 0.0
    %5257 = vmatpush1.msra.mxu0 0.0
    %5258 = vmatprep.subr.mxu0 0.0
    %5259 = vmatpush1.msra.mxu0 0.0
    %5260 = vmatprep.subr.mxu0 0.0
    %5261 = vmatpush1.msra.mxu0 0.0
    %5262 = vmatprep.subr.mxu0 0.0
    %5263 = vmatpush1.msra.mxu0 0.0
    %5264 = vmatprep.subr.mxu0 0.0
    %5265 = vmatpush1.msra.mxu0 0.0
    %5266 = vmatprep.subr.mxu0 0.0
    %5267 = vmatpush1.msra.mxu0 0.0
    %5268 = vmatprep.mubr.f32.mxu0 0.0
    %5269 = vmatmul.mubr.f32.gmra.mrb[0].mxu0 %v5199
    %v5270 = vpop.f32.mrb[0].mxu0
    %v5271 = vadd.f32 0.0, %v5270
    %v5272 = vpop.f32.mrb[0].mxu0
    %5273 = vmatprep.mubr.f32.mxu0 0.0
    %5274 = vmatmul.mubr.f32.gmra.mrb[0].mxu0 %v5202
    %v5275 = vpop.f32.mrb[0].mxu0
    %v5276 = vadd.f32 0.0, %v5275
    %v5277 = vpop.f32.mrb[0].mxu0
    %5278 = vdwg.mxu0
    %v5279 = vadd.f32 %v5193, %v5271
    %v5280 = vadd.f32 %v5194, %v5276
    %v5281 = vmax.f32 %v5279, 0.0
    %v5282 = vmax.f32 %v5280, 0.0
    %v5283 = vld [vmem:[%s83] sm:$0xff]
    %v5284 = vld [vmem:[%s83 + $0x8] sm:$0xff]
    %v5285 = vld [vmem:[%s77] sm:$0xff]
    %v5286 = vld [vmem:[%s77 + $0x8] sm:$0xff]
    %5288 = vset.pattern.permute.xlu0 0
    %5289 = vperm.xlu0 %5288, %v5285
    %v5290 = vpop.permute.xlu0 %5289
    %5293 = vset.pattern.permute.xlu0 0
    %5294 = vperm.xlu0 %5293, %v5286
    %v5295 = vpop.permute.xlu0 %5294
    %v5298 = vsel %vm211, %v5283, 0
    %v5301 = vsel %vm211, %v5284, 0
    %5303 = vmatprep.subr.mxu0 0.0
    %5304 = vmatpush1.msra.mxu0 %v4700
    %5305 = vmatprep.subr.mxu0 0.0
    %5306 = vmatpush1.msra.mxu0 0.0
    %5307 = vmatprep.subr.mxu0 0.0
    %5308 = vmatpush1.msra.mxu0 0.0
    %5309 = vmatprep.subr.mxu0 0.0
    %5310 = vmatpush1.msra.mxu0 0.0
    %5311 = vmatprep.subr.mxu0 0.0
    %5312 = vmatpush1.msra.mxu0 0.0
    %5313 = vmatprep.subr.mxu0 0.0
    %5314 = vmatpush1.msra.mxu0 0.0
    %5315 = vmatprep.subr.mxu0 0.0
    %5316 = vmatpush1.msra.mxu0 0.0
    %5317 = vmatprep.subr.mxu0 0.0
    %5318 = vmatpush1.msra.mxu0 0.0
    %5319 = vmatprep.subr.mxu0 0.0
    %5320 = vmatpush1.msra.mxu0 0.0
    %5321 = vmatprep.subr.mxu0 0.0
    %5322 = vmatpush1.msra.mxu0 0.0
    %5323 = vmatprep.subr.mxu0 0.0
    %5324 = vmatpush1.msra.mxu0 0.0
    %5325 = vmatprep.subr.mxu0 0.0
    %5326 = vmatpush1.msra.mxu0 0.0
    %5327 = vmatprep.subr.mxu0 0.0
    %5328 = vmatpush1.msra.mxu0 0.0
    %5329 = vmatprep.subr.mxu0 0.0
    %5330 = vmatpush1.msra.mxu0 0.0
    %5331 = vmatprep.subr.mxu0 0.0
    %5332 = vmatpush1.msra.mxu0 0.0
    %5333 = vmatprep.subr.mxu0 0.0
    %5334 = vmatpush1.msra.mxu0 0.0
    %5335 = vmatprep.subr.mxu0 0.0
    %5336 = vmatpush1.msra.mxu0 0.0
    %5337 = vmatprep.subr.mxu0 0.0
    %5338 = vmatpush1.msra.mxu0 0.0
    %5339 = vmatprep.subr.mxu0 0.0
    %5340 = vmatpush1.msra.mxu0 0.0
    %5341 = vmatprep.subr.mxu0 0.0
    %5342 = vmatpush1.msra.mxu0 0.0
    %5343 = vmatprep.subr.mxu0 0.0
    %5344 = vmatpush1.msra.mxu0 0.0
    %5345 = vmatprep.subr.mxu0 0.0
    %5346 = vmatpush1.msra.mxu0 0.0
    %5347 = vmatprep.subr.mxu0 0.0
    %5348 = vmatpush1.msra.mxu0 0.0
    %5349 = vmatprep.subr.mxu0 0.0
    %5350 = vmatpush1.msra.mxu0 0.0
    %5351 = vmatprep.subr.mxu0 0.0
    %5352 = vmatpush1.msra.mxu0 0.0
    %5353 = vmatprep.subr.mxu0 0.0
    %5354 = vmatpush1.msra.mxu0 0.0
    %5355 = vmatprep.subr.mxu0 0.0
    %5356 = vmatpush1.msra.mxu0 0.0
    %5357 = vmatprep.subr.mxu0 0.0
    %5358 = vmatpush1.msra.mxu0 0.0
    %5359 = vmatprep.subr.mxu0 0.0
    %5360 = vmatpush1.msra.mxu0 0.0
    %5361 = vmatprep.subr.mxu0 0.0
    %5362 = vmatpush1.msra.mxu0 0.0
    %5363 = vmatprep.subr.mxu0 0.0
    %5364 = vmatpush1.msra.mxu0 0.0
    %5365 = vmatprep.subr.mxu0 0.0
    %5366 = vmatpush1.msra.mxu0 0.0
    %5367 = vmatprep.mubr.f32.mxu0 0.0
    %5368 = vmatmul.mubr.f32.gmra.mrb[0].mxu0 %v5298
    %v5369 = vpop.f32.mrb[0].mxu0
    %v5370 = vadd.f32 %v5290, %v5369
    %v5371 = vpop.f32.mrb[0].mxu0
    %5372 = vmatprep.mubr.f32.mxu0 0.0
    %5373 = vmatmul.mubr.f32.gmra.mrb[0].mxu0 %v5301
    %v5374 = vpop.f32.mrb[0].mxu0
    %v5375 = vadd.f32 %v5295, %v5374
    %v5376 = vpop.f32.mrb[0].mxu0
    %5377 = vdwg.mxu0
    %v5378 = vadd.f32 %v5281, %v5370
    %v5379 = vadd.f32 %v5282, %v5375
    %v5380 = vmax.f32 %v5378, 0.0
    %v5381 = vmax.f32 %v5379, 0.0
    %v5382 = vld [vmem:[%s85] sm:$0xff]
    %v5383 = vld [vmem:[%s85 + $0x8] sm:$0xff]
    %5385 = vset.pattern.permute.xlu0 0
    %5386 = vperm.xlu0 %5385, %v5382
    %v5387 = vpop.permute.xlu0 %5386
    %5390 = vset.pattern.permute.xlu0 0
    %5391 = vperm.xlu0 %5390, %v5383
    %v5392 = vpop.permute.xlu0 %5391
    %v5394 = vadd.f32 %v5387, 0.0
    %v5395 = vadd.f32 %v5392, 0.0
    %5398 = vrot.lane.b32.xlu0 %v5380, 4
    %v5399 = vpop.permute.xlu0 %5398
    %5400 = vrot.lane.b32.xlu0 %v5381, 4
    %v5401 = vpop.permute.xlu0 %5400
    %vm5404 = vcmask 31744
    %v5405 = vsel %vm5404, 0.0, %v5399
    %v5406 = vsel %vm5404, 0.0, %v5401
    %v5407 = vld [vmem:[%s89] sm:$0xff]
    %v5408 = vld [vmem:[%s89 + $0x8] sm:$0xff]
    %v5410 = vsel %vm2385, %v5407, 0
    %v5413 = vsel %vm2385, %v5408, 0
    %5415 = vmatprep.subr.mxu0 0.0
    %5416 = vmatpush1.msra.mxu0 %v5405
    %5417 = vmatprep.subr.mxu0 0.0
    %5418 = vmatpush1.msra.mxu0 %v5406
    %5419 = vmatprep.subr.mxu0 0.0
    %5420 = vmatpush1.msra.mxu0 0.0
    %5421 = vmatprep.subr.mxu0 0.0
    %5422 = vmatpush1.msra.mxu0 0.0
    %5423 = vmatprep.subr.mxu0 0.0
    %5424 = vmatpush1.msra.mxu0 0.0
    %5425 = vmatprep.subr.mxu0 0.0
    %5426 = vmatpush1.msra.mxu0 0.0
    %5427 = vmatprep.subr.mxu0 0.0
    %5428 = vmatpush1.msra.mxu0 0.0
    %5429 = vmatprep.subr.mxu0 0.0
    %5430 = vmatpush1.msra.mxu0 0.0
    %5431 = vmatprep.subr.mxu0 0.0
    %5432 = vmatpush1.msra.mxu0 0.0
    %5433 = vmatprep.subr.mxu0 0.0
    %5434 = vmatpush1.msra.mxu0 0.0
    %5435 = vmatprep.subr.mxu0 0.0
    %5436 = vmatpush1.msra.mxu0 0.0
    %5437 = vmatprep.subr.mxu0 0.0
    %5438 = vmatpush1.msra.mxu0 0.0
    %5439 = vmatprep.subr.mxu0 0.0
    %5440 = vmatpush1.msra.mxu0 0.0
    %5441 = vmatprep.subr.mxu0 0.0
    %5442 = vmatpush1.msra.mxu0 0.0
    %5443 = vmatprep.subr.mxu0 0.0
    %5444 = vmatpush1.msra.mxu0 0.0
    %5445 = vmatprep.subr.mxu0 0.0
    %5446 = vmatpush1.msra.mxu0 0.0
    %5447 = vmatprep.subr.mxu0 0.0
    %5448 = vmatpush1.msra.mxu0 0.0
    %5449 = vmatprep.subr.mxu0 0.0
    %5450 = vmatpush1.msra.mxu0 0.0
    %5451 = vmatprep.subr.mxu0 0.0
    %5452 = vmatpush1.msra.mxu0 0.0
    %5453 = vmatprep.subr.mxu0 0.0
    %5454 = vmatpush1.msra.mxu0 0.0
    %5455 = vmatprep.subr.mxu0 0.0
    %5456 = vmatpush1.msra.mxu0 0.0
    %5457 = vmatprep.subr.mxu0 0.0
    %5458 = vmatpush1.msra.mxu0 0.0
    %5459 = vmatprep.subr.mxu0 0.0
    %5460 = vmatpush1.msra.mxu0 0.0
    %5461 = vmatprep.subr.mxu0 0.0
    %5462 = vmatpush1.msra.mxu0 0.0
    %5463 = vmatprep.subr.mxu0 0.0
    %5464 = vmatpush1.msra.mxu0 0.0
    %5465 = vmatprep.subr.mxu0 0.0
    %5466 = vmatpush1.msra.mxu0 0.0
    %5467 = vmatprep.subr.mxu0 0.0
    %5468 = vmatpush1.msra.mxu0 0.0
    %5469 = vmatprep.subr.mxu0 0.0
    %5470 = vmatpush1.msra.mxu0 0.0
    %5471 = vmatprep.subr.mxu0 0.0
    %5472 = vmatpush1.msra.mxu0 0.0
    %5473 = vmatprep.subr.mxu0 0.0
    %5474 = vmatpush1.msra.mxu0 0.0
    %5475 = vmatprep.subr.mxu0 0.0
    %5476 = vmatpush1.msra.mxu0 0.0
    %5477 = vmatprep.subr.mxu0 0.0
    %5478 = vmatpush1.msra.mxu0 0.0
    %5479 = vmatprep.mubr.f32.mxu0 0.0
    %5480 = vmatmul.mubr.f32.gmra.mrb[0].mxu0 %v5410
    %v5481 = vpop.f32.mrb[0].mxu0
    %v5482 = vadd.f32 0.0, %v5481
    %v5483 = vpop.f32.mrb[0].mxu0
    %5484 = vmatprep.mubr.f32.mxu0 0.0
    %5485 = vmatmul.mubr.f32.gmra.mrb[0].mxu0 %v5413
    %v5486 = vpop.f32.mrb[0].mxu0
    %v5487 = vadd.f32 0.0, %v5486
    %v5488 = vpop.f32.mrb[0].mxu0
    %5489 = vdwg.mxu0
    %v5490 = vadd.f32 %v5394, %v5482
    %v5491 = vadd.f32 %v5395, %v5487
    %5492 = vrot.lane.b32.xlu0 %v5380, 2
    %v5493 = vpop.permute.xlu0 %5492
    %5494 = vrot.lane.b32.xlu0 %v5381, 2
    %v5495 = vpop.permute.xlu0 %5494
    %v5498 = vsel %vm4726, 0.0, %v5493
    %v5499 = vsel %vm4726, 0.0, %v5495
    %s5500 = scalar_lea.vmem %s89, 16
    %v5501 = vld [vmem:[%s5500] sm:$0xff]
    %v5502 = vld [vmem:[%s5500 + $0x8] sm:$0xff]
    %v5504 = vsel %vm2385, %v5501, 0
    %v5507 = vsel %vm2385, %v5502, 0
    %5509 = vmatprep.subr.mxu0 0.0
    %5510 = vmatpush1.msra.mxu0 %v5498
    %5511 = vmatprep.subr.mxu0 0.0
    %5512 = vmatpush1.msra.mxu0 %v5499
    %5513 = vmatprep.subr.mxu0 0.0
    %5514 = vmatpush1.msra.mxu0 0.0
    %5515 = vmatprep.subr.mxu0 0.0
    %5516 = vmatpush1.msra.mxu0 0.0
    %5517 = vmatprep.subr.mxu0 0.0
    %5518 = vmatpush1.msra.mxu0 0.0
    %5519 = vmatprep.subr.mxu0 0.0
    %5520 = vmatpush1.msra.mxu0 0.0
    %5521 = vmatprep.subr.mxu0 0.0
    %5522 = vmatpush1.msra.mxu0 0.0
    %5523 = vmatprep.subr.mxu0 0.0
    %5524 = vmatpush1.msra.mxu0 0.0
    %5525 = vmatprep.subr.mxu0 0.0
    %5526 = vmatpush1.msra.mxu0 0.0
    %5527 = vmatprep.subr.mxu0 0.0
    %5528 = vmatpush1.msra.mxu0 0.0
    %5529 = vmatprep.subr.mxu0 0.0
    %5530 = vmatpush1.msra.mxu0 0.0
    %5531 = vmatprep.subr.mxu0 0.0
    %5532 = vmatpush1.msra.mxu0 0.0
    %5533 = vmatprep.subr.mxu0 0.0
    %5534 = vmatpush1.msra.mxu0 0.0
    %5535 = vmatprep.subr.mxu0 0.0
    %5536 = vmatpush1.msra.mxu0 0.0
    %5537 = vmatprep.subr.mxu0 0.0
    %5538 = vmatpush1.msra.mxu0 0.0
    %5539 = vmatprep.subr.mxu0 0.0
    %5540 = vmatpush1.msra.mxu0 0.0
    %5541 = vmatprep.subr.mxu0 0.0
    %5542 = vmatpush1.msra.mxu0 0.0
    %5543 = vmatprep.subr.mxu0 0.0
    %5544 = vmatpush1.msra.mxu0 0.0
    %5545 = vmatprep.subr.mxu0 0.0
    %5546 = vmatpush1.msra.mxu0 0.0
    %5547 = vmatprep.subr.mxu0 0.0
    %5548 = vmatpush1.msra.mxu0 0.0
    %5549 = vmatprep.subr.mxu0 0.0
    %5550 = vmatpush1.msra.mxu0 0.0
    %5551 = vmatprep.subr.mxu0 0.0
    %5552 = vmatpush1.msra.mxu0 0.0
    %5553 = vmatprep.subr.mxu0 0.0
    %5554 = vmatpush1.msra.mxu0 0.0
    %5555 = vmatprep.subr.mxu0 0.0
    %5556 = vmatpush1.msra.mxu0 0.0
    %5557 = vmatprep.subr.mxu0 0.0
    %5558 = vmatpush1.msra.mxu0 0.0
    %5559 = vmatprep.subr.mxu0 0.0
    %5560 = vmatpush1.msra.mxu0 0.0
    %5561 = vmatprep.subr.mxu0 0.0
    %5562 = vmatpush1.msra.mxu0 0.0
    %5563 = vmatprep.subr.mxu0 0.0
    %5564 = vmatpush1.msra.mxu0 0.0
    %5565 = vmatprep.subr.mxu0 0.0
    %5566 = vmatpush1.msra.mxu0 0.0
    %5567 = vmatprep.subr.mxu0 0.0
    %5568 = vmatpush1.msra.mxu0 0.0
    %5569 = vmatprep.subr.mxu0 0.0
    %5570 = vmatpush1.msra.mxu0 0.0
    %5571 = vmatprep.subr.mxu0 0.0
    %5572 = vmatpush1.msra.mxu0 0.0
    %5573 = vmatprep.mubr.f32.mxu0 0.0
    %5574 = vmatmul.mubr.f32.gmra.mrb[0].mxu0 %v5504
    %v5575 = vpop.f32.mrb[0].mxu0
    %v5576 = vadd.f32 0.0, %v5575
    %v5577 = vpop.f32.mrb[0].mxu0
    %5578 = vmatprep.mubr.f32.mxu0 0.0
    %5579 = vmatmul.mubr.f32.gmra.mrb[0].mxu0 %v5507
    %v5580 = vpop.f32.mrb[0].mxu0
    %v5581 = vadd.f32 0.0, %v5580
    %v5582 = vpop.f32.mrb[0].mxu0
    %5583 = vdwg.mxu0
    %v5584 = vadd.f32 %v5490, %v5576
    %v5585 = vadd.f32 %v5491, %v5581
    %s5586 = scalar_lea.vmem %s89, 32
    %v5587 = vld [vmem:[%s5586] sm:$0xff]
    %v5588 = vld [vmem:[%s5586 + $0x8] sm:$0xff]
    %v5590 = vsel %vm2385, %v5587, 0
    %v5593 = vsel %vm2385, %v5588, 0
    %5595 = vmatprep.subr.mxu0 0.0
    %5596 = vmatpush1.msra.mxu0 %v5380
    %5597 = vmatprep.subr.mxu0 0.0
    %5598 = vmatpush1.msra.mxu0 %v5381
    %5599 = vmatprep.subr.mxu0 0.0
    %5600 = vmatpush1.msra.mxu0 0.0
    %5601 = vmatprep.subr.mxu0 0.0
    %5602 = vmatpush1.msra.mxu0 0.0
    %5603 = vmatprep.subr.mxu0 0.0
    %5604 = vmatpush1.msra.mxu0 0.0
    %5605 = vmatprep.subr.mxu0 0.0
    %5606 = vmatpush1.msra.mxu0 0.0
    %5607 = vmatprep.subr.mxu0 0.0
    %5608 = vmatpush1.msra.mxu0 0.0
    %5609 = vmatprep.subr.mxu0 0.0
    %5610 = vmatpush1.msra.mxu0 0.0
    %5611 = vmatprep.subr.mxu0 0.0
    %5612 = vmatpush1.msra.mxu0 0.0
    %5613 = vmatprep.subr.mxu0 0.0
    %5614 = vmatpush1.msra.mxu0 0.0
    %5615 = vmatprep.subr.mxu0 0.0
    %5616 = vmatpush1.msra.mxu0 0.0
    %5617 = vmatprep.subr.mxu0 0.0
    %5618 = vmatpush1.msra.mxu0 0.0
    %5619 = vmatprep.subr.mxu0 0.0
    %5620 = vmatpush1.msra.mxu0 0.0
    %5621 = vmatprep.subr.mxu0 0.0
    %5622 = vmatpush1.msra.mxu0 0.0
    %5623 = vmatprep.subr.mxu0 0.0
    %5624 = vmatpush1.msra.mxu0 0.0
    %5625 = vmatprep.subr.mxu0 0.0
    %5626 = vmatpush1.msra.mxu0 0.0
    %5627 = vmatprep.subr.mxu0 0.0
    %5628 = vmatpush1.msra.mxu0 0.0
    %5629 = vmatprep.subr.mxu0 0.0
    %5630 = vmatpush1.msra.mxu0 0.0
    %5631 = vmatprep.subr.mxu0 0.0
    %5632 = vmatpush1.msra.mxu0 0.0
    %5633 = vmatprep.subr.mxu0 0.0
    %5634 = vmatpush1.msra.mxu0 0.0
    %5635 = vmatprep.subr.mxu0 0.0
    %5636 = vmatpush1.msra.mxu0 0.0
    %5637 = vmatprep.subr.mxu0 0.0
    %5638 = vmatpush1.msra.mxu0 0.0
    %5639 = vmatprep.subr.mxu0 0.0
    %5640 = vmatpush1.msra.mxu0 0.0
    %5641 = vmatprep.subr.mxu0 0.0
    %5642 = vmatpush1.msra.mxu0 0.0
    %5643 = vmatprep.subr.mxu0 0.0
    %5644 = vmatpush1.msra.mxu0 0.0
    %5645 = vmatprep.subr.mxu0 0.0
    %5646 = vmatpush1.msra.mxu0 0.0
    %5647 = vmatprep.subr.mxu0 0.0
    %5648 = vmatpush1.msra.mxu0 0.0
    %5649 = vmatprep.subr.mxu0 0.0
    %5650 = vmatpush1.msra.mxu0 0.0
    %5651 = vmatprep.subr.mxu0 0.0
    %5652 = vmatpush1.msra.mxu0 0.0
    %5653 = vmatprep.subr.mxu0 0.0
    %5654 = vmatpush1.msra.mxu0 0.0
    %5655 = vmatprep.subr.mxu0 0.0
    %5656 = vmatpush1.msra.mxu0 0.0
    %5657 = vmatprep.subr.mxu0 0.0
    %5658 = vmatpush1.msra.mxu0 0.0
    %5659 = vmatprep.mubr.f32.mxu0 0.0
    %5660 = vmatmul.mubr.f32.gmra.mrb[0].mxu0 %v5590
    %v5661 = vpop.f32.mrb[0].mxu0
    %v5662 = vadd.f32 0.0, %v5661
    %v5663 = vpop.f32.mrb[0].mxu0
    %5664 = vmatprep.mubr.f32.mxu0 0.0
    %5665 = vmatmul.mubr.f32.gmra.mrb[0].mxu0 %v5593
    %v5666 = vpop.f32.mrb[0].mxu0
    %v5667 = vadd.f32 0.0, %v5666
    %v5668 = vpop.f32.mrb[0].mxu0
    %5669 = vdwg.mxu0
    %v5670 = vadd.f32 %v5584, %v5662
    %v5671 = vadd.f32 %v5585, %v5667
    %v5672 = vmax.f32 %v5670, 0.0
    %v5673 = vmax.f32 %v5671, 0.0
    %v5674 = vld [vmem:[%s87] sm:$0xff]
    %v5675 = vld [vmem:[%s87 + $0x8] sm:$0xff]
    %5677 = vset.pattern.permute.xlu0 0
    %5678 = vperm.xlu0 %5677, %v5674
    %v5679 = vpop.permute.xlu0 %5678
    %5682 = vset.pattern.permute.xlu0 0
    %5683 = vperm.xlu0 %5682, %v5675
    %v5684 = vpop.permute.xlu0 %5683
    %v5686 = vadd.f32 %v5679, 0.0
    %v5687 = vadd.f32 %v5684, 0.0
    %5690 = vrot.lane.b32.xlu0 %v5672, 4
    %v5691 = vpop.permute.xlu0 %5690
    %5692 = vrot.lane.b32.xlu0 %v5673, 4
    %v5693 = vpop.permute.xlu0 %5692
    %v5696 = vsel %vm5404, 0.0, %v5691
    %v5697 = vsel %vm5404, 0.0, %v5693
    %v5698 = vld [vmem:[%s91] sm:$0xff]
    %v5699 = vld [vmem:[%s91 + $0x8] sm:$0xff]
    %v5701 = vsel %vm2385, %v5698, 0
    %v5704 = vsel %vm2385, %v5699, 0
    %5706 = vmatprep.subr.mxu0 0.0
    %5707 = vmatpush1.msra.mxu0 %v5696
    %5708 = vmatprep.subr.mxu0 0.0
    %5709 = vmatpush1.msra.mxu0 %v5697
    %5710 = vmatprep.subr.mxu0 0.0
    %5711 = vmatpush1.msra.mxu0 0.0
    %5712 = vmatprep.subr.mxu0 0.0
    %5713 = vmatpush1.msra.mxu0 0.0
    %5714 = vmatprep.subr.mxu0 0.0
    %5715 = vmatpush1.msra.mxu0 0.0
    %5716 = vmatprep.subr.mxu0 0.0
    %5717 = vmatpush1.msra.mxu0 0.0
    %5718 = vmatprep.subr.mxu0 0.0
    %5719 = vmatpush1.msra.mxu0 0.0
    %5720 = vmatprep.subr.mxu0 0.0
    %5721 = vmatpush1.msra.mxu0 0.0
    %5722 = vmatprep.subr.mxu0 0.0
    %5723 = vmatpush1.msra.mxu0 0.0
    %5724 = vmatprep.subr.mxu0 0.0
    %5725 = vmatpush1.msra.mxu0 0.0
    %5726 = vmatprep.subr.mxu0 0.0
    %5727 = vmatpush1.msra.mxu0 0.0
    %5728 = vmatprep.subr.mxu0 0.0
    %5729 = vmatpush1.msra.mxu0 0.0
    %5730 = vmatprep.subr.mxu0 0.0
    %5731 = vmatpush1.msra.mxu0 0.0
    %5732 = vmatprep.subr.mxu0 0.0
    %5733 = vmatpush1.msra.mxu0 0.0
    %5734 = vmatprep.subr.mxu0 0.0
    %5735 = vmatpush1.msra.mxu0 0.0
    %5736 = vmatprep.subr.mxu0 0.0
    %5737 = vmatpush1.msra.mxu0 0.0
    %5738 = vmatprep.subr.mxu0 0.0
    %5739 = vmatpush1.msra.mxu0 0.0
    %5740 = vmatprep.subr.mxu0 0.0
    %5741 = vmatpush1.msra.mxu0 0.0
    %5742 = vmatprep.subr.mxu0 0.0
    %5743 = vmatpush1.msra.mxu0 0.0
    %5744 = vmatprep.subr.mxu0 0.0
    %5745 = vmatpush1.msra.mxu0 0.0
    %5746 = vmatprep.subr.mxu0 0.0
    %5747 = vmatpush1.msra.mxu0 0.0
    %5748 = vmatprep.subr.mxu0 0.0
    %5749 = vmatpush1.msra.mxu0 0.0
    %5750 = vmatprep.subr.mxu0 0.0
    %5751 = vmatpush1.msra.mxu0 0.0
    %5752 = vmatprep.subr.mxu0 0.0
    %5753 = vmatpush1.msra.mxu0 0.0
    %5754 = vmatprep.subr.mxu0 0.0
    %5755 = vmatpush1.msra.mxu0 0.0
    %5756 = vmatprep.subr.mxu0 0.0
    %5757 = vmatpush1.msra.mxu0 0.0
    %5758 = vmatprep.subr.mxu0 0.0
    %5759 = vmatpush1.msra.mxu0 0.0
    %5760 = vmatprep.subr.mxu0 0.0
    %5761 = vmatpush1.msra.mxu0 0.0
    %5762 = vmatprep.subr.mxu0 0.0
    %5763 = vmatpush1.msra.mxu0 0.0
    %5764 = vmatprep.subr.mxu0 0.0
    %5765 = vmatpush1.msra.mxu0 0.0
    %5766 = vmatprep.subr.mxu0 0.0
    %5767 = vmatpush1.msra.mxu0 0.0
    %5768 = vmatprep.subr.mxu0 0.0
    %5769 = vmatpush1.msra.mxu0 0.0
    %5770 = vmatprep.mubr.f32.mxu0 0.0
    %5771 = vmatmul.mubr.f32.gmra.mrb[0].mxu0 %v5701
    %v5772 = vpop.f32.mrb[0].mxu0
    %v5773 = vadd.f32 0.0, %v5772
    %v5774 = vpop.f32.mrb[0].mxu0
    %5775 = vmatprep.mubr.f32.mxu0 0.0
    %5776 = vmatmul.mubr.f32.gmra.mrb[0].mxu0 %v5704
    %v5777 = vpop.f32.mrb[0].mxu0
    %v5778 = vadd.f32 0.0, %v5777
    %v5779 = vpop.f32.mrb[0].mxu0
    %5780 = vdwg.mxu0
    %v5781 = vadd.f32 %v5686, %v5773
    %v5782 = vadd.f32 %v5687, %v5778
    %5783 = vrot.lane.b32.xlu0 %v5672, 2
    %v5784 = vpop.permute.xlu0 %5783
    %5785 = vrot.lane.b32.xlu0 %v5673, 2
    %v5786 = vpop.permute.xlu0 %5785
    %v5789 = vsel %vm4726, 0.0, %v5784
    %v5790 = vsel %vm4726, 0.0, %v5786
    %s5791 = scalar_lea.vmem %s91, 16
    %v5792 = vld [vmem:[%s5791] sm:$0xff]
    %v5793 = vld [vmem:[%s5791 + $0x8] sm:$0xff]
    %v5795 = vsel %vm2385, %v5792, 0
    %v5798 = vsel %vm2385, %v5793, 0
    %5800 = vmatprep.subr.mxu0 0.0
    %5801 = vmatpush1.msra.mxu0 %v5789
    %5802 = vmatprep.subr.mxu0 0.0
    %5803 = vmatpush1.msra.mxu0 %v5790
    %5804 = vmatprep.subr.mxu0 0.0
    %5805 = vmatpush1.msra.mxu0 0.0
    %5806 = vmatprep.subr.mxu0 0.0
    %5807 = vmatpush1.msra.mxu0 0.0
    %5808 = vmatprep.subr.mxu0 0.0
    %5809 = vmatpush1.msra.mxu0 0.0
    %5810 = vmatprep.subr.mxu0 0.0
    %5811 = vmatpush1.msra.mxu0 0.0
    %5812 = vmatprep.subr.mxu0 0.0
    %5813 = vmatpush1.msra.mxu0 0.0
    %5814 = vmatprep.subr.mxu0 0.0
    %5815 = vmatpush1.msra.mxu0 0.0
    %5816 = vmatprep.subr.mxu0 0.0
    %5817 = vmatpush1.msra.mxu0 0.0
    %5818 = vmatprep.subr.mxu0 0.0
    %5819 = vmatpush1.msra.mxu0 0.0
    %5820 = vmatprep.subr.mxu0 0.0
    %5821 = vmatpush1.msra.mxu0 0.0
    %5822 = vmatprep.subr.mxu0 0.0
    %5823 = vmatpush1.msra.mxu0 0.0
    %5824 = vmatprep.subr.mxu0 0.0
    %5825 = vmatpush1.msra.mxu0 0.0
    %5826 = vmatprep.subr.mxu0 0.0
    %5827 = vmatpush1.msra.mxu0 0.0
    %5828 = vmatprep.subr.mxu0 0.0
    %5829 = vmatpush1.msra.mxu0 0.0
    %5830 = vmatprep.subr.mxu0 0.0
    %5831 = vmatpush1.msra.mxu0 0.0
    %5832 = vmatprep.subr.mxu0 0.0
    %5833 = vmatpush1.msra.mxu0 0.0
    %5834 = vmatprep.subr.mxu0 0.0
    %5835 = vmatpush1.msra.mxu0 0.0
    %5836 = vmatprep.subr.mxu0 0.0
    %5837 = vmatpush1.msra.mxu0 0.0
    %5838 = vmatprep.subr.mxu0 0.0
    %5839 = vmatpush1.msra.mxu0 0.0
    %5840 = vmatprep.subr.mxu0 0.0
    %5841 = vmatpush1.msra.mxu0 0.0
    %5842 = vmatprep.subr.mxu0 0.0
    %5843 = vmatpush1.msra.mxu0 0.0
    %5844 = vmatprep.subr.mxu0 0.0
    %5845 = vmatpush1.msra.mxu0 0.0
    %5846 = vmatprep.subr.mxu0 0.0
    %5847 = vmatpush1.msra.mxu0 0.0
    %5848 = vmatprep.subr.mxu0 0.0
    %5849 = vmatpush1.msra.mxu0 0.0
    %5850 = vmatprep.subr.mxu0 0.0
    %5851 = vmatpush1.msra.mxu0 0.0
    %5852 = vmatprep.subr.mxu0 0.0
    %5853 = vmatpush1.msra.mxu0 0.0
    %5854 = vmatprep.subr.mxu0 0.0
    %5855 = vmatpush1.msra.mxu0 0.0
    %5856 = vmatprep.subr.mxu0 0.0
    %5857 = vmatpush1.msra.mxu0 0.0
    %5858 = vmatprep.subr.mxu0 0.0
    %5859 = vmatpush1.msra.mxu0 0.0
    %5860 = vmatprep.subr.mxu0 0.0
    %5861 = vmatpush1.msra.mxu0 0.0
    %5862 = vmatprep.subr.mxu0 0.0
    %5863 = vmatpush1.msra.mxu0 0.0
    %5864 = vmatprep.mubr.f32.mxu0 0.0
    %5865 = vmatmul.mubr.f32.gmra.mrb[0].mxu0 %v5795
    %v5866 = vpop.f32.mrb[0].mxu0
    %v5867 = vadd.f32 0.0, %v5866
    %v5868 = vpop.f32.mrb[0].mxu0
    %5869 = vmatprep.mubr.f32.mxu0 0.0
    %5870 = vmatmul.mubr.f32.gmra.mrb[0].mxu0 %v5798
    %v5871 = vpop.f32.mrb[0].mxu0
    %v5872 = vadd.f32 0.0, %v5871
    %v5873 = vpop.f32.mrb[0].mxu0
    %5874 = vdwg.mxu0
    %v5875 = vadd.f32 %v5781, %v5867
    %v5876 = vadd.f32 %v5782, %v5872
    %s5877 = scalar_lea.vmem %s91, 32
    %v5878 = vld [vmem:[%s5877] sm:$0xff]
    %v5879 = vld [vmem:[%s5877 + $0x8] sm:$0xff]
    %v5881 = vsel %vm2385, %v5878, 0
    %v5884 = vsel %vm2385, %v5879, 0
    %5886 = vmatprep.subr.mxu0 0.0
    %5887 = vmatpush1.msra.mxu0 %v5672
    %5888 = vmatprep.subr.mxu0 0.0
    %5889 = vmatpush1.msra.mxu0 %v5673
    %5890 = vmatprep.subr.mxu0 0.0
    %5891 = vmatpush1.msra.mxu0 0.0
    %5892 = vmatprep.subr.mxu0 0.0
    %5893 = vmatpush1.msra.mxu0 0.0
    %5894 = vmatprep.subr.mxu0 0.0
    %5895 = vmatpush1.msra.mxu0 0.0
    %5896 = vmatprep.subr.mxu0 0.0
    %5897 = vmatpush1.msra.mxu0 0.0
    %5898 = vmatprep.subr.mxu0 0.0
    %5899 = vmatpush1.msra.mxu0 0.0
    %5900 = vmatprep.subr.mxu0 0.0
    %5901 = vmatpush1.msra.mxu0 0.0
    %5902 = vmatprep.subr.mxu0 0.0
    %5903 = vmatpush1.msra.mxu0 0.0
    %5904 = vmatprep.subr.mxu0 0.0
    %5905 = vmatpush1.msra.mxu0 0.0
    %5906 = vmatprep.subr.mxu0 0.0
    %5907 = vmatpush1.msra.mxu0 0.0
    %5908 = vmatprep.subr.mxu0 0.0
    %5909 = vmatpush1.msra.mxu0 0.0
    %5910 = vmatprep.subr.mxu0 0.0
    %5911 = vmatpush1.msra.mxu0 0.0
    %5912 = vmatprep.subr.mxu0 0.0
    %5913 = vmatpush1.msra.mxu0 0.0
    %5914 = vmatprep.subr.mxu0 0.0
    %5915 = vmatpush1.msra.mxu0 0.0
    %5916 = vmatprep.subr.mxu0 0.0
    %5917 = vmatpush1.msra.mxu0 0.0
    %5918 = vmatprep.subr.mxu0 0.0
    %5919 = vmatpush1.msra.mxu0 0.0
    %5920 = vmatprep.subr.mxu0 0.0
    %5921 = vmatpush1.msra.mxu0 0.0
    %5922 = vmatprep.subr.mxu0 0.0
    %5923 = vmatpush1.msra.mxu0 0.0
    %5924 = vmatprep.subr.mxu0 0.0
    %5925 = vmatpush1.msra.mxu0 0.0
    %5926 = vmatprep.subr.mxu0 0.0
    %5927 = vmatpush1.msra.mxu0 0.0
    %5928 = vmatprep.subr.mxu0 0.0
    %5929 = vmatpush1.msra.mxu0 0.0
    %5930 = vmatprep.subr.mxu0 0.0
    %5931 = vmatpush1.msra.mxu0 0.0
    %5932 = vmatprep.subr.mxu0 0.0
    %5933 = vmatpush1.msra.mxu0 0.0
    %5934 = vmatprep.subr.mxu0 0.0
    %5935 = vmatpush1.msra.mxu0 0.0
    %5936 = vmatprep.subr.mxu0 0.0
    %5937 = vmatpush1.msra.mxu0 0.0
    %5938 = vmatprep.subr.mxu0 0.0
    %5939 = vmatpush1.msra.mxu0 0.0
    %5940 = vmatprep.subr.mxu0 0.0
    %5941 = vmatpush1.msra.mxu0 0.0
    %5942 = vmatprep.subr.mxu0 0.0
    %5943 = vmatpush1.msra.mxu0 0.0
    %5944 = vmatprep.subr.mxu0 0.0
    %5945 = vmatpush1.msra.mxu0 0.0
    %5946 = vmatprep.subr.mxu0 0.0
    %5947 = vmatpush1.msra.mxu0 0.0
    %5948 = vmatprep.subr.mxu0 0.0
    %5949 = vmatpush1.msra.mxu0 0.0
    %5950 = vmatprep.mubr.f32.mxu0 0.0
    %5951 = vmatmul.mubr.f32.gmra.mrb[0].mxu0 %v5881
    %v5952 = vpop.f32.mrb[0].mxu0
    %v5953 = vadd.f32 0.0, %v5952
    %v5954 = vpop.f32.mrb[0].mxu0
    %5955 = vmatprep.mubr.f32.mxu0 0.0
    %5956 = vmatmul.mubr.f32.gmra.mrb[0].mxu0 %v5884
    %v5957 = vpop.f32.mrb[0].mxu0
    %v5958 = vadd.f32 0.0, %v5957
    %v5959 = vpop.f32.mrb[0].mxu0
    %5960 = vdwg.mxu0
    %v5961 = vadd.f32 %v5875, %v5953
    %v5962 = vadd.f32 %v5876, %v5958
    %v5963 = vmax.f32 %v5961, 0.0
    %v5964 = vmax.f32 %v5962, 0.0
    %v5965 = vadd.f32 %v5963, %v5380
    %v5966 = vadd.f32 %v5964, %v5381
    %v5967 = vmax.f32 %v5965, 0.0
    %v5968 = vmax.f32 %v5966, 0.0
    %v5969 = vld [vmem:[%s93] sm:$0xff]
    %v5970 = vld [vmem:[%s93 + $0x8] sm:$0xff]
    %5972 = vset.pattern.permute.xlu0 0
    %5973 = vperm.xlu0 %5972, %v5969
    %v5974 = vpop.permute.xlu0 %5973
    %5977 = vset.pattern.permute.xlu0 0
    %5978 = vperm.xlu0 %5977, %v5970
    %v5979 = vpop.permute.xlu0 %5978
    %v5981 = vadd.f32 %v5974, 0.0
    %v5982 = vadd.f32 %v5979, 0.0
    %5985 = vrot.lane.b32.xlu0 %v5967, 8
    %v5986 = vpop.permute.xlu0 %5985
    %5987 = vrot.lane.b32.xlu0 %v5968, 8
    %v5988 = vpop.permute.xlu0 %5987
    %v5991 = vsel %vm211, 0.0, %v5986
    %v5992 = vsel %vm211, 0.0, %v5988
    %v5993 = vld [vmem:[%s97] sm:$0xff]
    %v5994 = vld [vmem:[%s97 + $0x8] sm:$0xff]
    %v5996 = vsel %vm2385, %v5993, 0
    %v5999 = vsel %vm2385, %v5994, 0
    %6001 = vmatprep.subr.mxu0 0.0
    %6002 = vmatpush1.msra.mxu0 %v5991
    %6003 = vmatprep.subr.mxu0 0.0
    %6004 = vmatpush1.msra.mxu0 %v5992
    %6005 = vmatprep.subr.mxu0 0.0
    %6006 = vmatpush1.msra.mxu0 0.0
    %6007 = vmatprep.subr.mxu0 0.0
    %6008 = vmatpush1.msra.mxu0 0.0
    %6009 = vmatprep.subr.mxu0 0.0
    %6010 = vmatpush1.msra.mxu0 0.0
    %6011 = vmatprep.subr.mxu0 0.0
    %6012 = vmatpush1.msra.mxu0 0.0
    %6013 = vmatprep.subr.mxu0 0.0
    %6014 = vmatpush1.msra.mxu0 0.0
    %6015 = vmatprep.subr.mxu0 0.0
    %6016 = vmatpush1.msra.mxu0 0.0
    %6017 = vmatprep.subr.mxu0 0.0
    %6018 = vmatpush1.msra.mxu0 0.0
    %6019 = vmatprep.subr.mxu0 0.0
    %6020 = vmatpush1.msra.mxu0 0.0
    %6021 = vmatprep.subr.mxu0 0.0
    %6022 = vmatpush1.msra.mxu0 0.0
    %6023 = vmatprep.subr.mxu0 0.0
    %6024 = vmatpush1.msra.mxu0 0.0
    %6025 = vmatprep.subr.mxu0 0.0
    %6026 = vmatpush1.msra.mxu0 0.0
    %6027 = vmatprep.subr.mxu0 0.0
    %6028 = vmatpush1.msra.mxu0 0.0
    %6029 = vmatprep.subr.mxu0 0.0
    %6030 = vmatpush1.msra.mxu0 0.0
    %6031 = vmatprep.subr.mxu0 0.0
    %6032 = vmatpush1.msra.mxu0 0.0
    %6033 = vmatprep.subr.mxu0 0.0
    %6034 = vmatpush1.msra.mxu0 0.0
    %6035 = vmatprep.subr.mxu0 0.0
    %6036 = vmatpush1.msra.mxu0 0.0
    %6037 = vmatprep.subr.mxu0 0.0
    %6038 = vmatpush1.msra.mxu0 0.0
    %6039 = vmatprep.subr.mxu0 0.0
    %6040 = vmatpush1.msra.mxu0 0.0
    %6041 = vmatprep.subr.mxu0 0.0
    %6042 = vmatpush1.msra.mxu0 0.0
    %6043 = vmatprep.subr.mxu0 0.0
    %6044 = vmatpush1.msra.mxu0 0.0
    %6045 = vmatprep.subr.mxu0 0.0
    %6046 = vmatpush1.msra.mxu0 0.0
    %6047 = vmatprep.subr.mxu0 0.0
    %6048 = vmatpush1.msra.mxu0 0.0
    %6049 = vmatprep.subr.mxu0 0.0
    %6050 = vmatpush1.msra.mxu0 0.0
    %6051 = vmatprep.subr.mxu0 0.0
    %6052 = vmatpush1.msra.mxu0 0.0
    %6053 = vmatprep.subr.mxu0 0.0
    %6054 = vmatpush1.msra.mxu0 0.0
    %6055 = vmatprep.subr.mxu0 0.0
    %6056 = vmatpush1.msra.mxu0 0.0
    %6057 = vmatprep.subr.mxu0 0.0
    %6058 = vmatpush1.msra.mxu0 0.0
    %6059 = vmatprep.subr.mxu0 0.0
    %6060 = vmatpush1.msra.mxu0 0.0
    %6061 = vmatprep.subr.mxu0 0.0
    %6062 = vmatpush1.msra.mxu0 0.0
    %6063 = vmatprep.subr.mxu0 0.0
    %6064 = vmatpush1.msra.mxu0 0.0
    %6065 = vmatprep.mubr.f32.mxu0 0.0
    %6066 = vmatmul.mubr.f32.gmra.mrb[0].mxu0 %v5996
    %v6067 = vpop.f32.mrb[0].mxu0
    %v6068 = vadd.f32 0.0, %v6067
    %v6069 = vpop.f32.mrb[0].mxu0
    %6070 = vmatprep.mubr.f32.mxu0 0.0
    %6071 = vmatmul.mubr.f32.gmra.mrb[0].mxu0 %v5999
    %v6072 = vpop.f32.mrb[0].mxu0
    %v6073 = vadd.f32 0.0, %v6072
    %v6074 = vpop.f32.mrb[0].mxu0
    %6075 = vdwg.mxu0
    %v6076 = vadd.f32 %v5981, %v6068
    %v6077 = vadd.f32 %v5982, %v6073
    %6078 = vrot.lane.b32.xlu0 %v5967, 4
    %v6079 = vpop.permute.xlu0 %6078
    %6080 = vrot.lane.b32.xlu0 %v5968, 4
    %v6081 = vpop.permute.xlu0 %6080
    %v6084 = vsel %vm5404, 0.0, %v6079
    %v6085 = vsel %vm5404, 0.0, %v6081
    %s6086 = scalar_lea.vmem %s97, 16
    %v6087 = vld [vmem:[%s6086] sm:$0xff]
    %v6088 = vld [vmem:[%s6086 + $0x8] sm:$0xff]
    %v6090 = vsel %vm2385, %v6087, 0
    %v6093 = vsel %vm2385, %v6088, 0
    %6095 = vmatprep.subr.mxu0 0.0
    %6096 = vmatpush1.msra.mxu0 %v6084
    %6097 = vmatprep.subr.mxu0 0.0
    %6098 = vmatpush1.msra.mxu0 %v6085
    %6099 = vmatprep.subr.mxu0 0.0
    %6100 = vmatpush1.msra.mxu0 0.0
    %6101 = vmatprep.subr.mxu0 0.0
    %6102 = vmatpush1.msra.mxu0 0.0
    %6103 = vmatprep.subr.mxu0 0.0
    %6104 = vmatpush1.msra.mxu0 0.0
    %6105 = vmatprep.subr.mxu0 0.0
    %6106 = vmatpush1.msra.mxu0 0.0
    %6107 = vmatprep.subr.mxu0 0.0
    %6108 = vmatpush1.msra.mxu0 0.0
    %6109 = vmatprep.subr.mxu0 0.0
    %6110 = vmatpush1.msra.mxu0 0.0
    %6111 = vmatprep.subr.mxu0 0.0
    %6112 = vmatpush1.msra.mxu0 0.0
    %6113 = vmatprep.subr.mxu0 0.0
    %6114 = vmatpush1.msra.mxu0 0.0
    %6115 = vmatprep.subr.mxu0 0.0
    %6116 = vmatpush1.msra.mxu0 0.0
    %6117 = vmatprep.subr.mxu0 0.0
    %6118 = vmatpush1.msra.mxu0 0.0
    %6119 = vmatprep.subr.mxu0 0.0
    %6120 = vmatpush1.msra.mxu0 0.0
    %6121 = vmatprep.subr.mxu0 0.0
    %6122 = vmatpush1.msra.mxu0 0.0
    %6123 = vmatprep.subr.mxu0 0.0
    %6124 = vmatpush1.msra.mxu0 0.0
    %6125 = vmatprep.subr.mxu0 0.0
    %6126 = vmatpush1.msra.mxu0 0.0
    %6127 = vmatprep.subr.mxu0 0.0
    %6128 = vmatpush1.msra.mxu0 0.0
    %6129 = vmatprep.subr.mxu0 0.0
    %6130 = vmatpush1.msra.mxu0 0.0
    %6131 = vmatprep.subr.mxu0 0.0
    %6132 = vmatpush1.msra.mxu0 0.0
    %6133 = vmatprep.subr.mxu0 0.0
    %6134 = vmatpush1.msra.mxu0 0.0
    %6135 = vmatprep.subr.mxu0 0.0
    %6136 = vmatpush1.msra.mxu0 0.0
    %6137 = vmatprep.subr.mxu0 0.0
    %6138 = vmatpush1.msra.mxu0 0.0
    %6139 = vmatprep.subr.mxu0 0.0
    %6140 = vmatpush1.msra.mxu0 0.0
    %6141 = vmatprep.subr.mxu0 0.0
    %6142 = vmatpush1.msra.mxu0 0.0
    %6143 = vmatprep.subr.mxu0 0.0
    %6144 = vmatpush1.msra.mxu0 0.0
    %6145 = vmatprep.subr.mxu0 0.0
    %6146 = vmatpush1.msra.mxu0 0.0
    %6147 = vmatprep.subr.mxu0 0.0
    %6148 = vmatpush1.msra.mxu0 0.0
    %6149 = vmatprep.subr.mxu0 0.0
    %6150 = vmatpush1.msra.mxu0 0.0
    %6151 = vmatprep.subr.mxu0 0.0
    %6152 = vmatpush1.msra.mxu0 0.0
    %6153 = vmatprep.subr.mxu0 0.0
    %6154 = vmatpush1.msra.mxu0 0.0
    %6155 = vmatprep.subr.mxu0 0.0
    %6156 = vmatpush1.msra.mxu0 0.0
    %6157 = vmatprep.subr.mxu0 0.0
    %6158 = vmatpush1.msra.mxu0 0.0
    %6159 = vmatprep.mubr.f32.mxu0 0.0
    %6160 = vmatmul.mubr.f32.gmra.mrb[0].mxu0 %v6090
    %v6161 = vpop.f32.mrb[0].mxu0
    %v6162 = vadd.f32 0.0, %v6161
    %v6163 = vpop.f32.mrb[0].mxu0
    %6164 = vmatprep.mubr.f32.mxu0 0.0
    %6165 = vmatmul.mubr.f32.gmra.mrb[0].mxu0 %v6093
    %v6166 = vpop.f32.mrb[0].mxu0
    %v6167 = vadd.f32 0.0, %v6166
    %v6168 = vpop.f32.mrb[0].mxu0
    %6169 = vdwg.mxu0
    %v6170 = vadd.f32 %v6076, %v6162
    %v6171 = vadd.f32 %v6077, %v6167
    %s6172 = scalar_lea.vmem %s97, 32
    %v6173 = vld [vmem:[%s6172] sm:$0xff]
    %v6174 = vld [vmem:[%s6172 + $0x8] sm:$0xff]
    %v6176 = vsel %vm2385, %v6173, 0
    %v6179 = vsel %vm2385, %v6174, 0
    %6181 = vmatprep.subr.mxu0 0.0
    %6182 = vmatpush1.msra.mxu0 %v5967
    %6183 = vmatprep.subr.mxu0 0.0
    %6184 = vmatpush1.msra.mxu0 %v5968
    %6185 = vmatprep.subr.mxu0 0.0
    %6186 = vmatpush1.msra.mxu0 0.0
    %6187 = vmatprep.subr.mxu0 0.0
    %6188 = vmatpush1.msra.mxu0 0.0
    %6189 = vmatprep.subr.mxu0 0.0
    %6190 = vmatpush1.msra.mxu0 0.0
    %6191 = vmatprep.subr.mxu0 0.0
    %6192 = vmatpush1.msra.mxu0 0.0
    %6193 = vmatprep.subr.mxu0 0.0
    %6194 = vmatpush1.msra.mxu0 0.0
    %6195 = vmatprep.subr.mxu0 0.0
    %6196 = vmatpush1.msra.mxu0 0.0
    %6197 = vmatprep.subr.mxu0 0.0
    %6198 = vmatpush1.msra.mxu0 0.0
    %6199 = vmatprep.subr.mxu0 0.0
    %6200 = vmatpush1.msra.mxu0 0.0
    %6201 = vmatprep.subr.mxu0 0.0
    %6202 = vmatpush1.msra.mxu0 0.0
    %6203 = vmatprep.subr.mxu0 0.0
    %6204 = vmatpush1.msra.mxu0 0.0
    %6205 = vmatprep.subr.mxu0 0.0
    %6206 = vmatpush1.msra.mxu0 0.0
    %6207 = vmatprep.subr.mxu0 0.0
    %6208 = vmatpush1.msra.mxu0 0.0
    %6209 = vmatprep.subr.mxu0 0.0
    %6210 = vmatpush1.msra.mxu0 0.0
    %6211 = vmatprep.subr.mxu0 0.0
    %6212 = vmatpush1.msra.mxu0 0.0
    %6213 = vmatprep.subr.mxu0 0.0
    %6214 = vmatpush1.msra.mxu0 0.0
    %6215 = vmatprep.subr.mxu0 0.0
    %6216 = vmatpush1.msra.mxu0 0.0
    %6217 = vmatprep.subr.mxu0 0.0
    %6218 = vmatpush1.msra.mxu0 0.0
    %6219 = vmatprep.subr.mxu0 0.0
    %6220 = vmatpush1.msra.mxu0 0.0
    %6221 = vmatprep.subr.mxu0 0.0
    %6222 = vmatpush1.msra.mxu0 0.0
    %6223 = vmatprep.subr.mxu0 0.0
    %6224 = vmatpush1.msra.mxu0 0.0
    %6225 = vmatprep.subr.mxu0 0.0
    %6226 = vmatpush1.msra.mxu0 0.0
    %6227 = vmatprep.subr.mxu0 0.0
    %6228 = vmatpush1.msra.mxu0 0.0
    %6229 = vmatprep.subr.mxu0 0.0
    %6230 = vmatpush1.msra.mxu0 0.0
    %6231 = vmatprep.subr.mxu0 0.0
    %6232 = vmatpush1.msra.mxu0 0.0
    %6233 = vmatprep.subr.mxu0 0.0
    %6234 = vmatpush1.msra.mxu0 0.0
    %6235 = vmatprep.subr.mxu0 0.0
    %6236 = vmatpush1.msra.mxu0 0.0
    %6237 = vmatprep.subr.mxu0 0.0
    %6238 = vmatpush1.msra.mxu0 0.0
    %6239 = vmatprep.subr.mxu0 0.0
    %6240 = vmatpush1.msra.mxu0 0.0
    %6241 = vmatprep.subr.mxu0 0.0
    %6242 = vmatpush1.msra.mxu0 0.0
    %6243 = vmatprep.subr.mxu0 0.0
    %6244 = vmatpush1.msra.mxu0 0.0
    %6245 = vmatprep.mubr.f32.mxu0 0.0
    %6246 = vmatmul.mubr.f32.gmra.mrb[0].mxu0 %v6176
    %v6247 = vpop.f32.mrb[0].mxu0
    %v6248 = vadd.f32 0.0, %v6247
    %v6249 = vpop.f32.mrb[0].mxu0
    %6250 = vmatprep.mubr.f32.mxu0 0.0
    %6251 = vmatmul.mubr.f32.gmra.mrb[0].mxu0 %v6179
    %v6252 = vpop.f32.mrb[0].mxu0
    %v6253 = vadd.f32 0.0, %v6252
    %v6254 = vpop.f32.mrb[0].mxu0
    %6255 = vdwg.mxu0
    %v6256 = vadd.f32 %v6170, %v6248
    %v6257 = vadd.f32 %v6171, %v6253
    %v6258 = vmax.f32 %v6256, 0.0
    %v6259 = vmax.f32 %v6257, 0.0
    %v6260 = vld [vmem:[%s95 + $0x8] sm:$0xff]
    %6262 = vset.pattern.permute.xlu0 0
    %6263 = vperm.xlu0 %6262, %v6260
    %v6264 = vpop.permute.xlu0 %6263
    %v6266 = vadd.f32 %v6264, 0.0
    %6269 = vrot.lane.b32.xlu0 %v6258, 8
    %v6270 = vpop.permute.xlu0 %6269
    %6271 = vrot.lane.b32.xlu0 %v6259, 8
    %v6272 = vpop.permute.xlu0 %6271
    %v6275 = vsel %vm211, 0.0, %v6270
    %v6276 = vsel %vm211, 0.0, %v6272
    %v6277 = vld [vmem:[%s99] sm:$0xff]
    %v6278 = vld [vmem:[%s99 + $0x8] sm:$0xff]
    %v6280 = vsel %vm2385, %v6277, 0
    %v6283 = vsel %vm2385, %v6278, 0
    %6285 = vmatprep.subr.mxu0 0.0
    %6286 = vmatpush1.msra.mxu0 %v6275
    %6287 = vmatprep.subr.mxu0 0.0
    %6288 = vmatpush1.msra.mxu0 %v6276
    %6289 = vmatprep.subr.mxu0 0.0
    %6290 = vmatpush1.msra.mxu0 0.0
    %6291 = vmatprep.subr.mxu0 0.0
    %6292 = vmatpush1.msra.mxu0 0.0
    %6293 = vmatprep.subr.mxu0 0.0
    %6294 = vmatpush1.msra.mxu0 0.0
    %6295 = vmatprep.subr.mxu0 0.0
    %6296 = vmatpush1.msra.mxu0 0.0
    %6297 = vmatprep.subr.mxu0 0.0
    %6298 = vmatpush1.msra.mxu0 0.0
    %6299 = vmatprep.subr.mxu0 0.0
    %6300 = vmatpush1.msra.mxu0 0.0
    %6301 = vmatprep.subr.mxu0 0.0
    %6302 = vmatpush1.msra.mxu0 0.0
    %6303 = vmatprep.subr.mxu0 0.0
    %6304 = vmatpush1.msra.mxu0 0.0
    %6305 = vmatprep.subr.mxu0 0.0
    %6306 = vmatpush1.msra.mxu0 0.0
    %6307 = vmatprep.subr.mxu0 0.0
    %6308 = vmatpush1.msra.mxu0 0.0
    %6309 = vmatprep.subr.mxu0 0.0
    %6310 = vmatpush1.msra.mxu0 0.0
    %6311 = vmatprep.subr.mxu0 0.0
    %6312 = vmatpush1.msra.mxu0 0.0
    %6313 = vmatprep.subr.mxu0 0.0
    %6314 = vmatpush1.msra.mxu0 0.0
    %6315 = vmatprep.subr.mxu0 0.0
    %6316 = vmatpush1.msra.mxu0 0.0
    %6317 = vmatprep.subr.mxu0 0.0
    %6318 = vmatpush1.msra.mxu0 0.0
    %6319 = vmatprep.subr.mxu0 0.0
    %6320 = vmatpush1.msra.mxu0 0.0
    %6321 = vmatprep.subr.mxu0 0.0
    %6322 = vmatpush1.msra.mxu0 0.0
    %6323 = vmatprep.subr.mxu0 0.0
    %6324 = vmatpush1.msra.mxu0 0.0
    %6325 = vmatprep.subr.mxu0 0.0
    %6326 = vmatpush1.msra.mxu0 0.0
    %6327 = vmatprep.subr.mxu0 0.0
    %6328 = vmatpush1.msra.mxu0 0.0
    %6329 = vmatprep.subr.mxu0 0.0
    %6330 = vmatpush1.msra.mxu0 0.0
    %6331 = vmatprep.subr.mxu0 0.0
    %6332 = vmatpush1.msra.mxu0 0.0
    %6333 = vmatprep.subr.mxu0 0.0
    %6334 = vmatpush1.msra.mxu0 0.0
    %6335 = vmatprep.subr.mxu0 0.0
    %6336 = vmatpush1.msra.mxu0 0.0
    %6337 = vmatprep.subr.mxu0 0.0
    %6338 = vmatpush1.msra.mxu0 0.0
    %6339 = vmatprep.subr.mxu0 0.0
    %6340 = vmatpush1.msra.mxu0 0.0
    %6341 = vmatprep.subr.mxu0 0.0
    %6342 = vmatpush1.msra.mxu0 0.0
    %6343 = vmatprep.subr.mxu0 0.0
    %6344 = vmatpush1.msra.mxu0 0.0
    %6345 = vmatprep.subr.mxu0 0.0
    %6346 = vmatpush1.msra.mxu0 0.0
    %6347 = vmatprep.subr.mxu0 0.0
    %6348 = vmatpush1.msra.mxu0 0.0
    %6349 = vmatprep.mubr.f32.mxu0 0.0
    %6350 = vmatmul.mubr.f32.gmra.mrb[0].mxu0 %v6280
    %v6351 = vpop.f32.mrb[0].mxu0
    %v6352 = vpop.f32.mrb[0].mxu0
    %6353 = vmatprep.mubr.f32.mxu0 0.0
    %6354 = vmatmul.mubr.f32.gmra.mrb[0].mxu0 %v6283
    %v6355 = vpop.f32.mrb[0].mxu0
    %v6356 = vadd.f32 0.0, %v6355
    %v6357 = vpop.f32.mrb[0].mxu0
    %6358 = vdwg.mxu0
    %v6359 = vadd.f32 %v6266, %v6356
    %6360 = vrot.lane.b32.xlu0 %v6258, 4
    %v6361 = vpop.permute.xlu0 %6360
    %6362 = vrot.lane.b32.xlu0 %v6259, 4
    %v6363 = vpop.permute.xlu0 %6362
    %v6366 = vsel %vm5404, 0.0, %v6361
    %v6367 = vsel %vm5404, 0.0, %v6363
    %s6368 = scalar_lea.vmem %s99, 16
    %v6369 = vld [vmem:[%s6368] sm:$0xff]
    %v6370 = vld [vmem:[%s6368 + $0x8] sm:$0xff]
    %v6372 = vsel %vm2385, %v6369, 0
    %v6375 = vsel %vm2385, %v6370, 0
    %6377 = vmatprep.subr.mxu0 0.0
    %6378 = vmatpush1.msra.mxu0 %v6366
    %6379 = vmatprep.subr.mxu0 0.0
    %6380 = vmatpush1.msra.mxu0 %v6367
    %6381 = vmatprep.subr.mxu0 0.0
    %6382 = vmatpush1.msra.mxu0 0.0
    %6383 = vmatprep.subr.mxu0 0.0
    %6384 = vmatpush1.msra.mxu0 0.0
    %6385 = vmatprep.subr.mxu0 0.0
    %6386 = vmatpush1.msra.mxu0 0.0
    %6387 = vmatprep.subr.mxu0 0.0
    %6388 = vmatpush1.msra.mxu0 0.0
    %6389 = vmatprep.subr.mxu0 0.0
    %6390 = vmatpush1.msra.mxu0 0.0
    %6391 = vmatprep.subr.mxu0 0.0
    %6392 = vmatpush1.msra.mxu0 0.0
    %6393 = vmatprep.subr.mxu0 0.0
    %6394 = vmatpush1.msra.mxu0 0.0
    %6395 = vmatprep.subr.mxu0 0.0
    %6396 = vmatpush1.msra.mxu0 0.0
    %6397 = vmatprep.subr.mxu0 0.0
    %6398 = vmatpush1.msra.mxu0 0.0
    %6399 = vmatprep.subr.mxu0 0.0
    %6400 = vmatpush1.msra.mxu0 0.0
    %6401 = vmatprep.subr.mxu0 0.0
    %6402 = vmatpush1.msra.mxu0 0.0
    %6403 = vmatprep.subr.mxu0 0.0
    %6404 = vmatpush1.msra.mxu0 0.0
    %6405 = vmatprep.subr.mxu0 0.0
    %6406 = vmatpush1.msra.mxu0 0.0
    %6407 = vmatprep.subr.mxu0 0.0
    %6408 = vmatpush1.msra.mxu0 0.0
    %6409 = vmatprep.subr.mxu0 0.0
    %6410 = vmatpush1.msra.mxu0 0.0
    %6411 = vmatprep.subr.mxu0 0.0
    %6412 = vmatpush1.msra.mxu0 0.0
    %6413 = vmatprep.subr.mxu0 0.0
    %6414 = vmatpush1.msra.mxu0 0.0
    %6415 = vmatprep.subr.mxu0 0.0
    %6416 = vmatpush1.msra.mxu0 0.0
    %6417 = vmatprep.subr.mxu0 0.0
    %6418 = vmatpush1.msra.mxu0 0.0
    %6419 = vmatprep.subr.mxu0 0.0
    %6420 = vmatpush1.msra.mxu0 0.0
    %6421 = vmatprep.subr.mxu0 0.0
    %6422 = vmatpush1.msra.mxu0 0.0
    %6423 = vmatprep.subr.mxu0 0.0
    %6424 = vmatpush1.msra.mxu0 0.0
    %6425 = vmatprep.subr.mxu0 0.0
    %6426 = vmatpush1.msra.mxu0 0.0
    %6427 = vmatprep.subr.mxu0 0.0
    %6428 = vmatpush1.msra.mxu0 0.0
    %6429 = vmatprep.subr.mxu0 0.0
    %6430 = vmatpush1.msra.mxu0 0.0
    %6431 = vmatprep.subr.mxu0 0.0
    %6432 = vmatpush1.msra.mxu0 0.0
    %6433 = vmatprep.subr.mxu0 0.0
    %6434 = vmatpush1.msra.mxu0 0.0
    %6435 = vmatprep.subr.mxu0 0.0
    %6436 = vmatpush1.msra.mxu0 0.0
    %6437 = vmatprep.subr.mxu0 0.0
    %6438 = vmatpush1.msra.mxu0 0.0
    %6439 = vmatprep.subr.mxu0 0.0
    %6440 = vmatpush1.msra.mxu0 0.0
    %6441 = vmatprep.mubr.f32.mxu0 0.0
    %6442 = vmatmul.mubr.f32.gmra.mrb[0].mxu0 %v6372
    %v6443 = vpop.f32.mrb[0].mxu0
    %v6444 = vpop.f32.mrb[0].mxu0
    %6445 = vmatprep.mubr.f32.mxu0 0.0
    %6446 = vmatmul.mubr.f32.gmra.mrb[0].mxu0 %v6375
    %v6447 = vpop.f32.mrb[0].mxu0
    %v6448 = vadd.f32 0.0, %v6447
    %v6449 = vpop.f32.mrb[0].mxu0
    %6450 = vdwg.mxu0
    %v6451 = vadd.f32 %v6359, %v6448
    %s6452 = scalar_lea.vmem %s99, 32
    %v6453 = vld [vmem:[%s6452] sm:$0xff]
    %v6454 = vld [vmem:[%s6452 + $0x8] sm:$0xff]
    %v6456 = vsel %vm2385, %v6453, 0
    %v6459 = vsel %vm2385, %v6454, 0
    %6461 = vmatprep.subr.mxu0 0.0
    %6462 = vmatpush1.msra.mxu0 %v6258
    %6463 = vmatprep.subr.mxu0 0.0
    %6464 = vmatpush1.msra.mxu0 %v6259
    %6465 = vmatprep.subr.mxu0 0.0
    %6466 = vmatpush1.msra.mxu0 0.0
    %6467 = vmatprep.subr.mxu0 0.0
    %6468 = vmatpush1.msra.mxu0 0.0
    %6469 = vmatprep.subr.mxu0 0.0
    %6470 = vmatpush1.msra.mxu0 0.0
    %6471 = vmatprep.subr.mxu0 0.0
    %6472 = vmatpush1.msra.mxu0 0.0
    %6473 = vmatprep.subr.mxu0 0.0
    %6474 = vmatpush1.msra.mxu0 0.0
    %6475 = vmatprep.subr.mxu0 0.0
    %6476 = vmatpush1.msra.mxu0 0.0
    %6477 = vmatprep.subr.mxu0 0.0
    %6478 = vmatpush1.msra.mxu0 0.0
    %6479 = vmatprep.subr.mxu0 0.0
    %6480 = vmatpush1.msra.mxu0 0.0
    %6481 = vmatprep.subr.mxu0 0.0
    %6482 = vmatpush1.msra.mxu0 0.0
    %6483 = vmatprep.subr.mxu0 0.0
    %6484 = vmatpush1.msra.mxu0 0.0
    %6485 = vmatprep.subr.mxu0 0.0
    %6486 = vmatpush1.msra.mxu0 0.0
    %6487 = vmatprep.subr.mxu0 0.0
    %6488 = vmatpush1.msra.mxu0 0.0
    %6489 = vmatprep.subr.mxu0 0.0
    %6490 = vmatpush1.msra.mxu0 0.0
    %6491 = vmatprep.subr.mxu0 0.0
    %6492 = vmatpush1.msra.mxu0 0.0
    %6493 = vmatprep.subr.mxu0 0.0
    %6494 = vmatpush1.msra.mxu0 0.0
    %6495 = vmatprep.subr.mxu0 0.0
    %6496 = vmatpush1.msra.mxu0 0.0
    %6497 = vmatprep.subr.mxu0 0.0
    %6498 = vmatpush1.msra.mxu0 0.0
    %6499 = vmatprep.subr.mxu0 0.0
    %6500 = vmatpush1.msra.mxu0 0.0
    %6501 = vmatprep.subr.mxu0 0.0
    %6502 = vmatpush1.msra.mxu0 0.0
    %6503 = vmatprep.subr.mxu0 0.0
    %6504 = vmatpush1.msra.mxu0 0.0
    %6505 = vmatprep.subr.mxu0 0.0
    %6506 = vmatpush1.msra.mxu0 0.0
    %6507 = vmatprep.subr.mxu0 0.0
    %6508 = vmatpush1.msra.mxu0 0.0
    %6509 = vmatprep.subr.mxu0 0.0
    %6510 = vmatpush1.msra.mxu0 0.0
    %6511 = vmatprep.subr.mxu0 0.0
    %6512 = vmatpush1.msra.mxu0 0.0
    %6513 = vmatprep.subr.mxu0 0.0
    %6514 = vmatpush1.msra.mxu0 0.0
    %6515 = vmatprep.subr.mxu0 0.0
    %6516 = vmatpush1.msra.mxu0 0.0
    %6517 = vmatprep.subr.mxu0 0.0
    %6518 = vmatpush1.msra.mxu0 0.0
    %6519 = vmatprep.subr.mxu0 0.0
    %6520 = vmatpush1.msra.mxu0 0.0
    %6521 = vmatprep.subr.mxu0 0.0
    %6522 = vmatpush1.msra.mxu0 0.0
    %6523 = vmatprep.subr.mxu0 0.0
    %6524 = vmatpush1.msra.mxu0 0.0
    %6525 = vmatprep.mubr.f32.mxu0 0.0
    %6526 = vmatmul.mubr.f32.gmra.mrb[0].mxu0 %v6456
    %v6527 = vpop.f32.mrb[0].mxu0
    %v6528 = vpop.f32.mrb[0].mxu0
    %6529 = vmatprep.mubr.f32.mxu0 0.0
    %6530 = vmatmul.mubr.f32.gmra.mrb[0].mxu0 %v6459
    %v6531 = vpop.f32.mrb[0].mxu0
    %v6532 = vadd.f32 0.0, %v6531
    %v6533 = vpop.f32.mrb[0].mxu0
    %6534 = vdwg.mxu0
    %v6535 = vadd.f32 %v6451, %v6532
    %v6536 = vmax.f32 %v6535, 0.0
    %v6537 = vadd.f32 %v6536, %v5968
    %v6538 = vmax.f32 %v6537, 0.0
    %6540 = vrot.lane.b32.xlu0 %v4705, 2
    %v6541 = vpop.permute.xlu0 %6540
    %v6543 = vsel %vm4726, 0.0, %v6541
    %6544 = vmatprep.subr.mxu0 0.0
    %6545 = vmatpush1.msra.mxu0 %v6543
    %6546 = vmatprep.subr.mxu0 0.0
    %6547 = vmatpush1.msra.mxu0 0.0
    %6548 = vmatprep.subr.mxu0 0.0
    %6549 = vmatpush1.msra.mxu0 0.0
    %6550 = vmatprep.subr.mxu0 0.0
    %6551 = vmatpush1.msra.mxu0 0.0
    %6552 = vmatprep.subr.mxu0 0.0
    %6553 = vmatpush1.msra.mxu0 0.0
    %6554 = vmatprep.subr.mxu0 0.0
    %6555 = vmatpush1.msra.mxu0 0.0
    %6556 = vmatprep.subr.mxu0 0.0
    %6557 = vmatpush1.msra.mxu0 0.0
    %6558 = vmatprep.subr.mxu0 0.0
    %6559 = vmatpush1.msra.mxu0 0.0
    %6560 = vmatprep.subr.mxu0 0.0
    %6561 = vmatpush1.msra.mxu0 0.0
    %6562 = vmatprep.subr.mxu0 0.0
    %6563 = vmatpush1.msra.mxu0 0.0
    %6564 = vmatprep.subr.mxu0 0.0
    %6565 = vmatpush1.msra.mxu0 0.0
    %6566 = vmatprep.subr.mxu0 0.0
    %6567 = vmatpush1.msra.mxu0 0.0
    %6568 = vmatprep.subr.mxu0 0.0
    %6569 = vmatpush1.msra.mxu0 0.0
    %6570 = vmatprep.subr.mxu0 0.0
    %6571 = vmatpush1.msra.mxu0 0.0
    %6572 = vmatprep.subr.mxu0 0.0
    %6573 = vmatpush1.msra.mxu0 0.0
    %6574 = vmatprep.subr.mxu0 0.0
    %6575 = vmatpush1.msra.mxu0 0.0
    %6576 = vmatprep.subr.mxu0 0.0
    %6577 = vmatpush1.msra.mxu0 0.0
    %6578 = vmatprep.subr.mxu0 0.0
    %6579 = vmatpush1.msra.mxu0 0.0
    %6580 = vmatprep.subr.mxu0 0.0
    %6581 = vmatpush1.msra.mxu0 0.0
    %6582 = vmatprep.subr.mxu0 0.0
    %6583 = vmatpush1.msra.mxu0 0.0
    %6584 = vmatprep.subr.mxu0 0.0
    %6585 = vmatpush1.msra.mxu0 0.0
    %6586 = vmatprep.subr.mxu0 0.0
    %6587 = vmatpush1.msra.mxu0 0.0
    %6588 = vmatprep.subr.mxu0 0.0
    %6589 = vmatpush1.msra.mxu0 0.0
    %6590 = vmatprep.subr.mxu0 0.0
    %6591 = vmatpush1.msra.mxu0 0.0
    %6592 = vmatprep.subr.mxu0 0.0
    %6593 = vmatpush1.msra.mxu0 0.0
    %6594 = vmatprep.subr.mxu0 0.0
    %6595 = vmatpush1.msra.mxu0 0.0
    %6596 = vmatprep.subr.mxu0 0.0
    %6597 = vmatpush1.msra.mxu0 0.0
    %6598 = vmatprep.subr.mxu0 0.0
    %6599 = vmatpush1.msra.mxu0 0.0
    %6600 = vmatprep.subr.mxu0 0.0
    %6601 = vmatpush1.msra.mxu0 0.0
    %6602 = vmatprep.subr.mxu0 0.0
    %6603 = vmatpush1.msra.mxu0 0.0
    %6604 = vmatprep.subr.mxu0 0.0
    %6605 = vmatpush1.msra.mxu0 0.0
    %6606 = vmatprep.subr.mxu0 0.0
    %6607 = vmatpush1.msra.mxu0 0.0
    %6608 = vmatprep.mubr.f32.mxu0 0.0
    %6609 = vmatmul.mubr.f32.gmra.mrb[0].mxu0 %v4731
    %v6610 = vpop.f32.mrb[0].mxu0
    %v6611 = vadd.f32 0.0, %v6610
    %v6612 = vpop.f32.mrb[0].mxu0
    %6613 = vmatprep.mubr.f32.mxu0 0.0
    %6614 = vmatmul.mubr.f32.gmra.mrb[0].mxu0 %v4734
    %v6615 = vpop.f32.mrb[0].mxu0
    %v6616 = vadd.f32 0.0, %v6615
    %v6617 = vpop.f32.mrb[0].mxu0
    %6618 = vdwg.mxu0
    %v6619 = vadd.f32 %v4720, %v6611
    %v6620 = vadd.f32 %v4721, %v6616
    %6621 = vrot.lane.b32.xlu0 %v4705, 1
    %v6622 = vpop.permute.xlu0 %6621
    %v6624 = vsel %vm4816, 0.0, %v6622
    %6625 = vmatprep.subr.mxu0 0.0
    %6626 = vmatpush1.msra.mxu0 %v6624
    %6627 = vmatprep.subr.mxu0 0.0
    %6628 = vmatpush1.msra.mxu0 0.0
    %6629 = vmatprep.subr.mxu0 0.0
    %6630 = vmatpush1.msra.mxu0 0.0
    %6631 = vmatprep.subr.mxu0 0.0
    %6632 = vmatpush1.msra.mxu0 0.0
    %6633 = vmatprep.subr.mxu0 0.0
    %6634 = vmatpush1.msra.mxu0 0.0
    %6635 = vmatprep.subr.mxu0 0.0
    %6636 = vmatpush1.msra.mxu0 0.0
    %6637 = vmatprep.subr.mxu0 0.0
    %6638 = vmatpush1.msra.mxu0 0.0
    %6639 = vmatprep.subr.mxu0 0.0
    %6640 = vmatpush1.msra.mxu0 0.0
    %6641 = vmatprep.subr.mxu0 0.0
    %6642 = vmatpush1.msra.mxu0 0.0
    %6643 = vmatprep.subr.mxu0 0.0
    %6644 = vmatpush1.msra.mxu0 0.0
    %6645 = vmatprep.subr.mxu0 0.0
    %6646 = vmatpush1.msra.mxu0 0.0
    %6647 = vmatprep.subr.mxu0 0.0
    %6648 = vmatpush1.msra.mxu0 0.0
    %6649 = vmatprep.subr.mxu0 0.0
    %6650 = vmatpush1.msra.mxu0 0.0
    %6651 = vmatprep.subr.mxu0 0.0
    %6652 = vmatpush1.msra.mxu0 0.0
    %6653 = vmatprep.subr.mxu0 0.0
    %6654 = vmatpush1.msra.mxu0 0.0
    %6655 = vmatprep.subr.mxu0 0.0
    %6656 = vmatpush1.msra.mxu0 0.0
    %6657 = vmatprep.subr.mxu0 0.0
    %6658 = vmatpush1.msra.mxu0 0.0
    %6659 = vmatprep.subr.mxu0 0.0
    %6660 = vmatpush1.msra.mxu0 0.0
    %6661 = vmatprep.subr.mxu0 0.0
    %6662 = vmatpush1.msra.mxu0 0.0
    %6663 = vmatprep.subr.mxu0 0.0
    %6664 = vmatpush1.msra.mxu0 0.0
    %6665 = vmatprep.subr.mxu0 0.0
    %6666 = vmatpush1.msra.mxu0 0.0
    %6667 = vmatprep.subr.mxu0 0.0
    %6668 = vmatpush1.msra.mxu0 0.0
    %6669 = vmatprep.subr.mxu0 0.0
    %6670 = vmatpush1.msra.mxu0 0.0
    %6671 = vmatprep.subr.mxu0 0.0
    %6672 = vmatpush1.msra.mxu0 0.0
    %6673 = vmatprep.subr.mxu0 0.0
    %6674 = vmatpush1.msra.mxu0 0.0
    %6675 = vmatprep.subr.mxu0 0.0
    %6676 = vmatpush1.msra.mxu0 0.0
    %6677 = vmatprep.subr.mxu0 0.0
    %6678 = vmatpush1.msra.mxu0 0.0
    %6679 = vmatprep.subr.mxu0 0.0
    %6680 = vmatpush1.msra.mxu0 0.0
    %6681 = vmatprep.subr.mxu0 0.0
    %6682 = vmatpush1.msra.mxu0 0.0
    %6683 = vmatprep.subr.mxu0 0.0
    %6684 = vmatpush1.msra.mxu0 0.0
    %6685 = vmatprep.subr.mxu0 0.0
    %6686 = vmatpush1.msra.mxu0 0.0
    %6687 = vmatprep.subr.mxu0 0.0
    %6688 = vmatpush1.msra.mxu0 0.0
    %6689 = vmatprep.mubr.f32.mxu0 0.0
    %6690 = vmatmul.mubr.f32.gmra.mrb[0].mxu0 %v4822
    %v6691 = vpop.f32.mrb[0].mxu0
    %v6692 = vadd.f32 0.0, %v6691
    %v6693 = vpop.f32.mrb[0].mxu0
    %6694 = vmatprep.mubr.f32.mxu0 0.0
    %6695 = vmatmul.mubr.f32.gmra.mrb[0].mxu0 %v4825
    %v6696 = vpop.f32.mrb[0].mxu0
    %v6697 = vadd.f32 0.0, %v6696
    %v6698 = vpop.f32.mrb[0].mxu0
    %6699 = vdwg.mxu0
    %v6700 = vadd.f32 %v6619, %v6692
    %v6701 = vadd.f32 %v6620, %v6697
    %6702 = vmatprep.subr.mxu0 0.0
    %6703 = vmatpush1.msra.mxu0 %v4705
    %6704 = vmatprep.subr.mxu0 0.0
    %6705 = vmatpush1.msra.mxu0 0.0
    %6706 = vmatprep.subr.mxu0 0.0
    %6707 = vmatpush1.msra.mxu0 0.0
    %6708 = vmatprep.subr.mxu0 0.0
    %6709 = vmatpush1.msra.mxu0 0.0
    %6710 = vmatprep.subr.mxu0 0.0
    %6711 = vmatpush1.msra.mxu0 0.0
    %6712 = vmatprep.subr.mxu0 0.0
    %6713 = vmatpush1.msra.mxu0 0.0
    %6714 = vmatprep.subr.mxu0 0.0
    %6715 = vmatpush1.msra.mxu0 0.0
    %6716 = vmatprep.subr.mxu0 0.0
    %6717 = vmatpush1.msra.mxu0 0.0
    %6718 = vmatprep.subr.mxu0 0.0
    %6719 = vmatpush1.msra.mxu0 0.0
    %6720 = vmatprep.subr.mxu0 0.0
    %6721 = vmatpush1.msra.mxu0 0.0
    %6722 = vmatprep.subr.mxu0 0.0
    %6723 = vmatpush1.msra.mxu0 0.0
    %6724 = vmatprep.subr.mxu0 0.0
    %6725 = vmatpush1.msra.mxu0 0.0
    %6726 = vmatprep.subr.mxu0 0.0
    %6727 = vmatpush1.msra.mxu0 0.0
    %6728 = vmatprep.subr.mxu0 0.0
    %6729 = vmatpush1.msra.mxu0 0.0
    %6730 = vmatprep.subr.mxu0 0.0
    %6731 = vmatpush1.msra.mxu0 0.0
    %6732 = vmatprep.subr.mxu0 0.0
    %6733 = vmatpush1.msra.mxu0 0.0
    %6734 = vmatprep.subr.mxu0 0.0
    %6735 = vmatpush1.msra.mxu0 0.0
    %6736 = vmatprep.subr.mxu0 0.0
    %6737 = vmatpush1.msra.mxu0 0.0
    %6738 = vmatprep.subr.mxu0 0.0
    %6739 = vmatpush1.msra.mxu0 0.0
    %6740 = vmatprep.subr.mxu0 0.0
    %6741 = vmatpush1.msra.mxu0 0.0
    %6742 = vmatprep.subr.mxu0 0.0
    %6743 = vmatpush1.msra.mxu0 0.0
    %6744 = vmatprep.subr.mxu0 0.0
    %6745 = vmatpush1.msra.mxu0 0.0
    %6746 = vmatprep.subr.mxu0 0.0
    %6747 = vmatpush1.msra.mxu0 0.0
    %6748 = vmatprep.subr.mxu0 0.0
    %6749 = vmatpush1.msra.mxu0 0.0
    %6750 = vmatprep.subr.mxu0 0.0
    %6751 = vmatpush1.msra.mxu0 0.0
    %6752 = vmatprep.subr.mxu0 0.0
    %6753 = vmatpush1.msra.mxu0 0.0
    %6754 = vmatprep.subr.mxu0 0.0
    %6755 = vmatpush1.msra.mxu0 0.0
    %6756 = vmatprep.subr.mxu0 0.0
    %6757 = vmatpush1.msra.mxu0 0.0
    %6758 = vmatprep.subr.mxu0 0.0
    %6759 = vmatpush1.msra.mxu0 0.0
    %6760 = vmatprep.subr.mxu0 0.0
    %6761 = vmatpush1.msra.mxu0 0.0
    %6762 = vmatprep.subr.mxu0 0.0
    %6763 = vmatpush1.msra.mxu0 0.0
    %6764 = vmatprep.subr.mxu0 0.0
    %6765 = vmatpush1.msra.mxu0 0.0
    %6766 = vmatprep.mubr.f32.mxu0 0.0
    %6767 = vmatmul.mubr.f32.gmra.mrb[0].mxu0 %v4908
    %v6768 = vpop.f32.mrb[0].mxu0
    %v6769 = vadd.f32 0.0, %v6768
    %v6770 = vpop.f32.mrb[0].mxu0
    %6771 = vmatprep.mubr.f32.mxu0 0.0
    %6772 = vmatmul.mubr.f32.gmra.mrb[0].mxu0 %v4911
    %v6773 = vpop.f32.mrb[0].mxu0
    %v6774 = vadd.f32 0.0, %v6773
    %v6775 = vpop.f32.mrb[0].mxu0
    %6776 = vdwg.mxu0
    %v6777 = vadd.f32 %v6700, %v6769
    %v6778 = vadd.f32 %v6701, %v6774
    %v6779 = vmax.f32 %v6777, 0.0
    %v6780 = vmax.f32 %v6778, 0.0
    %6783 = vrot.lane.b32.xlu0 %v6779, 2
    %v6784 = vpop.permute.xlu0 %6783
    %6785 = vrot.lane.b32.xlu0 %v6780, 2
    %v6786 = vpop.permute.xlu0 %6785
    %v6789 = vsel %vm4726, 0.0, %v6784
    %v6790 = vsel %vm4726, 0.0, %v6786
    %6791 = vmatprep.subr.mxu0 0.0
    %6792 = vmatpush1.msra.mxu0 %v6789
    %6793 = vmatprep.subr.mxu0 0.0
    %6794 = vmatpush1.msra.mxu0 %v6790
    %6795 = vmatprep.subr.mxu0 0.0
    %6796 = vmatpush1.msra.mxu0 0.0
    %6797 = vmatprep.subr.mxu0 0.0
    %6798 = vmatpush1.msra.mxu0 0.0
    %6799 = vmatprep.subr.mxu0 0.0
    %6800 = vmatpush1.msra.mxu0 0.0
    %6801 = vmatprep.subr.mxu0 0.0
    %6802 = vmatpush1.msra.mxu0 0.0
    %6803 = vmatprep.subr.mxu0 0.0
    %6804 = vmatpush1.msra.mxu0 0.0
    %6805 = vmatprep.subr.mxu0 0.0
    %6806 = vmatpush1.msra.mxu0 0.0
    %6807 = vmatprep.subr.mxu0 0.0
    %6808 = vmatpush1.msra.mxu0 0.0
    %6809 = vmatprep.subr.mxu0 0.0
    %6810 = vmatpush1.msra.mxu0 0.0
    %6811 = vmatprep.subr.mxu0 0.0
    %6812 = vmatpush1.msra.mxu0 0.0
    %6813 = vmatprep.subr.mxu0 0.0
    %6814 = vmatpush1.msra.mxu0 0.0
    %6815 = vmatprep.subr.mxu0 0.0
    %6816 = vmatpush1.msra.mxu0 0.0
    %6817 = vmatprep.subr.mxu0 0.0
    %6818 = vmatpush1.msra.mxu0 0.0
    %6819 = vmatprep.subr.mxu0 0.0
    %6820 = vmatpush1.msra.mxu0 0.0
    %6821 = vmatprep.subr.mxu0 0.0
    %6822 = vmatpush1.msra.mxu0 0.0
    %6823 = vmatprep.subr.mxu0 0.0
    %6824 = vmatpush1.msra.mxu0 0.0
    %6825 = vmatprep.subr.mxu0 0.0
    %6826 = vmatpush1.msra.mxu0 0.0
    %6827 = vmatprep.subr.mxu0 0.0
    %6828 = vmatpush1.msra.mxu0 0.0
    %6829 = vmatprep.subr.mxu0 0.0
    %6830 = vmatpush1.msra.mxu0 0.0
    %6831 = vmatprep.subr.mxu0 0.0
    %6832 = vmatpush1.msra.mxu0 0.0
    %6833 = vmatprep.subr.mxu0 0.0
    %6834 = vmatpush1.msra.mxu0 0.0
    %6835 = vmatprep.subr.mxu0 0.0
    %6836 = vmatpush1.msra.mxu0 0.0
    %6837 = vmatprep.subr.mxu0 0.0
    %6838 = vmatpush1.msra.mxu0 0.0
    %6839 = vmatprep.subr.mxu0 0.0
    %6840 = vmatpush1.msra.mxu0 0.0
    %6841 = vmatprep.subr.mxu0 0.0
    %6842 = vmatpush1.msra.mxu0 0.0
    %6843 = vmatprep.subr.mxu0 0.0
    %6844 = vmatpush1.msra.mxu0 0.0
    %6845 = vmatprep.subr.mxu0 0.0
    %6846 = vmatpush1.msra.mxu0 0.0
    %6847 = vmatprep.subr.mxu0 0.0
    %6848 = vmatpush1.msra.mxu0 0.0
    %6849 = vmatprep.subr.mxu0 0.0
    %6850 = vmatpush1.msra.mxu0 0.0
    %6851 = vmatprep.subr.mxu0 0.0
    %6852 = vmatpush1.msra.mxu0 0.0
    %6853 = vmatprep.subr.mxu0 0.0
    %6854 = vmatpush1.msra.mxu0 0.0
    %6855 = vmatprep.mubr.f32.mxu0 0.0
    %6856 = vmatmul.mubr.f32.gmra.mrb[0].mxu0 %v5019
    %v6857 = vpop.f32.mrb[0].mxu0
    %v6858 = vadd.f32 0.0, %v6857
    %v6859 = vpop.f32.mrb[0].mxu0
    %6860 = vmatprep.mubr.f32.mxu0 0.0
    %6861 = vmatmul.mubr.f32.gmra.mrb[0].mxu0 %v5022
    %v6862 = vpop.f32.mrb[0].mxu0
    %v6863 = vadd.f32 0.0, %v6862
    %v6864 = vpop.f32.mrb[0].mxu0
    %6865 = vdwg.mxu0
    %v6866 = vadd.f32 %v5004, %v6858
    %v6867 = vadd.f32 %v5005, %v6863
    %6868 = vrot.lane.b32.xlu0 %v6779, 1
    %v6869 = vpop.permute.xlu0 %6868
    %6870 = vrot.lane.b32.xlu0 %v6780, 1
    %v6871 = vpop.permute.xlu0 %6870
    %v6874 = vsel %vm4816, 0.0, %v6869
    %v6875 = vsel %vm4816, 0.0, %v6871
    %6876 = vmatprep.subr.mxu0 0.0
    %6877 = vmatpush1.msra.mxu0 %v6874
    %6878 = vmatprep.subr.mxu0 0.0
    %6879 = vmatpush1.msra.mxu0 %v6875
    %6880 = vmatprep.subr.mxu0 0.0
    %6881 = vmatpush1.msra.mxu0 0.0
    %6882 = vmatprep.subr.mxu0 0.0
    %6883 = vmatpush1.msra.mxu0 0.0
    %6884 = vmatprep.subr.mxu0 0.0
    %6885 = vmatpush1.msra.mxu0 0.0
    %6886 = vmatprep.subr.mxu0 0.0
    %6887 = vmatpush1.msra.mxu0 0.0
    %6888 = vmatprep.subr.mxu0 0.0
    %6889 = vmatpush1.msra.mxu0 0.0
    %6890 = vmatprep.subr.mxu0 0.0
    %6891 = vmatpush1.msra.mxu0 0.0
    %6892 = vmatprep.subr.mxu0 0.0
    %6893 = vmatpush1.msra.mxu0 0.0
    %6894 = vmatprep.subr.mxu0 0.0
    %6895 = vmatpush1.msra.mxu0 0.0
    %6896 = vmatprep.subr.mxu0 0.0
    %6897 = vmatpush1.msra.mxu0 0.0
    %6898 = vmatprep.subr.mxu0 0.0
    %6899 = vmatpush1.msra.mxu0 0.0
    %6900 = vmatprep.subr.mxu0 0.0
    %6901 = vmatpush1.msra.mxu0 0.0
    %6902 = vmatprep.subr.mxu0 0.0
    %6903 = vmatpush1.msra.mxu0 0.0
    %6904 = vmatprep.subr.mxu0 0.0
    %6905 = vmatpush1.msra.mxu0 0.0
    %6906 = vmatprep.subr.mxu0 0.0
    %6907 = vmatpush1.msra.mxu0 0.0
    %6908 = vmatprep.subr.mxu0 0.0
    %6909 = vmatpush1.msra.mxu0 0.0
    %6910 = vmatprep.subr.mxu0 0.0
    %6911 = vmatpush1.msra.mxu0 0.0
    %6912 = vmatprep.subr.mxu0 0.0
    %6913 = vmatpush1.msra.mxu0 0.0
    %6914 = vmatprep.subr.mxu0 0.0
    %6915 = vmatpush1.msra.mxu0 0.0
    %6916 = vmatprep.subr.mxu0 0.0
    %6917 = vmatpush1.msra.mxu0 0.0
    %6918 = vmatprep.subr.mxu0 0.0
    %6919 = vmatpush1.msra.mxu0 0.0
    %6920 = vmatprep.subr.mxu0 0.0
    %6921 = vmatpush1.msra.mxu0 0.0
    %6922 = vmatprep.subr.mxu0 0.0
    %6923 = vmatpush1.msra.mxu0 0.0
    %6924 = vmatprep.subr.mxu0 0.0
    %6925 = vmatpush1.msra.mxu0 0.0
    %6926 = vmatprep.subr.mxu0 0.0
    %6927 = vmatpush1.msra.mxu0 0.0
    %6928 = vmatprep.subr.mxu0 0.0
    %6929 = vmatpush1.msra.mxu0 0.0
    %6930 = vmatprep.subr.mxu0 0.0
    %6931 = vmatpush1.msra.mxu0 0.0
    %6932 = vmatprep.subr.mxu0 0.0
    %6933 = vmatpush1.msra.mxu0 0.0
    %6934 = vmatprep.subr.mxu0 0.0
    %6935 = vmatpush1.msra.mxu0 0.0
    %6936 = vmatprep.subr.mxu0 0.0
    %6937 = vmatpush1.msra.mxu0 0.0
    %6938 = vmatprep.subr.mxu0 0.0
    %6939 = vmatpush1.msra.mxu0 0.0
    %6940 = vmatprep.mubr.f32.mxu0 0.0
    %6941 = vmatmul.mubr.f32.gmra.mrb[0].mxu0 %v5113
    %v6942 = vpop.f32.mrb[0].mxu0
    %v6943 = vadd.f32 0.0, %v6942
    %v6944 = vpop.f32.mrb[0].mxu0
    %6945 = vmatprep.mubr.f32.mxu0 0.0
    %6946 = vmatmul.mubr.f32.gmra.mrb[0].mxu0 %v5116
    %v6947 = vpop.f32.mrb[0].mxu0
    %v6948 = vadd.f32 0.0, %v6947
    %v6949 = vpop.f32.mrb[0].mxu0
    %6950 = vdwg.mxu0
    %v6951 = vadd.f32 %v6866, %v6943
    %v6952 = vadd.f32 %v6867, %v6948
    %6953 = vmatprep.subr.mxu0 0.0
    %6954 = vmatpush1.msra.mxu0 %v6779
    %6955 = vmatprep.subr.mxu0 0.0
    %6956 = vmatpush1.msra.mxu0 %v6780
    %6957 = vmatprep.subr.mxu0 0.0
    %6958 = vmatpush1.msra.mxu0 0.0
    %6959 = vmatprep.subr.mxu0 0.0
    %6960 = vmatpush1.msra.mxu0 0.0
    %6961 = vmatprep.subr.mxu0 0.0
    %6962 = vmatpush1.msra.mxu0 0.0
    %6963 = vmatprep.subr.mxu0 0.0
    %6964 = vmatpush1.msra.mxu0 0.0
    %6965 = vmatprep.subr.mxu0 0.0
    %6966 = vmatpush1.msra.mxu0 0.0
    %6967 = vmatprep.subr.mxu0 0.0
    %6968 = vmatpush1.msra.mxu0 0.0
    %6969 = vmatprep.subr.mxu0 0.0
    %6970 = vmatpush1.msra.mxu0 0.0
    %6971 = vmatprep.subr.mxu0 0.0
    %6972 = vmatpush1.msra.mxu0 0.0
    %6973 = vmatprep.subr.mxu0 0.0
    %6974 = vmatpush1.msra.mxu0 0.0
    %6975 = vmatprep.subr.mxu0 0.0
    %6976 = vmatpush1.msra.mxu0 0.0
    %6977 = vmatprep.subr.mxu0 0.0
    %6978 = vmatpush1.msra.mxu0 0.0
    %6979 = vmatprep.subr.mxu0 0.0
    %6980 = vmatpush1.msra.mxu0 0.0
    %6981 = vmatprep.subr.mxu0 0.0
    %6982 = vmatpush1.msra.mxu0 0.0
    %6983 = vmatprep.subr.mxu0 0.0
    %6984 = vmatpush1.msra.mxu0 0.0
    %6985 = vmatprep.subr.mxu0 0.0
    %6986 = vmatpush1.msra.mxu0 0.0
    %6987 = vmatprep.subr.mxu0 0.0
    %6988 = vmatpush1.msra.mxu0 0.0
    %6989 = vmatprep.subr.mxu0 0.0
    %6990 = vmatpush1.msra.mxu0 0.0
    %6991 = vmatprep.subr.mxu0 0.0
    %6992 = vmatpush1.msra.mxu0 0.0
    %6993 = vmatprep.subr.mxu0 0.0
    %6994 = vmatpush1.msra.mxu0 0.0
    %6995 = vmatprep.subr.mxu0 0.0
    %6996 = vmatpush1.msra.mxu0 0.0
    %6997 = vmatprep.subr.mxu0 0.0
    %6998 = vmatpush1.msra.mxu0 0.0
    %6999 = vmatprep.subr.mxu0 0.0
    %7000 = vmatpush1.msra.mxu0 0.0
    %7001 = vmatprep.subr.mxu0 0.0
    %7002 = vmatpush1.msra.mxu0 0.0
    %7003 = vmatprep.subr.mxu0 0.0
    %7004 = vmatpush1.msra.mxu0 0.0
    %7005 = vmatprep.subr.mxu0 0.0
    %7006 = vmatpush1.msra.mxu0 0.0
    %7007 = vmatprep.subr.mxu0 0.0
    %7008 = vmatpush1.msra.mxu0 0.0
    %7009 = vmatprep.subr.mxu0 0.0
    %7010 = vmatpush1.msra.mxu0 0.0
    %7011 = vmatprep.subr.mxu0 0.0
    %7012 = vmatpush1.msra.mxu0 0.0
    %7013 = vmatprep.subr.mxu0 0.0
    %7014 = vmatpush1.msra.mxu0 0.0
    %7015 = vmatprep.subr.mxu0 0.0
    %7016 = vmatpush1.msra.mxu0 0.0
    %7017 = vmatprep.mubr.f32.mxu0 0.0
    %7018 = vmatmul.mubr.f32.gmra.mrb[0].mxu0 %v5199
    %v7019 = vpop.f32.mrb[0].mxu0
    %v7020 = vadd.f32 0.0, %v7019
    %v7021 = vpop.f32.mrb[0].mxu0
    %7022 = vmatprep.mubr.f32.mxu0 0.0
    %7023 = vmatmul.mubr.f32.gmra.mrb[0].mxu0 %v5202
    %v7024 = vpop.f32.mrb[0].mxu0
    %v7025 = vadd.f32 0.0, %v7024
    %v7026 = vpop.f32.mrb[0].mxu0
    %7027 = vdwg.mxu0
    %v7028 = vadd.f32 %v6951, %v7020
    %v7029 = vadd.f32 %v6952, %v7025
    %v7030 = vmax.f32 %v7028, 0.0
    %v7031 = vmax.f32 %v7029, 0.0
    %7032 = vmatprep.subr.mxu0 0.0
    %7033 = vmatpush1.msra.mxu0 %v4705
    %7034 = vmatprep.subr.mxu0 0.0
    %7035 = vmatpush1.msra.mxu0 0.0
    %7036 = vmatprep.subr.mxu0 0.0
    %7037 = vmatpush1.msra.mxu0 0.0
    %7038 = vmatprep.subr.mxu0 0.0
    %7039 = vmatpush1.msra.mxu0 0.0
    %7040 = vmatprep.subr.mxu0 0.0
    %7041 = vmatpush1.msra.mxu0 0.0
    %7042 = vmatprep.subr.mxu0 0.0
    %7043 = vmatpush1.msra.mxu0 0.0
    %7044 = vmatprep.subr.mxu0 0.0
    %7045 = vmatpush1.msra.mxu0 0.0
    %7046 = vmatprep.subr.mxu0 0.0
    %7047 = vmatpush1.msra.mxu0 0.0
    %7048 = vmatprep.subr.mxu0 0.0
    %7049 = vmatpush1.msra.mxu0 0.0
    %7050 = vmatprep.subr.mxu0 0.0
    %7051 = vmatpush1.msra.mxu0 0.0
    %7052 = vmatprep.subr.mxu0 0.0
    %7053 = vmatpush1.msra.mxu0 0.0
    %7054 = vmatprep.subr.mxu0 0.0
    %7055 = vmatpush1.msra.mxu0 0.0
    %7056 = vmatprep.subr.mxu0 0.0
    %7057 = vmatpush1.msra.mxu0 0.0
    %7058 = vmatprep.subr.mxu0 0.0
    %7059 = vmatpush1.msra.mxu0 0.0
    %7060 = vmatprep.subr.mxu0 0.0
    %7061 = vmatpush1.msra.mxu0 0.0
    %7062 = vmatprep.subr.mxu0 0.0
    %7063 = vmatpush1.msra.mxu0 0.0
    %7064 = vmatprep.subr.mxu0 0.0
    %7065 = vmatpush1.msra.mxu0 0.0
    %7066 = vmatprep.subr.mxu0 0.0
    %7067 = vmatpush1.msra.mxu0 0.0
    %7068 = vmatprep.subr.mxu0 0.0
    %7069 = vmatpush1.msra.mxu0 0.0
    %7070 = vmatprep.subr.mxu0 0.0
    %7071 = vmatpush1.msra.mxu0 0.0
    %7072 = vmatprep.subr.mxu0 0.0
    %7073 = vmatpush1.msra.mxu0 0.0
    %7074 = vmatprep.subr.mxu0 0.0
    %7075 = vmatpush1.msra.mxu0 0.0
    %7076 = vmatprep.subr.mxu0 0.0
    %7077 = vmatpush1.msra.mxu0 0.0
    %7078 = vmatprep.subr.mxu0 0.0
    %7079 = vmatpush1.msra.mxu0 0.0
    %7080 = vmatprep.subr.mxu0 0.0
    %7081 = vmatpush1.msra.mxu0 0.0
    %7082 = vmatprep.subr.mxu0 0.0
    %7083 = vmatpush1.msra.mxu0 0.0
    %7084 = vmatprep.subr.mxu0 0.0
    %7085 = vmatpush1.msra.mxu0 0.0
    %7086 = vmatprep.subr.mxu0 0.0
    %7087 = vmatpush1.msra.mxu0 0.0
    %7088 = vmatprep.subr.mxu0 0.0
    %7089 = vmatpush1.msra.mxu0 0.0
    %7090 = vmatprep.subr.mxu0 0.0
    %7091 = vmatpush1.msra.mxu0 0.0
    %7092 = vmatprep.subr.mxu0 0.0
    %7093 = vmatpush1.msra.mxu0 0.0
    %7094 = vmatprep.subr.mxu0 0.0
    %7095 = vmatpush1.msra.mxu0 0.0
    %7096 = vmatprep.mubr.f32.mxu0 0.0
    %7097 = vmatmul.mubr.f32.gmra.mrb[0].mxu0 %v5298
    %v7098 = vpop.f32.mrb[0].mxu0
    %v7099 = vadd.f32 %v5290, %v7098
    %v7100 = vpop.f32.mrb[0].mxu0
    %7101 = vmatprep.mubr.f32.mxu0 0.0
    %7102 = vmatmul.mubr.f32.gmra.mrb[0].mxu0 %v5301
    %v7103 = vpop.f32.mrb[0].mxu0
    %v7104 = vadd.f32 %v5295, %v7103
    %v7105 = vpop.f32.mrb[0].mxu0
    %7106 = vdwg.mxu0
    %v7107 = vadd.f32 %v7030, %v7099
    %v7108 = vadd.f32 %v7031, %v7104
    %v7109 = vmax.f32 %v7107, 0.0
    %v7110 = vmax.f32 %v7108, 0.0
    %7113 = vrot.lane.b32.xlu0 %v7109, 4
    %v7114 = vpop.permute.xlu0 %7113
    %7115 = vrot.lane.b32.xlu0 %v7110, 4
    %v7116 = vpop.permute.xlu0 %7115
    %v7119 = vsel %vm5404, 0.0, %v7114
    %v7120 = vsel %vm5404, 0.0, %v7116
    %7121 = vmatprep.subr.mxu0 0.0
    %7122 = vmatpush1.msra.mxu0 %v7119
    %7123 = vmatprep.subr.mxu0 0.0
    %7124 = vmatpush1.msra.mxu0 %v7120
    %7125 = vmatprep.subr.mxu0 0.0
    %7126 = vmatpush1.msra.mxu0 0.0
    %7127 = vmatprep.subr.mxu0 0.0
    %7128 = vmatpush1.msra.mxu0 0.0
    %7129 = vmatprep.subr.mxu0 0.0
    %7130 = vmatpush1.msra.mxu0 0.0
    %7131 = vmatprep.subr.mxu0 0.0
    %7132 = vmatpush1.msra.mxu0 0.0
    %7133 = vmatprep.subr.mxu0 0.0
    %7134 = vmatpush1.msra.mxu0 0.0
    %7135 = vmatprep.subr.mxu0 0.0
    %7136 = vmatpush1.msra.mxu0 0.0
    %7137 = vmatprep.subr.mxu0 0.0
    %7138 = vmatpush1.msra.mxu0 0.0
    %7139 = vmatprep.subr.mxu0 0.0
    %7140 = vmatpush1.msra.mxu0 0.0
    %7141 = vmatprep.subr.mxu0 0.0
    %7142 = vmatpush1.msra.mxu0 0.0
    %7143 = vmatprep.subr.mxu0 0.0
    %7144 = vmatpush1.msra.mxu0 0.0
    %7145 = vmatprep.subr.mxu0 0.0
    %7146 = vmatpush1.msra.mxu0 0.0
    %7147 = vmatprep.subr.mxu0 0.0
    %7148 = vmatpush1.msra.mxu0 0.0
    %7149 = vmatprep.subr.mxu0 0.0
    %7150 = vmatpush1.msra.mxu0 0.0
    %7151 = vmatprep.subr.mxu0 0.0
    %7152 = vmatpush1.msra.mxu0 0.0
    %7153 = vmatprep.subr.mxu0 0.0
    %7154 = vmatpush1.msra.mxu0 0.0
    %7155 = vmatprep.subr.mxu0 0.0
    %7156 = vmatpush1.msra.mxu0 0.0
    %7157 = vmatprep.subr.mxu0 0.0
    %7158 = vmatpush1.msra.mxu0 0.0
    %7159 = vmatprep.subr.mxu0 0.0
    %7160 = vmatpush1.msra.mxu0 0.0
    %7161 = vmatprep.subr.mxu0 0.0
    %7162 = vmatpush1.msra.mxu0 0.0
    %7163 = vmatprep.subr.mxu0 0.0
    %7164 = vmatpush1.msra.mxu0 0.0
    %7165 = vmatprep.subr.mxu0 0.0
    %7166 = vmatpush1.msra.mxu0 0.0
    %7167 = vmatprep.subr.mxu0 0.0
    %7168 = vmatpush1.msra.mxu0 0.0
    %7169 = vmatprep.subr.mxu0 0.0
    %7170 = vmatpush1.msra.mxu0 0.0
    %7171 = vmatprep.subr.mxu0 0.0
    %7172 = vmatpush1.msra.mxu0 0.0
    %7173 = vmatprep.subr.mxu0 0.0
    %7174 = vmatpush1.msra.mxu0 0.0
    %7175 = vmatprep.subr.mxu0 0.0
    %7176 = vmatpush1.msra.mxu0 0.0
    %7177 = vmatprep.subr.mxu0 0.0
    %7178 = vmatpush1.msra.mxu0 0.0
    %7179 = vmatprep.subr.mxu0 0.0
    %7180 = vmatpush1.msra.mxu0 0.0
    %7181 = vmatprep.subr.mxu0 0.0
    %7182 = vmatpush1.msra.mxu0 0.0
    %7183 = vmatprep.subr.mxu0 0.0
    %7184 = vmatpush1.msra.mxu0 0.0
    %7185 = vmatprep.mubr.f32.mxu0 0.0
    %7186 = vmatmul.mubr.f32.gmra.mrb[0].mxu0 %v5410
    %v7187 = vpop.f32.mrb[0].mxu0
    %v7188 = vadd.f32 0.0, %v7187
    %v7189 = vpop.f32.mrb[0].mxu0
    %7190 = vmatprep.mubr.f32.mxu0 0.0
    %7191 = vmatmul.mubr.f32.gmra.mrb[0].mxu0 %v5413
    %v7192 = vpop.f32.mrb[0].mxu0
    %v7193 = vadd.f32 0.0, %v7192
    %v7194 = vpop.f32.mrb[0].mxu0
    %7195 = vdwg.mxu0
    %v7196 = vadd.f32 %v5394, %v7188
    %v7197 = vadd.f32 %v5395, %v7193
    %7198 = vrot.lane.b32.xlu0 %v7109, 2
    %v7199 = vpop.permute.xlu0 %7198
    %7200 = vrot.lane.b32.xlu0 %v7110, 2
    %v7201 = vpop.permute.xlu0 %7200
    %v7204 = vsel %vm4726, 0.0, %v7199
    %v7205 = vsel %vm4726, 0.0, %v7201
    %7206 = vmatprep.subr.mxu0 0.0
    %7207 = vmatpush1.msra.mxu0 %v7204
    %7208 = vmatprep.subr.mxu0 0.0
    %7209 = vmatpush1.msra.mxu0 %v7205
    %7210 = vmatprep.subr.mxu0 0.0
    %7211 = vmatpush1.msra.mxu0 0.0
    %7212 = vmatprep.subr.mxu0 0.0
    %7213 = vmatpush1.msra.mxu0 0.0
    %7214 = vmatprep.subr.mxu0 0.0
    %7215 = vmatpush1.msra.mxu0 0.0
    %7216 = vmatprep.subr.mxu0 0.0
    %7217 = vmatpush1.msra.mxu0 0.0
    %7218 = vmatprep.subr.mxu0 0.0
    %7219 = vmatpush1.msra.mxu0 0.0
    %7220 = vmatprep.subr.mxu0 0.0
    %7221 = vmatpush1.msra.mxu0 0.0
    %7222 = vmatprep.subr.mxu0 0.0
    %7223 = vmatpush1.msra.mxu0 0.0
    %7224 = vmatprep.subr.mxu0 0.0
    %7225 = vmatpush1.msra.mxu0 0.0
    %7226 = vmatprep.subr.mxu0 0.0
    %7227 = vmatpush1.msra.mxu0 0.0
    %7228 = vmatprep.subr.mxu0 0.0
    %7229 = vmatpush1.msra.mxu0 0.0
    %7230 = vmatprep.subr.mxu0 0.0
    %7231 = vmatpush1.msra.mxu0 0.0
    %7232 = vmatprep.subr.mxu0 0.0
    %7233 = vmatpush1.msra.mxu0 0.0
    %7234 = vmatprep.subr.mxu0 0.0
    %7235 = vmatpush1.msra.mxu0 0.0
    %7236 = vmatprep.subr.mxu0 0.0
    %7237 = vmatpush1.msra.mxu0 0.0
    %7238 = vmatprep.subr.mxu0 0.0
    %7239 = vmatpush1.msra.mxu0 0.0
    %7240 = vmatprep.subr.mxu0 0.0
    %7241 = vmatpush1.msra.mxu0 0.0
    %7242 = vmatprep.subr.mxu0 0.0
    %7243 = vmatpush1.msra.mxu0 0.0
    %7244 = vmatprep.subr.mxu0 0.0
    %7245 = vmatpush1.msra.mxu0 0.0
    %7246 = vmatprep.subr.mxu0 0.0
    %7247 = vmatpush1.msra.mxu0 0.0
    %7248 = vmatprep.subr.mxu0 0.0
    %7249 = vmatpush1.msra.mxu0 0.0
    %7250 = vmatprep.subr.mxu0 0.0
    %7251 = vmatpush1.msra.mxu0 0.0
    %7252 = vmatprep.subr.mxu0 0.0
    %7253 = vmatpush1.msra.mxu0 0.0
    %7254 = vmatprep.subr.mxu0 0.0
    %7255 = vmatpush1.msra.mxu0 0.0
    %7256 = vmatprep.subr.mxu0 0.0
    %7257 = vmatpush1.msra.mxu0 0.0
    %7258 = vmatprep.subr.mxu0 0.0
    %7259 = vmatpush1.msra.mxu0 0.0
    %7260 = vmatprep.subr.mxu0 0.0
    %7261 = vmatpush1.msra.mxu0 0.0
    %7262 = vmatprep.subr.mxu0 0.0
    %7263 = vmatpush1.msra.mxu0 0.0
    %7264 = vmatprep.subr.mxu0 0.0
    %7265 = vmatpush1.msra.mxu0 0.0
    %7266 = vmatprep.subr.mxu0 0.0
    %7267 = vmatpush1.msra.mxu0 0.0
    %7268 = vmatprep.subr.mxu0 0.0
    %7269 = vmatpush1.msra.mxu0 0.0
    %7270 = vmatprep.mubr.f32.mxu0 0.0
    %7271 = vmatmul.mubr.f32.gmra.mrb[0].mxu0 %v5504
    %v7272 = vpop.f32.mrb[0].mxu0
    %v7273 = vadd.f32 0.0, %v7272
    %v7274 = vpop.f32.mrb[0].mxu0
    %7275 = vmatprep.mubr.f32.mxu0 0.0
    %7276 = vmatmul.mubr.f32.gmra.mrb[0].mxu0 %v5507
    %v7277 = vpop.f32.mrb[0].mxu0
    %v7278 = vadd.f32 0.0, %v7277
    %v7279 = vpop.f32.mrb[0].mxu0
    %7280 = vdwg.mxu0
    %v7281 = vadd.f32 %v7196, %v7273
    %v7282 = vadd.f32 %v7197, %v7278
    %7283 = vmatprep.subr.mxu0 0.0
    %7284 = vmatpush1.msra.mxu0 %v7109
    %7285 = vmatprep.subr.mxu0 0.0
    %7286 = vmatpush1.msra.mxu0 %v7110
    %7287 = vmatprep.subr.mxu0 0.0
    %7288 = vmatpush1.msra.mxu0 0.0
    %7289 = vmatprep.subr.mxu0 0.0
    %7290 = vmatpush1.msra.mxu0 0.0
    %7291 = vmatprep.subr.mxu0 0.0
    %7292 = vmatpush1.msra.mxu0 0.0
    %7293 = vmatprep.subr.mxu0 0.0
    %7294 = vmatpush1.msra.mxu0 0.0
    %7295 = vmatprep.subr.mxu0 0.0
    %7296 = vmatpush1.msra.mxu0 0.0
    %7297 = vmatprep.subr.mxu0 0.0
    %7298 = vmatpush1.msra.mxu0 0.0
    %7299 = vmatprep.subr.mxu0 0.0
    %7300 = vmatpush1.msra.mxu0 0.0
    %7301 = vmatprep.subr.mxu0 0.0
    %7302 = vmatpush1.msra.mxu0 0.0
    %7303 = vmatprep.subr.mxu0 0.0
    %7304 = vmatpush1.msra.mxu0 0.0
    %7305 = vmatprep.subr.mxu0 0.0
    %7306 = vmatpush1.msra.mxu0 0.0
    %7307 = vmatprep.subr.mxu0 0.0
    %7308 = vmatpush1.msra.mxu0 0.0
    %7309 = vmatprep.subr.mxu0 0.0
    %7310 = vmatpush1.msra.mxu0 0.0
    %7311 = vmatprep.subr.mxu0 0.0
    %7312 = vmatpush1.msra.mxu0 0.0
    %7313 = vmatprep.subr.mxu0 0.0
    %7314 = vmatpush1.msra.mxu0 0.0
    %7315 = vmatprep.subr.mxu0 0.0
    %7316 = vmatpush1.msra.mxu0 0.0
    %7317 = vmatprep.subr.mxu0 0.0
    %7318 = vmatpush1.msra.mxu0 0.0
    %7319 = vmatprep.subr.mxu0 0.0
    %7320 = vmatpush1.msra.mxu0 0.0
    %7321 = vmatprep.subr.mxu0 0.0
    %7322 = vmatpush1.msra.mxu0 0.0
    %7323 = vmatprep.subr.mxu0 0.0
    %7324 = vmatpush1.msra.mxu0 0.0
    %7325 = vmatprep.subr.mxu0 0.0
    %7326 = vmatpush1.msra.mxu0 0.0
    %7327 = vmatprep.subr.mxu0 0.0
    %7328 = vmatpush1.msra.mxu0 0.0
    %7329 = vmatprep.subr.mxu0 0.0
    %7330 = vmatpush1.msra.mxu0 0.0
    %7331 = vmatprep.subr.mxu0 0.0
    %7332 = vmatpush1.msra.mxu0 0.0
    %7333 = vmatprep.subr.mxu0 0.0
    %7334 = vmatpush1.msra.mxu0 0.0
    %7335 = vmatprep.subr.mxu0 0.0
    %7336 = vmatpush1.msra.mxu0 0.0
    %7337 = vmatprep.subr.mxu0 0.0
    %7338 = vmatpush1.msra.mxu0 0.0
    %7339 = vmatprep.subr.mxu0 0.0
    %7340 = vmatpush1.msra.mxu0 0.0
    %7341 = vmatprep.subr.mxu0 0.0
    %7342 = vmatpush1.msra.mxu0 0.0
    %7343 = vmatprep.subr.mxu0 0.0
    %7344 = vmatpush1.msra.mxu0 0.0
    %7345 = vmatprep.subr.mxu0 0.0
    %7346 = vmatpush1.msra.mxu0 0.0
    %7347 = vmatprep.mubr.f32.mxu0 0.0
    %7348 = vmatmul.mubr.f32.gmra.mrb[0].mxu0 %v5590
    %v7349 = vpop.f32.mrb[0].mxu0
    %v7350 = vadd.f32 0.0, %v7349
    %v7351 = vpop.f32.mrb[0].mxu0
    %7352 = vmatprep.mubr.f32.mxu0 0.0
    %7353 = vmatmul.mubr.f32.gmra.mrb[0].mxu0 %v5593
    %v7354 = vpop.f32.mrb[0].mxu0
    %v7355 = vadd.f32 0.0, %v7354
    %v7356 = vpop.f32.mrb[0].mxu0
    %7357 = vdwg.mxu0
    %v7358 = vadd.f32 %v7281, %v7350
    %v7359 = vadd.f32 %v7282, %v7355
    %v7360 = vmax.f32 %v7358, 0.0
    %v7361 = vmax.f32 %v7359, 0.0
    %7364 = vrot.lane.b32.xlu0 %v7360, 4
    %v7365 = vpop.permute.xlu0 %7364
    %7366 = vrot.lane.b32.xlu0 %v7361, 4
    %v7367 = vpop.permute.xlu0 %7366
    %v7370 = vsel %vm5404, 0.0, %v7365
    %v7371 = vsel %vm5404, 0.0, %v7367
    %7372 = vmatprep.subr.mxu0 0.0
    %7373 = vmatpush1.msra.mxu0 %v7370
    %7374 = vmatprep.subr.mxu0 0.0
    %7375 = vmatpush1.msra.mxu0 %v7371
    %7376 = vmatprep.subr.mxu0 0.0
    %7377 = vmatpush1.msra.mxu0 0.0
    %7378 = vmatprep.subr.mxu0 0.0
    %7379 = vmatpush1.msra.mxu0 0.0
    %7380 = vmatprep.subr.mxu0 0.0
    %7381 = vmatpush1.msra.mxu0 0.0
    %7382 = vmatprep.subr.mxu0 0.0
    %7383 = vmatpush1.msra.mxu0 0.0
    %7384 = vmatprep.subr.mxu0 0.0
    %7385 = vmatpush1.msra.mxu0 0.0
    %7386 = vmatprep.subr.mxu0 0.0
    %7387 = vmatpush1.msra.mxu0 0.0
    %7388 = vmatprep.subr.mxu0 0.0
    %7389 = vmatpush1.msra.mxu0 0.0
    %7390 = vmatprep.subr.mxu0 0.0
    %7391 = vmatpush1.msra.mxu0 0.0
    %7392 = vmatprep.subr.mxu0 0.0
    %7393 = vmatpush1.msra.mxu0 0.0
    %7394 = vmatprep.subr.mxu0 0.0
    %7395 = vmatpush1.msra.mxu0 0.0
    %7396 = vmatprep.subr.mxu0 0.0
    %7397 = vmatpush1.msra.mxu0 0.0
    %7398 = vmatprep.subr.mxu0 0.0
    %7399 = vmatpush1.msra.mxu0 0.0
    %7400 = vmatprep.subr.mxu0 0.0
    %7401 = vmatpush1.msra.mxu0 0.0
    %7402 = vmatprep.subr.mxu0 0.0
    %7403 = vmatpush1.msra.mxu0 0.0
    %7404 = vmatprep.subr.mxu0 0.0
    %7405 = vmatpush1.msra.mxu0 0.0
    %7406 = vmatprep.subr.mxu0 0.0
    %7407 = vmatpush1.msra.mxu0 0.0
    %7408 = vmatprep.subr.mxu0 0.0
    %7409 = vmatpush1.msra.mxu0 0.0
    %7410 = vmatprep.subr.mxu0 0.0
    %7411 = vmatpush1.msra.mxu0 0.0
    %7412 = vmatprep.subr.mxu0 0.0
    %7413 = vmatpush1.msra.mxu0 0.0
    %7414 = vmatprep.subr.mxu0 0.0
    %7415 = vmatpush1.msra.mxu0 0.0
    %7416 = vmatprep.subr.mxu0 0.0
    %7417 = vmatpush1.msra.mxu0 0.0
    %7418 = vmatprep.subr.mxu0 0.0
    %7419 = vmatpush1.msra.mxu0 0.0
    %7420 = vmatprep.subr.mxu0 0.0
    %7421 = vmatpush1.msra.mxu0 0.0
    %7422 = vmatprep.subr.mxu0 0.0
    %7423 = vmatpush1.msra.mxu0 0.0
    %7424 = vmatprep.subr.mxu0 0.0
    %7425 = vmatpush1.msra.mxu0 0.0
    %7426 = vmatprep.subr.mxu0 0.0
    %7427 = vmatpush1.msra.mxu0 0.0
    %7428 = vmatprep.subr.mxu0 0.0
    %7429 = vmatpush1.msra.mxu0 0.0
    %7430 = vmatprep.subr.mxu0 0.0
    %7431 = vmatpush1.msra.mxu0 0.0
    %7432 = vmatprep.subr.mxu0 0.0
    %7433 = vmatpush1.msra.mxu0 0.0
    %7434 = vmatprep.subr.mxu0 0.0
    %7435 = vmatpush1.msra.mxu0 0.0
    %7436 = vmatprep.mubr.f32.mxu0 0.0
    %7437 = vmatmul.mubr.f32.gmra.mrb[0].mxu0 %v5701
    %v7438 = vpop.f32.mrb[0].mxu0
    %v7439 = vadd.f32 0.0, %v7438
    %v7440 = vpop.f32.mrb[0].mxu0
    %7441 = vmatprep.mubr.f32.mxu0 0.0
    %7442 = vmatmul.mubr.f32.gmra.mrb[0].mxu0 %v5704
    %v7443 = vpop.f32.mrb[0].mxu0
    %v7444 = vadd.f32 0.0, %v7443
    %v7445 = vpop.f32.mrb[0].mxu0
    %7446 = vdwg.mxu0
    %v7447 = vadd.f32 %v5686, %v7439
    %v7448 = vadd.f32 %v5687, %v7444
    %7449 = vrot.lane.b32.xlu0 %v7360, 2
    %v7450 = vpop.permute.xlu0 %7449
    %7451 = vrot.lane.b32.xlu0 %v7361, 2
    %v7452 = vpop.permute.xlu0 %7451
    %v7455 = vsel %vm4726, 0.0, %v7450
    %v7456 = vsel %vm4726, 0.0, %v7452
    %7457 = vmatprep.subr.mxu0 0.0
    %7458 = vmatpush1.msra.mxu0 %v7455
    %7459 = vmatprep.subr.mxu0 0.0
    %7460 = vmatpush1.msra.mxu0 %v7456
    %7461 = vmatprep.subr.mxu0 0.0
    %7462 = vmatpush1.msra.mxu0 0.0
    %7463 = vmatprep.subr.mxu0 0.0
    %7464 = vmatpush1.msra.mxu0 0.0
    %7465 = vmatprep.subr.mxu0 0.0
    %7466 = vmatpush1.msra.mxu0 0.0
    %7467 = vmatprep.subr.mxu0 0.0
    %7468 = vmatpush1.msra.mxu0 0.0
    %7469 = vmatprep.subr.mxu0 0.0
    %7470 = vmatpush1.msra.mxu0 0.0
    %7471 = vmatprep.subr.mxu0 0.0
    %7472 = vmatpush1.msra.mxu0 0.0
    %7473 = vmatprep.subr.mxu0 0.0
    %7474 = vmatpush1.msra.mxu0 0.0
    %7475 = vmatprep.subr.mxu0 0.0
    %7476 = vmatpush1.msra.mxu0 0.0
    %7477 = vmatprep.subr.mxu0 0.0
    %7478 = vmatpush1.msra.mxu0 0.0
    %7479 = vmatprep.subr.mxu0 0.0
    %7480 = vmatpush1.msra.mxu0 0.0
    %7481 = vmatprep.subr.mxu0 0.0
    %7482 = vmatpush1.msra.mxu0 0.0
    %7483 = vmatprep.subr.mxu0 0.0
    %7484 = vmatpush1.msra.mxu0 0.0
    %7485 = vmatprep.subr.mxu0 0.0
    %7486 = vmatpush1.msra.mxu0 0.0
    %7487 = vmatprep.subr.mxu0 0.0
    %7488 = vmatpush1.msra.mxu0 0.0
    %7489 = vmatprep.subr.mxu0 0.0
    %7490 = vmatpush1.msra.mxu0 0.0
    %7491 = vmatprep.subr.mxu0 0.0
    %7492 = vmatpush1.msra.mxu0 0.0
    %7493 = vmatprep.subr.mxu0 0.0
    %7494 = vmatpush1.msra.mxu0 0.0
    %7495 = vmatprep.subr.mxu0 0.0
    %7496 = vmatpush1.msra.mxu0 0.0
    %7497 = vmatprep.subr.mxu0 0.0
    %7498 = vmatpush1.msra.mxu0 0.0
    %7499 = vmatprep.subr.mxu0 0.0
    %7500 = vmatpush1.msra.mxu0 0.0
    %7501 = vmatprep.subr.mxu0 0.0
    %7502 = vmatpush1.msra.mxu0 0.0
    %7503 = vmatprep.subr.mxu0 0.0
    %7504 = vmatpush1.msra.mxu0 0.0
    %7505 = vmatprep.subr.mxu0 0.0
    %7506 = vmatpush1.msra.mxu0 0.0
    %7507 = vmatprep.subr.mxu0 0.0
    %7508 = vmatpush1.msra.mxu0 0.0
    %7509 = vmatprep.subr.mxu0 0.0
    %7510 = vmatpush1.msra.mxu0 0.0
    %7511 = vmatprep.subr.mxu0 0.0
    %7512 = vmatpush1.msra.mxu0 0.0
    %7513 = vmatprep.subr.mxu0 0.0
    %7514 = vmatpush1.msra.mxu0 0.0
    %7515 = vmatprep.subr.mxu0 0.0
    %7516 = vmatpush1.msra.mxu0 0.0
    %7517 = vmatprep.subr.mxu0 0.0
    %7518 = vmatpush1.msra.mxu0 0.0
    %7519 = vmatprep.subr.mxu0 0.0
    %7520 = vmatpush1.msra.mxu0 0.0
    %7521 = vmatprep.mubr.f32.mxu0 0.0
    %7522 = vmatmul.mubr.f32.gmra.mrb[0].mxu0 %v5795
    %v7523 = vpop.f32.mrb[0].mxu0
    %v7524 = vadd.f32 0.0, %v7523
    %v7525 = vpop.f32.mrb[0].mxu0
    %7526 = vmatprep.mubr.f32.mxu0 0.0
    %7527 = vmatmul.mubr.f32.gmra.mrb[0].mxu0 %v5798
    %v7528 = vpop.f32.mrb[0].mxu0
    %v7529 = vadd.f32 0.0, %v7528
    %v7530 = vpop.f32.mrb[0].mxu0
    %7531 = vdwg.mxu0
    %v7532 = vadd.f32 %v7447, %v7524
    %v7533 = vadd.f32 %v7448, %v7529
    %7534 = vmatprep.subr.mxu0 0.0
    %7535 = vmatpush1.msra.mxu0 %v7360
    %7536 = vmatprep.subr.mxu0 0.0
    %7537 = vmatpush1.msra.mxu0 %v7361
    %7538 = vmatprep.subr.mxu0 0.0
    %7539 = vmatpush1.msra.mxu0 0.0
    %7540 = vmatprep.subr.mxu0 0.0
    %7541 = vmatpush1.msra.mxu0 0.0
    %7542 = vmatprep.subr.mxu0 0.0
    %7543 = vmatpush1.msra.mxu0 0.0
    %7544 = vmatprep.subr.mxu0 0.0
    %7545 = vmatpush1.msra.mxu0 0.0
    %7546 = vmatprep.subr.mxu0 0.0
    %7547 = vmatpush1.msra.mxu0 0.0
    %7548 = vmatprep.subr.mxu0 0.0
    %7549 = vmatpush1.msra.mxu0 0.0
    %7550 = vmatprep.subr.mxu0 0.0
    %7551 = vmatpush1.msra.mxu0 0.0
    %7552 = vmatprep.subr.mxu0 0.0
    %7553 = vmatpush1.msra.mxu0 0.0
    %7554 = vmatprep.subr.mxu0 0.0
    %7555 = vmatpush1.msra.mxu0 0.0
    %7556 = vmatprep.subr.mxu0 0.0
    %7557 = vmatpush1.msra.mxu0 0.0
    %7558 = vmatprep.subr.mxu0 0.0
    %7559 = vmatpush1.msra.mxu0 0.0
    %7560 = vmatprep.subr.mxu0 0.0
    %7561 = vmatpush1.msra.mxu0 0.0
    %7562 = vmatprep.subr.mxu0 0.0
    %7563 = vmatpush1.msra.mxu0 0.0
    %7564 = vmatprep.subr.mxu0 0.0
    %7565 = vmatpush1.msra.mxu0 0.0
    %7566 = vmatprep.subr.mxu0 0.0
    %7567 = vmatpush1.msra.mxu0 0.0
    %7568 = vmatprep.subr.mxu0 0.0
    %7569 = vmatpush1.msra.mxu0 0.0
    %7570 = vmatprep.subr.mxu0 0.0
    %7571 = vmatpush1.msra.mxu0 0.0
    %7572 = vmatprep.subr.mxu0 0.0
    %7573 = vmatpush1.msra.mxu0 0.0
    %7574 = vmatprep.subr.mxu0 0.0
    %7575 = vmatpush1.msra.mxu0 0.0
    %7576 = vmatprep.subr.mxu0 0.0
    %7577 = vmatpush1.msra.mxu0 0.0
    %7578 = vmatprep.subr.mxu0 0.0
    %7579 = vmatpush1.msra.mxu0 0.0
    %7580 = vmatprep.subr.mxu0 0.0
    %7581 = vmatpush1.msra.mxu0 0.0
    %7582 = vmatprep.subr.mxu0 0.0
    %7583 = vmatpush1.msra.mxu0 0.0
    %7584 = vmatprep.subr.mxu0 0.0
    %7585 = vmatpush1.msra.mxu0 0.0
    %7586 = vmatprep.subr.mxu0 0.0
    %7587 = vmatpush1.msra.mxu0 0.0
    %7588 = vmatprep.subr.mxu0 0.0
    %7589 = vmatpush1.msra.mxu0 0.0
    %7590 = vmatprep.subr.mxu0 0.0
    %7591 = vmatpush1.msra.mxu0 0.0
    %7592 = vmatprep.subr.mxu0 0.0
    %7593 = vmatpush1.msra.mxu0 0.0
    %7594 = vmatprep.subr.mxu0 0.0
    %7595 = vmatpush1.msra.mxu0 0.0
    %7596 = vmatprep.subr.mxu0 0.0
    %7597 = vmatpush1.msra.mxu0 0.0
    %7598 = vmatprep.mubr.f32.mxu0 0.0
    %7599 = vmatmul.mubr.f32.gmra.mrb[0].mxu0 %v5881
    %v7600 = vpop.f32.mrb[0].mxu0
    %v7601 = vadd.f32 0.0, %v7600
    %v7602 = vpop.f32.mrb[0].mxu0
    %7603 = vmatprep.mubr.f32.mxu0 0.0
    %7604 = vmatmul.mubr.f32.gmra.mrb[0].mxu0 %v5884
    %v7605 = vpop.f32.mrb[0].mxu0
    %v7606 = vadd.f32 0.0, %v7605
    %v7607 = vpop.f32.mrb[0].mxu0
    %7608 = vdwg.mxu0
    %v7609 = vadd.f32 %v7532, %v7601
    %v7610 = vadd.f32 %v7533, %v7606
    %v7611 = vmax.f32 %v7609, 0.0
    %v7612 = vmax.f32 %v7610, 0.0
    %v7613 = vadd.f32 %v7611, %v7109
    %v7614 = vadd.f32 %v7612, %v7110
    %v7615 = vmax.f32 %v7613, 0.0
    %v7616 = vmax.f32 %v7614, 0.0
    %7619 = vrot.lane.b32.xlu0 %v7615, 8
    %v7620 = vpop.permute.xlu0 %7619
    %7621 = vrot.lane.b32.xlu0 %v7616, 8
    %v7622 = vpop.permute.xlu0 %7621
    %v7625 = vsel %vm211, 0.0, %v7620
    %v7626 = vsel %vm211, 0.0, %v7622
    %7627 = vmatprep.subr.mxu0 0.0
    %7628 = vmatpush1.msra.mxu0 %v7625
    %7629 = vmatprep.subr.mxu0 0.0
    %7630 = vmatpush1.msra.mxu0 %v7626
    %7631 = vmatprep.subr.mxu0 0.0
    %7632 = vmatpush1.msra.mxu0 0.0
    %7633 = vmatprep.subr.mxu0 0.0
    %7634 = vmatpush1.msra.mxu0 0.0
    %7635 = vmatprep.subr.mxu0 0.0
    %7636 = vmatpush1.msra.mxu0 0.0
    %7637 = vmatprep.subr.mxu0 0.0
    %7638 = vmatpush1.msra.mxu0 0.0
    %7639 = vmatprep.subr.mxu0 0.0
    %7640 = vmatpush1.msra.mxu0 0.0
    %7641 = vmatprep.subr.mxu0 0.0
    %7642 = vmatpush1.msra.mxu0 0.0
    %7643 = vmatprep.subr.mxu0 0.0
    %7644 = vmatpush1.msra.mxu0 0.0
    %7645 = vmatprep.subr.mxu0 0.0
    %7646 = vmatpush1.msra.mxu0 0.0
    %7647 = vmatprep.subr.mxu0 0.0
    %7648 = vmatpush1.msra.mxu0 0.0
    %7649 = vmatprep.subr.mxu0 0.0
    %7650 = vmatpush1.msra.mxu0 0.0
    %7651 = vmatprep.subr.mxu0 0.0
    %7652 = vmatpush1.msra.mxu0 0.0
    %7653 = vmatprep.subr.mxu0 0.0
    %7654 = vmatpush1.msra.mxu0 0.0
    %7655 = vmatprep.subr.mxu0 0.0
    %7656 = vmatpush1.msra.mxu0 0.0
    %7657 = vmatprep.subr.mxu0 0.0
    %7658 = vmatpush1.msra.mxu0 0.0
    %7659 = vmatprep.subr.mxu0 0.0
    %7660 = vmatpush1.msra.mxu0 0.0
    %7661 = vmatprep.subr.mxu0 0.0
    %7662 = vmatpush1.msra.mxu0 0.0
    %7663 = vmatprep.subr.mxu0 0.0
    %7664 = vmatpush1.msra.mxu0 0.0
    %7665 = vmatprep.subr.mxu0 0.0
    %7666 = vmatpush1.msra.mxu0 0.0
    %7667 = vmatprep.subr.mxu0 0.0
    %7668 = vmatpush1.msra.mxu0 0.0
    %7669 = vmatprep.subr.mxu0 0.0
    %7670 = vmatpush1.msra.mxu0 0.0
    %7671 = vmatprep.subr.mxu0 0.0
    %7672 = vmatpush1.msra.mxu0 0.0
    %7673 = vmatprep.subr.mxu0 0.0
    %7674 = vmatpush1.msra.mxu0 0.0
    %7675 = vmatprep.subr.mxu0 0.0
    %7676 = vmatpush1.msra.mxu0 0.0
    %7677 = vmatprep.subr.mxu0 0.0
    %7678 = vmatpush1.msra.mxu0 0.0
    %7679 = vmatprep.subr.mxu0 0.0
    %7680 = vmatpush1.msra.mxu0 0.0
    %7681 = vmatprep.subr.mxu0 0.0
    %7682 = vmatpush1.msra.mxu0 0.0
    %7683 = vmatprep.subr.mxu0 0.0
    %7684 = vmatpush1.msra.mxu0 0.0
    %7685 = vmatprep.subr.mxu0 0.0
    %7686 = vmatpush1.msra.mxu0 0.0
    %7687 = vmatprep.subr.mxu0 0.0
    %7688 = vmatpush1.msra.mxu0 0.0
    %7689 = vmatprep.subr.mxu0 0.0
    %7690 = vmatpush1.msra.mxu0 0.0
    %7691 = vmatprep.mubr.f32.mxu0 0.0
    %7692 = vmatmul.mubr.f32.gmra.mrb[0].mxu0 %v5996
    %v7693 = vpop.f32.mrb[0].mxu0
    %v7694 = vadd.f32 0.0, %v7693
    %v7695 = vpop.f32.mrb[0].mxu0
    %7696 = vmatprep.mubr.f32.mxu0 0.0
    %7697 = vmatmul.mubr.f32.gmra.mrb[0].mxu0 %v5999
    %v7698 = vpop.f32.mrb[0].mxu0
    %v7699 = vadd.f32 0.0, %v7698
    %v7700 = vpop.f32.mrb[0].mxu0
    %7701 = vdwg.mxu0
    %v7702 = vadd.f32 %v5981, %v7694
    %v7703 = vadd.f32 %v5982, %v7699
    %7704 = vrot.lane.b32.xlu0 %v7615, 4
    %v7705 = vpop.permute.xlu0 %7704
    %7706 = vrot.lane.b32.xlu0 %v7616, 4
    %v7707 = vpop.permute.xlu0 %7706
    %v7710 = vsel %vm5404, 0.0, %v7705
    %v7711 = vsel %vm5404, 0.0, %v7707
    %7712 = vmatprep.subr.mxu0 0.0
    %7713 = vmatpush1.msra.mxu0 %v7710
    %7714 = vmatprep.subr.mxu0 0.0
    %7715 = vmatpush1.msra.mxu0 %v7711
    %7716 = vmatprep.subr.mxu0 0.0
    %7717 = vmatpush1.msra.mxu0 0.0
    %7718 = vmatprep.subr.mxu0 0.0
    %7719 = vmatpush1.msra.mxu0 0.0
    %7720 = vmatprep.subr.mxu0 0.0
    %7721 = vmatpush1.msra.mxu0 0.0
    %7722 = vmatprep.subr.mxu0 0.0
    %7723 = vmatpush1.msra.mxu0 0.0
    %7724 = vmatprep.subr.mxu0 0.0
    %7725 = vmatpush1.msra.mxu0 0.0
    %7726 = vmatprep.subr.mxu0 0.0
    %7727 = vmatpush1.msra.mxu0 0.0
    %7728 = vmatprep.subr.mxu0 0.0
    %7729 = vmatpush1.msra.mxu0 0.0
    %7730 = vmatprep.subr.mxu0 0.0
    %7731 = vmatpush1.msra.mxu0 0.0
    %7732 = vmatprep.subr.mxu0 0.0
    %7733 = vmatpush1.msra.mxu0 0.0
    %7734 = vmatprep.subr.mxu0 0.0
    %7735 = vmatpush1.msra.mxu0 0.0
    %7736 = vmatprep.subr.mxu0 0.0
    %7737 = vmatpush1.msra.mxu0 0.0
    %7738 = vmatprep.subr.mxu0 0.0
    %7739 = vmatpush1.msra.mxu0 0.0
    %7740 = vmatprep.subr.mxu0 0.0
    %7741 = vmatpush1.msra.mxu0 0.0
    %7742 = vmatprep.subr.mxu0 0.0
    %7743 = vmatpush1.msra.mxu0 0.0
    %7744 = vmatprep.subr.mxu0 0.0
    %7745 = vmatpush1.msra.mxu0 0.0
    %7746 = vmatprep.subr.mxu0 0.0
    %7747 = vmatpush1.msra.mxu0 0.0
    %7748 = vmatprep.subr.mxu0 0.0
    %7749 = vmatpush1.msra.mxu0 0.0
    %7750 = vmatprep.subr.mxu0 0.0
    %7751 = vmatpush1.msra.mxu0 0.0
    %7752 = vmatprep.subr.mxu0 0.0
    %7753 = vmatpush1.msra.mxu0 0.0
    %7754 = vmatprep.subr.mxu0 0.0
    %7755 = vmatpush1.msra.mxu0 0.0
    %7756 = vmatprep.subr.mxu0 0.0
    %7757 = vmatpush1.msra.mxu0 0.0
    %7758 = vmatprep.subr.mxu0 0.0
    %7759 = vmatpush1.msra.mxu0 0.0
    %7760 = vmatprep.subr.mxu0 0.0
    %7761 = vmatpush1.msra.mxu0 0.0
    %7762 = vmatprep.subr.mxu0 0.0
    %7763 = vmatpush1.msra.mxu0 0.0
    %7764 = vmatprep.subr.mxu0 0.0
    %7765 = vmatpush1.msra.mxu0 0.0
    %7766 = vmatprep.subr.mxu0 0.0
    %7767 = vmatpush1.msra.mxu0 0.0
    %7768 = vmatprep.subr.mxu0 0.0
    %7769 = vmatpush1.msra.mxu0 0.0
    %7770 = vmatprep.subr.mxu0 0.0
    %7771 = vmatpush1.msra.mxu0 0.0
    %7772 = vmatprep.subr.mxu0 0.0
    %7773 = vmatpush1.msra.mxu0 0.0
    %7774 = vmatprep.subr.mxu0 0.0
    %7775 = vmatpush1.msra.mxu0 0.0
    %7776 = vmatprep.mubr.f32.mxu0 0.0
    %7777 = vmatmul.mubr.f32.gmra.mrb[0].mxu0 %v6090
    %v7778 = vpop.f32.mrb[0].mxu0
    %v7779 = vadd.f32 0.0, %v7778
    %v7780 = vpop.f32.mrb[0].mxu0
    %7781 = vmatprep.mubr.f32.mxu0 0.0
    %7782 = vmatmul.mubr.f32.gmra.mrb[0].mxu0 %v6093
    %v7783 = vpop.f32.mrb[0].mxu0
    %v7784 = vadd.f32 0.0, %v7783
    %v7785 = vpop.f32.mrb[0].mxu0
    %7786 = vdwg.mxu0
    %v7787 = vadd.f32 %v7702, %v7779
    %v7788 = vadd.f32 %v7703, %v7784
    %7789 = vmatprep.subr.mxu0 0.0
    %7790 = vmatpush1.msra.mxu0 %v7615
    %7791 = vmatprep.subr.mxu0 0.0
    %7792 = vmatpush1.msra.mxu0 %v7616
    %7793 = vmatprep.subr.mxu0 0.0
    %7794 = vmatpush1.msra.mxu0 0.0
    %7795 = vmatprep.subr.mxu0 0.0
    %7796 = vmatpush1.msra.mxu0 0.0
    %7797 = vmatprep.subr.mxu0 0.0
    %7798 = vmatpush1.msra.mxu0 0.0
    %7799 = vmatprep.subr.mxu0 0.0
    %7800 = vmatpush1.msra.mxu0 0.0
    %7801 = vmatprep.subr.mxu0 0.0
    %7802 = vmatpush1.msra.mxu0 0.0
    %7803 = vmatprep.subr.mxu0 0.0
    %7804 = vmatpush1.msra.mxu0 0.0
    %7805 = vmatprep.subr.mxu0 0.0
    %7806 = vmatpush1.msra.mxu0 0.0
    %7807 = vmatprep.subr.mxu0 0.0
    %7808 = vmatpush1.msra.mxu0 0.0
    %7809 = vmatprep.subr.mxu0 0.0
    %7810 = vmatpush1.msra.mxu0 0.0
    %7811 = vmatprep.subr.mxu0 0.0
    %7812 = vmatpush1.msra.mxu0 0.0
    %7813 = vmatprep.subr.mxu0 0.0
    %7814 = vmatpush1.msra.mxu0 0.0
    %7815 = vmatprep.subr.mxu0 0.0
    %7816 = vmatpush1.msra.mxu0 0.0
    %7817 = vmatprep.subr.mxu0 0.0
    %7818 = vmatpush1.msra.mxu0 0.0
    %7819 = vmatprep.subr.mxu0 0.0
    %7820 = vmatpush1.msra.mxu0 0.0
    %7821 = vmatprep.subr.mxu0 0.0
    %7822 = vmatpush1.msra.mxu0 0.0
    %7823 = vmatprep.subr.mxu0 0.0
    %7824 = vmatpush1.msra.mxu0 0.0
    %7825 = vmatprep.subr.mxu0 0.0
    %7826 = vmatpush1.msra.mxu0 0.0
    %7827 = vmatprep.subr.mxu0 0.0
    %7828 = vmatpush1.msra.mxu0 0.0
    %7829 = vmatprep.subr.mxu0 0.0
    %7830 = vmatpush1.msra.mxu0 0.0
    %7831 = vmatprep.subr.mxu0 0.0
    %7832 = vmatpush1.msra.mxu0 0.0
    %7833 = vmatprep.subr.mxu0 0.0
    %7834 = vmatpush1.msra.mxu0 0.0
    %7835 = vmatprep.subr.mxu0 0.0
    %7836 = vmatpush1.msra.mxu0 0.0
    %7837 = vmatprep.subr.mxu0 0.0
    %7838 = vmatpush1.msra.mxu0 0.0
    %7839 = vmatprep.subr.mxu0 0.0
    %7840 = vmatpush1.msra.mxu0 0.0
    %7841 = vmatprep.subr.mxu0 0.0
    %7842 = vmatpush1.msra.mxu0 0.0
    %7843 = vmatprep.subr.mxu0 0.0
    %7844 = vmatpush1.msra.mxu0 0.0
    %7845 = vmatprep.subr.mxu0 0.0
    %7846 = vmatpush1.msra.mxu0 0.0
    %7847 = vmatprep.subr.mxu0 0.0
    %7848 = vmatpush1.msra.mxu0 0.0
    %7849 = vmatprep.subr.mxu0 0.0
    %7850 = vmatpush1.msra.mxu0 0.0
    %7851 = vmatprep.subr.mxu0 0.0
    %7852 = vmatpush1.msra.mxu0 0.0
    %7853 = vmatprep.mubr.f32.mxu0 0.0
    %7854 = vmatmul.mubr.f32.gmra.mrb[0].mxu0 %v6176
    %v7855 = vpop.f32.mrb[0].mxu0
    %v7856 = vadd.f32 0.0, %v7855
    %v7857 = vpop.f32.mrb[0].mxu0
    %7858 = vmatprep.mubr.f32.mxu0 0.0
    %7859 = vmatmul.mubr.f32.gmra.mrb[0].mxu0 %v6179
    %v7860 = vpop.f32.mrb[0].mxu0
    %v7861 = vadd.f32 0.0, %v7860
    %v7862 = vpop.f32.mrb[0].mxu0
    %7863 = vdwg.mxu0
    %v7864 = vadd.f32 %v7787, %v7856
    %v7865 = vadd.f32 %v7788, %v7861
    %v7866 = vmax.f32 %v7864, 0.0
    %v7867 = vmax.f32 %v7865, 0.0
    %7870 = vrot.lane.b32.xlu0 %v7866, 8
    %v7871 = vpop.permute.xlu0 %7870
    %7872 = vrot.lane.b32.xlu0 %v7867, 8
    %v7873 = vpop.permute.xlu0 %7872
    %v7876 = vsel %vm211, 0.0, %v7871
    %v7877 = vsel %vm211, 0.0, %v7873
    %7878 = vmatprep.subr.mxu0 0.0
    %7879 = vmatpush1.msra.mxu0 %v7876
    %7880 = vmatprep.subr.mxu0 0.0
    %7881 = vmatpush1.msra.mxu0 %v7877
    %7882 = vmatprep.subr.mxu0 0.0
    %7883 = vmatpush1.msra.mxu0 0.0
    %7884 = vmatprep.subr.mxu0 0.0
    %7885 = vmatpush1.msra.mxu0 0.0
    %7886 = vmatprep.subr.mxu0 0.0
    %7887 = vmatpush1.msra.mxu0 0.0
    %7888 = vmatprep.subr.mxu0 0.0
    %7889 = vmatpush1.msra.mxu0 0.0
    %7890 = vmatprep.subr.mxu0 0.0
    %7891 = vmatpush1.msra.mxu0 0.0
    %7892 = vmatprep.subr.mxu0 0.0
    %7893 = vmatpush1.msra.mxu0 0.0
    %7894 = vmatprep.subr.mxu0 0.0
    %7895 = vmatpush1.msra.mxu0 0.0
    %7896 = vmatprep.subr.mxu0 0.0
    %7897 = vmatpush1.msra.mxu0 0.0
    %7898 = vmatprep.subr.mxu0 0.0
    %7899 = vmatpush1.msra.mxu0 0.0
    %7900 = vmatprep.subr.mxu0 0.0
    %7901 = vmatpush1.msra.mxu0 0.0
    %7902 = vmatprep.subr.mxu0 0.0
    %7903 = vmatpush1.msra.mxu0 0.0
    %7904 = vmatprep.subr.mxu0 0.0
    %7905 = vmatpush1.msra.mxu0 0.0
    %7906 = vmatprep.subr.mxu0 0.0
    %7907 = vmatpush1.msra.mxu0 0.0
    %7908 = vmatprep.subr.mxu0 0.0
    %7909 = vmatpush1.msra.mxu0 0.0
    %7910 = vmatprep.subr.mxu0 0.0
    %7911 = vmatpush1.msra.mxu0 0.0
    %7912 = vmatprep.subr.mxu0 0.0
    %7913 = vmatpush1.msra.mxu0 0.0
    %7914 = vmatprep.subr.mxu0 0.0
    %7915 = vmatpush1.msra.mxu0 0.0
    %7916 = vmatprep.subr.mxu0 0.0
    %7917 = vmatpush1.msra.mxu0 0.0
    %7918 = vmatprep.subr.mxu0 0.0
    %7919 = vmatpush1.msra.mxu0 0.0
    %7920 = vmatprep.subr.mxu0 0.0
    %7921 = vmatpush1.msra.mxu0 0.0
    %7922 = vmatprep.subr.mxu0 0.0
    %7923 = vmatpush1.msra.mxu0 0.0
    %7924 = vmatprep.subr.mxu0 0.0
    %7925 = vmatpush1.msra.mxu0 0.0
    %7926 = vmatprep.subr.mxu0 0.0
    %7927 = vmatpush1.msra.mxu0 0.0
    %7928 = vmatprep.subr.mxu0 0.0
    %7929 = vmatpush1.msra.mxu0 0.0
    %7930 = vmatprep.subr.mxu0 0.0
    %7931 = vmatpush1.msra.mxu0 0.0
    %7932 = vmatprep.subr.mxu0 0.0
    %7933 = vmatpush1.msra.mxu0 0.0
    %7934 = vmatprep.subr.mxu0 0.0
    %7935 = vmatpush1.msra.mxu0 0.0
    %7936 = vmatprep.subr.mxu0 0.0
    %7937 = vmatpush1.msra.mxu0 0.0
    %7938 = vmatprep.subr.mxu0 0.0
    %7939 = vmatpush1.msra.mxu0 0.0
    %7940 = vmatprep.subr.mxu0 0.0
    %7941 = vmatpush1.msra.mxu0 0.0
    %7942 = vmatprep.mubr.f32.mxu0 0.0
    %7943 = vmatmul.mubr.f32.gmra.mrb[0].mxu0 %v6280
    %v7944 = vpop.f32.mrb[0].mxu0
    %v7945 = vpop.f32.mrb[0].mxu0
    %7946 = vmatprep.mubr.f32.mxu0 0.0
    %7947 = vmatmul.mubr.f32.gmra.mrb[0].mxu0 %v6283
    %v7948 = vpop.f32.mrb[0].mxu0
    %v7949 = vadd.f32 0.0, %v7948
    %v7950 = vpop.f32.mrb[0].mxu0
    %7951 = vdwg.mxu0
    %v7952 = vadd.f32 %v6266, %v7949
    %7953 = vrot.lane.b32.xlu0 %v7866, 4
    %v7954 = vpop.permute.xlu0 %7953
    %7955 = vrot.lane.b32.xlu0 %v7867, 4
    %v7956 = vpop.permute.xlu0 %7955
    %v7959 = vsel %vm5404, 0.0, %v7954
    %v7960 = vsel %vm5404, 0.0, %v7956
    %7961 = vmatprep.subr.mxu0 0.0
    %7962 = vmatpush1.msra.mxu0 %v7959
    %7963 = vmatprep.subr.mxu0 0.0
    %7964 = vmatpush1.msra.mxu0 %v7960
    %7965 = vmatprep.subr.mxu0 0.0
    %7966 = vmatpush1.msra.mxu0 0.0
    %7967 = vmatprep.subr.mxu0 0.0
    %7968 = vmatpush1.msra.mxu0 0.0
    %7969 = vmatprep.subr.mxu0 0.0
    %7970 = vmatpush1.msra.mxu0 0.0
    %7971 = vmatprep.subr.mxu0 0.0
    %7972 = vmatpush1.msra.mxu0 0.0
    %7973 = vmatprep.subr.mxu0 0.0
    %7974 = vmatpush1.msra.mxu0 0.0
    %7975 = vmatprep.subr.mxu0 0.0
    %7976 = vmatpush1.msra.mxu0 0.0
    %7977 = vmatprep.subr.mxu0 0.0
    %7978 = vmatpush1.msra.mxu0 0.0
    %7979 = vmatprep.subr.mxu0 0.0
    %7980 = vmatpush1.msra.mxu0 0.0
    %7981 = vmatprep.subr.mxu0 0.0
    %7982 = vmatpush1.msra.mxu0 0.0
    %7983 = vmatprep.subr.mxu0 0.0
    %7984 = vmatpush1.msra.mxu0 0.0
    %7985 = vmatprep.subr.mxu0 0.0
    %7986 = vmatpush1.msra.mxu0 0.0
    %7987 = vmatprep.subr.mxu0 0.0
    %7988 = vmatpush1.msra.mxu0 0.0
    %7989 = vmatprep.subr.mxu0 0.0
    %7990 = vmatpush1.msra.mxu0 0.0
    %7991 = vmatprep.subr.mxu0 0.0
    %7992 = vmatpush1.msra.mxu0 0.0
    %7993 = vmatprep.subr.mxu0 0.0
    %7994 = vmatpush1.msra.mxu0 0.0
    %7995 = vmatprep.subr.mxu0 0.0
    %7996 = vmatpush1.msra.mxu0 0.0
    %7997 = vmatprep.subr.mxu0 0.0
    %7998 = vmatpush1.msra.mxu0 0.0
    %7999 = vmatprep.subr.mxu0 0.0
    %8000 = vmatpush1.msra.mxu0 0.0
    %8001 = vmatprep.subr.mxu0 0.0
    %8002 = vmatpush1.msra.mxu0 0.0
    %8003 = vmatprep.subr.mxu0 0.0
    %8004 = vmatpush1.msra.mxu0 0.0
    %8005 = vmatprep.subr.mxu0 0.0
    %8006 = vmatpush1.msra.mxu0 0.0
    %8007 = vmatprep.subr.mxu0 0.0
    %8008 = vmatpush1.msra.mxu0 0.0
    %8009 = vmatprep.subr.mxu0 0.0
    %8010 = vmatpush1.msra.mxu0 0.0
    %8011 = vmatprep.subr.mxu0 0.0
    %8012 = vmatpush1.msra.mxu0 0.0
    %8013 = vmatprep.subr.mxu0 0.0
    %8014 = vmatpush1.msra.mxu0 0.0
    %8015 = vmatprep.subr.mxu0 0.0
    %8016 = vmatpush1.msra.mxu0 0.0
    %8017 = vmatprep.subr.mxu0 0.0
    %8018 = vmatpush1.msra.mxu0 0.0
    %8019 = vmatprep.subr.mxu0 0.0
    %8020 = vmatpush1.msra.mxu0 0.0
    %8021 = vmatprep.subr.mxu0 0.0
    %8022 = vmatpush1.msra.mxu0 0.0
    %8023 = vmatprep.subr.mxu0 0.0
    %8024 = vmatpush1.msra.mxu0 0.0
    %8025 = vmatprep.mubr.f32.mxu0 0.0
    %8026 = vmatmul.mubr.f32.gmra.mrb[0].mxu0 %v6372
    %v8027 = vpop.f32.mrb[0].mxu0
    %v8028 = vpop.f32.mrb[0].mxu0
    %8029 = vmatprep.mubr.f32.mxu0 0.0
    %8030 = vmatmul.mubr.f32.gmra.mrb[0].mxu0 %v6375
    %v8031 = vpop.f32.mrb[0].mxu0
    %v8032 = vadd.f32 0.0, %v8031
    %v8033 = vpop.f32.mrb[0].mxu0
    %8034 = vdwg.mxu0
    %v8035 = vadd.f32 %v7952, %v8032
    %8036 = vmatprep.subr.mxu0 0.0
    %8037 = vmatpush1.msra.mxu0 %v7866
    %8038 = vmatprep.subr.mxu0 0.0
    %8039 = vmatpush1.msra.mxu0 %v7867
    %8040 = vmatprep.subr.mxu0 0.0
    %8041 = vmatpush1.msra.mxu0 0.0
    %8042 = vmatprep.subr.mxu0 0.0
    %8043 = vmatpush1.msra.mxu0 0.0
    %8044 = vmatprep.subr.mxu0 0.0
    %8045 = vmatpush1.msra.mxu0 0.0
    %8046 = vmatprep.subr.mxu0 0.0
    %8047 = vmatpush1.msra.mxu0 0.0
    %8048 = vmatprep.subr.mxu0 0.0
    %8049 = vmatpush1.msra.mxu0 0.0
    %8050 = vmatprep.subr.mxu0 0.0
    %8051 = vmatpush1.msra.mxu0 0.0
    %8052 = vmatprep.subr.mxu0 0.0
    %8053 = vmatpush1.msra.mxu0 0.0
    %8054 = vmatprep.subr.mxu0 0.0
    %8055 = vmatpush1.msra.mxu0 0.0
    %8056 = vmatprep.subr.mxu0 0.0
    %8057 = vmatpush1.msra.mxu0 0.0
    %8058 = vmatprep.subr.mxu0 0.0
    %8059 = vmatpush1.msra.mxu0 0.0
    %8060 = vmatprep.subr.mxu0 0.0
    %8061 = vmatpush1.msra.mxu0 0.0
    %8062 = vmatprep.subr.mxu0 0.0
    %8063 = vmatpush1.msra.mxu0 0.0
    %8064 = vmatprep.subr.mxu0 0.0
    %8065 = vmatpush1.msra.mxu0 0.0
    %8066 = vmatprep.subr.mxu0 0.0
    %8067 = vmatpush1.msra.mxu0 0.0
    %8068 = vmatprep.subr.mxu0 0.0
    %8069 = vmatpush1.msra.mxu0 0.0
    %8070 = vmatprep.subr.mxu0 0.0
    %8071 = vmatpush1.msra.mxu0 0.0
    %8072 = vmatprep.subr.mxu0 0.0
    %8073 = vmatpush1.msra.mxu0 0.0
    %8074 = vmatprep.subr.mxu0 0.0
    %8075 = vmatpush1.msra.mxu0 0.0
    %8076 = vmatprep.subr.mxu0 0.0
    %8077 = vmatpush1.msra.mxu0 0.0
    %8078 = vmatprep.subr.mxu0 0.0
    %8079 = vmatpush1.msra.mxu0 0.0
    %8080 = vmatprep.subr.mxu0 0.0
    %8081 = vmatpush1.msra.mxu0 0.0
    %8082 = vmatprep.subr.mxu0 0.0
    %8083 = vmatpush1.msra.mxu0 0.0
    %8084 = vmatprep.subr.mxu0 0.0
    %8085 = vmatpush1.msra.mxu0 0.0
    %8086 = vmatprep.subr.mxu0 0.0
    %8087 = vmatpush1.msra.mxu0 0.0
    %8088 = vmatprep.subr.mxu0 0.0
    %8089 = vmatpush1.msra.mxu0 0.0
    %8090 = vmatprep.subr.mxu0 0.0
    %8091 = vmatpush1.msra.mxu0 0.0
    %8092 = vmatprep.subr.mxu0 0.0
    %8093 = vmatpush1.msra.mxu0 0.0
    %8094 = vmatprep.subr.mxu0 0.0
    %8095 = vmatpush1.msra.mxu0 0.0
    %8096 = vmatprep.subr.mxu0 0.0
    %8097 = vmatpush1.msra.mxu0 0.0
    %8098 = vmatprep.subr.mxu0 0.0
    %8099 = vmatpush1.msra.mxu0 0.0
    %8100 = vmatprep.mubr.f32.mxu0 0.0
    %8101 = vmatmul.mubr.f32.gmra.mrb[0].mxu0 %v6456
    %v8102 = vpop.f32.mrb[0].mxu0
    %v8103 = vpop.f32.mrb[0].mxu0
    %8104 = vmatprep.mubr.f32.mxu0 0.0
    %8105 = vmatmul.mubr.f32.gmra.mrb[0].mxu0 %v6459
    %v8106 = vpop.f32.mrb[0].mxu0
    %v8107 = vadd.f32 0.0, %v8106
    %v8108 = vpop.f32.mrb[0].mxu0
    %8109 = vdwg.mxu0
    %v8110 = vadd.f32 %v8035, %v8107
    %v8111 = vmax.f32 %v8110, 0.0
    %v8112 = vadd.f32 %v8111, %v7616
    %v8113 = vmax.f32 %v8112, 0.0
    %v8115 = vrot.slane %v6538, 7
    %v8118 = vrot.slane %v8113, 6
    %v8120 = vsel %vm1983, %v8115, %v8118
    %v8121 = vld [vmem:[%s61] sm:$0xff]
    %v8122 = vld [vmem:[%s61 + $0x8] sm:$0x3]
    %v8123 = vld [vmem:[%s57] sm:$0x1]
    %v8125 = vlaneseq
    %v8126 = vshrl.u32 %v8125, 7
    %v8127 = vsub.s32 0, %v8126
    %v8128 = vrot.slane %v8123, %v8127
    %v8131 = vsel %vm2038, %v8120, 0
    %v8134 = vsel %vm1985, %v8122, 0
    %8136 = vmatprep.subr.mxu0 0.0
    %8137 = vmatpush1.msra.mxu0 %v8121
    %8138 = vmatprep.subr.mxu0 0.0
    %8139 = vmatpush1.msra.mxu0 %v8134
    %8140 = vmatprep.subr.mxu0 0.0
    %8141 = vmatpush1.msra.mxu0 0.0
    %8142 = vmatprep.subr.mxu0 0.0
    %8143 = vmatpush1.msra.mxu0 0.0
    %8144 = vmatprep.subr.mxu0 0.0
    %8145 = vmatpush1.msra.mxu0 0.0
    %8146 = vmatprep.subr.mxu0 0.0
    %8147 = vmatpush1.msra.mxu0 0.0
    %8148 = vmatprep.subr.mxu0 0.0
    %8149 = vmatpush1.msra.mxu0 0.0
    %8150 = vmatprep.subr.mxu0 0.0
    %8151 = vmatpush1.msra.mxu0 0.0
    %8152 = vmatprep.subr.mxu0 0.0
    %8153 = vmatpush1.msra.mxu0 0.0
    %8154 = vmatprep.subr.mxu0 0.0
    %8155 = vmatpush1.msra.mxu0 0.0
    %8156 = vmatprep.subr.mxu0 0.0
    %8157 = vmatpush1.msra.mxu0 0.0
    %8158 = vmatprep.subr.mxu0 0.0
    %8159 = vmatpush1.msra.mxu0 0.0
    %8160 = vmatprep.subr.mxu0 0.0
    %8161 = vmatpush1.msra.mxu0 0.0
    %8162 = vmatprep.subr.mxu0 0.0
    %8163 = vmatpush1.msra.mxu0 0.0
    %8164 = vmatprep.subr.mxu0 0.0
    %8165 = vmatpush1.msra.mxu0 0.0
    %8166 = vmatprep.subr.mxu0 0.0
    %8167 = vmatpush1.msra.mxu0 0.0
    %8168 = vmatprep.subr.mxu0 0.0
    %8169 = vmatpush1.msra.mxu0 0.0
    %8170 = vmatprep.subr.mxu0 0.0
    %8171 = vmatpush1.msra.mxu0 0.0
    %8172 = vmatprep.subr.mxu0 0.0
    %8173 = vmatpush1.msra.mxu0 0.0
    %8174 = vmatprep.subr.mxu0 0.0
    %8175 = vmatpush1.msra.mxu0 0.0
    %8176 = vmatprep.subr.mxu0 0.0
    %8177 = vmatpush1.msra.mxu0 0.0
    %8178 = vmatprep.subr.mxu0 0.0
    %8179 = vmatpush1.msra.mxu0 0.0
    %8180 = vmatprep.subr.mxu0 0.0
    %8181 = vmatpush1.msra.mxu0 0.0
    %8182 = vmatprep.subr.mxu0 0.0
    %8183 = vmatpush1.msra.mxu0 0.0
    %8184 = vmatprep.subr.mxu0 0.0
    %8185 = vmatpush1.msra.mxu0 0.0
    %8186 = vmatprep.subr.mxu0 0.0
    %8187 = vmatpush1.msra.mxu0 0.0
    %8188 = vmatprep.subr.mxu0 0.0
    %8189 = vmatpush1.msra.mxu0 0.0
    %8190 = vmatprep.subr.mxu0 0.0
    %8191 = vmatpush1.msra.mxu0 0.0
    %8192 = vmatprep.subr.mxu0 0.0
    %8193 = vmatpush1.msra.mxu0 0.0
    %8194 = vmatprep.subr.mxu0 0.0
    %8195 = vmatpush1.msra.mxu0 0.0
    %8196 = vmatprep.subr.mxu0 0.0
    %8197 = vmatpush1.msra.mxu0 0.0
    %8198 = vmatprep.subr.mxu0 0.0
    %8199 = vmatpush1.msra.mxu0 0.0
    %8200 = vmatprep.mubr.f32.mxu0 0.0
    %8201 = vmatmul.mubr.f32.gmra.mrb[0].mxu0 %v8131
    %v8202 = vpop.f32.mrb[0].mxu0
    %v8203 = vadd.f32 %v8128, %v8202
    %v8204 = vpop.f32.mrb[0].mxu0
    %8205 = vdwg.mxu0
    %v8206 = vmax.f32 %v8203, 0.0
    %v8207 = vld [vmem:[%s63] sm:$0xff]
    %v8208 = vld [vmem:[%s59] sm:$0x1]
    %v8210 = vlaneseq
    %v8211 = vshrl.u32 %v8210, 7
    %v8212 = vsub.s32 0, %v8211
    %v8213 = vrot.slane %v8208, %v8212
    %v8216 = vsel %vm211, %v8206, 0
    %8218 = vmatprep.subr.mxu0 0.0
    %8219 = vmatpush1.msra.mxu0 %v8207
    %8220 = vmatprep.subr.mxu0 0.0
    %8221 = vmatpush1.msra.mxu0 0.0
    %8222 = vmatprep.subr.mxu0 0.0
    %8223 = vmatpush1.msra.mxu0 0.0
    %8224 = vmatprep.subr.mxu0 0.0
    %8225 = vmatpush1.msra.mxu0 0.0
    %8226 = vmatprep.subr.mxu0 0.0
    %8227 = vmatpush1.msra.mxu0 0.0
    %8228 = vmatprep.subr.mxu0 0.0
    %8229 = vmatpush1.msra.mxu0 0.0
    %8230 = vmatprep.subr.mxu0 0.0
    %8231 = vmatpush1.msra.mxu0 0.0
    %8232 = vmatprep.subr.mxu0 0.0
    %8233 = vmatpush1.msra.mxu0 0.0
    %8234 = vmatprep.subr.mxu0 0.0
    %8235 = vmatpush1.msra.mxu0 0.0
    %8236 = vmatprep.subr.mxu0 0.0
    %8237 = vmatpush1.msra.mxu0 0.0
    %8238 = vmatprep.subr.mxu0 0.0
    %8239 = vmatpush1.msra.mxu0 0.0
    %8240 = vmatprep.subr.mxu0 0.0
    %8241 = vmatpush1.msra.mxu0 0.0
    %8242 = vmatprep.subr.mxu0 0.0
    %8243 = vmatpush1.msra.mxu0 0.0
    %8244 = vmatprep.subr.mxu0 0.0
    %8245 = vmatpush1.msra.mxu0 0.0
    %8246 = vmatprep.subr.mxu0 0.0
    %8247 = vmatpush1.msra.mxu0 0.0
    %8248 = vmatprep.subr.mxu0 0.0
    %8249 = vmatpush1.msra.mxu0 0.0
    %8250 = vmatprep.subr.mxu0 0.0
    %8251 = vmatpush1.msra.mxu0 0.0
    %8252 = vmatprep.subr.mxu0 0.0
    %8253 = vmatpush1.msra.mxu0 0.0
    %8254 = vmatprep.subr.mxu0 0.0
    %8255 = vmatpush1.msra.mxu0 0.0
    %8256 = vmatprep.subr.mxu0 0.0
    %8257 = vmatpush1.msra.mxu0 0.0
    %8258 = vmatprep.subr.mxu0 0.0
    %8259 = vmatpush1.msra.mxu0 0.0
    %8260 = vmatprep.subr.mxu0 0.0
    %8261 = vmatpush1.msra.mxu0 0.0
    %8262 = vmatprep.subr.mxu0 0.0
    %8263 = vmatpush1.msra.mxu0 0.0
    %8264 = vmatprep.subr.mxu0 0.0
    %8265 = vmatpush1.msra.mxu0 0.0
    %8266 = vmatprep.subr.mxu0 0.0
    %8267 = vmatpush1.msra.mxu0 0.0
    %8268 = vmatprep.subr.mxu0 0.0
    %8269 = vmatpush1.msra.mxu0 0.0
    %8270 = vmatprep.subr.mxu0 0.0
    %8271 = vmatpush1.msra.mxu0 0.0
    %8272 = vmatprep.subr.mxu0 0.0
    %8273 = vmatpush1.msra.mxu0 0.0
    %8274 = vmatprep.subr.mxu0 0.0
    %8275 = vmatpush1.msra.mxu0 0.0
    %8276 = vmatprep.subr.mxu0 0.0
    %8277 = vmatpush1.msra.mxu0 0.0
    %8278 = vmatprep.subr.mxu0 0.0
    %8279 = vmatpush1.msra.mxu0 0.0
    %8280 = vmatprep.subr.mxu0 0.0
    %8281 = vmatpush1.msra.mxu0 0.0
    %8282 = vmatprep.mubr.f32.mxu0 0.0
    %8283 = vmatmul.mubr.f32.gmra.mrb[0].mxu0 %v8216
    %v8284 = vpop.f32.mrb[0].mxu0
    %v8285 = vadd.f32 %v8213, %v8284
    %v8286 = vpop.f32.mrb[0].mxu0
    %8287 = vdwg.mxu0
    %vm8288 = vcmask 25600
    %8289 = vst.msk [vmem:[#allocation2] sm:$0x3] %vm8288, %v8285
    // Predicated region
    $region202: #{forward.1} parent=1 // pred_check
      _
    $region203: #{forward.1} parent=1 // pred_check_branch
      %8291 = sbr.rel (0) target = $region205
    $region204: #{forward.1} parent=1 // pred_region
      %s8293 = ssub.s32 32, 32
      %8294 = vsyncadd [#allocation3], %s8293
      %s8296 = sshll.u32 [#allocation2], 4
      %s8297 = int_to_ptr.vmem [resolvable:$true] %s8296
      %8299 = dma.vmem_to_hbm [thread:$0]  %s8297, 32, %s101, [#allocation3]
    $region205: #{forward.1} parent=1 // pred_fallthru
      _
    // Predicated region
    $region206: #{forward.1} parent=1 // pred_check
      _
    $region207: #{forward.1} parent=1 // pred_check_branch
      %8301 = sbr.rel (0) target = $region209
    $region208: #{forward.1} parent=1 // pred_region
      %8302 = dma.done [#allocation3], 32
    $region209: #{forward.1} parent=1 // pred_fallthru
      _
    %8303 = vsyncpa [#allocation3], 1

</llo_original>
